<compile_context>
chip_gen: v5e
topology: v5e:2x2
jax: 0.10.0
libtpu: 0.0.40
codegen_flags: <defaults>
</compile_context>

<pallas_src>
import math
import functools

import jax
import jax.numpy as jnp
from jax.experimental import pallas as pl
from jax.experimental.pallas import tpu as pltpu


# ----------------------------------------------------------------------------
# Convolution: tap-accumulating Pallas kernel (no im2col materialization).
# ----------------------------------------------------------------------------

def _conv_tap_kernel(x_ref, w_ref, b_ref, *rest, kh, kw, stride, ow, has_skip):
    """Computes one output row (ow, Cout) for sample n = program_id(0),
    output row oh = program_id(1).

      x_ref : (Hp, stride, Wps, Cin)  phase-split padded input (full sample,
                                      resident in VMEM across the oh axis)
      w_ref : (kh*kw, Cin, Cout)
      b_ref : (1, Cout)
      skip  : (ow, Cout)              optional fused residual-add term
      o_ref : (ow, Cout)
    """
    if has_skip:
        skip_ref, o_ref = rest
    else:
        (o_ref,) = rest
    oh = pl.program_id(1)
    cout = o_ref.shape[-1]

    acc = jnp.broadcast_to(b_ref[...], (ow, cout))           # bias
    if has_skip:
        acc = acc + skip_ref[...]                             # fused residual add
    for i in range(kh):
        row = oh * stride + i                                 # dynamic major-dim index
        for j in range(kw):
            ph, off = j % stride, j // stride                 # column phase / offset
            tap = x_ref[row, ph, pl.ds(off, ow), :]           # (ow, Cin), unit stride
            acc = acc + jnp.dot(tap, w_ref[i * kw + j],
                                preferred_element_type=jnp.float32)
    o_ref[...] = acc


def _phase_split(x, pad, stride):
    """Spatially pad and split the padded W axis into `stride` column phases so
    every in-kernel tap slice is unit-stride:
        out[n, h, p, m, c] == x_pad[n, h, m*stride + p, c]
    Returns (x_ps, Hp, Wps) with x_ps of shape (N, Hp, stride, Wps, C)."""
    n, h, w, c = x.shape
    xp = jnp.pad(x, ((0, 0), (pad, pad), (pad, pad), (0, 0)))
    hp, wp = h + 2 * pad, w + 2 * pad
    wps = -(-wp // stride)
    if wps * stride != wp:
        xp = jnp.pad(xp, ((0, 0), (0, 0), (0, wps * stride - wp), (0, 0)))
    xps = xp.reshape(n, hp, wps, stride, c).transpose(0, 1, 3, 2, 4)
    return xps, hp, wps


def conv2d(x, p, stride, padding, skip=None):
    """NHWC conv with PyTorch Conv2d semantics (+bias). If `skip` is given
    (same shape as the output) it is added inside the kernel."""
    w, b = p["w"], p["b"]
    kh, kw, cin, cout = w.shape
    n, h, wd, _ = x.shape
    oh = (h + 2 * padding - kh) // stride + 1
    ow = (wd + 2 * padding - kw) // stride + 1
    xps, hp, wps = _phase_split(x, padding, stride)
    wt = w.reshape(kh * kw, cin, cout)
    bias = b.reshape(1, cout)

    kernel = functools.partial(_conv_tap_kernel, kh=kh, kw=kw, stride=stride,
                               ow=ow, has_skip=skip is not None)
    in_specs = [
        # full padded sample, fetched once per n and reused across oh
        pl.BlockSpec((None, hp, stride, wps, cin),
                     lambda ni, oi: (ni, 0, 0, 0, 0)),
        pl.BlockSpec((kh * kw, cin, cout), lambda ni, oi: (0, 0, 0)),
        pl.BlockSpec((1, cout), lambda ni, oi: (0, 0)),
    ]
    args = [xps, wt, bias]
    if skip is not None:
        in_specs.append(pl.BlockSpec((None, None, ow, cout),
                                     lambda ni, oi: (ni, oi, 0, 0)))
        args.append(skip)

    return pl.pallas_call(
        kernel,
        out_shape=jax.ShapeDtypeStruct((n, oh, ow, cout), jnp.float32),
        grid=(n, oh),
        in_specs=in_specs,
        out_specs=pl.BlockSpec((None, None, ow, cout),
                               lambda ni, oi: (ni, oi, 0, 0)),
        compiler_params=pltpu.CompilerParams(
            dimension_semantics=("parallel", "parallel")),
    )(*args)


# ----------------------------------------------------------------------------
# BatchNorm (train-mode batch stats) + LeakyReLU(0.1), tiled & lane-dense.
# ----------------------------------------------------------------------------

def _bn_stats_kernel(x_ref, sum_ref, ssq_ref):
    # Accumulator pattern: output block index constant over the grid axis.
    @pl.when(pl.program_id(0) == 0)
    def _():
        sum_ref[...] = jnp.zeros_like(sum_ref)
        ssq_ref[...] = jnp.zeros_like(ssq_ref)
    x = x_ref[...]
    sum_ref[...] += jnp.sum(x, axis=0, keepdims=True)
    ssq_ref[...] += jnp.sum(x * x, axis=0, keepdims=True)


def _bn_apply_kernel(x_ref, sc_ref, sh_ref, o_ref):
    y = x_ref[...] * sc_ref[...] + sh_ref[...]
    o_ref[...] = jnp.where(y >= 0, y, 0.1 * y)


def _bn_apply_pool_kernel(x_ref, sc_ref, sh_ref, o_ref):
    # Fused normalize + LeakyReLU + global average pool for one sample.
    y = x_ref[...] * sc_ref[...] + sh_ref[...]          # (H*W, C)
    y = jnp.where(y >= 0, y, 0.1 * y)
    o_ref[...] = jnp.mean(y, axis=0, keepdims=True)     # (1, C)


def _row_tile(r):
    """Row-block size: full if small, else a divisor that is a multiple of 8."""
    if r <= 1024:
        return r
    for t in (1024, 512, 256, 128, 64, 32, 16, 8):
        if r % t == 0:
            return t
    return r


def _batch_stats(x2, w, c, count):
    """Per-channel mean / biased variance over the lane-dense (rows, W*C) view;
    variance computed in one pass as E[x^2] - mean^2."""
    r, l = x2.shape
    tr = _row_tile(r)
    s, ss = pl.pallas_call(
        _bn_stats_kernel,
        out_shape=(jax.ShapeDtypeStruct((1, l), jnp.float32),
                   jax.ShapeDtypeStruct((1, l), jnp.float32)),
        grid=(r // tr,),
        in_specs=[pl.BlockSpec((tr, l), lambda i: (i, 0))],
        out_specs=(pl.BlockSpec((1, l), lambda i: (0, 0)),
                   pl.BlockSpec((1, l), lambda i: (0, 0))),
        compiler_params=pltpu.CompilerParams(
            dimension_semantics=("arbitrary",)),
    )(x2)
    s = s.reshape(w, c).sum(axis=0)        # fold the W copies (tiny XLA op)
    ss = ss.reshape(w, c).sum(axis=0)
    mean = s / count
    var = ss / count - mean * mean
    return mean, var


def _bn_scale_shift(mean, var, gamma, beta, eps=1e-5):
    scale = gamma * jax.lax.rsqrt(var + eps)
    shift = beta - mean * scale
    return scale, shift


def batchnorm_lrelu(x, gamma, beta):
    """BatchNorm2d (training-mode batch statistics) + LeakyReLU(0.1)."""
    n, h, w, c = x.shape
    r, l = n * h, w * c                      # lane-dense: fold W into the lane axis
    x2 = x.reshape(r, l)                     # free reshape (same memory layout)
    mean, var = _batch_stats(x2, w, c, float(n * h * w))
    scale, shift = _bn_scale_shift(mean, var, gamma, beta)
    sc = jnp.tile(scale, w).reshape(1, l)
    sh = jnp.tile(shift, w).reshape(1, l)
    tr = _row_tile(r)
    y2 = pl.pallas_call(
        _bn_apply_kernel,
        out_shape=jax.ShapeDtypeStruct((r, l), jnp.float32),
        grid=(r // tr,),
        in_specs=[pl.BlockSpec((tr, l), lambda i: (i, 0)),
                  pl.BlockSpec((1, l), lambda i: (0, 0)),
                  pl.BlockSpec((1, l), lambda i: (0, 0))],
        out_specs=pl.BlockSpec((tr, l), lambda i: (i, 0)),
        compiler_params=pltpu.CompilerParams(
            dimension_semantics=("parallel",)),
    )(x2, sc, sh)
    return y2.reshape(n, h, w, c)


def batchnorm_lrelu_pool(x, gamma, beta):
    """Final BN + LeakyReLU + AdaptiveAvgPool2d(1) fused; the normalized
    activation tensor is never written back to HBM and no transpose is used."""
    n, h, w, c = x.shape
    x2 = x.reshape(n * h, w * c)
    mean, var = _batch_stats(x2, w, c, float(n * h * w))
    scale, shift = _bn_scale_shift(mean, var, gamma, beta)
    x3 = x.reshape(n, h * w, c)              # free reshape, native layout
    out = pl.pallas_call(
        _bn_apply_pool_kernel,
        out_shape=jax.ShapeDtypeStruct((n, 1, c), jnp.float32),
        grid=(n,),
        in_specs=[pl.BlockSpec((None, h * w, c), lambda i: (i, 0, 0)),
                  pl.BlockSpec((1, c), lambda i: (0, 0)),
                  pl.BlockSpec((1, c), lambda i: (0, 0))],
        out_specs=pl.BlockSpec((None, 1, c), lambda i: (i, 0, 0)),
        compiler_params=pltpu.CompilerParams(
            dimension_semantics=("parallel",)),
    )(x3, scale.reshape(1, c), shift.reshape(1, c))
    return out.reshape(n, c)


# ----------------------------------------------------------------------------
# Final Linear layer.
# ----------------------------------------------------------------------------

def _fc_kernel(x_ref, w_ref, b_ref, o_ref):
    o_ref[...] = (jnp.dot(x_ref[...], w_ref[...],
                          preferred_element_type=jnp.float32) + b_ref[...])


def linear(x, w, b):
    m, k = x.shape
    _, ncls = w.shape
    mp = ((m + 7) // 8) * 8                       # tiny pads only (weights/bias/rows)
    npad = ((ncls + 127) // 128) * 128
    xp = jnp.pad(x, ((0, mp - m), (0, 0)))
    wp = jnp.pad(w, ((0, 0), (0, npad - ncls)))
    bp = jnp.pad(b, (0, npad - ncls)).reshape(1, npad)
    out = pl.pallas_call(
        _fc_kernel,
        out_shape=jax.ShapeDtypeStruct((mp, npad), jnp.float32),
        grid=(1,),
        in_specs=[pl.BlockSpec((mp, k), lambda i: (0, 0)),
                  pl.BlockSpec((k, npad), lambda i: (0, 0)),
                  pl.BlockSpec((1, npad), lambda i: (0, 0))],
        out_specs=pl.BlockSpec((mp, npad), lambda i: (0, 0)),
    )(xp, wp, bp)
    return out[:m, :ncls]


# ----------------------------------------------------------------------------
# Parameters (match PyTorch init_weights / defaults).
# ----------------------------------------------------------------------------

def init_conv(key, kh, kw, cin, cout):
    kw_, kb_ = jax.random.split(key)
    # nn.init.normal_(w, std=rsqrt(0.5 * k * k * out_channels)); kernels are square.
    std = 1.0 / math.sqrt(0.5 * kh * kw * cout)
    w = std * jax.random.normal(kw_, (kh, kw, cin, cout), jnp.float32)
    bound = 1.0 / math.sqrt(cin * kh * kw)        # PyTorch default bias init range
    b = jax.random.uniform(kb_, (cout,), jnp.float32, -bound, bound)
    return {"w": w, "b": b}


def init_residual(key, cin, cout):
    k1, k2, k3 = jax.random.split(key, 3)
    p = {
        "bn1_g": jnp.ones((cin,), jnp.float32), "bn1_b": jnp.zeros((cin,), jnp.float32),
        "conv1": init_conv(k1, 3, 3, cin, cout),
        "bn2_g": jnp.ones((cout,), jnp.float32), "bn2_b": jnp.zeros((cout,), jnp.float32),
        "conv2": init_conv(k2, 3, 3, cout, cout),
    }
    if cin != cout:
        p["skip"] = init_conv(k3, 1, 1, cin, cout)
    return p


def init_wrn(key, num_classes=10, filters=32, repeat=4):
    # cfg: static python structure (cin, cout, stride, activate_before_residual)
    cfg = []
    chans = [16, filters, filters * 2, filters * 4]
    for blk in range(3):
        stride = 1 if blk == 0 else 2
        for r in range(repeat):
            cfg.append((chans[blk] if r == 0 else chans[blk + 1],
                        chans[blk + 1],
                        stride if r == 0 else 1,
                        blk == 0 and r == 0))
    n_res = len(cfg)
    keys = jax.random.split(key, n_res + 2)
    params = {"conv": init_conv(keys[0], 3, 3, 3, 16)}
    params["blocks"] = [init_residual(keys[1 + i], cin, cout)
                        for i, (cin, cout, _, _) in enumerate(cfg)]
    c_final = filters * 4
    params["bn_g"] = jnp.ones((c_final,), jnp.float32)
    params["bn_b"] = jnp.zeros((c_final,), jnp.float32)
    kfw, kfb = jax.random.split(keys[-1])
    std = math.sqrt(2.0 / (c_final + num_classes))   # xavier_normal_
    params["fc_w"] = std * jax.random.normal(kfw, (c_final, num_classes), jnp.float32)
    bound = 1.0 / math.sqrt(c_final)
    params["fc_b"] = jax.random.uniform(kfb, (num_classes,), jnp.float32, -bound, bound)
    return params, tuple(cfg)


# ----------------------------------------------------------------------------
# Forward pass.
# ----------------------------------------------------------------------------

def residual_fwd(p, x0, stride, activate_before_residual):
    x = batchnorm_lrelu(x0, p["bn1_g"], p["bn1_b"])
    if activate_before_residual:
        x0 = x
    x = conv2d(x, p["conv1"], stride, 1)
    x = batchnorm_lrelu(x, p["bn2_g"], p["bn2_b"])
    skip = conv2d(x0, p["skip"], stride, 0) if "skip" in p else x0
    return conv2d(x, p["conv2"], 1, 1, skip=skip)     # residual add fused in-kernel


def wrn_forward(params, x_nchw, cfg):
    # NCHW (PyTorch convention) -> NHWC (kernel layout: channels on lanes)
    x = jnp.transpose(x_nchw, (0, 2, 3, 1)).astype(jnp.float32)
    x = conv2d(x, params["conv"], stride=1, padding=1)
    for p, (_, _, stride, abr) in zip(params["blocks"], cfg):
        x = residual_fwd(p, x, stride, abr)
    pooled = batchnorm_lrelu_pool(x, params["bn_g"], params["bn_b"])
    return linear(pooled, params["fc_w"], params["fc_b"])
    # TODO(synk): BatchNorm running_mean/running_var buffer updates
    # (momentum=0.001) are not tracked; train-mode forward output does not
    # depend on them.


# ----------------------------------------------------------------------------
# main
# ----------------------------------------------------------------------------

if __name__ == "__main__":
    key = jax.random.PRNGKey(0)
    kp, kx = jax.random.split(key)

    # Small but structurally faithful configuration (3 stages, strides 1/2/2).
    num_classes, filters, repeat = 10, 16, 2
    params, cfg = init_wrn(kp, num_classes=num_classes, filters=filters, repeat=repeat)

    x = jax.random.normal(kx, (2, 3, 16, 16), jnp.float32)   # NCHW like PyTorch

    fwd = jax.jit(functools.partial(wrn_forward, cfg=cfg))
    logits = fwd(params, x)
    jax.block_until_ready(logits)
    assert logits.shape == (2, num_classes), logits.shape
    assert logits.dtype == jnp.float32
    print("KERNEL_OK")
</pallas_src>

<mosaic_0001>
module attributes {stable_mosaic.version = 11 : i64} {
  func.func @_conv_tap_kernel(%arg0: i32, %arg1: i32, %arg2: memref<1x18x1x18x3xf32, #tpu.memory_space<vmem>>, %arg3: memref<9x3x16xf32, #tpu.memory_space<vmem>>, %arg4: memref<1x16xf32, #tpu.memory_space<vmem>>, %arg5: memref<1x1x16x16xf32, #tpu.memory_space<vmem>>) attributes {dimension_semantics = [#tpu.dimension_semantics<parallel>, #tpu.dimension_semantics<parallel>], iteration_bounds = array<i64: 2, 16>, scalar_prefetch = 0 : i64, scratch_operands = 0 : i64, tpu.core_type = #tpu.core_type<tc>, window_params = [{transform_indices = @transform_0, window_bounds = array<i64: 1, 18, 1, 18, 3>}, {pipeline_mode = #tpu.pipeline_mode<synchronous>, transform_indices = @transform_1, window_bounds = array<i64: 9, 3, 16>}, {pipeline_mode = #tpu.pipeline_mode<synchronous>, transform_indices = @transform_2, window_bounds = array<i64: 1, 16>}, {transform_indices = @transform_3, window_bounds = array<i64: 1, 1, 16, 16>}]} {
    %c0 = arith.constant 0 : index
    %c0_0 = arith.constant 0 : index
    %0 = vector.load %arg4[%c0, %c0_0] : memref<1x16xf32, #tpu.memory_space<vmem>>, vector<1x16xf32>
    %1 = vector.shape_cast %0 : vector<1x16xf32> to vector<1x16xf32>
    %2 = vector.broadcast %1 : vector<1x16xf32> to vector<16x16xf32>
    %c1_i32 = arith.constant 1 : i32
    %3 = arith.muli %arg1, %c1_i32 : i32
    %c0_i32 = arith.constant 0 : i32
    %4 = arith.addi %3, %c0_i32 : i32
    %c0_1 = arith.constant 0 : index
    %5 = arith.index_cast %4 : i32 to index
    %c0_2 = arith.constant 0 : index
    %c0_3 = arith.constant 0 : index
    %c0_4 = arith.constant 0 : index
    %6 = vector.load %arg2[%c0_1, %5, %c0_2, %c0_3, %c0_4] : memref<1x18x1x18x3xf32, #tpu.memory_space<vmem>>, vector<1x1x1x16x3xf32>
    %7 = vector.shape_cast %6 : vector<1x1x1x16x3xf32> to vector<16x3xf32>
    %c0_5 = arith.constant 0 : index
    %c0_6 = arith.constant 0 : index
    %c0_7 = arith.constant 0 : index
    %8 = vector.load %arg3[%c0_5, %c0_6, %c0_7] : memref<9x3x16xf32, #tpu.memory_space<vmem>>, vector<1x3x16xf32>
    %9 = vector.shape_cast %8 : vector<1x3x16xf32> to vector<3x16xf32>
    %cst = arith.constant dense<0.000000e+00> : vector<16x16xf32>
    %10 = tpu.matmul %7, %9, %cst {dimension_numbers = #tpu.dot_dimension_numbers<[1], [0], [0], [1], [0, 0, 1, 1], [], []>} : vector<16x3xf32>, vector<3x16xf32>, vector<16x16xf32> -> vector<16x16xf32>
    %11 = arith.addf %2, %10 : vector<16x16xf32>
    %c0_8 = arith.constant 0 : index
    %12 = arith.index_cast %4 : i32 to index
    %c0_9 = arith.constant 0 : index
    %c1 = arith.constant 1 : index
    %c0_10 = arith.constant 0 : index
    %13 = vector.load %arg2[%c0_8, %12, %c0_9, %c1, %c0_10] : memref<1x18x1x18x3xf32, #tpu.memory_space<vmem>>, vector<1x1x1x16x3xf32>
    %14 = vector.shape_cast %13 : vector<1x1x1x16x3xf32> to vector<16x3xf32>
    %c1_11 = arith.constant 1 : index
    %c0_12 = arith.constant 0 : index
    %c0_13 = arith.constant 0 : index
    %15 = vector.load %arg3[%c1_11, %c0_12, %c0_13] : memref<9x3x16xf32, #tpu.memory_space<vmem>>, vector<1x3x16xf32>
    %16 = vector.shape_cast %15 : vector<1x3x16xf32> to vector<3x16xf32>
    %cst_14 = arith.constant dense<0.000000e+00> : vector<16x16xf32>
    %17 = tpu.matmul %14, %16, %cst_14 {dimension_numbers = #tpu.dot_dimension_numbers<[1], [0], [0], [1], [0, 0, 1, 1], [], []>} : vector<16x3xf32>, vector<3x16xf32>, vector<16x16xf32> -> vector<16x16xf32>
    %18 = arith.addf %11, %17 : vector<16x16xf32>
    %c0_15 = arith.constant 0 : index
    %19 = arith.index_cast %4 : i32 to index
    %c0_16 = arith.constant 0 : index
    %c2 = arith.constant 2 : index
    %c0_17 = arith.constant 0 : index
    %20 = vector.load %arg2[%c0_15, %19, %c0_16, %c2, %c0_17] : memref<1x18x1x18x3xf32, #tpu.memory_space<vmem>>, vector<1x1x1x16x3xf32>
    %21 = vector.shape_cast %20 : vector<1x1x1x16x3xf32> to vector<16x3xf32>
    %c2_18 = arith.constant 2 : index
    %c0_19 = arith.constant 0 : index
    %c0_20 = arith.constant 0 : index
    %22 = vector.load %arg3[%c2_18, %c0_19, %c0_20] : memref<9x3x16xf32, #tpu.memory_space<vmem>>, vector<1x3x16xf32>
    %23 = vector.shape_cast %22 : vector<1x3x16xf32> to vector<3x16xf32>
    %cst_21 = arith.constant dense<0.000000e+00> : vector<16x16xf32>
    %24 = tpu.matmul %21, %23, %cst_21 {dimension_numbers = #tpu.dot_dimension_numbers<[1], [0], [0], [1], [0, 0, 1, 1], [], []>} : vector<16x3xf32>, vector<3x16xf32>, vector<16x16xf32> -> vector<16x16xf32>
    %25 = arith.addf %18, %24 : vector<16x16xf32>
    %c1_i32_22 = arith.constant 1 : i32
    %26 = arith.muli %arg1, %c1_i32_22 : i32
    %c1_i32_23 = arith.constant 1 : i32
    %27 = arith.addi %26, %c1_i32_23 : i32
    %c0_24 = arith.constant 0 : index
    %28 = arith.index_cast %27 : i32 to index
    %c0_25 = arith.constant 0 : index
    %c0_26 = arith.constant 0 : index
    %c0_27 = arith.constant 0 : index
    %29 = vector.load %arg2[%c0_24, %28, %c0_25, %c0_26, %c0_27] : memref<1x18x1x18x3xf32, #tpu.memory_space<vmem>>, vector<1x1x1x16x3xf32>
    %30 = vector.shape_cast %29 : vector<1x1x1x16x3xf32> to vector<16x3xf32>
    %c3 = arith.constant 3 : index
    %c0_28 = arith.constant 0 : index
    %c0_29 = arith.constant 0 : index
    %31 = vector.load %arg3[%c3, %c0_28, %c0_29] : memref<9x3x16xf32, #tpu.memory_space<vmem>>, vector<1x3x16xf32>
    %32 = vector.shape_cast %31 : vector<1x3x16xf32> to vector<3x16xf32>
    %cst_30 = arith.constant dense<0.000000e+00> : vector<16x16xf32>
    %33 = tpu.matmul %30, %32, %cst_30 {dimension_numbers = #tpu.dot_dimension_numbers<[1], [0], [0], [1], [0, 0, 1, 1], [], []>} : vector<16x3xf32>, vector<3x16xf32>, vector<16x16xf32> -> vector<16x16xf32>
    %34 = arith.addf %25, %33 : vector<16x16xf32>
    %c0_31 = arith.constant 0 : index
    %35 = arith.index_cast %27 : i32 to index
    %c0_32 = arith.constant 0 : index
    %c1_33 = arith.constant 1 : index
    %c0_34 = arith.constant 0 : index
    %36 = vector.load %arg2[%c0_31, %35, %c0_32, %c1_33, %c0_34] : memref<1x18x1x18x3xf32, #tpu.memory_space<vmem>>, vector<1x1x1x16x3xf32>
    %37 = vector.shape_cast %36 : vector<1x1x1x16x3xf32> to vector<16x3xf32>
    %c4 = arith.constant 4 : index
    %c0_35 = arith.constant 0 : index
    %c0_36 = arith.constant 0 : index
    %38 = vector.load %arg3[%c4, %c0_35, %c0_36] : memref<9x3x16xf32, #tpu.memory_space<vmem>>, vector<1x3x16xf32>
    %39 = vector.shape_cast %38 : vector<1x3x16xf32> to vector<3x16xf32>
    %cst_37 = arith.constant dense<0.000000e+00> : vector<16x16xf32>
    %40 = tpu.matmul %37, %39, %cst_37 {dimension_numbers = #tpu.dot_dimension_numbers<[1], [0], [0], [1], [0, 0, 1, 1], [], []>} : vector<16x3xf32>, vector<3x16xf32>, vector<16x16xf32> -> vector<16x16xf32>
    %41 = arith.addf %34, %40 : vector<16x16xf32>
    %c0_38 = arith.constant 0 : index
    %42 = arith.index_cast %27 : i32 to index
    %c0_39 = arith.constant 0 : index
    %c2_40 = arith.constant 2 : index
    %c0_41 = arith.constant 0 : index
    %43 = vector.load %arg2[%c0_38, %42, %c0_39, %c2_40, %c0_41] : memref<1x18x1x18x3xf32, #tpu.memory_space<vmem>>, vector<1x1x1x16x3xf32>
    %44 = vector.shape_cast %43 : vector<1x1x1x16x3xf32> to vector<16x3xf32>
    %c5 = arith.constant 5 : index
    %c0_42 = arith.constant 0 : index
    %c0_43 = arith.constant 0 : index
    %45 = vector.load %arg3[%c5, %c0_42, %c0_43] : memref<9x3x16xf32, #tpu.memory_space<vmem>>, vector<1x3x16xf32>
    %46 = vector.shape_cast %45 : vector<1x3x16xf32> to vector<3x16xf32>
    %cst_44 = arith.constant dense<0.000000e+00> : vector<16x16xf32>
    %47 = tpu.matmul %44, %46, %cst_44 {dimension_numbers = #tpu.dot_dimension_numbers<[1], [0], [0], [1], [0, 0, 1, 1], [], []>} : vector<16x3xf32>, vector<3x16xf32>, vector<16x16xf32> -> vector<16x16xf32>
    %48 = arith.addf %41, %47 : vector<16x16xf32>
    %c1_i32_45 = arith.constant 1 : i32
    %49 = arith.muli %arg1, %c1_i32_45 : i32
    %c2_i32 = arith.constant 2 : i32
    %50 = arith.addi %49, %c2_i32 : i32
    %c0_46 = arith.constant 0 : index
    %51 = arith.index_cast %50 : i32 to index
    %c0_47 = arith.constant 0 : index
    %c0_48 = arith.constant 0 : index
    %c0_49 = arith.constant 0 : index
    %52 = vector.load %arg2[%c0_46, %51, %c0_47, %c0_48, %c0_49] : memref<1x18x1x18x3xf32, #tpu.memory_space<vmem>>, vector<1x1x1x16x3xf32>
    %53 = vector.shape_cast %52 : vector<1x1x1x16x3xf32> to vector<16x3xf32>
    %c6 = arith.constant 6 : index
    %c0_50 = arith.constant 0 : index
    %c0_51 = arith.constant 0 : index
    %54 = vector.load %arg3[%c6, %c0_50, %c0_51] : memref<9x3x16xf32, #tpu.memory_space<vmem>>, vector<1x3x16xf32>
    %55 = vector.shape_cast %54 : vector<1x3x16xf32> to vector<3x16xf32>
    %cst_52 = arith.constant dense<0.000000e+00> : vector<16x16xf32>
    %56 = tpu.matmul %53, %55, %cst_52 {dimension_numbers = #tpu.dot_dimension_numbers<[1], [0], [0], [1], [0, 0, 1, 1], [], []>} : vector<16x3xf32>, vector<3x16xf32>, vector<16x16xf32> -> vector<16x16xf32>
    %57 = arith.addf %48, %56 : vector<16x16xf32>
    %c0_53 = arith.constant 0 : index
    %58 = arith.index_cast %50 : i32 to index
    %c0_54 = arith.constant 0 : index
    %c1_55 = arith.constant 1 : index
    %c0_56 = arith.constant 0 : index
    %59 = vector.load %arg2[%c0_53, %58, %c0_54, %c1_55, %c0_56] : memref<1x18x1x18x3xf32, #tpu.memory_space<vmem>>, vector<1x1x1x16x3xf32>
    %60 = vector.shape_cast %59 : vector<1x1x1x16x3xf32> to vector<16x3xf32>
    %c7 = arith.constant 7 : index
    %c0_57 = arith.constant 0 : index
    %c0_58 = arith.constant 0 : index
    %61 = vector.load %arg3[%c7, %c0_57, %c0_58] : memref<9x3x16xf32, #tpu.memory_space<vmem>>, vector<1x3x16xf32>
    %62 = vector.shape_cast %61 : vector<1x3x16xf32> to vector<3x16xf32>
    %cst_59 = arith.constant dense<0.000000e+00> : vector<16x16xf32>
    %63 = tpu.matmul %60, %62, %cst_59 {dimension_numbers = #tpu.dot_dimension_numbers<[1], [0], [0], [1], [0, 0, 1, 1], [], []>} : vector<16x3xf32>, vector<3x16xf32>, vector<16x16xf32> -> vector<16x16xf32>
    %64 = arith.addf %57, %63 : vector<16x16xf32>
    %c0_60 = arith.constant 0 : index
    %65 = arith.index_cast %50 : i32 to index
    %c0_61 = arith.constant 0 : index
    %c2_62 = arith.constant 2 : index
    %c0_63 = arith.constant 0 : index
    %66 = vector.load %arg2[%c0_60, %65, %c0_61, %c2_62, %c0_63] : memref<1x18x1x18x3xf32, #tpu.memory_space<vmem>>, vector<1x1x1x16x3xf32>
    %67 = vector.shape_cast %66 : vector<1x1x1x16x3xf32> to vector<16x3xf32>
    %c8 = arith.constant 8 : index
    %c0_64 = arith.constant 0 : index
    %c0_65 = arith.constant 0 : index
    %68 = vector.load %arg3[%c8, %c0_64, %c0_65] : memref<9x3x16xf32, #tpu.memory_space<vmem>>, vector<1x3x16xf32>
    %69 = vector.shape_cast %68 : vector<1x3x16xf32> to vector<3x16xf32>
    %cst_66 = arith.constant dense<0.000000e+00> : vector<16x16xf32>
    %70 = tpu.matmul %67, %69, %cst_66 {dimension_numbers = #tpu.dot_dimension_numbers<[1], [0], [0], [1], [0, 0, 1, 1], [], []>} : vector<16x3xf32>, vector<3x16xf32>, vector<16x16xf32> -> vector<16x16xf32>
    %71 = arith.addf %64, %70 : vector<16x16xf32>
    %c0_67 = arith.constant 0 : index
    %c0_68 = arith.constant 0 : index
    %c0_69 = arith.constant 0 : index
    %c0_70 = arith.constant 0 : index
    %72 = vector.load %arg5[%c0_67, %c0_68, %c0_69, %c0_70] : memref<1x1x16x16xf32, #tpu.memory_space<vmem>>, vector<1x1x16x16xf32>
    %73 = vector.shape_cast %72 : vector<1x1x16x16xf32> to vector<16x16xf32>
    %74 = vector.shape_cast %71 : vector<16x16xf32> to vector<1x1x16x16xf32>
    tpu.vector_store %arg5[%c0_67, %c0_68, %c0_69, %c0_70], %74 {strides = array<i32>} : memref<1x1x16x16xf32, #tpu.memory_space<vmem>>, vector<1x1x16x16xf32>,
    return
  }
  func.func @transform_0(%arg0: i32, %arg1: i32) -> (i32, i32, i32, i32, i32) {
    %c0_i32 = arith.constant 0 : i32
    %c0_i32_0 = arith.constant 0 : i32
    %c0_i32_1 = arith.constant 0 : i32
    %c0_i32_2 = arith.constant 0 : i32
    %c0_i32_3 = arith.constant 0 : i32
    return %arg0, %c0_i32, %c0_i32_0, %c0_i32_1, %c0_i32_2 : i32, i32, i32, i32, i32
  }
  func.func @transform_1(%arg0: i32, %arg1: i32) -> (i32, i32, i32) {
    %c0_i32 = arith.constant 0 : i32
    %c0_i32_0 = arith.constant 0 : i32
    %c0_i32_1 = arith.constant 0 : i32
    %c0_i32_2 = arith.constant 0 : i32
    return %c0_i32, %c0_i32_0, %c0_i32_1 : i32, i32, i32
  }
  func.func @transform_2(%arg0: i32, %arg1: i32) -> (i32, i32) {
    %c0_i32 = arith.constant 0 : i32
    %c0_i32_0 = arith.constant 0 : i32
    %c0_i32_1 = arith.constant 0 : i32
    return %c0_i32, %c0_i32_0 : i32, i32
  }
  func.func @transform_3(%arg0: i32, %arg1: i32) -> (i32, i32, i32, i32) {
    %c0_i32 = arith.constant 0 : i32
    %c0_i32_0 = arith.constant 0 : i32
    %c0_i32_1 = arith.constant 0 : i32
    return %arg0, %arg1, %c0_i32, %c0_i32_0 : i32, i32, i32, i32
  }
}

module attributes {stable_mosaic.version = 11 : i64} {
  func.func @_bn_stats_kernel(%arg0: i32, %arg1: memref<32x256xf32, #tpu.memory_space<vmem>>, %arg2: memref<1x256xf32, #tpu.memory_space<vmem>>, %arg3: memref<1x256xf32, #tpu.memory_space<vmem>>) attributes {dimension_semantics = [#tpu.dimension_semantics<arbitrary>], iteration_bounds = array<i64: 1>, scalar_prefetch = 0 : i64, scratch_operands = 0 : i64, tpu.core_type = #tpu.core_type<tc>, window_params = [{transform_indices = @transform_0, window_bounds = array<i64: 32, 256>}, {pipeline_mode = #tpu.pipeline_mode<synchronous>, transform_indices = @transform_1, window_bounds = array<i64: 1, 256>}, {pipeline_mode = #tpu.pipeline_mode<synchronous>, transform_indices = @transform_2, window_bounds = array<i64: 1, 256>}]} {
    %c0_i32 = arith.constant 0 : i32
    %0 = arith.cmpi eq, %arg0, %c0_i32 : i32
    %1 = arith.extui %0 : i1 to i32
    %c0_i32_0 = arith.constant 0 : i32
    %2 = arith.cmpi ne, %1, %c0_i32_0 : i32
    scf.if %2 {
      %cst_11 = arith.constant 0.000000e+00 : f32
      %15 = vector.broadcast %cst_11 : f32 to vector<1x256xf32>
      %c0_12 = arith.constant 0 : index
      %c0_13 = arith.constant 0 : index
      %16 = vector.load %arg2[%c0_12, %c0_13] : memref<1x256xf32, #tpu.memory_space<vmem>>, vector<1x256xf32>
      tpu.vector_store %arg2[%c0_12, %c0_13], %15 {strides = array<i32>} : memref<1x256xf32, #tpu.memory_space<vmem>>, vector<1x256xf32>,
      %cst_14 = arith.constant 0.000000e+00 : f32
      %17 = vector.broadcast %cst_14 : f32 to vector<1x256xf32>
      %c0_15 = arith.constant 0 : index
      %c0_16 = arith.constant 0 : index
      %18 = vector.load %arg3[%c0_15, %c0_16] : memref<1x256xf32, #tpu.memory_space<vmem>>, vector<1x256xf32>
      tpu.vector_store %arg3[%c0_15, %c0_16], %17 {strides = array<i32>} : memref<1x256xf32, #tpu.memory_space<vmem>>, vector<1x256xf32>,
    } else {
    }
    %c0 = arith.constant 0 : index
    %c0_1 = arith.constant 0 : index
    %3 = vector.load %arg1[%c0, %c0_1] : memref<32x256xf32, #tpu.memory_space<vmem>>, vector<32x256xf32>
    %c0_2 = arith.constant 0 : index
    %c0_3 = arith.constant 0 : index
    %4 = vector.load %arg2[%c0_2, %c0_3] : memref<1x256xf32, #tpu.memory_space<vmem>>, vector<1x256xf32>
    %cst = arith.constant dense<0.000000e+00> : vector<256xf32>
    %5 = vector.multi_reduction <add>, %3, %cst [0] : vector<32x256xf32> to vector<256xf32>
    %6 = vector.shape_cast %5 : vector<256xf32> to vector<1x256xf32>
    %7 = arith.addf %4, %6 : vector<1x256xf32>
    %c0_4 = arith.constant 0 : index
    %c0_5 = arith.constant 0 : index
    %8 = vector.load %arg2[%c0_4, %c0_5] : memref<1x256xf32, #tpu.memory_space<vmem>>, vector<1x256xf32>
    tpu.vector_store %arg2[%c0_4, %c0_5], %7 {strides = array<i32>} : memref<1x256xf32, #tpu.memory_space<vmem>>, vector<1x256xf32>,
    %c0_6 = arith.constant 0 : index
    %c0_7 = arith.constant 0 : index
    %9 = vector.load %arg3[%c0_6, %c0_7] : memref<1x256xf32, #tpu.memory_space<vmem>>, vector<1x256xf32>
    %10 = arith.mulf %3, %3 : vector<32x256xf32>
    %cst_8 = arith.constant dense<0.000000e+00> : vector<256xf32>
    %11 = vector.multi_reduction <add>, %10, %cst_8 [0] : vector<32x256xf32> to vector<256xf32>
    %12 = vector.shape_cast %11 : vector<256xf32> to vector<1x256xf32>
    %13 = arith.addf %9, %12 : vector<1x256xf32>
    %c0_9 = arith.constant 0 : index
    %c0_10 = arith.constant 0 : index
    %14 = vector.load %arg3[%c0_9, %c0_10] : memref<1x256xf32, #tpu.memory_space<vmem>>, vector<1x256xf32>
    tpu.vector_store %arg3[%c0_9, %c0_10], %13 {strides = array<i32>} : memref<1x256xf32, #tpu.memory_space<vmem>>, vector<1x256xf32>,
    return
  }
  func.func @transform_0(%arg0: i32) -> (i32, i32) {
    %c0_i32 = arith.constant 0 : i32
    %c0_i32_0 = arith.constant 0 : i32
    return %arg0, %c0_i32 : i32, i32
  }
  func.func @transform_1(%arg0: i32) -> (i32, i32) {
    %c0_i32 = arith.constant 0 : i32
    %c0_i32_0 = arith.constant 0 : i32
    %c0_i32_1 = arith.constant 0 : i32
    return %c0_i32, %c0_i32_0 : i32, i32
  }
  func.func @transform_2(%arg0: i32) -> (i32, i32) {
    %c0_i32 = arith.constant 0 : i32
    %c0_i32_0 = arith.constant 0 : i32
    %c0_i32_1 = arith.constant 0 : i32
    return %c0_i32, %c0_i32_0 : i32, i32
  }
}

module attributes {stable_mosaic.version = 11 : i64} {
  func.func @_bn_apply_kernel(%arg0: i32, %arg1: memref<32x256xf32, #tpu.memory_space<vmem>>, %arg2: memref<1x256xf32, #tpu.memory_space<vmem>>, %arg3: memref<1x256xf32, #tpu.memory_space<vmem>>, %arg4: memref<32x256xf32, #tpu.memory_space<vmem>>) attributes {dimension_semantics = [#tpu.dimension_semantics<parallel>], iteration_bounds = array<i64: 1>, scalar_prefetch = 0 : i64, scratch_operands = 0 : i64, tpu.core_type = #tpu.core_type<tc>, window_params = [{transform_indices = @transform_0, window_bounds = array<i64: 32, 256>}, {pipeline_mode = #tpu.pipeline_mode<synchronous>, transform_indices = @transform_1, window_bounds = array<i64: 1, 256>}, {pipeline_mode = #tpu.pipeline_mode<synchronous>, transform_indices = @transform_2, window_bounds = array<i64: 1, 256>}, {transform_indices = @transform_3, window_bounds = array<i64: 32, 256>}]} {
    %c0 = arith.constant 0 : index
    %c0_0 = arith.constant 0 : index
    %0 = vector.load %arg1[%c0, %c0_0] : memref<32x256xf32, #tpu.memory_space<vmem>>, vector<32x256xf32>
    %c0_1 = arith.constant 0 : index
    %c0_2 = arith.constant 0 : index
    %1 = vector.load %arg2[%c0_1, %c0_2] : memref<1x256xf32, #tpu.memory_space<vmem>>, vector<1x256xf32>
    %2 = vector.broadcast %1 : vector<1x256xf32> to vector<32x256xf32>
    %3 = arith.mulf %0, %2 : vector<32x256xf32>
    %c0_3 = arith.constant 0 : index
    %c0_4 = arith.constant 0 : index
    %4 = vector.load %arg3[%c0_3, %c0_4] : memref<1x256xf32, #tpu.memory_space<vmem>>, vector<1x256xf32>
    %5 = vector.broadcast %4 : vector<1x256xf32> to vector<32x256xf32>
    %6 = arith.addf %3, %5 : vector<32x256xf32>
    %cst = arith.constant 0.000000e+00 : f32
    %7 = vector.broadcast %cst : f32 to vector<32x256xf32>
    %8 = arith.cmpf oge, %6, %7 : vector<32x256xf32>
    %cst_5 = arith.constant 1.000000e-01 : f32
    %9 = vector.broadcast %cst_5 : f32 to vector<32x256xf32>
    %10 = arith.mulf %9, %6 : vector<32x256xf32>
    %11 = arith.select %8, %6, %10 : vector<32x256xi1>, vector<32x256xf32>
    %c0_6 = arith.constant 0 : index
    %c0_7 = arith.constant 0 : index
    %12 = vector.load %arg4[%c0_6, %c0_7] : memref<32x256xf32, #tpu.memory_space<vmem>>, vector<32x256xf32>
    tpu.vector_store %arg4[%c0_6, %c0_7], %11 {strides = array<i32>} : memref<32x256xf32, #tpu.memory_space<vmem>>, vector<32x256xf32>,
    return
  }
  func.func @transform_0(%arg0: i32) -> (i32, i32) {
    %c0_i32 = arith.constant 0 : i32
    %c0_i32_0 = arith.constant 0 : i32
    return %arg0, %c0_i32 : i32, i32
  }
  func.func @transform_1(%arg0: i32) -> (i32, i32) {
    %c0_i32 = arith.constant 0 : i32
    %c0_i32_0 = arith.constant 0 : i32
    %c0_i32_1 = arith.constant 0 : i32
    return %c0_i32, %c0_i32_0 : i32, i32
  }
  func.func @transform_2(%arg0: i32) -> (i32, i32) {
    %c0_i32 = arith.constant 0 : i32
    %c0_i32_0 = arith.constant 0 : i32
    %c0_i32_1 = arith.constant 0 : i32
    return %c0_i32, %c0_i32_0 : i32, i32
  }
  func.func @transform_3(%arg0: i32) -> (i32, i32) {
    %c0_i32 = arith.constant 0 : i32
    %c0_i32_0 = arith.constant 0 : i32
    return %arg0, %c0_i32 : i32, i32
  }
}

module attributes {stable_mosaic.version = 11 : i64} {
  func.func @_conv_tap_kernel(%arg0: i32, %arg1: i32, %arg2: memref<1x18x1x18x16xf32, #tpu.memory_space<vmem>>, %arg3: memref<9x16x16xf32, #tpu.memory_space<vmem>>, %arg4: memref<1x16xf32, #tpu.memory_space<vmem>>, %arg5: memref<1x1x16x16xf32, #tpu.memory_space<vmem>>, %arg6: memref<1x1x16x16xf32, #tpu.memory_space<vmem>>) attributes {dimension_semantics = [#tpu.dimension_semantics<parallel>, #tpu.dimension_semantics<parallel>], iteration_bounds = array<i64: 2, 16>, scalar_prefetch = 0 : i64, scratch_operands = 0 : i64, tpu.core_type = #tpu.core_type<tc>, window_params = [{transform_indices = @transform_0, window_bounds = array<i64: 1, 18, 1, 18, 16>}, {pipeline_mode = #tpu.pipeline_mode<synchronous>, transform_indices = @transform_1, window_bounds = array<i64: 9, 16, 16>}, {pipeline_mode = #tpu.pipeline_mode<synchronous>, transform_indices = @transform_2, window_bounds = array<i64: 1, 16>}, {transform_indices = @transform_3, window_bounds = array<i64: 1, 1, 16, 16>}, {transform_indices = @transform_4, window_bounds = array<i64: 1, 1, 16, 16>}]} {
    %c0 = arith.constant 0 : index
    %c0_0 = arith.constant 0 : index
    %0 = vector.load %arg4[%c0, %c0_0] : memref<1x16xf32, #tpu.memory_space<vmem>>, vector<1x16xf32>
    %1 = vector.shape_cast %0 : vector<1x16xf32> to vector<1x16xf32>
    %2 = vector.broadcast %1 : vector<1x16xf32> to vector<16x16xf32>
    %c0_1 = arith.constant 0 : index
    %c0_2 = arith.constant 0 : index
    %c0_3 = arith.constant 0 : index
    %c0_4 = arith.constant 0 : index
    %3 = vector.load %arg5[%c0_1, %c0_2, %c0_3, %c0_4] : memref<1x1x16x16xf32, #tpu.memory_space<vmem>>, vector<1x1x16x16xf32>
    %4 = vector.shape_cast %3 : vector<1x1x16x16xf32> to vector<16x16xf32>
    %5 = arith.addf %2, %4 : vector<16x16xf32>
    %c1_i32 = arith.constant 1 : i32
    %6 = arith.muli %arg1, %c1_i32 : i32
    %c0_i32 = arith.constant 0 : i32
    %7 = arith.addi %6, %c0_i32 : i32
    %c0_5 = arith.constant 0 : index
    %8 = arith.index_cast %7 : i32 to index
    %c0_6 = arith.constant 0 : index
    %c0_7 = arith.constant 0 : index
    %c0_8 = arith.constant 0 : index
    %9 = vector.load %arg2[%c0_5, %8, %c0_6, %c0_7, %c0_8] : memref<1x18x1x18x16xf32, #tpu.memory_space<vmem>>, vector<1x1x1x16x16xf32>
    %10 = vector.shape_cast %9 : vector<1x1x1x16x16xf32> to vector<16x16xf32>
    %c0_9 = arith.constant 0 : index
    %c0_10 = arith.constant 0 : index
    %c0_11 = arith.constant 0 : index
    %11 = vector.load %arg3[%c0_9, %c0_10, %c0_11] : memref<9x16x16xf32, #tpu.memory_space<vmem>>, vector<1x16x16xf32>
    %12 = vector.shape_cast %11 : vector<1x16x16xf32> to vector<16x16xf32>
    %cst = arith.constant dense<0.000000e+00> : vector<16x16xf32>
    %13 = tpu.matmul %10, %12, %cst {dimension_numbers = #tpu.dot_dimension_numbers<[1], [0], [0], [1], [0, 0, 1, 1], [], []>} : vector<16x16xf32>, vector<16x16xf32>, vector<16x16xf32> -> vector<16x16xf32>
    %14 = arith.addf %5, %13 : vector<16x16xf32>
    %c0_12 = arith.constant 0 : index
    %15 = arith.index_cast %7 : i32 to index
    %c0_13 = arith.constant 0 : index
    %c1 = arith.constant 1 : index
    %c0_14 = arith.constant 0 : index
    %16 = vector.load %arg2[%c0_12, %15, %c0_13, %c1, %c0_14] : memref<1x18x1x18x16xf32, #tpu.memory_space<vmem>>, vector<1x1x1x16x16xf32>
    %17 = vector.shape_cast %16 : vector<1x1x1x16x16xf32> to vector<16x16xf32>
    %c1_15 = arith.constant 1 : index
    %c0_16 = arith.constant 0 : index
    %c0_17 = arith.constant 0 : index
    %18 = vector.load %arg3[%c1_15, %c0_16, %c0_17] : memref<9x16x16xf32, #tpu.memory_space<vmem>>, vector<1x16x16xf32>
    %19 = vector.shape_cast %18 : vector<1x16x16xf32> to vector<16x16xf32>
    %cst_18 = arith.constant dense<0.000000e+00> : vector<16x16xf32>
    %20 = tpu.matmul %17, %19, %cst_18 {dimension_numbers = #tpu.dot_dimension_numbers<[1], [0], [0], [1], [0, 0, 1, 1], [], []>} : vector<16x16xf32>, vector<16x16xf32>, vector<16x16xf32> -> vector<16x16xf32>
    %21 = arith.addf %14, %20 : vector<16x16xf32>
    %c0_19 = arith.constant 0 : index
    %22 = arith.index_cast %7 : i32 to index
    %c0_20 = arith.constant 0 : index
    %c2 = arith.constant 2 : index
    %c0_21 = arith.constant 0 : index
    %23 = vector.load %arg2[%c0_19, %22, %c0_20, %c2, %c0_21] : memref<1x18x1x18x16xf32, #tpu.memory_space<vmem>>, vector<1x1x1x16x16xf32>
    %24 = vector.shape_cast %23 : vector<1x1x1x16x16xf32> to vector<16x16xf32>
    %c2_22 = arith.constant 2 : index
    %c0_23 = arith.constant 0 : index
    %c0_24 = arith.constant 0 : index
    %25 = vector.load %arg3[%c2_22, %c0_23, %c0_24] : memref<9x16x16xf32, #tpu.memory_space<vmem>>, vector<1x16x16xf32>
    %26 = vector.shape_cast %25 : vector<1x16x16xf32> to vector<16x16xf32>
    %cst_25 = arith.constant dense<0.000000e+00> : vector<16x16xf32>
    %27 = tpu.matmul %24, %26, %cst_25 {dimension_numbers = #tpu.dot_dimension_numbers<[1], [0], [0], [1], [0, 0, 1, 1], [], []>} : vector<16x16xf32>, vector<16x16xf32>, vector<16x16xf32> -> vector<16x16xf32>
    %28 = arith.addf %21, %27 : vector<16x16xf32>
    %c1_i32_26 = arith.constant 1 : i32
    %29 = arith.muli %arg1, %c1_i32_26 : i32
    %c1_i32_27 = arith.constant 1 : i32
    %30 = arith.addi %29, %c1_i32_27 : i32
    %c0_28 = arith.constant 0 : index
    %31 = arith.index_cast %30 : i32 to index
    %c0_29 = arith.constant 0 : index
    %c0_30 = arith.constant 0 : index
    %c0_31 = arith.constant 0 : index
    %32 = vector.load %arg2[%c0_28, %31, %c0_29, %c0_30, %c0_31] : memref<1x18x1x18x16xf32, #tpu.memory_space<vmem>>, vector<1x1x1x16x16xf32>
    %33 = vector.shape_cast %32 : vector<1x1x1x16x16xf32> to vector<16x16xf32>
    %c3 = arith.constant 3 : index
    %c0_32 = arith.constant 0 : index
    %c0_33 = arith.constant 0 : index
    %34 = vector.load %arg3[%c3, %c0_32, %c0_33] : memref<9x16x16xf32, #tpu.memory_space<vmem>>, vector<1x16x16xf32>
    %35 = vector.shape_cast %34 : vector<1x16x16xf32> to vector<16x16xf32>
    %cst_34 = arith.constant dense<0.000000e+00> : vector<16x16xf32>
    %36 = tpu.matmul %33, %35, %cst_34 {dimension_numbers = #tpu.dot_dimension_numbers<[1], [0], [0], [1], [0, 0, 1, 1], [], []>} : vector<16x16xf32>, vector<16x16xf32>, vector<16x16xf32> -> vector<16x16xf32>
    %37 = arith.addf %28, %36 : vector<16x16xf32>
    %c0_35 = arith.constant 0 : index
    %38 = arith.index_cast %30 : i32 to index
    %c0_36 = arith.constant 0 : index
    %c1_37 = arith.constant 1 : index
    %c0_38 = arith.constant 0 : index
    %39 = vector.load %arg2[%c0_35, %38, %c0_36, %c1_37, %c0_38] : memref<1x18x1x18x16xf32, #tpu.memory_space<vmem>>, vector<1x1x1x16x16xf32>
    %40 = vector.shape_cast %39 : vector<1x1x1x16x16xf32> to vector<16x16xf32>
    %c4 = arith.constant 4 : index
    %c0_39 = arith.constant 0 : index
    %c0_40 = arith.constant 0 : index
    %41 = vector.load %arg3[%c4, %c0_39, %c0_40] : memref<9x16x16xf32, #tpu.memory_space<vmem>>, vector<1x16x16xf32>
    %42 = vector.shape_cast %41 : vector<1x16x16xf32> to vector<16x16xf32>
    %cst_41 = arith.constant dense<0.000000e+00> : vector<16x16xf32>
    %43 = tpu.matmul %40, %42, %cst_41 {dimension_numbers = #tpu.dot_dimension_numbers<[1], [0], [0], [1], [0, 0, 1, 1], [], []>} : vector<16x16xf32>, vector<16x16xf32>, vector<16x16xf32> -> vector<16x16xf32>
    %44 = arith.addf %37, %43 : vector<16x16xf32>
    %c0_42 = arith.constant 0 : index
    %45 = arith.index_cast %30 : i32 to index
    %c0_43 = arith.constant 0 : index
    %c2_44 = arith.constant 2 : index
    %c0_45 = arith.constant 0 : index
    %46 = vector.load %arg2[%c0_42, %45, %c0_43, %c2_44, %c0_45] : memref<1x18x1x18x16xf32, #tpu.memory_space<vmem>>, vector<1x1x1x16x16xf32>
    %47 = vector.shape_cast %46 : vector<1x1x1x16x16xf32> to vector<16x16xf32>
    %c5 = arith.constant 5 : index
    %c0_46 = arith.constant 0 : index
    %c0_47 = arith.constant 0 : index
    %48 = vector.load %arg3[%c5, %c0_46, %c0_47] : memref<9x16x16xf32, #tpu.memory_space<vmem>>, vector<1x16x16xf32>
    %49 = vector.shape_cast %48 : vector<1x16x16xf32> to vector<16x16xf32>
    %cst_48 = arith.constant dense<0.000000e+00> : vector<16x16xf32>
    %50 = tpu.matmul %47, %49, %cst_48 {dimension_numbers = #tpu.dot_dimension_numbers<[1], [0], [0], [1], [0, 0, 1, 1], [], []>} : vector<16x16xf32>, vector<16x16xf32>, vector<16x16xf32> -> vector<16x16xf32>
    %51 = arith.addf %44, %50 : vector<16x16xf32>
    %c1_i32_49 = arith.constant 1 : i32
    %52 = arith.muli %arg1, %c1_i32_49 : i32
    %c2_i32 = arith.constant 2 : i32
    %53 = arith.addi %52, %c2_i32 : i32
    %c0_50 = arith.constant 0 : index
    %54 = arith.index_cast %53 : i32 to index
    %c0_51 = arith.constant 0 : index
    %c0_52 = arith.constant 0 : index
    %c0_53 = arith.constant 0 : index
    %55 = vector.load %arg2[%c0_50, %54, %c0_51, %c0_52, %c0_53] : memref<1x18x1x18x16xf32, #tpu.memory_space<vmem>>, vector<1x1x1x16x16xf32>
    %56 = vector.shape_cast %55 : vector<1x1x1x16x16xf32> to vector<16x16xf32>
    %c6 = arith.constant 6 : index
    %c0_54 = arith.constant 0 : index
    %c0_55 = arith.constant 0 : index
    %57 = vector.load %arg3[%c6, %c0_54, %c0_55] : memref<9x16x16xf32, #tpu.memory_space<vmem>>, vector<1x16x16xf32>
    %58 = vector.shape_cast %57 : vector<1x16x16xf32> to vector<16x16xf32>
    %cst_56 = arith.constant dense<0.000000e+00> : vector<16x16xf32>
    %59 = tpu.matmul %56, %58, %cst_56 {dimension_numbers = #tpu.dot_dimension_numbers<[1], [0], [0], [1], [0, 0, 1, 1], [], []>} : vector<16x16xf32>, vector<16x16xf32>, vector<16x16xf32> -> vector<16x16xf32>
    %60 = arith.addf %51, %59 : vector<16x16xf32>
    %c0_57 = arith.constant 0 : index
    %61 = arith.index_cast %53 : i32 to index
    %c0_58 = arith.constant 0 : index
    %c1_59 = arith.constant 1 : index
    %c0_60 = arith.constant 0 : index
    %62 = vector.load %arg2[%c0_57, %61, %c0_58, %c1_59, %c0_60] : memref<1x18x1x18x16xf32, #tpu.memory_space<vmem>>, vector<1x1x1x16x16xf32>
    %63 = vector.shape_cast %62 : vector<1x1x1x16x16xf32> to vector<16x16xf32>
    %c7 = arith.constant 7 : index
    %c0_61 = arith.constant 0 : index
    %c0_62 = arith.constant 0 : index
    %64 = vector.load %arg3[%c7, %c0_61, %c0_62] : memref<9x16x16xf32, #tpu.memory_space<vmem>>, vector<1x16x16xf32>
    %65 = vector.shape_cast %64 : vector<1x16x16xf32> to vector<16x16xf32>
    %cst_63 = arith.constant dense<0.000000e+00> : vector<16x16xf32>
    %66 = tpu.matmul %63, %65, %cst_63 {dimension_numbers = #tpu.dot_dimension_numbers<[1], [0], [0], [1], [0, 0, 1, 1], [], []>} : vector<16x16xf32>, vector<16x16xf32>, vector<16x16xf32> -> vector<16x16xf32>
    %67 = arith.addf %60, %66 : vector<16x16xf32>
    %c0_64 = arith.constant 0 : index
    %68 = arith.index_cast %53 : i32 to index
    %c0_65 = arith.constant 0 : index
    %c2_66 = arith.constant 2 : index
    %c0_67 = arith.constant 0 : index
    %69 = vector.load %arg2[%c0_64, %68, %c0_65, %c2_66, %c0_67] : memref<1x18x1x18x16xf32, #tpu.memory_space<vmem>>, vector<1x1x1x16x16xf32>
    %70 = vector.shape_cast %69 : vector<1x1x1x16x16xf32> to vector<16x16xf32>
    %c8 = arith.constant 8 : index
    %c0_68 = arith.constant 0 : index
    %c0_69 = arith.constant 0 : index
    %71 = vector.load %arg3[%c8, %c0_68, %c0_69] : memref<9x16x16xf32, #tpu.memory_space<vmem>>, vector<1x16x16xf32>
    %72 = vector.shape_cast %71 : vector<1x16x16xf32> to vector<16x16xf32>
    %cst_70 = arith.constant dense<0.000000e+00> : vector<16x16xf32>
    %73 = tpu.matmul %70, %72, %cst_70 {dimension_numbers = #tpu.dot_dimension_numbers<[1], [0], [0], [1], [0, 0, 1, 1], [], []>} : vector<16x16xf32>, vector<16x16xf32>, vector<16x16xf32> -> vector<16x16xf32>
    %74 = arith.addf %67, %73 : vector<16x16xf32>
    %c0_71 = arith.constant 0 : index
    %c0_72 = arith.constant 0 : index
    %c0_73 = arith.constant 0 : index
    %c0_74 = arith.constant 0 : index
    %75 = vector.load %arg6[%c0_71, %c0_72, %c0_73, %c0_74] : memref<1x1x16x16xf32, #tpu.memory_space<vmem>>, vector<1x1x16x16xf32>
    %76 = vector.shape_cast %75 : vector<1x1x16x16xf32> to vector<16x16xf32>
    %77 = vector.shape_cast %74 : vector<16x16xf32> to vector<1x1x16x16xf32>
    tpu.vector_store %arg6[%c0_71, %c0_72, %c0_73, %c0_74], %77 {strides = array<i32>} : memref<1x1x16x16xf32, #tpu.memory_space<vmem>>, vector<1x1x16x16xf32>,
    return
  }
  func.func @transform_0(%arg0: i32, %arg1: i32) -> (i32, i32, i32, i32, i32) {
    %c0_i32 = arith.constant 0 : i32
    %c0_i32_0 = arith.constant 0 : i32
    %c0_i32_1 = arith.constant 0 : i32
    %c0_i32_2 = arith.constant 0 : i32
    %c0_i32_3 = arith.constant 0 : i32
    return %arg0, %c0_i32, %c0_i32_0, %c0_i32_1, %c0_i32_2 : i32, i32, i32, i32, i32
  }
  func.func @transform_1(%arg0: i32, %arg1: i32) -> (i32, i32, i32) {
    %c0_i32 = arith.constant 0 : i32
    %c0_i32_0 = arith.constant 0 : i32
    %c0_i32_1 = arith.constant 0 : i32
    %c0_i32_2 = arith.constant 0 : i32
    return %c0_i32, %c0_i32_0, %c0_i32_1 : i32, i32, i32
  }
  func.func @transform_2(%arg0: i32, %arg1: i32) -> (i32, i32) {
    %c0_i32 = arith.constant 0 : i32
    %c0_i32_0 = arith.constant 0 : i32
    %c0_i32_1 = arith.constant 0 : i32
    return %c0_i32, %c0_i32_0 : i32, i32
  }
  func.func @transform_3(%arg0: i32, %arg1: i32) -> (i32, i32, i32, i32) {
    %c0_i32 = arith.constant 0 : i32
    %c0_i32_0 = arith.constant 0 : i32
    %c0_i32_1 = arith.constant 0 : i32
    return %arg0, %arg1, %c0_i32, %c0_i32_0 : i32, i32, i32, i32
  }
  func.func @transform_4(%arg0: i32, %arg1: i32) -> (i32, i32, i32, i32) {
    %c0_i32 = arith.constant 0 : i32
    %c0_i32_0 = arith.constant 0 : i32
    %c0_i32_1 = arith.constant 0 : i32
    return %arg0, %arg1, %c0_i32, %c0_i32_0 : i32, i32, i32, i32
  }
}

module attributes {stable_mosaic.version = 11 : i64} {
  func.func @_conv_tap_kernel(%arg0: i32, %arg1: i32, %arg2: memref<1x18x1x18x16xf32, #tpu.memory_space<vmem>>, %arg3: memref<9x16x16xf32, #tpu.memory_space<vmem>>, %arg4: memref<1x16xf32, #tpu.memory_space<vmem>>, %arg5: memref<1x1x16x16xf32, #tpu.memory_space<vmem>>) attributes {dimension_semantics = [#tpu.dimension_semantics<parallel>, #tpu.dimension_semantics<parallel>], iteration_bounds = array<i64: 2, 16>, scalar_prefetch = 0 : i64, scratch_operands = 0 : i64, tpu.core_type = #tpu.core_type<tc>, window_params = [{transform_indices = @transform_0, window_bounds = array<i64: 1, 18, 1, 18, 16>}, {pipeline_mode = #tpu.pipeline_mode<synchronous>, transform_indices = @transform_1, window_bounds = array<i64: 9, 16, 16>}, {pipeline_mode = #tpu.pipeline_mode<synchronous>, transform_indices = @transform_2, window_bounds = array<i64: 1, 16>}, {transform_indices = @transform_3, window_bounds = array<i64: 1, 1, 16, 16>}]} {
    %c0 = arith.constant 0 : index
    %c0_0 = arith.constant 0 : index
    %0 = vector.load %arg4[%c0, %c0_0] : memref<1x16xf32, #tpu.memory_space<vmem>>, vector<1x16xf32>
    %1 = vector.shape_cast %0 : vector<1x16xf32> to vector<1x16xf32>
    %2 = vector.broadcast %1 : vector<1x16xf32> to vector<16x16xf32>
    %c1_i32 = arith.constant 1 : i32
    %3 = arith.muli %arg1, %c1_i32 : i32
    %c0_i32 = arith.constant 0 : i32
    %4 = arith.addi %3, %c0_i32 : i32
    %c0_1 = arith.constant 0 : index
    %5 = arith.index_cast %4 : i32 to index
    %c0_2 = arith.constant 0 : index
    %c0_3 = arith.constant 0 : index
    %c0_4 = arith.constant 0 : index
    %6 = vector.load %arg2[%c0_1, %5, %c0_2, %c0_3, %c0_4] : memref<1x18x1x18x16xf32, #tpu.memory_space<vmem>>, vector<1x1x1x16x16xf32>
    %7 = vector.shape_cast %6 : vector<1x1x1x16x16xf32> to vector<16x16xf32>
    %c0_5 = arith.constant 0 : index
    %c0_6 = arith.constant 0 : index
    %c0_7 = arith.constant 0 : index
    %8 = vector.load %arg3[%c0_5, %c0_6, %c0_7] : memref<9x16x16xf32, #tpu.memory_space<vmem>>, vector<1x16x16xf32>
    %9 = vector.shape_cast %8 : vector<1x16x16xf32> to vector<16x16xf32>
    %cst = arith.constant dense<0.000000e+00> : vector<16x16xf32>
    %10 = tpu.matmul %7, %9, %cst {dimension_numbers = #tpu.dot_dimension_numbers<[1], [0], [0], [1], [0, 0, 1, 1], [], []>} : vector<16x16xf32>, vector<16x16xf32>, vector<16x16xf32> -> vector<16x16xf32>
    %11 = arith.addf %2, %10 : vector<16x16xf32>
    %c0_8 = arith.constant 0 : index
    %12 = arith.index_cast %4 : i32 to index
    %c0_9 = arith.constant 0 : index
    %c1 = arith.constant 1 : index
    %c0_10 = arith.constant 0 : index
    %13 = vector.load %arg2[%c0_8, %12, %c0_9, %c1, %c0_10] : memref<1x18x1x18x16xf32, #tpu.memory_space<vmem>>, vector<1x1x1x16x16xf32>
    %14 = vector.shape_cast %13 : vector<1x1x1x16x16xf32> to vector<16x16xf32>
    %c1_11 = arith.constant 1 : index
    %c0_12 = arith.constant 0 : index
    %c0_13 = arith.constant 0 : index
    %15 = vector.load %arg3[%c1_11, %c0_12, %c0_13] : memref<9x16x16xf32, #tpu.memory_space<vmem>>, vector<1x16x16xf32>
    %16 = vector.shape_cast %15 : vector<1x16x16xf32> to vector<16x16xf32>
    %cst_14 = arith.constant dense<0.000000e+00> : vector<16x16xf32>
    %17 = tpu.matmul %14, %16, %cst_14 {dimension_numbers = #tpu.dot_dimension_numbers<[1], [0], [0], [1], [0, 0, 1, 1], [], []>} : vector<16x16xf32>, vector<16x16xf32>, vector<16x16xf32> -> vector<16x16xf32>
    %18 = arith.addf %11, %17 : vector<16x16xf32>
    %c0_15 = arith.constant 0 : index
    %19 = arith.index_cast %4 : i32 to index
    %c0_16 = arith.constant 0 : index
    %c2 = arith.constant 2 : index
    %c0_17 = arith.constant 0 : index
    %20 = vector.load %arg2[%c0_15, %19, %c0_16, %c2, %c0_17] : memref<1x18x1x18x16xf32, #tpu.memory_space<vmem>>, vector<1x1x1x16x16xf32>
    %21 = vector.shape_cast %20 : vector<1x1x1x16x16xf32> to vector<16x16xf32>
    %c2_18 = arith.constant 2 : index
    %c0_19 = arith.constant 0 : index
    %c0_20 = arith.constant 0 : index
    %22 = vector.load %arg3[%c2_18, %c0_19, %c0_20] : memref<9x16x16xf32, #tpu.memory_space<vmem>>, vector<1x16x16xf32>
    %23 = vector.shape_cast %22 : vector<1x16x16xf32> to vector<16x16xf32>
    %cst_21 = arith.constant dense<0.000000e+00> : vector<16x16xf32>
    %24 = tpu.matmul %21, %23, %cst_21 {dimension_numbers = #tpu.dot_dimension_numbers<[1], [0], [0], [1], [0, 0, 1, 1], [], []>} : vector<16x16xf32>, vector<16x16xf32>, vector<16x16xf32> -> vector<16x16xf32>
    %25 = arith.addf %18, %24 : vector<16x16xf32>
    %c1_i32_22 = arith.constant 1 : i32
    %26 = arith.muli %arg1, %c1_i32_22 : i32
    %c1_i32_23 = arith.constant 1 : i32
    %27 = arith.addi %26, %c1_i32_23 : i32
    %c0_24 = arith.constant 0 : index
    %28 = arith.index_cast %27 : i32 to index
    %c0_25 = arith.constant 0 : index
    %c0_26 = arith.constant 0 : index
    %c0_27 = arith.constant 0 : index
    %29 = vector.load %arg2[%c0_24, %28, %c0_25, %c0_26, %c0_27] : memref<1x18x1x18x16xf32, #tpu.memory_space<vmem>>, vector<1x1x1x16x16xf32>
    %30 = vector.shape_cast %29 : vector<1x1x1x16x16xf32> to vector<16x16xf32>
    %c3 = arith.constant 3 : index
    %c0_28 = arith.constant 0 : index
    %c0_29 = arith.constant 0 : index
    %31 = vector.load %arg3[%c3, %c0_28, %c0_29] : memref<9x16x16xf32, #tpu.memory_space<vmem>>, vector<1x16x16xf32>
    %32 = vector.shape_cast %31 : vector<1x16x16xf32> to vector<16x16xf32>
    %cst_30 = arith.constant dense<0.000000e+00> : vector<16x16xf32>
    %33 = tpu.matmul %30, %32, %cst_30 {dimension_numbers = #tpu.dot_dimension_numbers<[1], [0], [0], [1], [0, 0, 1, 1], [], []>} : vector<16x16xf32>, vector<16x16xf32>, vector<16x16xf32> -> vector<16x16xf32>
    %34 = arith.addf %25, %33 : vector<16x16xf32>
    %c0_31 = arith.constant 0 : index
    %35 = arith.index_cast %27 : i32 to index
    %c0_32 = arith.constant 0 : index
    %c1_33 = arith.constant 1 : index
    %c0_34 = arith.constant 0 : index
    %36 = vector.load %arg2[%c0_31, %35, %c0_32, %c1_33, %c0_34] : memref<1x18x1x18x16xf32, #tpu.memory_space<vmem>>, vector<1x1x1x16x16xf32>
    %37 = vector.shape_cast %36 : vector<1x1x1x16x16xf32> to vector<16x16xf32>
    %c4 = arith.constant 4 : index
    %c0_35 = arith.constant 0 : index
    %c0_36 = arith.constant 0 : index
    %38 = vector.load %arg3[%c4, %c0_35, %c0_36] : memref<9x16x16xf32, #tpu.memory_space<vmem>>, vector<1x16x16xf32>
    %39 = vector.shape_cast %38 : vector<1x16x16xf32> to vector<16x16xf32>
    %cst_37 = arith.constant dense<0.000000e+00> : vector<16x16xf32>
    %40 = tpu.matmul %37, %39, %cst_37 {dimension_numbers = #tpu.dot_dimension_numbers<[1], [0], [0], [1], [0, 0, 1, 1], [], []>} : vector<16x16xf32>, vector<16x16xf32>, vector<16x16xf32> -> vector<16x16xf32>
    %41 = arith.addf %34, %40 : vector<16x16xf32>
    %c0_38 = arith.constant 0 : index
    %42 = arith.index_cast %27 : i32 to index
    %c0_39 = arith.constant 0 : index
    %c2_40 = arith.constant 2 : index
    %c0_41 = arith.constant 0 : index
    %43 = vector.load %arg2[%c0_38, %42, %c0_39, %c2_40, %c0_41] : memref<1x18x1x18x16xf32, #tpu.memory_space<vmem>>, vector<1x1x1x16x16xf32>
    %44 = vector.shape_cast %43 : vector<1x1x1x16x16xf32> to vector<16x16xf32>
    %c5 = arith.constant 5 : index
    %c0_42 = arith.constant 0 : index
    %c0_43 = arith.constant 0 : index
    %45 = vector.load %arg3[%c5, %c0_42, %c0_43] : memref<9x16x16xf32, #tpu.memory_space<vmem>>, vector<1x16x16xf32>
    %46 = vector.shape_cast %45 : vector<1x16x16xf32> to vector<16x16xf32>
    %cst_44 = arith.constant dense<0.000000e+00> : vector<16x16xf32>
    %47 = tpu.matmul %44, %46, %cst_44 {dimension_numbers = #tpu.dot_dimension_numbers<[1], [0], [0], [1], [0, 0, 1, 1], [], []>} : vector<16x16xf32>, vector<16x16xf32>, vector<16x16xf32> -> vector<16x16xf32>
    %48 = arith.addf %41, %47 : vector<16x16xf32>
    %c1_i32_45 = arith.constant 1 : i32
    %49 = arith.muli %arg1, %c1_i32_45 : i32
    %c2_i32 = arith.constant 2 : i32
    %50 = arith.addi %49, %c2_i32 : i32
    %c0_46 = arith.constant 0 : index
    %51 = arith.index_cast %50 : i32 to index
    %c0_47 = arith.constant 0 : index
    %c0_48 = arith.constant 0 : index
    %c0_49 = arith.constant 0 : index
    %52 = vector.load %arg2[%c0_46, %51, %c0_47, %c0_48, %c0_49] : memref<1x18x1x18x16xf32, #tpu.memory_space<vmem>>, vector<1x1x1x16x16xf32>
    %53 = vector.shape_cast %52 : vector<1x1x1x16x16xf32> to vector<16x16xf32>
    %c6 = arith.constant 6 : index
    %c0_50 = arith.constant 0 : index
    %c0_51 = arith.constant 0 : index
    %54 = vector.load %arg3[%c6, %c0_50, %c0_51] : memref<9x16x16xf32, #tpu.memory_space<vmem>>, vector<1x16x16xf32>
    %55 = vector.shape_cast %54 : vector<1x16x16xf32> to vector<16x16xf32>
    %cst_52 = arith.constant dense<0.000000e+00> : vector<16x16xf32>
    %56 = tpu.matmul %53, %55, %cst_52 {dimension_numbers = #tpu.dot_dimension_numbers<[1], [0], [0], [1], [0, 0, 1, 1], [], []>} : vector<16x16xf32>, vector<16x16xf32>, vector<16x16xf32> -> vector<16x16xf32>
    %57 = arith.addf %48, %56 : vector<16x16xf32>
    %c0_53 = arith.constant 0 : index
    %58 = arith.index_cast %50 : i32 to index
    %c0_54 = arith.constant 0 : index
    %c1_55 = arith.constant 1 : index
    %c0_56 = arith.constant 0 : index
    %59 = vector.load %arg2[%c0_53, %58, %c0_54, %c1_55, %c0_56] : memref<1x18x1x18x16xf32, #tpu.memory_space<vmem>>, vector<1x1x1x16x16xf32>
    %60 = vector.shape_cast %59 : vector<1x1x1x16x16xf32> to vector<16x16xf32>
    %c7 = arith.constant 7 : index
    %c0_57 = arith.constant 0 : index
    %c0_58 = arith.constant 0 : index
    %61 = vector.load %arg3[%c7, %c0_57, %c0_58] : memref<9x16x16xf32, #tpu.memory_space<vmem>>, vector<1x16x16xf32>
    %62 = vector.shape_cast %61 : vector<1x16x16xf32> to vector<16x16xf32>
    %cst_59 = arith.constant dense<0.000000e+00> : vector<16x16xf32>
    %63 = tpu.matmul %60, %62, %cst_59 {dimension_numbers = #tpu.dot_dimension_numbers<[1], [0], [0], [1], [0, 0, 1, 1], [], []>} : vector<16x16xf32>, vector<16x16xf32>, vector<16x16xf32> -> vector<16x16xf32>
    %64 = arith.addf %57, %63 : vector<16x16xf32>
    %c0_60 = arith.constant 0 : index
    %65 = arith.index_cast %50 : i32 to index
    %c0_61 = arith.constant 0 : index
    %c2_62 = arith.constant 2 : index
    %c0_63 = arith.constant 0 : index
    %66 = vector.load %arg2[%c0_60, %65, %c0_61, %c2_62, %c0_63] : memref<1x18x1x18x16xf32, #tpu.memory_space<vmem>>, vector<1x1x1x16x16xf32>
    %67 = vector.shape_cast %66 : vector<1x1x1x16x16xf32> to vector<16x16xf32>
    %c8 = arith.constant 8 : index
    %c0_64 = arith.constant 0 : index
    %c0_65 = arith.constant 0 : index
    %68 = vector.load %arg3[%c8, %c0_64, %c0_65] : memref<9x16x16xf32, #tpu.memory_space<vmem>>, vector<1x16x16xf32>
    %69 = vector.shape_cast %68 : vector<1x16x16xf32> to vector<16x16xf32>
    %cst_66 = arith.constant dense<0.000000e+00> : vector<16x16xf32>
    %70 = tpu.matmul %67, %69, %cst_66 {dimension_numbers = #tpu.dot_dimension_numbers<[1], [0], [0], [1], [0, 0, 1, 1], [], []>} : vector<16x16xf32>, vector<16x16xf32>, vector<16x16xf32> -> vector<16x16xf32>
    %71 = arith.addf %64, %70 : vector<16x16xf32>
    %c0_67 = arith.constant 0 : index
    %c0_68 = arith.constant 0 : index
    %c0_69 = arith.constant 0 : index
    %c0_70 = arith.constant 0 : index
    %72 = vector.load %arg5[%c0_67, %c0_68, %c0_69, %c0_70] : memref<1x1x16x16xf32, #tpu.memory_space<vmem>>, vector<1x1x16x16xf32>
    %73 = vector.shape_cast %72 : vector<1x1x16x16xf32> to vector<16x16xf32>
    %74 = vector.shape_cast %71 : vector<16x16xf32> to vector<1x1x16x16xf32>
    tpu.vector_store %arg5[%c0_67, %c0_68, %c0_69, %c0_70], %74 {strides = array<i32>} : memref<1x1x16x16xf32, #tpu.memory_space<vmem>>, vector<1x1x16x16xf32>,
    return
  }
  func.func @transform_0(%arg0: i32, %arg1: i32) -> (i32, i32, i32, i32, i32) {
    %c0_i32 = arith.constant 0 : i32
    %c0_i32_0 = arith.constant 0 : i32
    %c0_i32_1 = arith.constant 0 : i32
    %c0_i32_2 = arith.constant 0 : i32
    %c0_i32_3 = arith.constant 0 : i32
    return %arg0, %c0_i32, %c0_i32_0, %c0_i32_1, %c0_i32_2 : i32, i32, i32, i32, i32
  }
  func.func @transform_1(%arg0: i32, %arg1: i32) -> (i32, i32, i32) {
    %c0_i32 = arith.constant 0 : i32
    %c0_i32_0 = arith.constant 0 : i32
    %c0_i32_1 = arith.constant 0 : i32
    %c0_i32_2 = arith.constant 0 : i32
    return %c0_i32, %c0_i32_0, %c0_i32_1 : i32, i32, i32
  }
  func.func @transform_2(%arg0: i32, %arg1: i32) -> (i32, i32) {
    %c0_i32 = arith.constant 0 : i32
    %c0_i32_0 = arith.constant 0 : i32
    %c0_i32_1 = arith.constant 0 : i32
    return %c0_i32, %c0_i32_0 : i32, i32
  }
  func.func @transform_3(%arg0: i32, %arg1: i32) -> (i32, i32, i32, i32) {
    %c0_i32 = arith.constant 0 : i32
    %c0_i32_0 = arith.constant 0 : i32
    %c0_i32_1 = arith.constant 0 : i32
    return %arg0, %arg1, %c0_i32, %c0_i32_0 : i32, i32, i32, i32
  }
}

module attributes {stable_mosaic.version = 11 : i64} {
  func.func @_conv_tap_kernel(%arg0: i32, %arg1: i32, %arg2: memref<1x18x2x9x16xf32, #tpu.memory_space<vmem>>, %arg3: memref<9x16x32xf32, #tpu.memory_space<vmem>>, %arg4: memref<1x32xf32, #tpu.memory_space<vmem>>, %arg5: memref<1x1x8x32xf32, #tpu.memory_space<vmem>>) attributes {dimension_semantics = [#tpu.dimension_semantics<parallel>, #tpu.dimension_semantics<parallel>], iteration_bounds = array<i64: 2, 8>, scalar_prefetch = 0 : i64, scratch_operands = 0 : i64, tpu.core_type = #tpu.core_type<tc>, window_params = [{transform_indices = @transform_0, window_bounds = array<i64: 1, 18, 2, 9, 16>}, {pipeline_mode = #tpu.pipeline_mode<synchronous>, transform_indices = @transform_1, window_bounds = array<i64: 9, 16, 32>}, {pipeline_mode = #tpu.pipeline_mode<synchronous>, transform_indices = @transform_2, window_bounds = array<i64: 1, 32>}, {transform_indices = @transform_3, window_bounds = array<i64: 1, 1, 8, 32>}]} {
    %c0 = arith.constant 0 : index
    %c0_0 = arith.constant 0 : index
    %0 = vector.load %arg4[%c0, %c0_0] : memref<1x32xf32, #tpu.memory_space<vmem>>, vector<1x32xf32>
    %1 = vector.shape_cast %0 : vector<1x32xf32> to vector<1x32xf32>
    %2 = vector.broadcast %1 : vector<1x32xf32> to vector<8x32xf32>
    %c2_i32 = arith.constant 2 : i32
    %3 = arith.muli %arg1, %c2_i32 : i32
    %c0_i32 = arith.constant 0 : i32
    %4 = arith.addi %3, %c0_i32 : i32
    %c0_1 = arith.constant 0 : index
    %5 = arith.index_cast %4 : i32 to index
    %c0_2 = arith.constant 0 : index
    %c0_3 = arith.constant 0 : index
    %c0_4 = arith.constant 0 : index
    %6 = vector.load %arg2[%c0_1, %5, %c0_2, %c0_3, %c0_4] : memref<1x18x2x9x16xf32, #tpu.memory_space<vmem>>, vector<1x1x1x8x16xf32>
    %7 = vector.shape_cast %6 : vector<1x1x1x8x16xf32> to vector<8x16xf32>
    %c0_5 = arith.constant 0 : index
    %c0_6 = arith.constant 0 : index
    %c0_7 = arith.constant 0 : index
    %8 = vector.load %arg3[%c0_5, %c0_6, %c0_7] : memref<9x16x32xf32, #tpu.memory_space<vmem>>, vector<1x16x32xf32>
    %9 = vector.shape_cast %8 : vector<1x16x32xf32> to vector<16x32xf32>
    %cst = arith.constant dense<0.000000e+00> : vector<8x32xf32>
    %10 = tpu.matmul %7, %9, %cst {dimension_numbers = #tpu.dot_dimension_numbers<[1], [0], [0], [1], [0, 0, 1, 1], [], []>} : vector<8x16xf32>, vector<16x32xf32>, vector<8x32xf32> -> vector<8x32xf32>
    %11 = arith.addf %2, %10 : vector<8x32xf32>
    %c0_8 = arith.constant 0 : index
    %12 = arith.index_cast %4 : i32 to index
    %c1 = arith.constant 1 : index
    %c0_9 = arith.constant 0 : index
    %c0_10 = arith.constant 0 : index
    %13 = vector.load %arg2[%c0_8, %12, %c1, %c0_9, %c0_10] : memref<1x18x2x9x16xf32, #tpu.memory_space<vmem>>, vector<1x1x1x8x16xf32>
    %14 = vector.shape_cast %13 : vector<1x1x1x8x16xf32> to vector<8x16xf32>
    %c1_11 = arith.constant 1 : index
    %c0_12 = arith.constant 0 : index
    %c0_13 = arith.constant 0 : index
    %15 = vector.load %arg3[%c1_11, %c0_12, %c0_13] : memref<9x16x32xf32, #tpu.memory_space<vmem>>, vector<1x16x32xf32>
    %16 = vector.shape_cast %15 : vector<1x16x32xf32> to vector<16x32xf32>
    %cst_14 = arith.constant dense<0.000000e+00> : vector<8x32xf32>
    %17 = tpu.matmul %14, %16, %cst_14 {dimension_numbers = #tpu.dot_dimension_numbers<[1], [0], [0], [1], [0, 0, 1, 1], [], []>} : vector<8x16xf32>, vector<16x32xf32>, vector<8x32xf32> -> vector<8x32xf32>
    %18 = arith.addf %11, %17 : vector<8x32xf32>
    %c0_15 = arith.constant 0 : index
    %19 = arith.index_cast %4 : i32 to index
    %c0_16 = arith.constant 0 : index
    %c1_17 = arith.constant 1 : index
    %c0_18 = arith.constant 0 : index
    %20 = vector.load %arg2[%c0_15, %19, %c0_16, %c1_17, %c0_18] : memref<1x18x2x9x16xf32, #tpu.memory_space<vmem>>, vector<1x1x1x8x16xf32>
    %21 = vector.shape_cast %20 : vector<1x1x1x8x16xf32> to vector<8x16xf32>
    %c2 = arith.constant 2 : index
    %c0_19 = arith.constant 0 : index
    %c0_20 = arith.constant 0 : index
    %22 = vector.load %arg3[%c2, %c0_19, %c0_20] : memref<9x16x32xf32, #tpu.memory_space<vmem>>, vector<1x16x32xf32>
    %23 = vector.shape_cast %22 : vector<1x16x32xf32> to vector<16x32xf32>
    %cst_21 = arith.constant dense<0.000000e+00> : vector<8x32xf32>
    %24 = tpu.matmul %21, %23, %cst_21 {dimension_numbers = #tpu.dot_dimension_numbers<[1], [0], [0], [1], [0, 0, 1, 1], [], []>} : vector<8x16xf32>, vector<16x32xf32>, vector<8x32xf32> -> vector<8x32xf32>
    %25 = arith.addf %18, %24 : vector<8x32xf32>
    %c2_i32_22 = arith.constant 2 : i32
    %26 = arith.muli %arg1, %c2_i32_22 : i32
    %c1_i32 = arith.constant 1 : i32
    %27 = arith.addi %26, %c1_i32 : i32
    %c0_23 = arith.constant 0 : index
    %28 = arith.index_cast %27 : i32 to index
    %c0_24 = arith.constant 0 : index
    %c0_25 = arith.constant 0 : index
    %c0_26 = arith.constant 0 : index
    %29 = vector.load %arg2[%c0_23, %28, %c0_24, %c0_25, %c0_26] : memref<1x18x2x9x16xf32, #tpu.memory_space<vmem>>, vector<1x1x1x8x16xf32>
    %30 = vector.shape_cast %29 : vector<1x1x1x8x16xf32> to vector<8x16xf32>
    %c3 = arith.constant 3 : index
    %c0_27 = arith.constant 0 : index
    %c0_28 = arith.constant 0 : index
    %31 = vector.load %arg3[%c3, %c0_27, %c0_28] : memref<9x16x32xf32, #tpu.memory_space<vmem>>, vector<1x16x32xf32>
    %32 = vector.shape_cast %31 : vector<1x16x32xf32> to vector<16x32xf32>
    %cst_29 = arith.constant dense<0.000000e+00> : vector<8x32xf32>
    %33 = tpu.matmul %30, %32, %cst_29 {dimension_numbers = #tpu.dot_dimension_numbers<[1], [0], [0], [1], [0, 0, 1, 1], [], []>} : vector<8x16xf32>, vector<16x32xf32>, vector<8x32xf32> -> vector<8x32xf32>
    %34 = arith.addf %25, %33 : vector<8x32xf32>
    %c0_30 = arith.constant 0 : index
    %35 = arith.index_cast %27 : i32 to index
    %c1_31 = arith.constant 1 : index
    %c0_32 = arith.constant 0 : index
    %c0_33 = arith.constant 0 : index
    %36 = vector.load %arg2[%c0_30, %35, %c1_31, %c0_32, %c0_33] : memref<1x18x2x9x16xf32, #tpu.memory_space<vmem>>, vector<1x1x1x8x16xf32>
    %37 = vector.shape_cast %36 : vector<1x1x1x8x16xf32> to vector<8x16xf32>
    %c4 = arith.constant 4 : index
    %c0_34 = arith.constant 0 : index
    %c0_35 = arith.constant 0 : index
    %38 = vector.load %arg3[%c4, %c0_34, %c0_35] : memref<9x16x32xf32, #tpu.memory_space<vmem>>, vector<1x16x32xf32>
    %39 = vector.shape_cast %38 : vector<1x16x32xf32> to vector<16x32xf32>
    %cst_36 = arith.constant dense<0.000000e+00> : vector<8x32xf32>
    %40 = tpu.matmul %37, %39, %cst_36 {dimension_numbers = #tpu.dot_dimension_numbers<[1], [0], [0], [1], [0, 0, 1, 1], [], []>} : vector<8x16xf32>, vector<16x32xf32>, vector<8x32xf32> -> vector<8x32xf32>
    %41 = arith.addf %34, %40 : vector<8x32xf32>
    %c0_37 = arith.constant 0 : index
    %42 = arith.index_cast %27 : i32 to index
    %c0_38 = arith.constant 0 : index
    %c1_39 = arith.constant 1 : index
    %c0_40 = arith.constant 0 : index
    %43 = vector.load %arg2[%c0_37, %42, %c0_38, %c1_39, %c0_40] : memref<1x18x2x9x16xf32, #tpu.memory_space<vmem>>, vector<1x1x1x8x16xf32>
    %44 = vector.shape_cast %43 : vector<1x1x1x8x16xf32> to vector<8x16xf32>
    %c5 = arith.constant 5 : index
    %c0_41 = arith.constant 0 : index
    %c0_42 = arith.constant 0 : index
    %45 = vector.load %arg3[%c5, %c0_41, %c0_42] : memref<9x16x32xf32, #tpu.memory_space<vmem>>, vector<1x16x32xf32>
    %46 = vector.shape_cast %45 : vector<1x16x32xf32> to vector<16x32xf32>
    %cst_43 = arith.constant dense<0.000000e+00> : vector<8x32xf32>
    %47 = tpu.matmul %44, %46, %cst_43 {dimension_numbers = #tpu.dot_dimension_numbers<[1], [0], [0], [1], [0, 0, 1, 1], [], []>} : vector<8x16xf32>, vector<16x32xf32>, vector<8x32xf32> -> vector<8x32xf32>
    %48 = arith.addf %41, %47 : vector<8x32xf32>
    %c2_i32_44 = arith.constant 2 : i32
    %49 = arith.muli %arg1, %c2_i32_44 : i32
    %c2_i32_45 = arith.constant 2 : i32
    %50 = arith.addi %49, %c2_i32_45 : i32
    %c0_46 = arith.constant 0 : index
    %51 = arith.index_cast %50 : i32 to index
    %c0_47 = arith.constant 0 : index
    %c0_48 = arith.constant 0 : index
    %c0_49 = arith.constant 0 : index
    %52 = vector.load %arg2[%c0_46, %51, %c0_47, %c0_48, %c0_49] : memref<1x18x2x9x16xf32, #tpu.memory_space<vmem>>, vector<1x1x1x8x16xf32>
    %53 = vector.shape_cast %52 : vector<1x1x1x8x16xf32> to vector<8x16xf32>
    %c6 = arith.constant 6 : index
    %c0_50 = arith.constant 0 : index
    %c0_51 = arith.constant 0 : index
    %54 = vector.load %arg3[%c6, %c0_50, %c0_51] : memref<9x16x32xf32, #tpu.memory_space<vmem>>, vector<1x16x32xf32>
    %55 = vector.shape_cast %54 : vector<1x16x32xf32> to vector<16x32xf32>
    %cst_52 = arith.constant dense<0.000000e+00> : vector<8x32xf32>
    %56 = tpu.matmul %53, %55, %cst_52 {dimension_numbers = #tpu.dot_dimension_numbers<[1], [0], [0], [1], [0, 0, 1, 1], [], []>} : vector<8x16xf32>, vector<16x32xf32>, vector<8x32xf32> -> vector<8x32xf32>
    %57 = arith.addf %48, %56 : vector<8x32xf32>
    %c0_53 = arith.constant 0 : index
    %58 = arith.index_cast %50 : i32 to index
    %c1_54 = arith.constant 1 : index
    %c0_55 = arith.constant 0 : index
    %c0_56 = arith.constant 0 : index
    %59 = vector.load %arg2[%c0_53, %58, %c1_54, %c0_55, %c0_56] : memref<1x18x2x9x16xf32, #tpu.memory_space<vmem>>, vector<1x1x1x8x16xf32>
    %60 = vector.shape_cast %59 : vector<1x1x1x8x16xf32> to vector<8x16xf32>
    %c7 = arith.constant 7 : index
    %c0_57 = arith.constant 0 : index
    %c0_58 = arith.constant 0 : index
    %61 = vector.load %arg3[%c7, %c0_57, %c0_58] : memref<9x16x32xf32, #tpu.memory_space<vmem>>, vector<1x16x32xf32>
    %62 = vector.shape_cast %61 : vector<1x16x32xf32> to vector<16x32xf32>
    %cst_59 = arith.constant dense<0.000000e+00> : vector<8x32xf32>
    %63 = tpu.matmul %60, %62, %cst_59 {dimension_numbers = #tpu.dot_dimension_numbers<[1], [0], [0], [1], [0, 0, 1, 1], [], []>} : vector<8x16xf32>, vector<16x32xf32>, vector<8x32xf32> -> vector<8x32xf32>
    %64 = arith.addf %57, %63 : vector<8x32xf32>
    %c0_60 = arith.constant 0 : index
    %65 = arith.index_cast %50 : i32 to index
    %c0_61 = arith.constant 0 : index
    %c1_62 = arith.constant 1 : index
    %c0_63 = arith.constant 0 : index
    %66 = vector.load %arg2[%c0_60, %65, %c0_61, %c1_62, %c0_63] : memref<1x18x2x9x16xf32, #tpu.memory_space<vmem>>, vector<1x1x1x8x16xf32>
    %67 = vector.shape_cast %66 : vector<1x1x1x8x16xf32> to vector<8x16xf32>
    %c8 = arith.constant 8 : index
    %c0_64 = arith.constant 0 : index
    %c0_65 = arith.constant 0 : index
    %68 = vector.load %arg3[%c8, %c0_64, %c0_65] : memref<9x16x32xf32, #tpu.memory_space<vmem>>, vector<1x16x32xf32>
    %69 = vector.shape_cast %68 : vector<1x16x32xf32> to vector<16x32xf32>
    %cst_66 = arith.constant dense<0.000000e+00> : vector<8x32xf32>
    %70 = tpu.matmul %67, %69, %cst_66 {dimension_numbers = #tpu.dot_dimension_numbers<[1], [0], [0], [1], [0, 0, 1, 1], [], []>} : vector<8x16xf32>, vector<16x32xf32>, vector<8x32xf32> -> vector<8x32xf32>
    %71 = arith.addf %64, %70 : vector<8x32xf32>
    %c0_67 = arith.constant 0 : index
    %c0_68 = arith.constant 0 : index
    %c0_69 = arith.constant 0 : index
    %c0_70 = arith.constant 0 : index
    %72 = vector.load %arg5[%c0_67, %c0_68, %c0_69, %c0_70] : memref<1x1x8x32xf32, #tpu.memory_space<vmem>>, vector<1x1x8x32xf32>
    %73 = vector.shape_cast %72 : vector<1x1x8x32xf32> to vector<8x32xf32>
    %74 = vector.shape_cast %71 : vector<8x32xf32> to vector<1x1x8x32xf32>
    tpu.vector_store %arg5[%c0_67, %c0_68, %c0_69, %c0_70], %74 {strides = array<i32>} : memref<1x1x8x32xf32, #tpu.memory_space<vmem>>, vector<1x1x8x32xf32>,
    return
  }
  func.func @transform_0(%arg0: i32, %arg1: i32) -> (i32, i32, i32, i32, i32) {
    %c0_i32 = arith.constant 0 : i32
    %c0_i32_0 = arith.constant 0 : i32
    %c0_i32_1 = arith.constant 0 : i32
    %c0_i32_2 = arith.constant 0 : i32
    %c0_i32_3 = arith.constant 0 : i32
    return %arg0, %c0_i32, %c0_i32_0, %c0_i32_1, %c0_i32_2 : i32, i32, i32, i32, i32
  }
  func.func @transform_1(%arg0: i32, %arg1: i32) -> (i32, i32, i32) {
    %c0_i32 = arith.constant 0 : i32
    %c0_i32_0 = arith.constant 0 : i32
    %c0_i32_1 = arith.constant 0 : i32
    %c0_i32_2 = arith.constant 0 : i32
    return %c0_i32, %c0_i32_0, %c0_i32_1 : i32, i32, i32
  }
  func.func @transform_2(%arg0: i32, %arg1: i32) -> (i32, i32) {
    %c0_i32 = arith.constant 0 : i32
    %c0_i32_0 = arith.constant 0 : i32
    %c0_i32_1 = arith.constant 0 : i32
    return %c0_i32, %c0_i32_0 : i32, i32
  }
  func.func @transform_3(%arg0: i32, %arg1: i32) -> (i32, i32, i32, i32) {
    %c0_i32 = arith.constant 0 : i32
    %c0_i32_0 = arith.constant 0 : i32
    %c0_i32_1 = arith.constant 0 : i32
    return %arg0, %arg1, %c0_i32, %c0_i32_0 : i32, i32, i32, i32
  }
}

module attributes {stable_mosaic.version = 11 : i64} {
  func.func @_conv_tap_kernel(%arg0: i32, %arg1: i32, %arg2: memref<1x16x2x8x16xf32, #tpu.memory_space<vmem>>, %arg3: memref<1x16x32xf32, #tpu.memory_space<vmem>>, %arg4: memref<1x32xf32, #tpu.memory_space<vmem>>, %arg5: memref<1x1x8x32xf32, #tpu.memory_space<vmem>>) attributes {dimension_semantics = [#tpu.dimension_semantics<parallel>, #tpu.dimension_semantics<parallel>], iteration_bounds = array<i64: 2, 8>, scalar_prefetch = 0 : i64, scratch_operands = 0 : i64, tpu.core_type = #tpu.core_type<tc>, window_params = [{transform_indices = @transform_0, window_bounds = array<i64: 1, 16, 2, 8, 16>}, {pipeline_mode = #tpu.pipeline_mode<synchronous>, transform_indices = @transform_1, window_bounds = array<i64: 1, 16, 32>}, {pipeline_mode = #tpu.pipeline_mode<synchronous>, transform_indices = @transform_2, window_bounds = array<i64: 1, 32>}, {transform_indices = @transform_3, window_bounds = array<i64: 1, 1, 8, 32>}]} {
    %c0 = arith.constant 0 : index
    %c0_0 = arith.constant 0 : index
    %0 = vector.load %arg4[%c0, %c0_0] : memref<1x32xf32, #tpu.memory_space<vmem>>, vector<1x32xf32>
    %1 = vector.shape_cast %0 : vector<1x32xf32> to vector<1x32xf32>
    %2 = vector.broadcast %1 : vector<1x32xf32> to vector<8x32xf32>
    %c2_i32 = arith.constant 2 : i32
    %3 = arith.muli %arg1, %c2_i32 : i32
    %c0_i32 = arith.constant 0 : i32
    %4 = arith.addi %3, %c0_i32 : i32
    %c0_1 = arith.constant 0 : index
    %5 = arith.index_cast %4 : i32 to index
    %c0_2 = arith.constant 0 : index
    %c0_3 = arith.constant 0 : index
    %c0_4 = arith.constant 0 : index
    %6 = vector.load %arg2[%c0_1, %5, %c0_2, %c0_3, %c0_4] : memref<1x16x2x8x16xf32, #tpu.memory_space<vmem>>, vector<1x1x1x8x16xf32>
    %7 = vector.shape_cast %6 : vector<1x1x1x8x16xf32> to vector<8x16xf32>
    %c0_5 = arith.constant 0 : index
    %c0_6 = arith.constant 0 : index
    %c0_7 = arith.constant 0 : index
    %8 = vector.load %arg3[%c0_5, %c0_6, %c0_7] : memref<1x16x32xf32, #tpu.memory_space<vmem>>, vector<1x16x32xf32>
    %9 = vector.shape_cast %8 : vector<1x16x32xf32> to vector<16x32xf32>
    %cst = arith.constant dense<0.000000e+00> : vector<8x32xf32>
    %10 = tpu.matmul %7, %9, %cst {dimension_numbers = #tpu.dot_dimension_numbers<[1], [0], [0], [1], [0, 0, 1, 1], [], []>} : vector<8x16xf32>, vector<16x32xf32>, vector<8x32xf32> -> vector<8x32xf32>
    %11 = arith.addf %2, %10 : vector<8x32xf32>
    %c0_8 = arith.constant 0 : index
    %c0_9 = arith.constant 0 : index
    %c0_10 = arith.constant 0 : index
    %c0_11 = arith.constant 0 : index
    %12 = vector.load %arg5[%c0_8, %c0_9, %c0_10, %c0_11] : memref<1x1x8x32xf32, #tpu.memory_space<vmem>>, vector<1x1x8x32xf32>
    %13 = vector.shape_cast %12 : vector<1x1x8x32xf32> to vector<8x32xf32>
    %14 = vector.shape_cast %11 : vector<8x32xf32> to vector<1x1x8x32xf32>
    tpu.vector_store %arg5[%c0_8, %c0_9, %c0_10, %c0_11], %14 {strides = array<i32>} : memref<1x1x8x32xf32, #tpu.memory_space<vmem>>, vector<1x1x8x32xf32>,
    return
  }
  func.func @transform_0(%arg0: i32, %arg1: i32) -> (i32, i32, i32, i32, i32) {
    %c0_i32 = arith.constant 0 : i32
    %c0_i32_0 = arith.constant 0 : i32
    %c0_i32_1 = arith.constant 0 : i32
    %c0_i32_2 = arith.constant 0 : i32
    %c0_i32_3 = arith.constant 0 : i32
    return %arg0, %c0_i32, %c0_i32_0, %c0_i32_1, %c0_i32_2 : i32, i32, i32, i32, i32
  }
  func.func @transform_1(%arg0: i32, %arg1: i32) -> (i32, i32, i32) {
    %c0_i32 = arith.constant 0 : i32
    %c0_i32_0 = arith.constant 0 : i32
    %c0_i32_1 = arith.constant 0 : i32
    %c0_i32_2 = arith.constant 0 : i32
    return %c0_i32, %c0_i32_0, %c0_i32_1 : i32, i32, i32
  }
  func.func @transform_2(%arg0: i32, %arg1: i32) -> (i32, i32) {
    %c0_i32 = arith.constant 0 : i32
    %c0_i32_0 = arith.constant 0 : i32
    %c0_i32_1 = arith.constant 0 : i32
    return %c0_i32, %c0_i32_0 : i32, i32
  }
  func.func @transform_3(%arg0: i32, %arg1: i32) -> (i32, i32, i32, i32) {
    %c0_i32 = arith.constant 0 : i32
    %c0_i32_0 = arith.constant 0 : i32
    %c0_i32_1 = arith.constant 0 : i32
    return %arg0, %arg1, %c0_i32, %c0_i32_0 : i32, i32, i32, i32
  }
}

module attributes {stable_mosaic.version = 11 : i64} {
  func.func @_bn_stats_kernel(%arg0: i32, %arg1: memref<16x256xf32, #tpu.memory_space<vmem>>, %arg2: memref<1x256xf32, #tpu.memory_space<vmem>>, %arg3: memref<1x256xf32, #tpu.memory_space<vmem>>) attributes {dimension_semantics = [#tpu.dimension_semantics<arbitrary>], iteration_bounds = array<i64: 1>, scalar_prefetch = 0 : i64, scratch_operands = 0 : i64, tpu.core_type = #tpu.core_type<tc>, window_params = [{transform_indices = @transform_0, window_bounds = array<i64: 16, 256>}, {pipeline_mode = #tpu.pipeline_mode<synchronous>, transform_indices = @transform_1, window_bounds = array<i64: 1, 256>}, {pipeline_mode = #tpu.pipeline_mode<synchronous>, transform_indices = @transform_2, window_bounds = array<i64: 1, 256>}]} {
    %c0_i32 = arith.constant 0 : i32
    %0 = arith.cmpi eq, %arg0, %c0_i32 : i32
    %1 = arith.extui %0 : i1 to i32
    %c0_i32_0 = arith.constant 0 : i32
    %2 = arith.cmpi ne, %1, %c0_i32_0 : i32
    scf.if %2 {
      %cst_11 = arith.constant 0.000000e+00 : f32
      %15 = vector.broadcast %cst_11 : f32 to vector<1x256xf32>
      %c0_12 = arith.constant 0 : index
      %c0_13 = arith.constant 0 : index
      %16 = vector.load %arg2[%c0_12, %c0_13] : memref<1x256xf32, #tpu.memory_space<vmem>>, vector<1x256xf32>
      tpu.vector_store %arg2[%c0_12, %c0_13], %15 {strides = array<i32>} : memref<1x256xf32, #tpu.memory_space<vmem>>, vector<1x256xf32>,
      %cst_14 = arith.constant 0.000000e+00 : f32
      %17 = vector.broadcast %cst_14 : f32 to vector<1x256xf32>
      %c0_15 = arith.constant 0 : index
      %c0_16 = arith.constant 0 : index
      %18 = vector.load %arg3[%c0_15, %c0_16] : memref<1x256xf32, #tpu.memory_space<vmem>>, vector<1x256xf32>
      tpu.vector_store %arg3[%c0_15, %c0_16], %17 {strides = array<i32>} : memref<1x256xf32, #tpu.memory_space<vmem>>, vector<1x256xf32>,
    } else {
    }
    %c0 = arith.constant 0 : index
    %c0_1 = arith.constant 0 : index
    %3 = vector.load %arg1[%c0, %c0_1] : memref<16x256xf32, #tpu.memory_space<vmem>>, vector<16x256xf32>
    %c0_2 = arith.constant 0 : index
    %c0_3 = arith.constant 0 : index
    %4 = vector.load %arg2[%c0_2, %c0_3] : memref<1x256xf32, #tpu.memory_space<vmem>>, vector<1x256xf32>
    %cst = arith.constant dense<0.000000e+00> : vector<256xf32>
    %5 = vector.multi_reduction <add>, %3, %cst [0] : vector<16x256xf32> to vector<256xf32>
    %6 = vector.shape_cast %5 : vector<256xf32> to vector<1x256xf32>
    %7 = arith.addf %4, %6 : vector<1x256xf32>
    %c0_4 = arith.constant 0 : index
    %c0_5 = arith.constant 0 : index
    %8 = vector.load %arg2[%c0_4, %c0_5] : memref<1x256xf32, #tpu.memory_space<vmem>>, vector<1x256xf32>
    tpu.vector_store %arg2[%c0_4, %c0_5], %7 {strides = array<i32>} : memref<1x256xf32, #tpu.memory_space<vmem>>, vector<1x256xf32>,
    %c0_6 = arith.constant 0 : index
    %c0_7 = arith.constant 0 : index
    %9 = vector.load %arg3[%c0_6, %c0_7] : memref<1x256xf32, #tpu.memory_space<vmem>>, vector<1x256xf32>
    %10 = arith.mulf %3, %3 : vector<16x256xf32>
    %cst_8 = arith.constant dense<0.000000e+00> : vector<256xf32>
    %11 = vector.multi_reduction <add>, %10, %cst_8 [0] : vector<16x256xf32> to vector<256xf32>
    %12 = vector.shape_cast %11 : vector<256xf32> to vector<1x256xf32>
    %13 = arith.addf %9, %12 : vector<1x256xf32>
    %c0_9 = arith.constant 0 : index
    %c0_10 = arith.constant 0 : index
    %14 = vector.load %arg3[%c0_9, %c0_10] : memref<1x256xf32, #tpu.memory_space<vmem>>, vector<1x256xf32>
    tpu.vector_store %arg3[%c0_9, %c0_10], %13 {strides = array<i32>} : memref<1x256xf32, #tpu.memory_space<vmem>>, vector<1x256xf32>,
    return
  }
  func.func @transform_0(%arg0: i32) -> (i32, i32) {
    %c0_i32 = arith.constant 0 : i32
    %c0_i32_0 = arith.constant 0 : i32
    return %arg0, %c0_i32 : i32, i32
  }
  func.func @transform_1(%arg0: i32) -> (i32, i32) {
    %c0_i32 = arith.constant 0 : i32
    %c0_i32_0 = arith.constant 0 : i32
    %c0_i32_1 = arith.constant 0 : i32
    return %c0_i32, %c0_i32_0 : i32, i32
  }
  func.func @transform_2(%arg0: i32) -> (i32, i32) {
    %c0_i32 = arith.constant 0 : i32
    %c0_i32_0 = arith.constant 0 : i32
    %c0_i32_1 = arith.constant 0 : i32
    return %c0_i32, %c0_i32_0 : i32, i32
  }
}

module attributes {stable_mosaic.version = 11 : i64} {
  func.func @_bn_apply_kernel(%arg0: i32, %arg1: memref<16x256xf32, #tpu.memory_space<vmem>>, %arg2: memref<1x256xf32, #tpu.memory_space<vmem>>, %arg3: memref<1x256xf32, #tpu.memory_space<vmem>>, %arg4: memref<16x256xf32, #tpu.memory_space<vmem>>) attributes {dimension_semantics = [#tpu.dimension_semantics<parallel>], iteration_bounds = array<i64: 1>, scalar_prefetch = 0 : i64, scratch_operands = 0 : i64, tpu.core_type = #tpu.core_type<tc>, window_params = [{transform_indices = @transform_0, window_bounds = array<i64: 16, 256>}, {pipeline_mode = #tpu.pipeline_mode<synchronous>, transform_indices = @transform_1, window_bounds = array<i64: 1, 256>}, {pipeline_mode = #tpu.pipeline_mode<synchronous>, transform_indices = @transform_2, window_bounds = array<i64: 1, 256>}, {transform_indices = @transform_3, window_bounds = array<i64: 16, 256>}]} {
    %c0 = arith.constant 0 : index
    %c0_0 = arith.constant 0 : index
    %0 = vector.load %arg1[%c0, %c0_0] : memref<16x256xf32, #tpu.memory_space<vmem>>, vector<16x256xf32>
    %c0_1 = arith.constant 0 : index
    %c0_2 = arith.constant 0 : index
    %1 = vector.load %arg2[%c0_1, %c0_2] : memref<1x256xf32, #tpu.memory_space<vmem>>, vector<1x256xf32>
    %2 = vector.broadcast %1 : vector<1x256xf32> to vector<16x256xf32>
    %3 = arith.mulf %0, %2 : vector<16x256xf32>
    %c0_3 = arith.constant 0 : index
    %c0_4 = arith.constant 0 : index
    %4 = vector.load %arg3[%c0_3, %c0_4] : memref<1x256xf32, #tpu.memory_space<vmem>>, vector<1x256xf32>
    %5 = vector.broadcast %4 : vector<1x256xf32> to vector<16x256xf32>
    %6 = arith.addf %3, %5 : vector<16x256xf32>
    %cst = arith.constant 0.000000e+00 : f32
    %7 = vector.broadcast %cst : f32 to vector<16x256xf32>
    %8 = arith.cmpf oge, %6, %7 : vector<16x256xf32>
    %cst_5 = arith.constant 1.000000e-01 : f32
    %9 = vector.broadcast %cst_5 : f32 to vector<16x256xf32>
    %10 = arith.mulf %9, %6 : vector<16x256xf32>
    %11 = arith.select %8, %6, %10 : vector<16x256xi1>, vector<16x256xf32>
    %c0_6 = arith.constant 0 : index
    %c0_7 = arith.constant 0 : index
    %12 = vector.load %arg4[%c0_6, %c0_7] : memref<16x256xf32, #tpu.memory_space<vmem>>, vector<16x256xf32>
    tpu.vector_store %arg4[%c0_6, %c0_7], %11 {strides = array<i32>} : memref<16x256xf32, #tpu.memory_space<vmem>>, vector<16x256xf32>,
    return
  }
  func.func @transform_0(%arg0: i32) -> (i32, i32) {
    %c0_i32 = arith.constant 0 : i32
    %c0_i32_0 = arith.constant 0 : i32
    return %arg0, %c0_i32 : i32, i32
  }
  func.func @transform_1(%arg0: i32) -> (i32, i32) {
    %c0_i32 = arith.constant 0 : i32
    %c0_i32_0 = arith.constant 0 : i32
    %c0_i32_1 = arith.constant 0 : i32
    return %c0_i32, %c0_i32_0 : i32, i32
  }
  func.func @transform_2(%arg0: i32) -> (i32, i32) {
    %c0_i32 = arith.constant 0 : i32
    %c0_i32_0 = arith.constant 0 : i32
    %c0_i32_1 = arith.constant 0 : i32
    return %c0_i32, %c0_i32_0 : i32, i32
  }
  func.func @transform_3(%arg0: i32) -> (i32, i32) {
    %c0_i32 = arith.constant 0 : i32
    %c0_i32_0 = arith.constant 0 : i32
    return %arg0, %c0_i32 : i32, i32
  }
}

module attributes {stable_mosaic.version = 11 : i64} {
  func.func @_conv_tap_kernel(%arg0: i32, %arg1: i32, %arg2: memref<1x10x1x10x32xf32, #tpu.memory_space<vmem>>, %arg3: memref<9x32x32xf32, #tpu.memory_space<vmem>>, %arg4: memref<1x32xf32, #tpu.memory_space<vmem>>, %arg5: memref<1x1x8x32xf32, #tpu.memory_space<vmem>>, %arg6: memref<1x1x8x32xf32, #tpu.memory_space<vmem>>) attributes {dimension_semantics = [#tpu.dimension_semantics<parallel>, #tpu.dimension_semantics<parallel>], iteration_bounds = array<i64: 2, 8>, scalar_prefetch = 0 : i64, scratch_operands = 0 : i64, tpu.core_type = #tpu.core_type<tc>, window_params = [{transform_indices = @transform_0, window_bounds = array<i64: 1, 10, 1, 10, 32>}, {pipeline_mode = #tpu.pipeline_mode<synchronous>, transform_indices = @transform_1, window_bounds = array<i64: 9, 32, 32>}, {pipeline_mode = #tpu.pipeline_mode<synchronous>, transform_indices = @transform_2, window_bounds = array<i64: 1, 32>}, {transform_indices = @transform_3, window_bounds = array<i64: 1, 1, 8, 32>}, {transform_indices = @transform_4, window_bounds = array<i64: 1, 1, 8, 32>}]} {
    %c0 = arith.constant 0 : index
    %c0_0 = arith.constant 0 : index
    %0 = vector.load %arg4[%c0, %c0_0] : memref<1x32xf32, #tpu.memory_space<vmem>>, vector<1x32xf32>
    %1 = vector.shape_cast %0 : vector<1x32xf32> to vector<1x32xf32>
    %2 = vector.broadcast %1 : vector<1x32xf32> to vector<8x32xf32>
    %c0_1 = arith.constant 0 : index
    %c0_2 = arith.constant 0 : index
    %c0_3 = arith.constant 0 : index
    %c0_4 = arith.constant 0 : index
    %3 = vector.load %arg5[%c0_1, %c0_2, %c0_3, %c0_4] : memref<1x1x8x32xf32, #tpu.memory_space<vmem>>, vector<1x1x8x32xf32>
    %4 = vector.shape_cast %3 : vector<1x1x8x32xf32> to vector<8x32xf32>
    %5 = arith.addf %2, %4 : vector<8x32xf32>
    %c1_i32 = arith.constant 1 : i32
    %6 = arith.muli %arg1, %c1_i32 : i32
    %c0_i32 = arith.constant 0 : i32
    %7 = arith.addi %6, %c0_i32 : i32
    %c0_5 = arith.constant 0 : index
    %8 = arith.index_cast %7 : i32 to index
    %c0_6 = arith.constant 0 : index
    %c0_7 = arith.constant 0 : index
    %c0_8 = arith.constant 0 : index
    %9 = vector.load %arg2[%c0_5, %8, %c0_6, %c0_7, %c0_8] : memref<1x10x1x10x32xf32, #tpu.memory_space<vmem>>, vector<1x1x1x8x32xf32>
    %10 = vector.shape_cast %9 : vector<1x1x1x8x32xf32> to vector<8x32xf32>
    %c0_9 = arith.constant 0 : index
    %c0_10 = arith.constant 0 : index
    %c0_11 = arith.constant 0 : index
    %11 = vector.load %arg3[%c0_9, %c0_10, %c0_11] : memref<9x32x32xf32, #tpu.memory_space<vmem>>, vector<1x32x32xf32>
    %12 = vector.shape_cast %11 : vector<1x32x32xf32> to vector<32x32xf32>
    %cst = arith.constant dense<0.000000e+00> : vector<8x32xf32>
    %13 = tpu.matmul %10, %12, %cst {dimension_numbers = #tpu.dot_dimension_numbers<[1], [0], [0], [1], [0, 0, 1, 1], [], []>} : vector<8x32xf32>, vector<32x32xf32>, vector<8x32xf32> -> vector<8x32xf32>
    %14 = arith.addf %5, %13 : vector<8x32xf32>
    %c0_12 = arith.constant 0 : index
    %15 = arith.index_cast %7 : i32 to index
    %c0_13 = arith.constant 0 : index
    %c1 = arith.constant 1 : index
    %c0_14 = arith.constant 0 : index
    %16 = vector.load %arg2[%c0_12, %15, %c0_13, %c1, %c0_14] : memref<1x10x1x10x32xf32, #tpu.memory_space<vmem>>, vector<1x1x1x8x32xf32>
    %17 = vector.shape_cast %16 : vector<1x1x1x8x32xf32> to vector<8x32xf32>
    %c1_15 = arith.constant 1 : index
    %c0_16 = arith.constant 0 : index
    %c0_17 = arith.constant 0 : index
    %18 = vector.load %arg3[%c1_15, %c0_16, %c0_17] : memref<9x32x32xf32, #tpu.memory_space<vmem>>, vector<1x32x32xf32>
    %19 = vector.shape_cast %18 : vector<1x32x32xf32> to vector<32x32xf32>
    %cst_18 = arith.constant dense<0.000000e+00> : vector<8x32xf32>
    %20 = tpu.matmul %17, %19, %cst_18 {dimension_numbers = #tpu.dot_dimension_numbers<[1], [0], [0], [1], [0, 0, 1, 1], [], []>} : vector<8x32xf32>, vector<32x32xf32>, vector<8x32xf32> -> vector<8x32xf32>
    %21 = arith.addf %14, %20 : vector<8x32xf32>
    %c0_19 = arith.constant 0 : index
    %22 = arith.index_cast %7 : i32 to index
    %c0_20 = arith.constant 0 : index
    %c2 = arith.constant 2 : index
    %c0_21 = arith.constant 0 : index
    %23 = vector.load %arg2[%c0_19, %22, %c0_20, %c2, %c0_21] : memref<1x10x1x10x32xf32, #tpu.memory_space<vmem>>, vector<1x1x1x8x32xf32>
    %24 = vector.shape_cast %23 : vector<1x1x1x8x32xf32> to vector<8x32xf32>
    %c2_22 = arith.constant 2 : index
    %c0_23 = arith.constant 0 : index
    %c0_24 = arith.constant 0 : index
    %25 = vector.load %arg3[%c2_22, %c0_23, %c0_24] : memref<9x32x32xf32, #tpu.memory_space<vmem>>, vector<1x32x32xf32>
    %26 = vector.shape_cast %25 : vector<1x32x32xf32> to vector<32x32xf32>
    %cst_25 = arith.constant dense<0.000000e+00> : vector<8x32xf32>
    %27 = tpu.matmul %24, %26, %cst_25 {dimension_numbers = #tpu.dot_dimension_numbers<[1], [0], [0], [1], [0, 0, 1, 1], [], []>} : vector<8x32xf32>, vector<32x32xf32>, vector<8x32xf32> -> vector<8x32xf32>
    %28 = arith.addf %21, %27 : vector<8x32xf32>
    %c1_i32_26 = arith.constant 1 : i32
    %29 = arith.muli %arg1, %c1_i32_26 : i32
    %c1_i32_27 = arith.constant 1 : i32
    %30 = arith.addi %29, %c1_i32_27 : i32
    %c0_28 = arith.constant 0 : index
    %31 = arith.index_cast %30 : i32 to index
    %c0_29 = arith.constant 0 : index
    %c0_30 = arith.constant 0 : index
    %c0_31 = arith.constant 0 : index
    %32 = vector.load %arg2[%c0_28, %31, %c0_29, %c0_30, %c0_31] : memref<1x10x1x10x32xf32, #tpu.memory_space<vmem>>, vector<1x1x1x8x32xf32>
    %33 = vector.shape_cast %32 : vector<1x1x1x8x32xf32> to vector<8x32xf32>
    %c3 = arith.constant 3 : index
    %c0_32 = arith.constant 0 : index
    %c0_33 = arith.constant 0 : index
    %34 = vector.load %arg3[%c3, %c0_32, %c0_33] : memref<9x32x32xf32, #tpu.memory_space<vmem>>, vector<1x32x32xf32>
    %35 = vector.shape_cast %34 : vector<1x32x32xf32> to vector<32x32xf32>
    %cst_34 = arith.constant dense<0.000000e+00> : vector<8x32xf32>
    %36 = tpu.matmul %33, %35, %cst_34 {dimension_numbers = #tpu.dot_dimension_numbers<[1], [0], [0], [1], [0, 0, 1, 1], [], []>} : vector<8x32xf32>, vector<32x32xf32>, vector<8x32xf32> -> vector<8x32xf32>
    %37 = arith.addf %28, %36 : vector<8x32xf32>
    %c0_35 = arith.constant 0 : index
    %38 = arith.index_cast %30 : i32 to index
    %c0_36 = arith.constant 0 : index
    %c1_37 = arith.constant 1 : index
    %c0_38 = arith.constant 0 : index
    %39 = vector.load %arg2[%c0_35, %38, %c0_36, %c1_37, %c0_38] : memref<1x10x1x10x32xf32, #tpu.memory_space<vmem>>, vector<1x1x1x8x32xf32>
    %40 = vector.shape_cast %39 : vector<1x1x1x8x32xf32> to vector<8x32xf32>
    %c4 = arith.constant 4 : index
    %c0_39 = arith.constant 0 : index
    %c0_40 = arith.constant 0 : index
    %41 = vector.load %arg3[%c4, %c0_39, %c0_40] : memref<9x32x32xf32, #tpu.memory_space<vmem>>, vector<1x32x32xf32>
    %42 = vector.shape_cast %41 : vector<1x32x32xf32> to vector<32x32xf32>
    %cst_41 = arith.constant dense<0.000000e+00> : vector<8x32xf32>
    %43 = tpu.matmul %40, %42, %cst_41 {dimension_numbers = #tpu.dot_dimension_numbers<[1], [0], [0], [1], [0, 0, 1, 1], [], []>} : vector<8x32xf32>, vector<32x32xf32>, vector<8x32xf32> -> vector<8x32xf32>
    %44 = arith.addf %37, %43 : vector<8x32xf32>
    %c0_42 = arith.constant 0 : index
    %45 = arith.index_cast %30 : i32 to index
    %c0_43 = arith.constant 0 : index
    %c2_44 = arith.constant 2 : index
    %c0_45 = arith.constant 0 : index
    %46 = vector.load %arg2[%c0_42, %45, %c0_43, %c2_44, %c0_45] : memref<1x10x1x10x32xf32, #tpu.memory_space<vmem>>, vector<1x1x1x8x32xf32>
    %47 = vector.shape_cast %46 : vector<1x1x1x8x32xf32> to vector<8x32xf32>
    %c5 = arith.constant 5 : index
    %c0_46 = arith.constant 0 : index
    %c0_47 = arith.constant 0 : index
    %48 = vector.load %arg3[%c5, %c0_46, %c0_47] : memref<9x32x32xf32, #tpu.memory_space<vmem>>, vector<1x32x32xf32>
    %49 = vector.shape_cast %48 : vector<1x32x32xf32> to vector<32x32xf32>
    %cst_48 = arith.constant dense<0.000000e+00> : vector<8x32xf32>
    %50 = tpu.matmul %47, %49, %cst_48 {dimension_numbers = #tpu.dot_dimension_numbers<[1], [0], [0], [1], [0, 0, 1, 1], [], []>} : vector<8x32xf32>, vector<32x32xf32>, vector<8x32xf32> -> vector<8x32xf32>
    %51 = arith.addf %44, %50 : vector<8x32xf32>
    %c1_i32_49 = arith.constant 1 : i32
    %52 = arith.muli %arg1, %c1_i32_49 : i32
    %c2_i32 = arith.constant 2 : i32
    %53 = arith.addi %52, %c2_i32 : i32
    %c0_50 = arith.constant 0 : index
    %54 = arith.index_cast %53 : i32 to index
    %c0_51 = arith.constant 0 : index
    %c0_52 = arith.constant 0 : index
    %c0_53 = arith.constant 0 : index
    %55 = vector.load %arg2[%c0_50, %54, %c0_51, %c0_52, %c0_53] : memref<1x10x1x10x32xf32, #tpu.memory_space<vmem>>, vector<1x1x1x8x32xf32>
    %56 = vector.shape_cast %55 : vector<1x1x1x8x32xf32> to vector<8x32xf32>
    %c6 = arith.constant 6 : index
    %c0_54 = arith.constant 0 : index
    %c0_55 = arith.constant 0 : index
    %57 = vector.load %arg3[%c6, %c0_54, %c0_55] : memref<9x32x32xf32, #tpu.memory_space<vmem>>, vector<1x32x32xf32>
    %58 = vector.shape_cast %57 : vector<1x32x32xf32> to vector<32x32xf32>
    %cst_56 = arith.constant dense<0.000000e+00> : vector<8x32xf32>
    %59 = tpu.matmul %56, %58, %cst_56 {dimension_numbers = #tpu.dot_dimension_numbers<[1], [0], [0], [1], [0, 0, 1, 1], [], []>} : vector<8x32xf32>, vector<32x32xf32>, vector<8x32xf32> -> vector<8x32xf32>
    %60 = arith.addf %51, %59 : vector<8x32xf32>
    %c0_57 = arith.constant 0 : index
    %61 = arith.index_cast %53 : i32 to index
    %c0_58 = arith.constant 0 : index
    %c1_59 = arith.constant 1 : index
    %c0_60 = arith.constant 0 : index
    %62 = vector.load %arg2[%c0_57, %61, %c0_58, %c1_59, %c0_60] : memref<1x10x1x10x32xf32, #tpu.memory_space<vmem>>, vector<1x1x1x8x32xf32>
    %63 = vector.shape_cast %62 : vector<1x1x1x8x32xf32> to vector<8x32xf32>
    %c7 = arith.constant 7 : index
    %c0_61 = arith.constant 0 : index
    %c0_62 = arith.constant 0 : index
    %64 = vector.load %arg3[%c7, %c0_61, %c0_62] : memref<9x32x32xf32, #tpu.memory_space<vmem>>, vector<1x32x32xf32>
    %65 = vector.shape_cast %64 : vector<1x32x32xf32> to vector<32x32xf32>
    %cst_63 = arith.constant dense<0.000000e+00> : vector<8x32xf32>
    %66 = tpu.matmul %63, %65, %cst_63 {dimension_numbers = #tpu.dot_dimension_numbers<[1], [0], [0], [1], [0, 0, 1, 1], [], []>} : vector<8x32xf32>, vector<32x32xf32>, vector<8x32xf32> -> vector<8x32xf32>
    %67 = arith.addf %60, %66 : vector<8x32xf32>
    %c0_64 = arith.constant 0 : index
    %68 = arith.index_cast %53 : i32 to index
    %c0_65 = arith.constant 0 : index
    %c2_66 = arith.constant 2 : index
    %c0_67 = arith.constant 0 : index
    %69 = vector.load %arg2[%c0_64, %68, %c0_65, %c2_66, %c0_67] : memref<1x10x1x10x32xf32, #tpu.memory_space<vmem>>, vector<1x1x1x8x32xf32>
    %70 = vector.shape_cast %69 : vector<1x1x1x8x32xf32> to vector<8x32xf32>
    %c8 = arith.constant 8 : index
    %c0_68 = arith.constant 0 : index
    %c0_69 = arith.constant 0 : index
    %71 = vector.load %arg3[%c8, %c0_68, %c0_69] : memref<9x32x32xf32, #tpu.memory_space<vmem>>, vector<1x32x32xf32>
    %72 = vector.shape_cast %71 : vector<1x32x32xf32> to vector<32x32xf32>
    %cst_70 = arith.constant dense<0.000000e+00> : vector<8x32xf32>
    %73 = tpu.matmul %70, %72, %cst_70 {dimension_numbers = #tpu.dot_dimension_numbers<[1], [0], [0], [1], [0, 0, 1, 1], [], []>} : vector<8x32xf32>, vector<32x32xf32>, vector<8x32xf32> -> vector<8x32xf32>
    %74 = arith.addf %67, %73 : vector<8x32xf32>
    %c0_71 = arith.constant 0 : index
    %c0_72 = arith.constant 0 : index
    %c0_73 = arith.constant 0 : index
    %c0_74 = arith.constant 0 : index
    %75 = vector.load %arg6[%c0_71, %c0_72, %c0_73, %c0_74] : memref<1x1x8x32xf32, #tpu.memory_space<vmem>>, vector<1x1x8x32xf32>
    %76 = vector.shape_cast %75 : vector<1x1x8x32xf32> to vector<8x32xf32>
    %77 = vector.shape_cast %74 : vector<8x32xf32> to vector<1x1x8x32xf32>
    tpu.vector_store %arg6[%c0_71, %c0_72, %c0_73, %c0_74], %77 {strides = array<i32>} : memref<1x1x8x32xf32, #tpu.memory_space<vmem>>, vector<1x1x8x32xf32>,
    return
  }
  func.func @transform_0(%arg0: i32, %arg1: i32) -> (i32, i32, i32, i32, i32) {
    %c0_i32 = arith.constant 0 : i32
    %c0_i32_0 = arith.constant 0 : i32
    %c0_i32_1 = arith.constant 0 : i32
    %c0_i32_2 = arith.constant 0 : i32
    %c0_i32_3 = arith.constant 0 : i32
    return %arg0, %c0_i32, %c0_i32_0, %c0_i32_1, %c0_i32_2 : i32, i32, i32, i32, i32
  }
  func.func @transform_1(%arg0: i32, %arg1: i32) -> (i32, i32, i32) {
    %c0_i32 = arith.constant 0 : i32
    %c0_i32_0 = arith.constant 0 : i32
    %c0_i32_1 = arith.constant 0 : i32
    %c0_i32_2 = arith.constant 0 : i32
    return %c0_i32, %c0_i32_0, %c0_i32_1 : i32, i32, i32
  }
  func.func @transform_2(%arg0: i32, %arg1: i32) -> (i32, i32) {
    %c0_i32 = arith.constant 0 : i32
    %c0_i32_0 = arith.constant 0 : i32
    %c0_i32_1 = arith.constant 0 : i32
    return %c0_i32, %c0_i32_0 : i32, i32
  }
  func.func @transform_3(%arg0: i32, %arg1: i32) -> (i32, i32, i32, i32) {
    %c0_i32 = arith.constant 0 : i32
    %c0_i32_0 = arith.constant 0 : i32
    %c0_i32_1 = arith.constant 0 : i32
    return %arg0, %arg1, %c0_i32, %c0_i32_0 : i32, i32, i32, i32
  }
  func.func @transform_4(%arg0: i32, %arg1: i32) -> (i32, i32, i32, i32) {
    %c0_i32 = arith.constant 0 : i32
    %c0_i32_0 = arith.constant 0 : i32
    %c0_i32_1 = arith.constant 0 : i32
    return %arg0, %arg1, %c0_i32, %c0_i32_0 : i32, i32, i32, i32
  }
}

module attributes {stable_mosaic.version = 11 : i64} {
  func.func @_conv_tap_kernel(%arg0: i32, %arg1: i32, %arg2: memref<1x10x1x10x32xf32, #tpu.memory_space<vmem>>, %arg3: memref<9x32x32xf32, #tpu.memory_space<vmem>>, %arg4: memref<1x32xf32, #tpu.memory_space<vmem>>, %arg5: memref<1x1x8x32xf32, #tpu.memory_space<vmem>>) attributes {dimension_semantics = [#tpu.dimension_semantics<parallel>, #tpu.dimension_semantics<parallel>], iteration_bounds = array<i64: 2, 8>, scalar_prefetch = 0 : i64, scratch_operands = 0 : i64, tpu.core_type = #tpu.core_type<tc>, window_params = [{transform_indices = @transform_0, window_bounds = array<i64: 1, 10, 1, 10, 32>}, {pipeline_mode = #tpu.pipeline_mode<synchronous>, transform_indices = @transform_1, window_bounds = array<i64: 9, 32, 32>}, {pipeline_mode = #tpu.pipeline_mode<synchronous>, transform_indices = @transform_2, window_bounds = array<i64: 1, 32>}, {transform_indices = @transform_3, window_bounds = array<i64: 1, 1, 8, 32>}]} {
    %c0 = arith.constant 0 : index
    %c0_0 = arith.constant 0 : index
    %0 = vector.load %arg4[%c0, %c0_0] : memref<1x32xf32, #tpu.memory_space<vmem>>, vector<1x32xf32>
    %1 = vector.shape_cast %0 : vector<1x32xf32> to vector<1x32xf32>
    %2 = vector.broadcast %1 : vector<1x32xf32> to vector<8x32xf32>
    %c1_i32 = arith.constant 1 : i32
    %3 = arith.muli %arg1, %c1_i32 : i32
    %c0_i32 = arith.constant 0 : i32
    %4 = arith.addi %3, %c0_i32 : i32
    %c0_1 = arith.constant 0 : index
    %5 = arith.index_cast %4 : i32 to index
    %c0_2 = arith.constant 0 : index
    %c0_3 = arith.constant 0 : index
    %c0_4 = arith.constant 0 : index
    %6 = vector.load %arg2[%c0_1, %5, %c0_2, %c0_3, %c0_4] : memref<1x10x1x10x32xf32, #tpu.memory_space<vmem>>, vector<1x1x1x8x32xf32>
    %7 = vector.shape_cast %6 : vector<1x1x1x8x32xf32> to vector<8x32xf32>
    %c0_5 = arith.constant 0 : index
    %c0_6 = arith.constant 0 : index
    %c0_7 = arith.constant 0 : index
    %8 = vector.load %arg3[%c0_5, %c0_6, %c0_7] : memref<9x32x32xf32, #tpu.memory_space<vmem>>, vector<1x32x32xf32>
    %9 = vector.shape_cast %8 : vector<1x32x32xf32> to vector<32x32xf32>
    %cst = arith.constant dense<0.000000e+00> : vector<8x32xf32>
    %10 = tpu.matmul %7, %9, %cst {dimension_numbers = #tpu.dot_dimension_numbers<[1], [0], [0], [1], [0, 0, 1, 1], [], []>} : vector<8x32xf32>, vector<32x32xf32>, vector<8x32xf32> -> vector<8x32xf32>
    %11 = arith.addf %2, %10 : vector<8x32xf32>
    %c0_8 = arith.constant 0 : index
    %12 = arith.index_cast %4 : i32 to index
    %c0_9 = arith.constant 0 : index
    %c1 = arith.constant 1 : index
    %c0_10 = arith.constant 0 : index
    %13 = vector.load %arg2[%c0_8, %12, %c0_9, %c1, %c0_10] : memref<1x10x1x10x32xf32, #tpu.memory_space<vmem>>, vector<1x1x1x8x32xf32>
    %14 = vector.shape_cast %13 : vector<1x1x1x8x32xf32> to vector<8x32xf32>
    %c1_11 = arith.constant 1 : index
    %c0_12 = arith.constant 0 : index
    %c0_13 = arith.constant 0 : index
    %15 = vector.load %arg3[%c1_11, %c0_12, %c0_13] : memref<9x32x32xf32, #tpu.memory_space<vmem>>, vector<1x32x32xf32>
    %16 = vector.shape_cast %15 : vector<1x32x32xf32> to vector<32x32xf32>
    %cst_14 = arith.constant dense<0.000000e+00> : vector<8x32xf32>
    %17 = tpu.matmul %14, %16, %cst_14 {dimension_numbers = #tpu.dot_dimension_numbers<[1], [0], [0], [1], [0, 0, 1, 1], [], []>} : vector<8x32xf32>, vector<32x32xf32>, vector<8x32xf32> -> vector<8x32xf32>
    %18 = arith.addf %11, %17 : vector<8x32xf32>
    %c0_15 = arith.constant 0 : index
    %19 = arith.index_cast %4 : i32 to index
    %c0_16 = arith.constant 0 : index
    %c2 = arith.constant 2 : index
    %c0_17 = arith.constant 0 : index
    %20 = vector.load %arg2[%c0_15, %19, %c0_16, %c2, %c0_17] : memref<1x10x1x10x32xf32, #tpu.memory_space<vmem>>, vector<1x1x1x8x32xf32>
    %21 = vector.shape_cast %20 : vector<1x1x1x8x32xf32> to vector<8x32xf32>
    %c2_18 = arith.constant 2 : index
    %c0_19 = arith.constant 0 : index
    %c0_20 = arith.constant 0 : index
    %22 = vector.load %arg3[%c2_18, %c0_19, %c0_20] : memref<9x32x32xf32, #tpu.memory_space<vmem>>, vector<1x32x32xf32>
    %23 = vector.shape_cast %22 : vector<1x32x32xf32> to vector<32x32xf32>
    %cst_21 = arith.constant dense<0.000000e+00> : vector<8x32xf32>
    %24 = tpu.matmul %21, %23, %cst_21 {dimension_numbers = #tpu.dot_dimension_numbers<[1], [0], [0], [1], [0, 0, 1, 1], [], []>} : vector<8x32xf32>, vector<32x32xf32>, vector<8x32xf32> -> vector<8x32xf32>
    %25 = arith.addf %18, %24 : vector<8x32xf32>
    %c1_i32_22 = arith.constant 1 : i32
    %26 = arith.muli %arg1, %c1_i32_22 : i32
    %c1_i32_23 = arith.constant 1 : i32
    %27 = arith.addi %26, %c1_i32_23 : i32
    %c0_24 = arith.constant 0 : index
    %28 = arith.index_cast %27 : i32 to index
    %c0_25 = arith.constant 0 : index
    %c0_26 = arith.constant 0 : index
    %c0_27 = arith.constant 0 : index
    %29 = vector.load %arg2[%c0_24, %28, %c0_25, %c0_26, %c0_27] : memref<1x10x1x10x32xf32, #tpu.memory_space<vmem>>, vector<1x1x1x8x32xf32>
    %30 = vector.shape_cast %29 : vector<1x1x1x8x32xf32> to vector<8x32xf32>
    %c3 = arith.constant 3 : index
    %c0_28 = arith.constant 0 : index
    %c0_29 = arith.constant 0 : index
    %31 = vector.load %arg3[%c3, %c0_28, %c0_29] : memref<9x32x32xf32, #tpu.memory_space<vmem>>, vector<1x32x32xf32>
    %32 = vector.shape_cast %31 : vector<1x32x32xf32> to vector<32x32xf32>
    %cst_30 = arith.constant dense<0.000000e+00> : vector<8x32xf32>
    %33 = tpu.matmul %30, %32, %cst_30 {dimension_numbers = #tpu.dot_dimension_numbers<[1], [0], [0], [1], [0, 0, 1, 1], [], []>} : vector<8x32xf32>, vector<32x32xf32>, vector<8x32xf32> -> vector<8x32xf32>
    %34 = arith.addf %25, %33 : vector<8x32xf32>
    %c0_31 = arith.constant 0 : index
    %35 = arith.index_cast %27 : i32 to index
    %c0_32 = arith.constant 0 : index
    %c1_33 = arith.constant 1 : index
    %c0_34 = arith.constant 0 : index
    %36 = vector.load %arg2[%c0_31, %35, %c0_32, %c1_33, %c0_34] : memref<1x10x1x10x32xf32, #tpu.memory_space<vmem>>, vector<1x1x1x8x32xf32>
    %37 = vector.shape_cast %36 : vector<1x1x1x8x32xf32> to vector<8x32xf32>
    %c4 = arith.constant 4 : index
    %c0_35 = arith.constant 0 : index
    %c0_36 = arith.constant 0 : index
    %38 = vector.load %arg3[%c4, %c0_35, %c0_36] : memref<9x32x32xf32, #tpu.memory_space<vmem>>, vector<1x32x32xf32>
    %39 = vector.shape_cast %38 : vector<1x32x32xf32> to vector<32x32xf32>
    %cst_37 = arith.constant dense<0.000000e+00> : vector<8x32xf32>
    %40 = tpu.matmul %37, %39, %cst_37 {dimension_numbers = #tpu.dot_dimension_numbers<[1], [0], [0], [1], [0, 0, 1, 1], [], []>} : vector<8x32xf32>, vector<32x32xf32>, vector<8x32xf32> -> vector<8x32xf32>
    %41 = arith.addf %34, %40 : vector<8x32xf32>
    %c0_38 = arith.constant 0 : index
    %42 = arith.index_cast %27 : i32 to index
    %c0_39 = arith.constant 0 : index
    %c2_40 = arith.constant 2 : index
    %c0_41 = arith.constant 0 : index
    %43 = vector.load %arg2[%c0_38, %42, %c0_39, %c2_40, %c0_41] : memref<1x10x1x10x32xf32, #tpu.memory_space<vmem>>, vector<1x1x1x8x32xf32>
    %44 = vector.shape_cast %43 : vector<1x1x1x8x32xf32> to vector<8x32xf32>
    %c5 = arith.constant 5 : index
    %c0_42 = arith.constant 0 : index
    %c0_43 = arith.constant 0 : index
    %45 = vector.load %arg3[%c5, %c0_42, %c0_43] : memref<9x32x32xf32, #tpu.memory_space<vmem>>, vector<1x32x32xf32>
    %46 = vector.shape_cast %45 : vector<1x32x32xf32> to vector<32x32xf32>
    %cst_44 = arith.constant dense<0.000000e+00> : vector<8x32xf32>
    %47 = tpu.matmul %44, %46, %cst_44 {dimension_numbers = #tpu.dot_dimension_numbers<[1], [0], [0], [1], [0, 0, 1, 1], [], []>} : vector<8x32xf32>, vector<32x32xf32>, vector<8x32xf32> -> vector<8x32xf32>
    %48 = arith.addf %41, %47 : vector<8x32xf32>
    %c1_i32_45 = arith.constant 1 : i32
    %49 = arith.muli %arg1, %c1_i32_45 : i32
    %c2_i32 = arith.constant 2 : i32
    %50 = arith.addi %49, %c2_i32 : i32
    %c0_46 = arith.constant 0 : index
    %51 = arith.index_cast %50 : i32 to index
    %c0_47 = arith.constant 0 : index
    %c0_48 = arith.constant 0 : index
    %c0_49 = arith.constant 0 : index
    %52 = vector.load %arg2[%c0_46, %51, %c0_47, %c0_48, %c0_49] : memref<1x10x1x10x32xf32, #tpu.memory_space<vmem>>, vector<1x1x1x8x32xf32>
    %53 = vector.shape_cast %52 : vector<1x1x1x8x32xf32> to vector<8x32xf32>
    %c6 = arith.constant 6 : index
    %c0_50 = arith.constant 0 : index
    %c0_51 = arith.constant 0 : index
    %54 = vector.load %arg3[%c6, %c0_50, %c0_51] : memref<9x32x32xf32, #tpu.memory_space<vmem>>, vector<1x32x32xf32>
    %55 = vector.shape_cast %54 : vector<1x32x32xf32> to vector<32x32xf32>
    %cst_52 = arith.constant dense<0.000000e+00> : vector<8x32xf32>
    %56 = tpu.matmul %53, %55, %cst_52 {dimension_numbers = #tpu.dot_dimension_numbers<[1], [0], [0], [1], [0, 0, 1, 1], [], []>} : vector<8x32xf32>, vector<32x32xf32>, vector<8x32xf32> -> vector<8x32xf32>
    %57 = arith.addf %48, %56 : vector<8x32xf32>
    %c0_53 = arith.constant 0 : index
    %58 = arith.index_cast %50 : i32 to index
    %c0_54 = arith.constant 0 : index
    %c1_55 = arith.constant 1 : index
    %c0_56 = arith.constant 0 : index
    %59 = vector.load %arg2[%c0_53, %58, %c0_54, %c1_55, %c0_56] : memref<1x10x1x10x32xf32, #tpu.memory_space<vmem>>, vector<1x1x1x8x32xf32>
    %60 = vector.shape_cast %59 : vector<1x1x1x8x32xf32> to vector<8x32xf32>
    %c7 = arith.constant 7 : index
    %c0_57 = arith.constant 0 : index
    %c0_58 = arith.constant 0 : index
    %61 = vector.load %arg3[%c7, %c0_57, %c0_58] : memref<9x32x32xf32, #tpu.memory_space<vmem>>, vector<1x32x32xf32>
    %62 = vector.shape_cast %61 : vector<1x32x32xf32> to vector<32x32xf32>
    %cst_59 = arith.constant dense<0.000000e+00> : vector<8x32xf32>
    %63 = tpu.matmul %60, %62, %cst_59 {dimension_numbers = #tpu.dot_dimension_numbers<[1], [0], [0], [1], [0, 0, 1, 1], [], []>} : vector<8x32xf32>, vector<32x32xf32>, vector<8x32xf32> -> vector<8x32xf32>
    %64 = arith.addf %57, %63 : vector<8x32xf32>
    %c0_60 = arith.constant 0 : index
    %65 = arith.index_cast %50 : i32 to index
    %c0_61 = arith.constant 0 : index
    %c2_62 = arith.constant 2 : index
    %c0_63 = arith.constant 0 : index
    %66 = vector.load %arg2[%c0_60, %65, %c0_61, %c2_62, %c0_63] : memref<1x10x1x10x32xf32, #tpu.memory_space<vmem>>, vector<1x1x1x8x32xf32>
    %67 = vector.shape_cast %66 : vector<1x1x1x8x32xf32> to vector<8x32xf32>
    %c8 = arith.constant 8 : index
    %c0_64 = arith.constant 0 : index
    %c0_65 = arith.constant 0 : index
    %68 = vector.load %arg3[%c8, %c0_64, %c0_65] : memref<9x32x32xf32, #tpu.memory_space<vmem>>, vector<1x32x32xf32>
    %69 = vector.shape_cast %68 : vector<1x32x32xf32> to vector<32x32xf32>
    %cst_66 = arith.constant dense<0.000000e+00> : vector<8x32xf32>
    %70 = tpu.matmul %67, %69, %cst_66 {dimension_numbers = #tpu.dot_dimension_numbers<[1], [0], [0], [1], [0, 0, 1, 1], [], []>} : vector<8x32xf32>, vector<32x32xf32>, vector<8x32xf32> -> vector<8x32xf32>
    %71 = arith.addf %64, %70 : vector<8x32xf32>
    %c0_67 = arith.constant 0 : index
    %c0_68 = arith.constant 0 : index
    %c0_69 = arith.constant 0 : index
    %c0_70 = arith.constant 0 : index
    %72 = vector.load %arg5[%c0_67, %c0_68, %c0_69, %c0_70] : memref<1x1x8x32xf32, #tpu.memory_space<vmem>>, vector<1x1x8x32xf32>
    %73 = vector.shape_cast %72 : vector<1x1x8x32xf32> to vector<8x32xf32>
    %74 = vector.shape_cast %71 : vector<8x32xf32> to vector<1x1x8x32xf32>
    tpu.vector_store %arg5[%c0_67, %c0_68, %c0_69, %c0_70], %74 {strides = array<i32>} : memref<1x1x8x32xf32, #tpu.memory_space<vmem>>, vector<1x1x8x32xf32>,
    return
  }
  func.func @transform_0(%arg0: i32, %arg1: i32) -> (i32, i32, i32, i32, i32) {
    %c0_i32 = arith.constant 0 : i32
    %c0_i32_0 = arith.constant 0 : i32
    %c0_i32_1 = arith.constant 0 : i32
    %c0_i32_2 = arith.constant 0 : i32
    %c0_i32_3 = arith.constant 0 : i32
    return %arg0, %c0_i32, %c0_i32_0, %c0_i32_1, %c0_i32_2 : i32, i32, i32, i32, i32
  }
  func.func @transform_1(%arg0: i32, %arg1: i32) -> (i32, i32, i32) {
    %c0_i32 = arith.constant 0 : i32
    %c0_i32_0 = arith.constant 0 : i32
    %c0_i32_1 = arith.constant 0 : i32
    %c0_i32_2 = arith.constant 0 : i32
    return %c0_i32, %c0_i32_0, %c0_i32_1 : i32, i32, i32
  }
  func.func @transform_2(%arg0: i32, %arg1: i32) -> (i32, i32) {
    %c0_i32 = arith.constant 0 : i32
    %c0_i32_0 = arith.constant 0 : i32
    %c0_i32_1 = arith.constant 0 : i32
    return %c0_i32, %c0_i32_0 : i32, i32
  }
  func.func @transform_3(%arg0: i32, %arg1: i32) -> (i32, i32, i32, i32) {
    %c0_i32 = arith.constant 0 : i32
    %c0_i32_0 = arith.constant 0 : i32
    %c0_i32_1 = arith.constant 0 : i32
    return %arg0, %arg1, %c0_i32, %c0_i32_0 : i32, i32, i32, i32
  }
}

module attributes {stable_mosaic.version = 11 : i64} {
  func.func @_conv_tap_kernel(%arg0: i32, %arg1: i32, %arg2: memref<1x10x2x5x32xf32, #tpu.memory_space<vmem>>, %arg3: memref<9x32x64xf32, #tpu.memory_space<vmem>>, %arg4: memref<1x64xf32, #tpu.memory_space<vmem>>, %arg5: memref<1x1x4x64xf32, #tpu.memory_space<vmem>>) attributes {dimension_semantics = [#tpu.dimension_semantics<parallel>, #tpu.dimension_semantics<parallel>], iteration_bounds = array<i64: 2, 4>, scalar_prefetch = 0 : i64, scratch_operands = 0 : i64, tpu.core_type = #tpu.core_type<tc>, window_params = [{transform_indices = @transform_0, window_bounds = array<i64: 1, 10, 2, 5, 32>}, {pipeline_mode = #tpu.pipeline_mode<synchronous>, transform_indices = @transform_1, window_bounds = array<i64: 9, 32, 64>}, {pipeline_mode = #tpu.pipeline_mode<synchronous>, transform_indices = @transform_2, window_bounds = array<i64: 1, 64>}, {transform_indices = @transform_3, window_bounds = array<i64: 1, 1, 4, 64>}]} {
    %c0 = arith.constant 0 : index
    %c0_0 = arith.constant 0 : index
    %0 = vector.load %arg4[%c0, %c0_0] : memref<1x64xf32, #tpu.memory_space<vmem>>, vector<1x64xf32>
    %1 = vector.shape_cast %0 : vector<1x64xf32> to vector<1x64xf32>
    %2 = vector.broadcast %1 : vector<1x64xf32> to vector<4x64xf32>
    %c2_i32 = arith.constant 2 : i32
    %3 = arith.muli %arg1, %c2_i32 : i32
    %c0_i32 = arith.constant 0 : i32
    %4 = arith.addi %3, %c0_i32 : i32
    %c0_1 = arith.constant 0 : index
    %5 = arith.index_cast %4 : i32 to index
    %c0_2 = arith.constant 0 : index
    %c0_3 = arith.constant 0 : index
    %c0_4 = arith.constant 0 : index
    %6 = vector.load %arg2[%c0_1, %5, %c0_2, %c0_3, %c0_4] : memref<1x10x2x5x32xf32, #tpu.memory_space<vmem>>, vector<1x1x1x4x32xf32>
    %7 = vector.shape_cast %6 : vector<1x1x1x4x32xf32> to vector<4x32xf32>
    %c0_5 = arith.constant 0 : index
    %c0_6 = arith.constant 0 : index
    %c0_7 = arith.constant 0 : index
    %8 = vector.load %arg3[%c0_5, %c0_6, %c0_7] : memref<9x32x64xf32, #tpu.memory_space<vmem>>, vector<1x32x64xf32>
    %9 = vector.shape_cast %8 : vector<1x32x64xf32> to vector<32x64xf32>
    %cst = arith.constant dense<0.000000e+00> : vector<4x64xf32>
    %10 = tpu.matmul %7, %9, %cst {dimension_numbers = #tpu.dot_dimension_numbers<[1], [0], [0], [1], [0, 0, 1, 1], [], []>} : vector<4x32xf32>, vector<32x64xf32>, vector<4x64xf32> -> vector<4x64xf32>
    %11 = arith.addf %2, %10 : vector<4x64xf32>
    %c0_8 = arith.constant 0 : index
    %12 = arith.index_cast %4 : i32 to index
    %c1 = arith.constant 1 : index
    %c0_9 = arith.constant 0 : index
    %c0_10 = arith.constant 0 : index
    %13 = vector.load %arg2[%c0_8, %12, %c1, %c0_9, %c0_10] : memref<1x10x2x5x32xf32, #tpu.memory_space<vmem>>, vector<1x1x1x4x32xf32>
    %14 = vector.shape_cast %13 : vector<1x1x1x4x32xf32> to vector<4x32xf32>
    %c1_11 = arith.constant 1 : index
    %c0_12 = arith.constant 0 : index
    %c0_13 = arith.constant 0 : index
    %15 = vector.load %arg3[%c1_11, %c0_12, %c0_13] : memref<9x32x64xf32, #tpu.memory_space<vmem>>, vector<1x32x64xf32>
    %16 = vector.shape_cast %15 : vector<1x32x64xf32> to vector<32x64xf32>
    %cst_14 = arith.constant dense<0.000000e+00> : vector<4x64xf32>
    %17 = tpu.matmul %14, %16, %cst_14 {dimension_numbers = #tpu.dot_dimension_numbers<[1], [0], [0], [1], [0, 0, 1, 1], [], []>} : vector<4x32xf32>, vector<32x64xf32>, vector<4x64xf32> -> vector<4x64xf32>
    %18 = arith.addf %11, %17 : vector<4x64xf32>
    %c0_15 = arith.constant 0 : index
    %19 = arith.index_cast %4 : i32 to index
    %c0_16 = arith.constant 0 : index
    %c1_17 = arith.constant 1 : index
    %c0_18 = arith.constant 0 : index
    %20 = vector.load %arg2[%c0_15, %19, %c0_16, %c1_17, %c0_18] : memref<1x10x2x5x32xf32, #tpu.memory_space<vmem>>, vector<1x1x1x4x32xf32>
    %21 = vector.shape_cast %20 : vector<1x1x1x4x32xf32> to vector<4x32xf32>
    %c2 = arith.constant 2 : index
    %c0_19 = arith.constant 0 : index
    %c0_20 = arith.constant 0 : index
    %22 = vector.load %arg3[%c2, %c0_19, %c0_20] : memref<9x32x64xf32, #tpu.memory_space<vmem>>, vector<1x32x64xf32>
    %23 = vector.shape_cast %22 : vector<1x32x64xf32> to vector<32x64xf32>
    %cst_21 = arith.constant dense<0.000000e+00> : vector<4x64xf32>
    %24 = tpu.matmul %21, %23, %cst_21 {dimension_numbers = #tpu.dot_dimension_numbers<[1], [0], [0], [1], [0, 0, 1, 1], [], []>} : vector<4x32xf32>, vector<32x64xf32>, vector<4x64xf32> -> vector<4x64xf32>
    %25 = arith.addf %18, %24 : vector<4x64xf32>
    %c2_i32_22 = arith.constant 2 : i32
    %26 = arith.muli %arg1, %c2_i32_22 : i32
    %c1_i32 = arith.constant 1 : i32
    %27 = arith.addi %26, %c1_i32 : i32
    %c0_23 = arith.constant 0 : index
    %28 = arith.index_cast %27 : i32 to index
    %c0_24 = arith.constant 0 : index
    %c0_25 = arith.constant 0 : index
    %c0_26 = arith.constant 0 : index
    %29 = vector.load %arg2[%c0_23, %28, %c0_24, %c0_25, %c0_26] : memref<1x10x2x5x32xf32, #tpu.memory_space<vmem>>, vector<1x1x1x4x32xf32>
    %30 = vector.shape_cast %29 : vector<1x1x1x4x32xf32> to vector<4x32xf32>
    %c3 = arith.constant 3 : index
    %c0_27 = arith.constant 0 : index
    %c0_28 = arith.constant 0 : index
    %31 = vector.load %arg3[%c3, %c0_27, %c0_28] : memref<9x32x64xf32, #tpu.memory_space<vmem>>, vector<1x32x64xf32>
    %32 = vector.shape_cast %31 : vector<1x32x64xf32> to vector<32x64xf32>
    %cst_29 = arith.constant dense<0.000000e+00> : vector<4x64xf32>
    %33 = tpu.matmul %30, %32, %cst_29 {dimension_numbers = #tpu.dot_dimension_numbers<[1], [0], [0], [1], [0, 0, 1, 1], [], []>} : vector<4x32xf32>, vector<32x64xf32>, vector<4x64xf32> -> vector<4x64xf32>
    %34 = arith.addf %25, %33 : vector<4x64xf32>
    %c0_30 = arith.constant 0 : index
    %35 = arith.index_cast %27 : i32 to index
    %c1_31 = arith.constant 1 : index
    %c0_32 = arith.constant 0 : index
    %c0_33 = arith.constant 0 : index
    %36 = vector.load %arg2[%c0_30, %35, %c1_31, %c0_32, %c0_33] : memref<1x10x2x5x32xf32, #tpu.memory_space<vmem>>, vector<1x1x1x4x32xf32>
    %37 = vector.shape_cast %36 : vector<1x1x1x4x32xf32> to vector<4x32xf32>
    %c4 = arith.constant 4 : index
    %c0_34 = arith.constant 0 : index
    %c0_35 = arith.constant 0 : index
    %38 = vector.load %arg3[%c4, %c0_34, %c0_35] : memref<9x32x64xf32, #tpu.memory_space<vmem>>, vector<1x32x64xf32>
    %39 = vector.shape_cast %38 : vector<1x32x64xf32> to vector<32x64xf32>
    %cst_36 = arith.constant dense<0.000000e+00> : vector<4x64xf32>
    %40 = tpu.matmul %37, %39, %cst_36 {dimension_numbers = #tpu.dot_dimension_numbers<[1], [0], [0], [1], [0, 0, 1, 1], [], []>} : vector<4x32xf32>, vector<32x64xf32>, vector<4x64xf32> -> vector<4x64xf32>
    %41 = arith.addf %34, %40 : vector<4x64xf32>
    %c0_37 = arith.constant 0 : index
    %42 = arith.index_cast %27 : i32 to index
    %c0_38 = arith.constant 0 : index
    %c1_39 = arith.constant 1 : index
    %c0_40 = arith.constant 0 : index
    %43 = vector.load %arg2[%c0_37, %42, %c0_38, %c1_39, %c0_40] : memref<1x10x2x5x32xf32, #tpu.memory_space<vmem>>, vector<1x1x1x4x32xf32>
    %44 = vector.shape_cast %43 : vector<1x1x1x4x32xf32> to vector<4x32xf32>
    %c5 = arith.constant 5 : index
    %c0_41 = arith.constant 0 : index
    %c0_42 = arith.constant 0 : index
    %45 = vector.load %arg3[%c5, %c0_41, %c0_42] : memref<9x32x64xf32, #tpu.memory_space<vmem>>, vector<1x32x64xf32>
    %46 = vector.shape_cast %45 : vector<1x32x64xf32> to vector<32x64xf32>
    %cst_43 = arith.constant dense<0.000000e+00> : vector<4x64xf32>
    %47 = tpu.matmul %44, %46, %cst_43 {dimension_numbers = #tpu.dot_dimension_numbers<[1], [0], [0], [1], [0, 0, 1, 1], [], []>} : vector<4x32xf32>, vector<32x64xf32>, vector<4x64xf32> -> vector<4x64xf32>
    %48 = arith.addf %41, %47 : vector<4x64xf32>
    %c2_i32_44 = arith.constant 2 : i32
    %49 = arith.muli %arg1, %c2_i32_44 : i32
    %c2_i32_45 = arith.constant 2 : i32
    %50 = arith.addi %49, %c2_i32_45 : i32
    %c0_46 = arith.constant 0 : index
    %51 = arith.index_cast %50 : i32 to index
    %c0_47 = arith.constant 0 : index
    %c0_48 = arith.constant 0 : index
    %c0_49 = arith.constant 0 : index
    %52 = vector.load %arg2[%c0_46, %51, %c0_47, %c0_48, %c0_49] : memref<1x10x2x5x32xf32, #tpu.memory_space<vmem>>, vector<1x1x1x4x32xf32>
    %53 = vector.shape_cast %52 : vector<1x1x1x4x32xf32> to vector<4x32xf32>
    %c6 = arith.constant 6 : index
    %c0_50 = arith.constant 0 : index
    %c0_51 = arith.constant 0 : index
    %54 = vector.load %arg3[%c6, %c0_50, %c0_51] : memref<9x32x64xf32, #tpu.memory_space<vmem>>, vector<1x32x64xf32>
    %55 = vector.shape_cast %54 : vector<1x32x64xf32> to vector<32x64xf32>
    %cst_52 = arith.constant dense<0.000000e+00> : vector<4x64xf32>
    %56 = tpu.matmul %53, %55, %cst_52 {dimension_numbers = #tpu.dot_dimension_numbers<[1], [0], [0], [1], [0, 0, 1, 1], [], []>} : vector<4x32xf32>, vector<32x64xf32>, vector<4x64xf32> -> vector<4x64xf32>
    %57 = arith.addf %48, %56 : vector<4x64xf32>
    %c0_53 = arith.constant 0 : index
    %58 = arith.index_cast %50 : i32 to index
    %c1_54 = arith.constant 1 : index
    %c0_55 = arith.constant 0 : index
    %c0_56 = arith.constant 0 : index
    %59 = vector.load %arg2[%c0_53, %58, %c1_54, %c0_55, %c0_56] : memref<1x10x2x5x32xf32, #tpu.memory_space<vmem>>, vector<1x1x1x4x32xf32>
    %60 = vector.shape_cast %59 : vector<1x1x1x4x32xf32> to vector<4x32xf32>
    %c7 = arith.constant 7 : index
    %c0_57 = arith.constant 0 : index
    %c0_58 = arith.constant 0 : index
    %61 = vector.load %arg3[%c7, %c0_57, %c0_58] : memref<9x32x64xf32, #tpu.memory_space<vmem>>, vector<1x32x64xf32>
    %62 = vector.shape_cast %61 : vector<1x32x64xf32> to vector<32x64xf32>
    %cst_59 = arith.constant dense<0.000000e+00> : vector<4x64xf32>
    %63 = tpu.matmul %60, %62, %cst_59 {dimension_numbers = #tpu.dot_dimension_numbers<[1], [0], [0], [1], [0, 0, 1, 1], [], []>} : vector<4x32xf32>, vector<32x64xf32>, vector<4x64xf32> -> vector<4x64xf32>
    %64 = arith.addf %57, %63 : vector<4x64xf32>
    %c0_60 = arith.constant 0 : index
    %65 = arith.index_cast %50 : i32 to index
    %c0_61 = arith.constant 0 : index
    %c1_62 = arith.constant 1 : index
    %c0_63 = arith.constant 0 : index
    %66 = vector.load %arg2[%c0_60, %65, %c0_61, %c1_62, %c0_63] : memref<1x10x2x5x32xf32, #tpu.memory_space<vmem>>, vector<1x1x1x4x32xf32>
    %67 = vector.shape_cast %66 : vector<1x1x1x4x32xf32> to vector<4x32xf32>
    %c8 = arith.constant 8 : index
    %c0_64 = arith.constant 0 : index
    %c0_65 = arith.constant 0 : index
    %68 = vector.load %arg3[%c8, %c0_64, %c0_65] : memref<9x32x64xf32, #tpu.memory_space<vmem>>, vector<1x32x64xf32>
    %69 = vector.shape_cast %68 : vector<1x32x64xf32> to vector<32x64xf32>
    %cst_66 = arith.constant dense<0.000000e+00> : vector<4x64xf32>
    %70 = tpu.matmul %67, %69, %cst_66 {dimension_numbers = #tpu.dot_dimension_numbers<[1], [0], [0], [1], [0, 0, 1, 1], [], []>} : vector<4x32xf32>, vector<32x64xf32>, vector<4x64xf32> -> vector<4x64xf32>
    %71 = arith.addf %64, %70 : vector<4x64xf32>
    %c0_67 = arith.constant 0 : index
    %c0_68 = arith.constant 0 : index
    %c0_69 = arith.constant 0 : index
    %c0_70 = arith.constant 0 : index
    %72 = vector.load %arg5[%c0_67, %c0_68, %c0_69, %c0_70] : memref<1x1x4x64xf32, #tpu.memory_space<vmem>>, vector<1x1x4x64xf32>
    %73 = vector.shape_cast %72 : vector<1x1x4x64xf32> to vector<4x64xf32>
    %74 = vector.shape_cast %71 : vector<4x64xf32> to vector<1x1x4x64xf32>
    tpu.vector_store %arg5[%c0_67, %c0_68, %c0_69, %c0_70], %74 {strides = array<i32>} : memref<1x1x4x64xf32, #tpu.memory_space<vmem>>, vector<1x1x4x64xf32>,
    return
  }
  func.func @transform_0(%arg0: i32, %arg1: i32) -> (i32, i32, i32, i32, i32) {
    %c0_i32 = arith.constant 0 : i32
    %c0_i32_0 = arith.constant 0 : i32
    %c0_i32_1 = arith.constant 0 : i32
    %c0_i32_2 = arith.constant 0 : i32
    %c0_i32_3 = arith.constant 0 : i32
    return %arg0, %c0_i32, %c0_i32_0, %c0_i32_1, %c0_i32_2 : i32, i32, i32, i32, i32
  }
  func.func @transform_1(%arg0: i32, %arg1: i32) -> (i32, i32, i32) {
    %c0_i32 = arith.constant 0 : i32
    %c0_i32_0 = arith.constant 0 : i32
    %c0_i32_1 = arith.constant 0 : i32
    %c0_i32_2 = arith.constant 0 : i32
    return %c0_i32, %c0_i32_0, %c0_i32_1 : i32, i32, i32
  }
  func.func @transform_2(%arg0: i32, %arg1: i32) -> (i32, i32) {
    %c0_i32 = arith.constant 0 : i32
    %c0_i32_0 = arith.constant 0 : i32
    %c0_i32_1 = arith.constant 0 : i32
    return %c0_i32, %c0_i32_0 : i32, i32
  }
  func.func @transform_3(%arg0: i32, %arg1: i32) -> (i32, i32, i32, i32) {
    %c0_i32 = arith.constant 0 : i32
    %c0_i32_0 = arith.constant 0 : i32
    %c0_i32_1 = arith.constant 0 : i32
    return %arg0, %arg1, %c0_i32, %c0_i32_0 : i32, i32, i32, i32
  }
}

module attributes {stable_mosaic.version = 11 : i64} {
  func.func @_bn_stats_kernel(%arg0: i32, %arg1: memref<8x256xf32, #tpu.memory_space<vmem>>, %arg2: memref<1x256xf32, #tpu.memory_space<vmem>>, %arg3: memref<1x256xf32, #tpu.memory_space<vmem>>) attributes {dimension_semantics = [#tpu.dimension_semantics<arbitrary>], iteration_bounds = array<i64: 1>, scalar_prefetch = 0 : i64, scratch_operands = 0 : i64, tpu.core_type = #tpu.core_type<tc>, window_params = [{transform_indices = @transform_0, window_bounds = array<i64: 8, 256>}, {pipeline_mode = #tpu.pipeline_mode<synchronous>, transform_indices = @transform_1, window_bounds = array<i64: 1, 256>}, {pipeline_mode = #tpu.pipeline_mode<synchronous>, transform_indices = @transform_2, window_bounds = array<i64: 1, 256>}]} {
    %c0_i32 = arith.constant 0 : i32
    %0 = arith.cmpi eq, %arg0, %c0_i32 : i32
    %1 = arith.extui %0 : i1 to i32
    %c0_i32_0 = arith.constant 0 : i32
    %2 = arith.cmpi ne, %1, %c0_i32_0 : i32
    scf.if %2 {
      %cst_11 = arith.constant 0.000000e+00 : f32
      %15 = vector.broadcast %cst_11 : f32 to vector<1x256xf32>
      %c0_12 = arith.constant 0 : index
      %c0_13 = arith.constant 0 : index
      %16 = vector.load %arg2[%c0_12, %c0_13] : memref<1x256xf32, #tpu.memory_space<vmem>>, vector<1x256xf32>
      tpu.vector_store %arg2[%c0_12, %c0_13], %15 {strides = array<i32>} : memref<1x256xf32, #tpu.memory_space<vmem>>, vector<1x256xf32>,
      %cst_14 = arith.constant 0.000000e+00 : f32
      %17 = vector.broadcast %cst_14 : f32 to vector<1x256xf32>
      %c0_15 = arith.constant 0 : index
      %c0_16 = arith.constant 0 : index
      %18 = vector.load %arg3[%c0_15, %c0_16] : memref<1x256xf32, #tpu.memory_space<vmem>>, vector<1x256xf32>
      tpu.vector_store %arg3[%c0_15, %c0_16], %17 {strides = array<i32>} : memref<1x256xf32, #tpu.memory_space<vmem>>, vector<1x256xf32>,
    } else {
    }
    %c0 = arith.constant 0 : index
    %c0_1 = arith.constant 0 : index
    %3 = vector.load %arg1[%c0, %c0_1] : memref<8x256xf32, #tpu.memory_space<vmem>>, vector<8x256xf32>
    %c0_2 = arith.constant 0 : index
    %c0_3 = arith.constant 0 : index
    %4 = vector.load %arg2[%c0_2, %c0_3] : memref<1x256xf32, #tpu.memory_space<vmem>>, vector<1x256xf32>
    %cst = arith.constant dense<0.000000e+00> : vector<256xf32>
    %5 = vector.multi_reduction <add>, %3, %cst [0] : vector<8x256xf32> to vector<256xf32>
    %6 = vector.shape_cast %5 : vector<256xf32> to vector<1x256xf32>
    %7 = arith.addf %4, %6 : vector<1x256xf32>
    %c0_4 = arith.constant 0 : index
    %c0_5 = arith.constant 0 : index
    %8 = vector.load %arg2[%c0_4, %c0_5] : memref<1x256xf32, #tpu.memory_space<vmem>>, vector<1x256xf32>
    tpu.vector_store %arg2[%c0_4, %c0_5], %7 {strides = array<i32>} : memref<1x256xf32, #tpu.memory_space<vmem>>, vector<1x256xf32>,
    %c0_6 = arith.constant 0 : index
    %c0_7 = arith.constant 0 : index
    %9 = vector.load %arg3[%c0_6, %c0_7] : memref<1x256xf32, #tpu.memory_space<vmem>>, vector<1x256xf32>
    %10 = arith.mulf %3, %3 : vector<8x256xf32>
    %cst_8 = arith.constant dense<0.000000e+00> : vector<256xf32>
    %11 = vector.multi_reduction <add>, %10, %cst_8 [0] : vector<8x256xf32> to vector<256xf32>
    %12 = vector.shape_cast %11 : vector<256xf32> to vector<1x256xf32>
    %13 = arith.addf %9, %12 : vector<1x256xf32>
    %c0_9 = arith.constant 0 : index
    %c0_10 = arith.constant 0 : index
    %14 = vector.load %arg3[%c0_9, %c0_10] : memref<1x256xf32, #tpu.memory_space<vmem>>, vector<1x256xf32>
    tpu.vector_store %arg3[%c0_9, %c0_10], %13 {strides = array<i32>} : memref<1x256xf32, #tpu.memory_space<vmem>>, vector<1x256xf32>,
    return
  }
  func.func @transform_0(%arg0: i32) -> (i32, i32) {
    %c0_i32 = arith.constant 0 : i32
    %c0_i32_0 = arith.constant 0 : i32
    return %arg0, %c0_i32 : i32, i32
  }
  func.func @transform_1(%arg0: i32) -> (i32, i32) {
    %c0_i32 = arith.constant 0 : i32
    %c0_i32_0 = arith.constant 0 : i32
    %c0_i32_1 = arith.constant 0 : i32
    return %c0_i32, %c0_i32_0 : i32, i32
  }
  func.func @transform_2(%arg0: i32) -> (i32, i32) {
    %c0_i32 = arith.constant 0 : i32
    %c0_i32_0 = arith.constant 0 : i32
    %c0_i32_1 = arith.constant 0 : i32
    return %c0_i32, %c0_i32_0 : i32, i32
  }
}

module attributes {stable_mosaic.version = 11 : i64} {
  func.func @_bn_apply_kernel(%arg0: i32, %arg1: memref<8x256xf32, #tpu.memory_space<vmem>>, %arg2: memref<1x256xf32, #tpu.memory_space<vmem>>, %arg3: memref<1x256xf32, #tpu.memory_space<vmem>>, %arg4: memref<8x256xf32, #tpu.memory_space<vmem>>) attributes {dimension_semantics = [#tpu.dimension_semantics<parallel>], iteration_bounds = array<i64: 1>, scalar_prefetch = 0 : i64, scratch_operands = 0 : i64, tpu.core_type = #tpu.core_type<tc>, window_params = [{transform_indices = @transform_0, window_bounds = array<i64: 8, 256>}, {pipeline_mode = #tpu.pipeline_mode<synchronous>, transform_indices = @transform_1, window_bounds = array<i64: 1, 256>}, {pipeline_mode = #tpu.pipeline_mode<synchronous>, transform_indices = @transform_2, window_bounds = array<i64: 1, 256>}, {transform_indices = @transform_3, window_bounds = array<i64: 8, 256>}]} {
    %c0 = arith.constant 0 : index
    %c0_0 = arith.constant 0 : index
    %0 = vector.load %arg1[%c0, %c0_0] : memref<8x256xf32, #tpu.memory_space<vmem>>, vector<8x256xf32>
    %c0_1 = arith.constant 0 : index
    %c0_2 = arith.constant 0 : index
    %1 = vector.load %arg2[%c0_1, %c0_2] : memref<1x256xf32, #tpu.memory_space<vmem>>, vector<1x256xf32>
    %2 = vector.broadcast %1 : vector<1x256xf32> to vector<8x256xf32>
    %3 = arith.mulf %0, %2 : vector<8x256xf32>
    %c0_3 = arith.constant 0 : index
    %c0_4 = arith.constant 0 : index
    %4 = vector.load %arg3[%c0_3, %c0_4] : memref<1x256xf32, #tpu.memory_space<vmem>>, vector<1x256xf32>
    %5 = vector.broadcast %4 : vector<1x256xf32> to vector<8x256xf32>
    %6 = arith.addf %3, %5 : vector<8x256xf32>
    %cst = arith.constant 0.000000e+00 : f32
    %7 = vector.broadcast %cst : f32 to vector<8x256xf32>
    %8 = arith.cmpf oge, %6, %7 : vector<8x256xf32>
    %cst_5 = arith.constant 1.000000e-01 : f32
    %9 = vector.broadcast %cst_5 : f32 to vector<8x256xf32>
    %10 = arith.mulf %9, %6 : vector<8x256xf32>
    %11 = arith.select %8, %6, %10 : vector<8x256xi1>, vector<8x256xf32>
    %c0_6 = arith.constant 0 : index
    %c0_7 = arith.constant 0 : index
    %12 = vector.load %arg4[%c0_6, %c0_7] : memref<8x256xf32, #tpu.memory_space<vmem>>, vector<8x256xf32>
    tpu.vector_store %arg4[%c0_6, %c0_7], %11 {strides = array<i32>} : memref<8x256xf32, #tpu.memory_space<vmem>>, vector<8x256xf32>,
    return
  }
  func.func @transform_0(%arg0: i32) -> (i32, i32) {
    %c0_i32 = arith.constant 0 : i32
    %c0_i32_0 = arith.constant 0 : i32
    return %arg0, %c0_i32 : i32, i32
  }
  func.func @transform_1(%arg0: i32) -> (i32, i32) {
    %c0_i32 = arith.constant 0 : i32
    %c0_i32_0 = arith.constant 0 : i32
    %c0_i32_1 = arith.constant 0 : i32
    return %c0_i32, %c0_i32_0 : i32, i32
  }
  func.func @transform_2(%arg0: i32) -> (i32, i32) {
    %c0_i32 = arith.constant 0 : i32
    %c0_i32_0 = arith.constant 0 : i32
    %c0_i32_1 = arith.constant 0 : i32
    return %c0_i32, %c0_i32_0 : i32, i32
  }
  func.func @transform_3(%arg0: i32) -> (i32, i32) {
    %c0_i32 = arith.constant 0 : i32
    %c0_i32_0 = arith.constant 0 : i32
    return %arg0, %c0_i32 : i32, i32
  }
}

module attributes {stable_mosaic.version = 11 : i64} {
  func.func @_conv_tap_kernel(%arg0: i32, %arg1: i32, %arg2: memref<1x8x2x4x32xf32, #tpu.memory_space<vmem>>, %arg3: memref<1x32x64xf32, #tpu.memory_space<vmem>>, %arg4: memref<1x64xf32, #tpu.memory_space<vmem>>, %arg5: memref<1x1x4x64xf32, #tpu.memory_space<vmem>>) attributes {dimension_semantics = [#tpu.dimension_semantics<parallel>, #tpu.dimension_semantics<parallel>], iteration_bounds = array<i64: 2, 4>, scalar_prefetch = 0 : i64, scratch_operands = 0 : i64, tpu.core_type = #tpu.core_type<tc>, window_params = [{transform_indices = @transform_0, window_bounds = array<i64: 1, 8, 2, 4, 32>}, {pipeline_mode = #tpu.pipeline_mode<synchronous>, transform_indices = @transform_1, window_bounds = array<i64: 1, 32, 64>}, {pipeline_mode = #tpu.pipeline_mode<synchronous>, transform_indices = @transform_2, window_bounds = array<i64: 1, 64>}, {transform_indices = @transform_3, window_bounds = array<i64: 1, 1, 4, 64>}]} {
    %c0 = arith.constant 0 : index
    %c0_0 = arith.constant 0 : index
    %0 = vector.load %arg4[%c0, %c0_0] : memref<1x64xf32, #tpu.memory_space<vmem>>, vector<1x64xf32>
    %1 = vector.shape_cast %0 : vector<1x64xf32> to vector<1x64xf32>
    %2 = vector.broadcast %1 : vector<1x64xf32> to vector<4x64xf32>
    %c2_i32 = arith.constant 2 : i32
    %3 = arith.muli %arg1, %c2_i32 : i32
    %c0_i32 = arith.constant 0 : i32
    %4 = arith.addi %3, %c0_i32 : i32
    %c0_1 = arith.constant 0 : index
    %5 = arith.index_cast %4 : i32 to index
    %c0_2 = arith.constant 0 : index
    %c0_3 = arith.constant 0 : index
    %c0_4 = arith.constant 0 : index
    %6 = vector.load %arg2[%c0_1, %5, %c0_2, %c0_3, %c0_4] : memref<1x8x2x4x32xf32, #tpu.memory_space<vmem>>, vector<1x1x1x4x32xf32>
    %7 = vector.shape_cast %6 : vector<1x1x1x4x32xf32> to vector<4x32xf32>
    %c0_5 = arith.constant 0 : index
    %c0_6 = arith.constant 0 : index
    %c0_7 = arith.constant 0 : index
    %8 = vector.load %arg3[%c0_5, %c0_6, %c0_7] : memref<1x32x64xf32, #tpu.memory_space<vmem>>, vector<1x32x64xf32>
    %9 = vector.shape_cast %8 : vector<1x32x64xf32> to vector<32x64xf32>
    %cst = arith.constant dense<0.000000e+00> : vector<4x64xf32>
    %10 = tpu.matmul %7, %9, %cst {dimension_numbers = #tpu.dot_dimension_numbers<[1], [0], [0], [1], [0, 0, 1, 1], [], []>} : vector<4x32xf32>, vector<32x64xf32>, vector<4x64xf32> -> vector<4x64xf32>
    %11 = arith.addf %2, %10 : vector<4x64xf32>
    %c0_8 = arith.constant 0 : index
    %c0_9 = arith.constant 0 : index
    %c0_10 = arith.constant 0 : index
    %c0_11 = arith.constant 0 : index
    %12 = vector.load %arg5[%c0_8, %c0_9, %c0_10, %c0_11] : memref<1x1x4x64xf32, #tpu.memory_space<vmem>>, vector<1x1x4x64xf32>
    %13 = vector.shape_cast %12 : vector<1x1x4x64xf32> to vector<4x64xf32>
    %14 = vector.shape_cast %11 : vector<4x64xf32> to vector<1x1x4x64xf32>
    tpu.vector_store %arg5[%c0_8, %c0_9, %c0_10, %c0_11], %14 {strides = array<i32>} : memref<1x1x4x64xf32, #tpu.memory_space<vmem>>, vector<1x1x4x64xf32>,
    return
  }
  func.func @transform_0(%arg0: i32, %arg1: i32) -> (i32, i32, i32, i32, i32) {
    %c0_i32 = arith.constant 0 : i32
    %c0_i32_0 = arith.constant 0 : i32
    %c0_i32_1 = arith.constant 0 : i32
    %c0_i32_2 = arith.constant 0 : i32
    %c0_i32_3 = arith.constant 0 : i32
    return %arg0, %c0_i32, %c0_i32_0, %c0_i32_1, %c0_i32_2 : i32, i32, i32, i32, i32
  }
  func.func @transform_1(%arg0: i32, %arg1: i32) -> (i32, i32, i32) {
    %c0_i32 = arith.constant 0 : i32
    %c0_i32_0 = arith.constant 0 : i32
    %c0_i32_1 = arith.constant 0 : i32
    %c0_i32_2 = arith.constant 0 : i32
    return %c0_i32, %c0_i32_0, %c0_i32_1 : i32, i32, i32
  }
  func.func @transform_2(%arg0: i32, %arg1: i32) -> (i32, i32) {
    %c0_i32 = arith.constant 0 : i32
    %c0_i32_0 = arith.constant 0 : i32
    %c0_i32_1 = arith.constant 0 : i32
    return %c0_i32, %c0_i32_0 : i32, i32
  }
  func.func @transform_3(%arg0: i32, %arg1: i32) -> (i32, i32, i32, i32) {
    %c0_i32 = arith.constant 0 : i32
    %c0_i32_0 = arith.constant 0 : i32
    %c0_i32_1 = arith.constant 0 : i32
    return %arg0, %arg1, %c0_i32, %c0_i32_0 : i32, i32, i32, i32
  }
}

module attributes {stable_mosaic.version = 11 : i64} {
  func.func @_conv_tap_kernel(%arg0: i32, %arg1: i32, %arg2: memref<1x6x1x6x64xf32, #tpu.memory_space<vmem>>, %arg3: memref<9x64x64xf32, #tpu.memory_space<vmem>>, %arg4: memref<1x64xf32, #tpu.memory_space<vmem>>, %arg5: memref<1x1x4x64xf32, #tpu.memory_space<vmem>>, %arg6: memref<1x1x4x64xf32, #tpu.memory_space<vmem>>) attributes {dimension_semantics = [#tpu.dimension_semantics<parallel>, #tpu.dimension_semantics<parallel>], iteration_bounds = array<i64: 2, 4>, scalar_prefetch = 0 : i64, scratch_operands = 0 : i64, tpu.core_type = #tpu.core_type<tc>, window_params = [{transform_indices = @transform_0, window_bounds = array<i64: 1, 6, 1, 6, 64>}, {pipeline_mode = #tpu.pipeline_mode<synchronous>, transform_indices = @transform_1, window_bounds = array<i64: 9, 64, 64>}, {pipeline_mode = #tpu.pipeline_mode<synchronous>, transform_indices = @transform_2, window_bounds = array<i64: 1, 64>}, {transform_indices = @transform_3, window_bounds = array<i64: 1, 1, 4, 64>}, {transform_indices = @transform_4, window_bounds = array<i64: 1, 1, 4, 64>}]} {
    %c0 = arith.constant 0 : index
    %c0_0 = arith.constant 0 : index
    %0 = vector.load %arg4[%c0, %c0_0] : memref<1x64xf32, #tpu.memory_space<vmem>>, vector<1x64xf32>
    %1 = vector.shape_cast %0 : vector<1x64xf32> to vector<1x64xf32>
    %2 = vector.broadcast %1 : vector<1x64xf32> to vector<4x64xf32>
    %c0_1 = arith.constant 0 : index
    %c0_2 = arith.constant 0 : index
    %c0_3 = arith.constant 0 : index
    %c0_4 = arith.constant 0 : index
    %3 = vector.load %arg5[%c0_1, %c0_2, %c0_3, %c0_4] : memref<1x1x4x64xf32, #tpu.memory_space<vmem>>, vector<1x1x4x64xf32>
    %4 = vector.shape_cast %3 : vector<1x1x4x64xf32> to vector<4x64xf32>
    %5 = arith.addf %2, %4 : vector<4x64xf32>
    %c1_i32 = arith.constant 1 : i32
    %6 = arith.muli %arg1, %c1_i32 : i32
    %c0_i32 = arith.constant 0 : i32
    %7 = arith.addi %6, %c0_i32 : i32
    %c0_5 = arith.constant 0 : index
    %8 = arith.index_cast %7 : i32 to index
    %c0_6 = arith.constant 0 : index
    %c0_7 = arith.constant 0 : index
    %c0_8 = arith.constant 0 : index
    %9 = vector.load %arg2[%c0_5, %8, %c0_6, %c0_7, %c0_8] : memref<1x6x1x6x64xf32, #tpu.memory_space<vmem>>, vector<1x1x1x4x64xf32>
    %10 = vector.shape_cast %9 : vector<1x1x1x4x64xf32> to vector<4x64xf32>
    %c0_9 = arith.constant 0 : index
    %c0_10 = arith.constant 0 : index
    %c0_11 = arith.constant 0 : index
    %11 = vector.load %arg3[%c0_9, %c0_10, %c0_11] : memref<9x64x64xf32, #tpu.memory_space<vmem>>, vector<1x64x64xf32>
    %12 = vector.shape_cast %11 : vector<1x64x64xf32> to vector<64x64xf32>
    %cst = arith.constant dense<0.000000e+00> : vector<4x64xf32>
    %13 = tpu.matmul %10, %12, %cst {dimension_numbers = #tpu.dot_dimension_numbers<[1], [0], [0], [1], [0, 0, 1, 1], [], []>} : vector<4x64xf32>, vector<64x64xf32>, vector<4x64xf32> -> vector<4x64xf32>
    %14 = arith.addf %5, %13 : vector<4x64xf32>
    %c0_12 = arith.constant 0 : index
    %15 = arith.index_cast %7 : i32 to index
    %c0_13 = arith.constant 0 : index
    %c1 = arith.constant 1 : index
    %c0_14 = arith.constant 0 : index
    %16 = vector.load %arg2[%c0_12, %15, %c0_13, %c1, %c0_14] : memref<1x6x1x6x64xf32, #tpu.memory_space<vmem>>, vector<1x1x1x4x64xf32>
    %17 = vector.shape_cast %16 : vector<1x1x1x4x64xf32> to vector<4x64xf32>
    %c1_15 = arith.constant 1 : index
    %c0_16 = arith.constant 0 : index
    %c0_17 = arith.constant 0 : index
    %18 = vector.load %arg3[%c1_15, %c0_16, %c0_17] : memref<9x64x64xf32, #tpu.memory_space<vmem>>, vector<1x64x64xf32>
    %19 = vector.shape_cast %18 : vector<1x64x64xf32> to vector<64x64xf32>
    %cst_18 = arith.constant dense<0.000000e+00> : vector<4x64xf32>
    %20 = tpu.matmul %17, %19, %cst_18 {dimension_numbers = #tpu.dot_dimension_numbers<[1], [0], [0], [1], [0, 0, 1, 1], [], []>} : vector<4x64xf32>, vector<64x64xf32>, vector<4x64xf32> -> vector<4x64xf32>
    %21 = arith.addf %14, %20 : vector<4x64xf32>
    %c0_19 = arith.constant 0 : index
    %22 = arith.index_cast %7 : i32 to index
    %c0_20 = arith.constant 0 : index
    %c2 = arith.constant 2 : index
    %c0_21 = arith.constant 0 : index
    %23 = vector.load %arg2[%c0_19, %22, %c0_20, %c2, %c0_21] : memref<1x6x1x6x64xf32, #tpu.memory_space<vmem>>, vector<1x1x1x4x64xf32>
    %24 = vector.shape_cast %23 : vector<1x1x1x4x64xf32> to vector<4x64xf32>
    %c2_22 = arith.constant 2 : index
    %c0_23 = arith.constant 0 : index
    %c0_24 = arith.constant 0 : index
    %25 = vector.load %arg3[%c2_22, %c0_23, %c0_24] : memref<9x64x64xf32, #tpu.memory_space<vmem>>, vector<1x64x64xf32>
    %26 = vector.shape_cast %25 : vector<1x64x64xf32> to vector<64x64xf32>
    %cst_25 = arith.constant dense<0.000000e+00> : vector<4x64xf32>
    %27 = tpu.matmul %24, %26, %cst_25 {dimension_numbers = #tpu.dot_dimension_numbers<[1], [0], [0], [1], [0, 0, 1, 1], [], []>} : vector<4x64xf32>, vector<64x64xf32>, vector<4x64xf32> -> vector<4x64xf32>
    %28 = arith.addf %21, %27 : vector<4x64xf32>
    %c1_i32_26 = arith.constant 1 : i32
    %29 = arith.muli %arg1, %c1_i32_26 : i32
    %c1_i32_27 = arith.constant 1 : i32
    %30 = arith.addi %29, %c1_i32_27 : i32
    %c0_28 = arith.constant 0 : index
    %31 = arith.index_cast %30 : i32 to index
    %c0_29 = arith.constant 0 : index
    %c0_30 = arith.constant 0 : index
    %c0_31 = arith.constant 0 : index
    %32 = vector.load %arg2[%c0_28, %31, %c0_29, %c0_30, %c0_31] : memref<1x6x1x6x64xf32, #tpu.memory_space<vmem>>, vector<1x1x1x4x64xf32>
    %33 = vector.shape_cast %32 : vector<1x1x1x4x64xf32> to vector<4x64xf32>
    %c3 = arith.constant 3 : index
    %c0_32 = arith.constant 0 : index
    %c0_33 = arith.constant 0 : index
    %34 = vector.load %arg3[%c3, %c0_32, %c0_33] : memref<9x64x64xf32, #tpu.memory_space<vmem>>, vector<1x64x64xf32>
    %35 = vector.shape_cast %34 : vector<1x64x64xf32> to vector<64x64xf32>
    %cst_34 = arith.constant dense<0.000000e+00> : vector<4x64xf32>
    %36 = tpu.matmul %33, %35, %cst_34 {dimension_numbers = #tpu.dot_dimension_numbers<[1], [0], [0], [1], [0, 0, 1, 1], [], []>} : vector<4x64xf32>, vector<64x64xf32>, vector<4x64xf32> -> vector<4x64xf32>
    %37 = arith.addf %28, %36 : vector<4x64xf32>
    %c0_35 = arith.constant 0 : index
    %38 = arith.index_cast %30 : i32 to index
    %c0_36 = arith.constant 0 : index
    %c1_37 = arith.constant 1 : index
    %c0_38 = arith.constant 0 : index
    %39 = vector.load %arg2[%c0_35, %38, %c0_36, %c1_37, %c0_38] : memref<1x6x1x6x64xf32, #tpu.memory_space<vmem>>, vector<1x1x1x4x64xf32>
    %40 = vector.shape_cast %39 : vector<1x1x1x4x64xf32> to vector<4x64xf32>
    %c4 = arith.constant 4 : index
    %c0_39 = arith.constant 0 : index
    %c0_40 = arith.constant 0 : index
    %41 = vector.load %arg3[%c4, %c0_39, %c0_40] : memref<9x64x64xf32, #tpu.memory_space<vmem>>, vector<1x64x64xf32>
    %42 = vector.shape_cast %41 : vector<1x64x64xf32> to vector<64x64xf32>
    %cst_41 = arith.constant dense<0.000000e+00> : vector<4x64xf32>
    %43 = tpu.matmul %40, %42, %cst_41 {dimension_numbers = #tpu.dot_dimension_numbers<[1], [0], [0], [1], [0, 0, 1, 1], [], []>} : vector<4x64xf32>, vector<64x64xf32>, vector<4x64xf32> -> vector<4x64xf32>
    %44 = arith.addf %37, %43 : vector<4x64xf32>
    %c0_42 = arith.constant 0 : index
    %45 = arith.index_cast %30 : i32 to index
    %c0_43 = arith.constant 0 : index
    %c2_44 = arith.constant 2 : index
    %c0_45 = arith.constant 0 : index
    %46 = vector.load %arg2[%c0_42, %45, %c0_43, %c2_44, %c0_45] : memref<1x6x1x6x64xf32, #tpu.memory_space<vmem>>, vector<1x1x1x4x64xf32>
    %47 = vector.shape_cast %46 : vector<1x1x1x4x64xf32> to vector<4x64xf32>
    %c5 = arith.constant 5 : index
    %c0_46 = arith.constant 0 : index
    %c0_47 = arith.constant 0 : index
    %48 = vector.load %arg3[%c5, %c0_46, %c0_47] : memref<9x64x64xf32, #tpu.memory_space<vmem>>, vector<1x64x64xf32>
    %49 = vector.shape_cast %48 : vector<1x64x64xf32> to vector<64x64xf32>
    %cst_48 = arith.constant dense<0.000000e+00> : vector<4x64xf32>
    %50 = tpu.matmul %47, %49, %cst_48 {dimension_numbers = #tpu.dot_dimension_numbers<[1], [0], [0], [1], [0, 0, 1, 1], [], []>} : vector<4x64xf32>, vector<64x64xf32>, vector<4x64xf32> -> vector<4x64xf32>
    %51 = arith.addf %44, %50 : vector<4x64xf32>
    %c1_i32_49 = arith.constant 1 : i32
    %52 = arith.muli %arg1, %c1_i32_49 : i32
    %c2_i32 = arith.constant 2 : i32
    %53 = arith.addi %52, %c2_i32 : i32
    %c0_50 = arith.constant 0 : index
    %54 = arith.index_cast %53 : i32 to index
    %c0_51 = arith.constant 0 : index
    %c0_52 = arith.constant 0 : index
    %c0_53 = arith.constant 0 : index
    %55 = vector.load %arg2[%c0_50, %54, %c0_51, %c0_52, %c0_53] : memref<1x6x1x6x64xf32, #tpu.memory_space<vmem>>, vector<1x1x1x4x64xf32>
    %56 = vector.shape_cast %55 : vector<1x1x1x4x64xf32> to vector<4x64xf32>
    %c6 = arith.constant 6 : index
    %c0_54 = arith.constant 0 : index
    %c0_55 = arith.constant 0 : index
    %57 = vector.load %arg3[%c6, %c0_54, %c0_55] : memref<9x64x64xf32, #tpu.memory_space<vmem>>, vector<1x64x64xf32>
    %58 = vector.shape_cast %57 : vector<1x64x64xf32> to vector<64x64xf32>
    %cst_56 = arith.constant dense<0.000000e+00> : vector<4x64xf32>
    %59 = tpu.matmul %56, %58, %cst_56 {dimension_numbers = #tpu.dot_dimension_numbers<[1], [0], [0], [1], [0, 0, 1, 1], [], []>} : vector<4x64xf32>, vector<64x64xf32>, vector<4x64xf32> -> vector<4x64xf32>
    %60 = arith.addf %51, %59 : vector<4x64xf32>
    %c0_57 = arith.constant 0 : index
    %61 = arith.index_cast %53 : i32 to index
    %c0_58 = arith.constant 0 : index
    %c1_59 = arith.constant 1 : index
    %c0_60 = arith.constant 0 : index
    %62 = vector.load %arg2[%c0_57, %61, %c0_58, %c1_59, %c0_60] : memref<1x6x1x6x64xf32, #tpu.memory_space<vmem>>, vector<1x1x1x4x64xf32>
    %63 = vector.shape_cast %62 : vector<1x1x1x4x64xf32> to vector<4x64xf32>
    %c7 = arith.constant 7 : index
    %c0_61 = arith.constant 0 : index
    %c0_62 = arith.constant 0 : index
    %64 = vector.load %arg3[%c7, %c0_61, %c0_62] : memref<9x64x64xf32, #tpu.memory_space<vmem>>, vector<1x64x64xf32>
    %65 = vector.shape_cast %64 : vector<1x64x64xf32> to vector<64x64xf32>
    %cst_63 = arith.constant dense<0.000000e+00> : vector<4x64xf32>
    %66 = tpu.matmul %63, %65, %cst_63 {dimension_numbers = #tpu.dot_dimension_numbers<[1], [0], [0], [1], [0, 0, 1, 1], [], []>} : vector<4x64xf32>, vector<64x64xf32>, vector<4x64xf32> -> vector<4x64xf32>
    %67 = arith.addf %60, %66 : vector<4x64xf32>
    %c0_64 = arith.constant 0 : index
    %68 = arith.index_cast %53 : i32 to index
    %c0_65 = arith.constant 0 : index
    %c2_66 = arith.constant 2 : index
    %c0_67 = arith.constant 0 : index
    %69 = vector.load %arg2[%c0_64, %68, %c0_65, %c2_66, %c0_67] : memref<1x6x1x6x64xf32, #tpu.memory_space<vmem>>, vector<1x1x1x4x64xf32>
    %70 = vector.shape_cast %69 : vector<1x1x1x4x64xf32> to vector<4x64xf32>
    %c8 = arith.constant 8 : index
    %c0_68 = arith.constant 0 : index
    %c0_69 = arith.constant 0 : index
    %71 = vector.load %arg3[%c8, %c0_68, %c0_69] : memref<9x64x64xf32, #tpu.memory_space<vmem>>, vector<1x64x64xf32>
    %72 = vector.shape_cast %71 : vector<1x64x64xf32> to vector<64x64xf32>
    %cst_70 = arith.constant dense<0.000000e+00> : vector<4x64xf32>
    %73 = tpu.matmul %70, %72, %cst_70 {dimension_numbers = #tpu.dot_dimension_numbers<[1], [0], [0], [1], [0, 0, 1, 1], [], []>} : vector<4x64xf32>, vector<64x64xf32>, vector<4x64xf32> -> vector<4x64xf32>
    %74 = arith.addf %67, %73 : vector<4x64xf32>
    %c0_71 = arith.constant 0 : index
    %c0_72 = arith.constant 0 : index
    %c0_73 = arith.constant 0 : index
    %c0_74 = arith.constant 0 : index
    %75 = vector.load %arg6[%c0_71, %c0_72, %c0_73, %c0_74] : memref<1x1x4x64xf32, #tpu.memory_space<vmem>>, vector<1x1x4x64xf32>
    %76 = vector.shape_cast %75 : vector<1x1x4x64xf32> to vector<4x64xf32>
    %77 = vector.shape_cast %74 : vector<4x64xf32> to vector<1x1x4x64xf32>
    tpu.vector_store %arg6[%c0_71, %c0_72, %c0_73, %c0_74], %77 {strides = array<i32>} : memref<1x1x4x64xf32, #tpu.memory_space<vmem>>, vector<1x1x4x64xf32>,
    return
  }
  func.func @transform_0(%arg0: i32, %arg1: i32) -> (i32, i32, i32, i32, i32) {
    %c0_i32 = arith.constant 0 : i32
    %c0_i32_0 = arith.constant 0 : i32
    %c0_i32_1 = arith.constant 0 : i32
    %c0_i32_2 = arith.constant 0 : i32
    %c0_i32_3 = arith.constant 0 : i32
    return %arg0, %c0_i32, %c0_i32_0, %c0_i32_1, %c0_i32_2 : i32, i32, i32, i32, i32
  }
  func.func @transform_1(%arg0: i32, %arg1: i32) -> (i32, i32, i32) {
    %c0_i32 = arith.constant 0 : i32
    %c0_i32_0 = arith.constant 0 : i32
    %c0_i32_1 = arith.constant 0 : i32
    %c0_i32_2 = arith.constant 0 : i32
    return %c0_i32, %c0_i32_0, %c0_i32_1 : i32, i32, i32
  }
  func.func @transform_2(%arg0: i32, %arg1: i32) -> (i32, i32) {
    %c0_i32 = arith.constant 0 : i32
    %c0_i32_0 = arith.constant 0 : i32
    %c0_i32_1 = arith.constant 0 : i32
    return %c0_i32, %c0_i32_0 : i32, i32
  }
  func.func @transform_3(%arg0: i32, %arg1: i32) -> (i32, i32, i32, i32) {
    %c0_i32 = arith.constant 0 : i32
    %c0_i32_0 = arith.constant 0 : i32
    %c0_i32_1 = arith.constant 0 : i32
    return %arg0, %arg1, %c0_i32, %c0_i32_0 : i32, i32, i32, i32
  }
  func.func @transform_4(%arg0: i32, %arg1: i32) -> (i32, i32, i32, i32) {
    %c0_i32 = arith.constant 0 : i32
    %c0_i32_0 = arith.constant 0 : i32
    %c0_i32_1 = arith.constant 0 : i32
    return %arg0, %arg1, %c0_i32, %c0_i32_0 : i32, i32, i32, i32
  }
}

module attributes {stable_mosaic.version = 11 : i64} {
  func.func @_conv_tap_kernel(%arg0: i32, %arg1: i32, %arg2: memref<1x6x1x6x64xf32, #tpu.memory_space<vmem>>, %arg3: memref<9x64x64xf32, #tpu.memory_space<vmem>>, %arg4: memref<1x64xf32, #tpu.memory_space<vmem>>, %arg5: memref<1x1x4x64xf32, #tpu.memory_space<vmem>>) attributes {dimension_semantics = [#tpu.dimension_semantics<parallel>, #tpu.dimension_semantics<parallel>], iteration_bounds = array<i64: 2, 4>, scalar_prefetch = 0 : i64, scratch_operands = 0 : i64, tpu.core_type = #tpu.core_type<tc>, window_params = [{transform_indices = @transform_0, window_bounds = array<i64: 1, 6, 1, 6, 64>}, {pipeline_mode = #tpu.pipeline_mode<synchronous>, transform_indices = @transform_1, window_bounds = array<i64: 9, 64, 64>}, {pipeline_mode = #tpu.pipeline_mode<synchronous>, transform_indices = @transform_2, window_bounds = array<i64: 1, 64>}, {transform_indices = @transform_3, window_bounds = array<i64: 1, 1, 4, 64>}]} {
    %c0 = arith.constant 0 : index
    %c0_0 = arith.constant 0 : index
    %0 = vector.load %arg4[%c0, %c0_0] : memref<1x64xf32, #tpu.memory_space<vmem>>, vector<1x64xf32>
    %1 = vector.shape_cast %0 : vector<1x64xf32> to vector<1x64xf32>
    %2 = vector.broadcast %1 : vector<1x64xf32> to vector<4x64xf32>
    %c1_i32 = arith.constant 1 : i32
    %3 = arith.muli %arg1, %c1_i32 : i32
    %c0_i32 = arith.constant 0 : i32
    %4 = arith.addi %3, %c0_i32 : i32
    %c0_1 = arith.constant 0 : index
    %5 = arith.index_cast %4 : i32 to index
    %c0_2 = arith.constant 0 : index
    %c0_3 = arith.constant 0 : index
    %c0_4 = arith.constant 0 : index
    %6 = vector.load %arg2[%c0_1, %5, %c0_2, %c0_3, %c0_4] : memref<1x6x1x6x64xf32, #tpu.memory_space<vmem>>, vector<1x1x1x4x64xf32>
    %7 = vector.shape_cast %6 : vector<1x1x1x4x64xf32> to vector<4x64xf32>
    %c0_5 = arith.constant 0 : index
    %c0_6 = arith.constant 0 : index
    %c0_7 = arith.constant 0 : index
    %8 = vector.load %arg3[%c0_5, %c0_6, %c0_7] : memref<9x64x64xf32, #tpu.memory_space<vmem>>, vector<1x64x64xf32>
    %9 = vector.shape_cast %8 : vector<1x64x64xf32> to vector<64x64xf32>
    %cst = arith.constant dense<0.000000e+00> : vector<4x64xf32>
    %10 = tpu.matmul %7, %9, %cst {dimension_numbers = #tpu.dot_dimension_numbers<[1], [0], [0], [1], [0, 0, 1, 1], [], []>} : vector<4x64xf32>, vector<64x64xf32>, vector<4x64xf32> -> vector<4x64xf32>
    %11 = arith.addf %2, %10 : vector<4x64xf32>
    %c0_8 = arith.constant 0 : index
    %12 = arith.index_cast %4 : i32 to index
    %c0_9 = arith.constant 0 : index
    %c1 = arith.constant 1 : index
    %c0_10 = arith.constant 0 : index
    %13 = vector.load %arg2[%c0_8, %12, %c0_9, %c1, %c0_10] : memref<1x6x1x6x64xf32, #tpu.memory_space<vmem>>, vector<1x1x1x4x64xf32>
    %14 = vector.shape_cast %13 : vector<1x1x1x4x64xf32> to vector<4x64xf32>
    %c1_11 = arith.constant 1 : index
    %c0_12 = arith.constant 0 : index
    %c0_13 = arith.constant 0 : index
    %15 = vector.load %arg3[%c1_11, %c0_12, %c0_13] : memref<9x64x64xf32, #tpu.memory_space<vmem>>, vector<1x64x64xf32>
    %16 = vector.shape_cast %15 : vector<1x64x64xf32> to vector<64x64xf32>
    %cst_14 = arith.constant dense<0.000000e+00> : vector<4x64xf32>
    %17 = tpu.matmul %14, %16, %cst_14 {dimension_numbers = #tpu.dot_dimension_numbers<[1], [0], [0], [1], [0, 0, 1, 1], [], []>} : vector<4x64xf32>, vector<64x64xf32>, vector<4x64xf32> -> vector<4x64xf32>
    %18 = arith.addf %11, %17 : vector<4x64xf32>
    %c0_15 = arith.constant 0 : index
    %19 = arith.index_cast %4 : i32 to index
    %c0_16 = arith.constant 0 : index
    %c2 = arith.constant 2 : index
    %c0_17 = arith.constant 0 : index
    %20 = vector.load %arg2[%c0_15, %19, %c0_16, %c2, %c0_17] : memref<1x6x1x6x64xf32, #tpu.memory_space<vmem>>, vector<1x1x1x4x64xf32>
    %21 = vector.shape_cast %20 : vector<1x1x1x4x64xf32> to vector<4x64xf32>
    %c2_18 = arith.constant 2 : index
    %c0_19 = arith.constant 0 : index
    %c0_20 = arith.constant 0 : index
    %22 = vector.load %arg3[%c2_18, %c0_19, %c0_20] : memref<9x64x64xf32, #tpu.memory_space<vmem>>, vector<1x64x64xf32>
    %23 = vector.shape_cast %22 : vector<1x64x64xf32> to vector<64x64xf32>
    %cst_21 = arith.constant dense<0.000000e+00> : vector<4x64xf32>
    %24 = tpu.matmul %21, %23, %cst_21 {dimension_numbers = #tpu.dot_dimension_numbers<[1], [0], [0], [1], [0, 0, 1, 1], [], []>} : vector<4x64xf32>, vector<64x64xf32>, vector<4x64xf32> -> vector<4x64xf32>
    %25 = arith.addf %18, %24 : vector<4x64xf32>
    %c1_i32_22 = arith.constant 1 : i32
    %26 = arith.muli %arg1, %c1_i32_22 : i32
    %c1_i32_23 = arith.constant 1 : i32
    %27 = arith.addi %26, %c1_i32_23 : i32
    %c0_24 = arith.constant 0 : index
    %28 = arith.index_cast %27 : i32 to index
    %c0_25 = arith.constant 0 : index
    %c0_26 = arith.constant 0 : index
    %c0_27 = arith.constant 0 : index
    %29 = vector.load %arg2[%c0_24, %28, %c0_25, %c0_26, %c0_27] : memref<1x6x1x6x64xf32, #tpu.memory_space<vmem>>, vector<1x1x1x4x64xf32>
    %30 = vector.shape_cast %29 : vector<1x1x1x4x64xf32> to vector<4x64xf32>
    %c3 = arith.constant 3 : index
    %c0_28 = arith.constant 0 : index
    %c0_29 = arith.constant 0 : index
    %31 = vector.load %arg3[%c3, %c0_28, %c0_29] : memref<9x64x64xf32, #tpu.memory_space<vmem>>, vector<1x64x64xf32>
    %32 = vector.shape_cast %31 : vector<1x64x64xf32> to vector<64x64xf32>
    %cst_30 = arith.constant dense<0.000000e+00> : vector<4x64xf32>
    %33 = tpu.matmul %30, %32, %cst_30 {dimension_numbers = #tpu.dot_dimension_numbers<[1], [0], [0], [1], [0, 0, 1, 1], [], []>} : vector<4x64xf32>, vector<64x64xf32>, vector<4x64xf32> -> vector<4x64xf32>
    %34 = arith.addf %25, %33 : vector<4x64xf32>
    %c0_31 = arith.constant 0 : index
    %35 = arith.index_cast %27 : i32 to index
    %c0_32 = arith.constant 0 : index
    %c1_33 = arith.constant 1 : index
    %c0_34 = arith.constant 0 : index
    %36 = vector.load %arg2[%c0_31, %35, %c0_32, %c1_33, %c0_34] : memref<1x6x1x6x64xf32, #tpu.memory_space<vmem>>, vector<1x1x1x4x64xf32>
    %37 = vector.shape_cast %36 : vector<1x1x1x4x64xf32> to vector<4x64xf32>
    %c4 = arith.constant 4 : index
    %c0_35 = arith.constant 0 : index
    %c0_36 = arith.constant 0 : index
    %38 = vector.load %arg3[%c4, %c0_35, %c0_36] : memref<9x64x64xf32, #tpu.memory_space<vmem>>, vector<1x64x64xf32>
    %39 = vector.shape_cast %38 : vector<1x64x64xf32> to vector<64x64xf32>
    %cst_37 = arith.constant dense<0.000000e+00> : vector<4x64xf32>
    %40 = tpu.matmul %37, %39, %cst_37 {dimension_numbers = #tpu.dot_dimension_numbers<[1], [0], [0], [1], [0, 0, 1, 1], [], []>} : vector<4x64xf32>, vector<64x64xf32>, vector<4x64xf32> -> vector<4x64xf32>
    %41 = arith.addf %34, %40 : vector<4x64xf32>
    %c0_38 = arith.constant 0 : index
    %42 = arith.index_cast %27 : i32 to index
    %c0_39 = arith.constant 0 : index
    %c2_40 = arith.constant 2 : index
    %c0_41 = arith.constant 0 : index
    %43 = vector.load %arg2[%c0_38, %42, %c0_39, %c2_40, %c0_41] : memref<1x6x1x6x64xf32, #tpu.memory_space<vmem>>, vector<1x1x1x4x64xf32>
    %44 = vector.shape_cast %43 : vector<1x1x1x4x64xf32> to vector<4x64xf32>
    %c5 = arith.constant 5 : index
    %c0_42 = arith.constant 0 : index
    %c0_43 = arith.constant 0 : index
    %45 = vector.load %arg3[%c5, %c0_42, %c0_43] : memref<9x64x64xf32, #tpu.memory_space<vmem>>, vector<1x64x64xf32>
    %46 = vector.shape_cast %45 : vector<1x64x64xf32> to vector<64x64xf32>
    %cst_44 = arith.constant dense<0.000000e+00> : vector<4x64xf32>
    %47 = tpu.matmul %44, %46, %cst_44 {dimension_numbers = #tpu.dot_dimension_numbers<[1], [0], [0], [1], [0, 0, 1, 1], [], []>} : vector<4x64xf32>, vector<64x64xf32>, vector<4x64xf32> -> vector<4x64xf32>
    %48 = arith.addf %41, %47 : vector<4x64xf32>
    %c1_i32_45 = arith.constant 1 : i32
    %49 = arith.muli %arg1, %c1_i32_45 : i32
    %c2_i32 = arith.constant 2 : i32
    %50 = arith.addi %49, %c2_i32 : i32
    %c0_46 = arith.constant 0 : index
    %51 = arith.index_cast %50 : i32 to index
    %c0_47 = arith.constant 0 : index
    %c0_48 = arith.constant 0 : index
    %c0_49 = arith.constant 0 : index
    %52 = vector.load %arg2[%c0_46, %51, %c0_47, %c0_48, %c0_49] : memref<1x6x1x6x64xf32, #tpu.memory_space<vmem>>, vector<1x1x1x4x64xf32>
    %53 = vector.shape_cast %52 : vector<1x1x1x4x64xf32> to vector<4x64xf32>
    %c6 = arith.constant 6 : index
    %c0_50 = arith.constant 0 : index
    %c0_51 = arith.constant 0 : index
    %54 = vector.load %arg3[%c6, %c0_50, %c0_51] : memref<9x64x64xf32, #tpu.memory_space<vmem>>, vector<1x64x64xf32>
    %55 = vector.shape_cast %54 : vector<1x64x64xf32> to vector<64x64xf32>
    %cst_52 = arith.constant dense<0.000000e+00> : vector<4x64xf32>
    %56 = tpu.matmul %53, %55, %cst_52 {dimension_numbers = #tpu.dot_dimension_numbers<[1], [0], [0], [1], [0, 0, 1, 1], [], []>} : vector<4x64xf32>, vector<64x64xf32>, vector<4x64xf32> -> vector<4x64xf32>
    %57 = arith.addf %48, %56 : vector<4x64xf32>
    %c0_53 = arith.constant 0 : index
    %58 = arith.index_cast %50 : i32 to index
    %c0_54 = arith.constant 0 : index
    %c1_55 = arith.constant 1 : index
    %c0_56 = arith.constant 0 : index
    %59 = vector.load %arg2[%c0_53, %58, %c0_54, %c1_55, %c0_56] : memref<1x6x1x6x64xf32, #tpu.memory_space<vmem>>, vector<1x1x1x4x64xf32>
    %60 = vector.shape_cast %59 : vector<1x1x1x4x64xf32> to vector<4x64xf32>
    %c7 = arith.constant 7 : index
    %c0_57 = arith.constant 0 : index
    %c0_58 = arith.constant 0 : index
    %61 = vector.load %arg3[%c7, %c0_57, %c0_58] : memref<9x64x64xf32, #tpu.memory_space<vmem>>, vector<1x64x64xf32>
    %62 = vector.shape_cast %61 : vector<1x64x64xf32> to vector<64x64xf32>
    %cst_59 = arith.constant dense<0.000000e+00> : vector<4x64xf32>
    %63 = tpu.matmul %60, %62, %cst_59 {dimension_numbers = #tpu.dot_dimension_numbers<[1], [0], [0], [1], [0, 0, 1, 1], [], []>} : vector<4x64xf32>, vector<64x64xf32>, vector<4x64xf32> -> vector<4x64xf32>
    %64 = arith.addf %57, %63 : vector<4x64xf32>
    %c0_60 = arith.constant 0 : index
    %65 = arith.index_cast %50 : i32 to index
    %c0_61 = arith.constant 0 : index
    %c2_62 = arith.constant 2 : index
    %c0_63 = arith.constant 0 : index
    %66 = vector.load %arg2[%c0_60, %65, %c0_61, %c2_62, %c0_63] : memref<1x6x1x6x64xf32, #tpu.memory_space<vmem>>, vector<1x1x1x4x64xf32>
    %67 = vector.shape_cast %66 : vector<1x1x1x4x64xf32> to vector<4x64xf32>
    %c8 = arith.constant 8 : index
    %c0_64 = arith.constant 0 : index
    %c0_65 = arith.constant 0 : index
    %68 = vector.load %arg3[%c8, %c0_64, %c0_65] : memref<9x64x64xf32, #tpu.memory_space<vmem>>, vector<1x64x64xf32>
    %69 = vector.shape_cast %68 : vector<1x64x64xf32> to vector<64x64xf32>
    %cst_66 = arith.constant dense<0.000000e+00> : vector<4x64xf32>
    %70 = tpu.matmul %67, %69, %cst_66 {dimension_numbers = #tpu.dot_dimension_numbers<[1], [0], [0], [1], [0, 0, 1, 1], [], []>} : vector<4x64xf32>, vector<64x64xf32>, vector<4x64xf32> -> vector<4x64xf32>
    %71 = arith.addf %64, %70 : vector<4x64xf32>
    %c0_67 = arith.constant 0 : index
    %c0_68 = arith.constant 0 : index
    %c0_69 = arith.constant 0 : index
    %c0_70 = arith.constant 0 : index
    %72 = vector.load %arg5[%c0_67, %c0_68, %c0_69, %c0_70] : memref<1x1x4x64xf32, #tpu.memory_space<vmem>>, vector<1x1x4x64xf32>
    %73 = vector.shape_cast %72 : vector<1x1x4x64xf32> to vector<4x64xf32>
    %74 = vector.shape_cast %71 : vector<4x64xf32> to vector<1x1x4x64xf32>
    tpu.vector_store %arg5[%c0_67, %c0_68, %c0_69, %c0_70], %74 {strides = array<i32>} : memref<1x1x4x64xf32, #tpu.memory_space<vmem>>, vector<1x1x4x64xf32>,
    return
  }
  func.func @transform_0(%arg0: i32, %arg1: i32) -> (i32, i32, i32, i32, i32) {
    %c0_i32 = arith.constant 0 : i32
    %c0_i32_0 = arith.constant 0 : i32
    %c0_i32_1 = arith.constant 0 : i32
    %c0_i32_2 = arith.constant 0 : i32
    %c0_i32_3 = arith.constant 0 : i32
    return %arg0, %c0_i32, %c0_i32_0, %c0_i32_1, %c0_i32_2 : i32, i32, i32, i32, i32
  }
  func.func @transform_1(%arg0: i32, %arg1: i32) -> (i32, i32, i32) {
    %c0_i32 = arith.constant 0 : i32
    %c0_i32_0 = arith.constant 0 : i32
    %c0_i32_1 = arith.constant 0 : i32
    %c0_i32_2 = arith.constant 0 : i32
    return %c0_i32, %c0_i32_0, %c0_i32_1 : i32, i32, i32
  }
  func.func @transform_2(%arg0: i32, %arg1: i32) -> (i32, i32) {
    %c0_i32 = arith.constant 0 : i32
    %c0_i32_0 = arith.constant 0 : i32
    %c0_i32_1 = arith.constant 0 : i32
    return %c0_i32, %c0_i32_0 : i32, i32
  }
  func.func @transform_3(%arg0: i32, %arg1: i32) -> (i32, i32, i32, i32) {
    %c0_i32 = arith.constant 0 : i32
    %c0_i32_0 = arith.constant 0 : i32
    %c0_i32_1 = arith.constant 0 : i32
    return %arg0, %arg1, %c0_i32, %c0_i32_0 : i32, i32, i32, i32
  }
}

module attributes {stable_mosaic.version = 11 : i64} {
  func.func @_bn_apply_pool_kernel(%arg0: i32, %arg1: memref<1x16x64xf32, #tpu.memory_space<vmem>>, %arg2: memref<1x64xf32, #tpu.memory_space<vmem>>, %arg3: memref<1x64xf32, #tpu.memory_space<vmem>>, %arg4: memref<1x1x64xf32, #tpu.memory_space<vmem>>) attributes {dimension_semantics = [#tpu.dimension_semantics<parallel>], iteration_bounds = array<i64: 2>, scalar_prefetch = 0 : i64, scratch_operands = 0 : i64, tpu.core_type = #tpu.core_type<tc>, window_params = [{transform_indices = @transform_0, window_bounds = array<i64: 1, 16, 64>}, {pipeline_mode = #tpu.pipeline_mode<synchronous>, transform_indices = @transform_1, window_bounds = array<i64: 1, 64>}, {pipeline_mode = #tpu.pipeline_mode<synchronous>, transform_indices = @transform_2, window_bounds = array<i64: 1, 64>}, {transform_indices = @transform_3, window_bounds = array<i64: 1, 1, 64>}]} {
    %c0 = arith.constant 0 : index
    %c0_0 = arith.constant 0 : index
    %c0_1 = arith.constant 0 : index
    %0 = vector.load %arg1[%c0, %c0_0, %c0_1] : memref<1x16x64xf32, #tpu.memory_space<vmem>>, vector<1x16x64xf32>
    %1 = vector.shape_cast %0 : vector<1x16x64xf32> to vector<16x64xf32>
    %c0_2 = arith.constant 0 : index
    %c0_3 = arith.constant 0 : index
    %2 = vector.load %arg2[%c0_2, %c0_3] : memref<1x64xf32, #tpu.memory_space<vmem>>, vector<1x64xf32>
    %3 = vector.broadcast %2 : vector<1x64xf32> to vector<16x64xf32>
    %4 = arith.mulf %1, %3 : vector<16x64xf32>
    %c0_4 = arith.constant 0 : index
    %c0_5 = arith.constant 0 : index
    %5 = vector.load %arg3[%c0_4, %c0_5] : memref<1x64xf32, #tpu.memory_space<vmem>>, vector<1x64xf32>
    %6 = vector.broadcast %5 : vector<1x64xf32> to vector<16x64xf32>
    %7 = arith.addf %4, %6 : vector<16x64xf32>
    %cst = arith.constant 0.000000e+00 : f32
    %8 = vector.broadcast %cst : f32 to vector<16x64xf32>
    %9 = arith.cmpf oge, %7, %8 : vector<16x64xf32>
    %cst_6 = arith.constant 1.000000e-01 : f32
    %10 = vector.broadcast %cst_6 : f32 to vector<16x64xf32>
    %11 = arith.mulf %10, %7 : vector<16x64xf32>
    %12 = arith.select %9, %7, %11 : vector<16x64xi1>, vector<16x64xf32>
    %cst_7 = arith.constant dense<0.000000e+00> : vector<64xf32>
    %13 = vector.multi_reduction <add>, %12, %cst_7 [0] : vector<16x64xf32> to vector<64xf32>
    %14 = vector.shape_cast %13 : vector<64xf32> to vector<1x64xf32>
    %cst_8 = arith.constant 1.600000e+01 : f32
    %15 = vector.broadcast %cst_8 : f32 to vector<1x64xf32>
    %16 = arith.divf %14, %15 : vector<1x64xf32>
    %c0_9 = arith.constant 0 : index
    %c0_10 = arith.constant 0 : index
    %c0_11 = arith.constant 0 : index
    %17 = vector.load %arg4[%c0_9, %c0_10, %c0_11] : memref<1x1x64xf32, #tpu.memory_space<vmem>>, vector<1x1x64xf32>
    %18 = vector.shape_cast %17 : vector<1x1x64xf32> to vector<1x64xf32>
    %19 = vector.shape_cast %16 : vector<1x64xf32> to vector<1x1x64xf32>
    tpu.vector_store %arg4[%c0_9, %c0_10, %c0_11], %19 {strides = array<i32>} : memref<1x1x64xf32, #tpu.memory_space<vmem>>, vector<1x1x64xf32>,
    return
  }
  func.func @transform_0(%arg0: i32) -> (i32, i32, i32) {
    %c0_i32 = arith.constant 0 : i32
    %c0_i32_0 = arith.constant 0 : i32
    %c0_i32_1 = arith.constant 0 : i32
    return %arg0, %c0_i32, %c0_i32_0 : i32, i32, i32
  }
  func.func @transform_1(%arg0: i32) -> (i32, i32) {
    %c0_i32 = arith.constant 0 : i32
    %c0_i32_0 = arith.constant 0 : i32
    %c0_i32_1 = arith.constant 0 : i32
    return %c0_i32, %c0_i32_0 : i32, i32
  }
  func.func @transform_2(%arg0: i32) -> (i32, i32) {
    %c0_i32 = arith.constant 0 : i32
    %c0_i32_0 = arith.constant 0 : i32
    %c0_i32_1 = arith.constant 0 : i32
    return %c0_i32, %c0_i32_0 : i32, i32
  }
  func.func @transform_3(%arg0: i32) -> (i32, i32, i32) {
    %c0_i32 = arith.constant 0 : i32
    %c0_i32_0 = arith.constant 0 : i32
    %c0_i32_1 = arith.constant 0 : i32
    return %arg0, %c0_i32, %c0_i32_0 : i32, i32, i32
  }
}

module attributes {stable_mosaic.version = 11 : i64} {
  func.func @_fc_kernel(%arg0: i32, %arg1: memref<8x64xf32, #tpu.memory_space<vmem>>, %arg2: memref<64x128xf32, #tpu.memory_space<vmem>>, %arg3: memref<1x128xf32, #tpu.memory_space<vmem>>, %arg4: memref<8x128xf32, #tpu.memory_space<vmem>>) attributes {dimension_semantics = [#tpu.dimension_semantics<arbitrary>], iteration_bounds = array<i64: 1>, scalar_prefetch = 0 : i64, scratch_operands = 0 : i64, tpu.core_type = #tpu.core_type<tc>, window_params = [{pipeline_mode = #tpu.pipeline_mode<synchronous>, transform_indices = @transform_0, window_bounds = array<i64: 8, 64>}, {pipeline_mode = #tpu.pipeline_mode<synchronous>, transform_indices = @transform_1, window_bounds = array<i64: 64, 128>}, {pipeline_mode = #tpu.pipeline_mode<synchronous>, transform_indices = @transform_2, window_bounds = array<i64: 1, 128>}, {pipeline_mode = #tpu.pipeline_mode<synchronous>, transform_indices = @transform_3, window_bounds = array<i64: 8, 128>}]} {
    %c0 = arith.constant 0 : index
    %c0_0 = arith.constant 0 : index
    %0 = vector.load %arg1[%c0, %c0_0] : memref<8x64xf32, #tpu.memory_space<vmem>>, vector<8x64xf32>
    %c0_1 = arith.constant 0 : index
    %c0_2 = arith.constant 0 : index
    %1 = vector.load %arg2[%c0_1, %c0_2] : memref<64x128xf32, #tpu.memory_space<vmem>>, vector<64x128xf32>
    %cst = arith.constant dense<0.000000e+00> : vector<8x128xf32>
    %2 = tpu.matmul %0, %1, %cst {dimension_numbers = #tpu.dot_dimension_numbers<[1], [0], [0], [1], [0, 0, 1, 1], [], []>} : vector<8x64xf32>, vector<64x128xf32>, vector<8x128xf32> -> vector<8x128xf32>
    %c0_3 = arith.constant 0 : index
    %c0_4 = arith.constant 0 : index
    %3 = vector.load %arg3[%c0_3, %c0_4] : memref<1x128xf32, #tpu.memory_space<vmem>>, vector<1x128xf32>
    %4 = vector.broadcast %3 : vector<1x128xf32> to vector<8x128xf32>
    %5 = arith.addf %2, %4 : vector<8x128xf32>
    %c0_5 = arith.constant 0 : index
    %c0_6 = arith.constant 0 : index
    %6 = vector.load %arg4[%c0_5, %c0_6] : memref<8x128xf32, #tpu.memory_space<vmem>>, vector<8x128xf32>
    tpu.vector_store %arg4[%c0_5, %c0_6], %5 {strides = array<i32>} : memref<8x128xf32, #tpu.memory_space<vmem>>, vector<8x128xf32>,
    return
  }
  func.func @transform_0(%arg0: i32) -> (i32, i32) {
    %c0_i32 = arith.constant 0 : i32
    %c0_i32_0 = arith.constant 0 : i32
    %c0_i32_1 = arith.constant 0 : i32
    return %c0_i32, %c0_i32_0 : i32, i32
  }
  func.func @transform_1(%arg0: i32) -> (i32, i32) {
    %c0_i32 = arith.constant 0 : i32
    %c0_i32_0 = arith.constant 0 : i32
    %c0_i32_1 = arith.constant 0 : i32
    return %c0_i32, %c0_i32_0 : i32, i32
  }
  func.func @transform_2(%arg0: i32) -> (i32, i32) {
    %c0_i32 = arith.constant 0 : i32
    %c0_i32_0 = arith.constant 0 : i32
    %c0_i32_1 = arith.constant 0 : i32
    return %c0_i32, %c0_i32_0 : i32, i32
  }
  func.func @transform_3(%arg0: i32) -> (i32, i32) {
    %c0_i32 = arith.constant 0 : i32
    %c0_i32_0 = arith.constant 0 : i32
    %c0_i32_1 = arith.constant 0 : i32
    return %c0_i32, %c0_i32_0 : i32, i32
  }
}

</mosaic_0001>

<llo_original>
// kernel: tile.128
$region0: #{tile.128}
  #allocation0 [shape = 's32[1]{0}', space=sflag, size = 0x4, scoped, tag = 'scoped memory for tile.128']
  %s0 = inlined_call_operand.vmem [shape: f32[16], index: 0, kind: input, shape index: {}]
  %s1 = inlined_call_operand.vmem [shape: f32[16,16], index: 1, kind: output, shape index: {}]
  // Predicated region
  $region2: #{tile.128} parent=0 // pred_check
    _
  $region3: #{tile.128} parent=0 // pred_check_branch
    %3 = sbr.rel (0) target = $region5
  $region4: #{tile.128} parent=0 // pred_region
    _
  $region5: #{tile.128} parent=0 // pred_fallthru
    _
  %v4 = vld [vmem:[%s0] ss:$0 sm:$0xff]
  %5 = vst [vmem:[%s1] sm:$0xff] %v4
  %s6 = scalar_lea.vmem %s1, 8
  %7 = vst [vmem:[%s6] sm:$0xff] %v4

// kernel: tile.129
$region0: #{tile.129}
  %s0 = inlined_call_operand.vmem [shape: f32[16,16], index: 0, kind: input, shape index: {}]
  %s1 = inlined_call_operand.vmem [shape: f32[1,256], index: 1, kind: output, shape index: {}]
  $region1: #{tile.129} parent=0
    #allocation0 [shape = 'u8[8192]{0}', space=vmem, size = 0x2000, scoped, tag = 'scoped mem for output reshape']
    %s2 = smov 3
    %v3 = vld [vmem:[%s0] ss:$8 sm:%s2]
    %vm4 = vcmask 130048
    %5 = vst.msk [vmem:[#allocation0] ss:$8 sm:$0x3] %vm4, %v3
    %s6 = scalar_lea.vmem %s0, 7
    %s7 = smov 3
    %v8 = vld [vmem:[%s6] ss:$8 sm:%s7]
    %9 = vrot.lane.b32.xlu0 %v8, 112
    %v10 = vpop.permute.xlu0 %9
    %vm11 = vcmask 1048448
    %12 = vst.msk [vmem:[#allocation0] ss:$8 sm:$0x3] %vm11, %v10
    %s13 = scalar_lea.vmem %s0, 6
    %s14 = smov 3
    %v15 = vld [vmem:[%s13] ss:$8 sm:%s14]
    %16 = vrot.lane.b32.xlu0 %v15, 96
    %v17 = vpop.permute.xlu0 %16
    %vm18 = vcmask 917248
    %19 = vst.msk [vmem:[#allocation0] ss:$8 sm:$0x3] %vm18, %v17
    %s20 = scalar_lea.vmem %s0, 5
    %s21 = smov 3
    %v22 = vld [vmem:[%s20] ss:$8 sm:%s21]
    %23 = vrot.lane.b32.xlu0 %v22, 80
    %v24 = vpop.permute.xlu0 %23
    %vm25 = vcmask 786048
    %26 = vst.msk [vmem:[#allocation0] ss:$8 sm:$0x3] %vm25, %v24
    %s27 = scalar_lea.vmem %s0, 4
    %s28 = smov 3
    %v29 = vld [vmem:[%s27] ss:$8 sm:%s28]
    %30 = vrot.lane.b32.xlu0 %v29, 64
    %v31 = vpop.permute.xlu0 %30
    %vm32 = vcmask 654848
    %33 = vst.msk [vmem:[#allocation0] ss:$8 sm:$0x3] %vm32, %v31
    %s34 = scalar_lea.vmem %s0, 3
    %s35 = smov 3
    %v36 = vld [vmem:[%s34] ss:$8 sm:%s35]
    %37 = vrot.lane.b32.xlu0 %v36, 48
    %v38 = vpop.permute.xlu0 %37
    %vm39 = vcmask 523648
    %40 = vst.msk [vmem:[#allocation0] ss:$8 sm:$0x3] %vm39, %v38
    %s41 = scalar_lea.vmem %s0, 2
    %s42 = smov 3
    %v43 = vld [vmem:[%s41] ss:$8 sm:%s42]
    %44 = vrot.lane.b32.xlu0 %v43, 32
    %v45 = vpop.permute.xlu0 %44
    %vm46 = vcmask 392448
    %47 = vst.msk [vmem:[#allocation0] ss:$8 sm:$0x3] %vm46, %v45
    %s48 = scalar_lea.vmem %s0, 1
    %s49 = smov 3
    %v50 = vld [vmem:[%s48] ss:$8 sm:%s49]
    %51 = vrot.lane.b32.xlu0 %v50, 16
    %v52 = vpop.permute.xlu0 %51
    %vm53 = vcmask 261248
    %54 = vst.msk [vmem:[#allocation0] ss:$8 sm:$0x3] %vm53, %v52
    %s56 = ssub.s32 2, 1
    %v57 = vld [vmem:[#allocation0] sm:%s56]
    %s59 = ssub.s32 2, 1
    %60 = vst [vmem:[%s1] sm:%s59] %v57
    %s61 = scalar_lea.vmem [#allocation0], 8
    %v62 = vld [vmem:[%s61] sm:%s56]
    %s64 = ssub.s32 2, 1
    %s65 = scalar_lea.vmem %s1, 1
    %66 = vst [vmem:[%s65] sm:%s64] %v62

// kernel: wrn_forward.43
$region0: #{wrn_forward.43}
  #allocation0 [shape = 'u32[]', space=smem, size = 0x4, offset = 0x4, fixed_abs, tag = 'smem constant byte address 0x4 - core index']
  #allocation1 [shape = 'u32[72,128]{1,0:T(1,128)}', space=vmem, size = 0x9000, scoped, tag = 'internal scratch']
  %s0 = inlined_call_operand.vmem [shape: f32[32,256], index: 0, kind: input, shape index: {}]
  %s1 = inlined_call_operand.vmem [shape: f32[1,256], index: 1, kind: output, shape index: {0}]
  %s2 = inlined_call_operand.vmem [shape: f32[1,256], index: 2, kind: output, shape index: {1}]
  %3 = xla_tuple %s1, %s2
  %s4 = sld [smem:[#allocation0]]
  $region26: #{wrn_forward.43} parent=0
    _
  %s6 = ssub.s32 1, %s4
  %s7 = scalar_select 0, %s6, %s4
  // Predicated region
  $region2: #{wrn_forward.43} parent=0 // pred_check
    _
  $region3: #{wrn_forward.43} parent=0 // pred_check_branch
    %9 = sbr.rel (0) target = $region5
  $region4: #{wrn_forward.43} parent=0 // pred_region
    _
  $region5: #{wrn_forward.43} parent=0 // pred_fallthru
    _
  %p10 = scmp.eq.s32.totalorder 0, 0
  // Predicated region
  $region6: #{wrn_forward.43} parent=0 // pred_check
    %p11 = pneg %p10
  $region7: #{wrn_forward.43} parent=0 // pred_check_branch
    %13 = sbr.rel (%p11) target = $region9
  $region8: #{wrn_forward.43} parent=0 // pred_region
    %v14 = vlaneseq
    %vm15 = vcmp.ge.s32.totalorder %v14, 0
    %vm16 = vcmp.lt.s32.totalorder %v14, 256
    %vm17 = vmand %vm15, %vm16
    %18 = vst.msk [vmem:[%s1] sm:$0x3] %vm17, 0.0
    %19 = vst.msk [vmem:[%s2] sm:$0x3] %vm17, 0.0
  $region9: #{wrn_forward.43} parent=0 // pred_fallthru
    _
  %v20 = vld [vmem:[%s0] sm:$0xff]
  %v21 = vld [vmem:[%s0 + $0x8] sm:$0xff]
  %v22 = vld [vmem:[%s0 + $0x10] sm:$0xff]
  %v23 = vld [vmem:[%s0 + $0x18] sm:$0xff]
  %v24 = vld [vmem:[%s0 + $0x20] sm:$0xff]
  %v25 = vld [vmem:[%s0 + $0x28] sm:$0xff]
  %v26 = vld [vmem:[%s0 + $0x30] sm:$0xff]
  %v27 = vld [vmem:[%s0 + $0x38] sm:$0xff]
  %v28 = vld [vmem:[%s1] sm:$0x3]
  %v29 = vadd.f32 %v20, %v22
  %v30 = vadd.f32 %v29, %v24
  %v31 = vadd.f32 %v30, %v26
  %v32 = vrot.slane %v31, 4
  %v33 = vadd.f32 %v31, %v32
  %v34 = vrot.slane %v33, 2
  %v35 = vadd.f32 %v33, %v34
  %v36 = vrot.slane %v35, 1
  %v37 = vadd.f32 %v35, %v36
  %v38 = vadd.f32 %v21, %v23
  %v39 = vadd.f32 %v38, %v25
  %v40 = vadd.f32 %v39, %v27
  %v41 = vrot.slane %v40, 4
  %v42 = vadd.f32 %v40, %v41
  %v43 = vrot.slane %v42, 2
  %v44 = vadd.f32 %v42, %v43
  %v45 = vrot.slane %v44, 1
  %v46 = vadd.f32 %v44, %v45
  %v49 = vrot.slane %v46, 7
  %vm50 = vcmask 1040384
  %v51 = vsel %vm50, %v37, %v49
  %v53 = vadd.f32 %v28, %v51
  %v54 = vlaneseq
  %vm55 = vcmp.ge.s32.totalorder %v54, 0
  %vm56 = vcmp.lt.s32.totalorder %v54, 256
  %vm57 = vmand %vm55, %vm56
  %58 = vst.msk [vmem:[%s1] sm:$0x3] %vm57, %v53
  %v59 = vld [vmem:[%s2] sm:$0x3]
  %v60 = vmul.f32 %v20, %v20
  %v61 = vmul.f32 %v21, %v21
  %v62 = vmul.f32 %v22, %v22
  %v63 = vmul.f32 %v23, %v23
  %v64 = vmul.f32 %v24, %v24
  %v65 = vmul.f32 %v25, %v25
  %v66 = vmul.f32 %v26, %v26
  %v67 = vmul.f32 %v27, %v27
  %v68 = vadd.f32 %v60, %v62
  %v69 = vadd.f32 %v68, %v64
  %v70 = vadd.f32 %v69, %v66
  %v71 = vrot.slane %v70, 4
  %v72 = vadd.f32 %v70, %v71
  %v73 = vrot.slane %v72, 2
  %v74 = vadd.f32 %v72, %v73
  %v75 = vrot.slane %v74, 1
  %v76 = vadd.f32 %v74, %v75
  %v77 = vadd.f32 %v61, %v63
  %v78 = vadd.f32 %v77, %v65
  %v79 = vadd.f32 %v78, %v67
  %v80 = vrot.slane %v79, 4
  %v81 = vadd.f32 %v79, %v80
  %v82 = vrot.slane %v81, 2
  %v83 = vadd.f32 %v81, %v82
  %v84 = vrot.slane %v83, 1
  %v85 = vadd.f32 %v83, %v84
  %v88 = vrot.slane %v85, 7
  %v89 = vsel %vm50, %v76, %v88
  %v91 = vadd.f32 %v59, %v89
  %92 = vst.msk [vmem:[%s2] sm:$0x3] %vm57, %v91
  // Predicated region
  $region10: #{wrn_forward.43} parent=0 // pred_check
    _
  $region11: #{wrn_forward.43} parent=0 // pred_check_branch
    %94 = sbr.rel (0) target = $region13
  $region12: #{wrn_forward.43} parent=0 // pred_region
    _
  $region13: #{wrn_forward.43} parent=0 // pred_fallthru
    _
  // Predicated region
  $region14: #{wrn_forward.43} parent=0 // pred_check
    _
  $region15: #{wrn_forward.43} parent=0 // pred_check_branch
    %96 = sbr.rel (0) target = $region17
  $region16: #{wrn_forward.43} parent=0 // pred_region
    _
  $region17: #{wrn_forward.43} parent=0 // pred_fallthru
    _
  // Predicated region
  $region18: #{wrn_forward.43} parent=0 // pred_check
    _
  $region19: #{wrn_forward.43} parent=0 // pred_check_branch
    %98 = sbr.rel (0) target = $region21
  $region20: #{wrn_forward.43} parent=0 // pred_region
    _
  $region21: #{wrn_forward.43} parent=0 // pred_fallthru
    _
  // Predicated region
  $region22: #{wrn_forward.43} parent=0 // pred_check
    _
  $region23: #{wrn_forward.43} parent=0 // pred_check_branch
    %100 = sbr.rel (0) target = $region25
  $region24: #{wrn_forward.43} parent=0 // pred_region
    _
  $region25: #{wrn_forward.43} parent=0 // pred_fallthru
    _

// kernel: wrn_forward.42
$region0: #{wrn_forward.42}
  #allocation0 [shape = 'u32[]', space=smem, size = 0x4, offset = 0x4, fixed_abs, tag = 'smem constant byte address 0x4 - core index']
  #allocation1 [shape = 'u32[72,128]{1,0:T(1,128)}', space=vmem, size = 0x9000, scoped, tag = 'internal scratch']
  %s0 = inlined_call_operand.vmem [shape: f32[2,18,1,18,3], index: 0, kind: input, shape index: {}]
  %s1 = inlined_call_operand.vmem [shape: f32[9,3,16], index: 1, kind: input, shape index: {}]
  %s2 = inlined_call_operand.vmem [shape: f32[1,16], index: 2, kind: input, shape index: {}]
  %s3 = inlined_call_operand.vmem [shape: f32[2,16,16,16], index: 3, kind: output, shape index: {}]
  %s4 = sld [smem:[#allocation0]]
  $region45: #{wrn_forward.42} parent=0
    _
  %s6 = ssub.s32 1, %s4
  %s7 = scalar_select 0, %s6, %s4
  loop: start=0, step=1, limit=34
  $region2: #{wrn_forward.42} parent=0 // loop_pre_header
    _
  $region3: #{wrn_forward.42} parent=0 // loop_header
    %s9 = sphi 0, %s13
    %p10 = scmp.ge.s32.totalorder %s9, 34
    %s16 = sphi 0, %s28
    %s17 = sphi 0, %s24
    %s18 = sphi 0, %s16
    %s19 = sphi 0, %s17
    %s20 = sphi 0, %s18
    %s21 = sphi 0, %s19
    %s31 = sphi 0, %s33
    %s34 = sphi 0, %s31
    %s35 = sphi 0, %s34
    %s51 = sphi 0, %s35
    %s55 = sphi 0, %s55
    %s57 = sphi 0, %s55
    %s58 = sphi 0, %s57
    %s72 = sphi 0, %s58
    %s76 = sphi 0, %s76
    %s78 = sphi 0, %s76
    %s79 = sphi 0, %s78
    %s93 = sphi 0, %s79
    %s101 = sphi 0, %s103
    %s104 = sphi 0, %s101
    %s105 = sphi 0, %s104
    %s121 = sphi 0, %s105
  $region4: #{wrn_forward.42} parent=0 // loop_header_branch
    %12 = sbr.rel (%p10) target = $region8
  $region5: #{wrn_forward.42} parent=0 // loop_body
    %s14 = ssub.s32 %s9, 1
    %s15 = ssub.s32 %s9, 2
    %s22 = sadd.s32 1, %s17
    %p23 = scmp.ge.s32.totalorder %s22, 16
    %s24 = scalar_select %p23, 0, %s22
    %s25 = sadd.s32 1, %s16
    %s26 = scalar_select %p23, %s25, %s16
    %p27 = scmp.ge.s32.totalorder %s26, 2
    %s28 = scalar_select %p27, 0, %s26
    %s29 = ssub.s32 %s16, %s28
    %p30 = scmp.eq.s32.totalorder %s29, 0
    %s32 = sadd.s32 %s31, 1
    %s33 = scalar_select %p30, %s31, %s32
    %p36 = pneg %p30
    %p37 = scmp.eq.s32.totalorder %s9, 31
    %p38 = por %p36, %p37
    %p39 = scmp.ne.s32.totalorder %s31, %s34
    %p40 = scmp.eq.s32.totalorder %s9, 0
    %p41 = por %p39, %p40
    %p42 = scmp.ne.s32.totalorder %s31, %s34
    %p43 = scmp.eq.s32.totalorder %s14, 31
    %p44 = por %p42, %p43
    %p45 = scmp.ne.s32.totalorder %s34, %s35
    %p46 = scmp.eq.s32.totalorder %s14, 0
    %p47 = por %p45, %p46
    %p48 = scmp.ne.s32.totalorder %s34, %s35
    %p49 = scmp.eq.s32.totalorder %s15, 31
    %p50 = por %p48, %p49
    %p52 = scmp.ne.s32.totalorder %s35, %s51
    %p53 = scmp.eq.s32.totalorder %s15, 0
    %p54 = por %p52, %p53
    %s56 = sadd.s32 %s55, 1
    %p59 = scmp.eq.s32.totalorder %s9, 31
    %p60 = scmp.ne.s32.totalorder %s55, %s57
    %p61 = scmp.eq.s32.totalorder %s9, 0
    %p62 = por %p60, %p61
    %p63 = scmp.ne.s32.totalorder %s55, %s57
    %p64 = scmp.eq.s32.totalorder %s14, 31
    %p65 = por %p63, %p64
    %p66 = scmp.ne.s32.totalorder %s57, %s58
    %p67 = scmp.eq.s32.totalorder %s14, 0
    %p68 = por %p66, %p67
    %p69 = scmp.ne.s32.totalorder %s57, %s58
    %p70 = scmp.eq.s32.totalorder %s15, 31
    %p71 = por %p69, %p70
    %p73 = scmp.ne.s32.totalorder %s58, %s72
    %p74 = scmp.eq.s32.totalorder %s15, 0
    %p75 = por %p73, %p74
    %s77 = sadd.s32 %s76, 1
    %p80 = scmp.eq.s32.totalorder %s9, 31
    %p81 = scmp.ne.s32.totalorder %s76, %s78
    %p82 = scmp.eq.s32.totalorder %s9, 0
    %p83 = por %p81, %p82
    %p84 = scmp.ne.s32.totalorder %s76, %s78
    %p85 = scmp.eq.s32.totalorder %s14, 31
    %p86 = por %p84, %p85
    %p87 = scmp.ne.s32.totalorder %s78, %s79
    %p88 = scmp.eq.s32.totalorder %s14, 0
    %p89 = por %p87, %p88
    %p90 = scmp.ne.s32.totalorder %s78, %s79
    %p91 = scmp.eq.s32.totalorder %s15, 31
    %p92 = por %p90, %p91
    %p94 = scmp.ne.s32.totalorder %s79, %s93
    %p95 = scmp.eq.s32.totalorder %s15, 0
    %p96 = por %p94, %p95
    %s97 = ssub.s32 %s16, %s28
    %s98 = ssub.s32 %s17, %s24
    %s99 = sor.u32 %s97, %s98
    %p100 = scmp.eq.s32.totalorder %s99, 0
    %s102 = sadd.s32 %s101, 1
    %s103 = scalar_select %p100, %s101, %s102
    %p106 = pneg %p100
    %p107 = scmp.eq.s32.totalorder %s9, 31
    %p108 = por %p106, %p107
    %p109 = scmp.ne.s32.totalorder %s101, %s104
    %p110 = scmp.eq.s32.totalorder %s9, 0
    %p111 = por %p109, %p110
    %p112 = scmp.ne.s32.totalorder %s101, %s104
    %p113 = scmp.eq.s32.totalorder %s14, 31
    %p114 = por %p112, %p113
    %p115 = scmp.ne.s32.totalorder %s104, %s105
    %p116 = scmp.eq.s32.totalorder %s14, 0
    %p117 = por %p115, %p116
    %p118 = scmp.ne.s32.totalorder %s104, %s105
    %p119 = scmp.eq.s32.totalorder %s15, 31
    %p120 = por %p118, %p119
    %p122 = scmp.ne.s32.totalorder %s105, %s121
    %p123 = scmp.eq.s32.totalorder %s15, 0
    %p124 = por %p122, %p123
    %p125 = scmp.le.s32.totalorder 1, %s9
    %p126 = scmp.lt.s32.totalorder %s9, 33
    %p127 = pnand %p125, %p126
    %p128 = pneg %p127
    // Predicated region
    $region9: #{wrn_forward.42} parent=5 // pred_check
      _
    $region10: #{wrn_forward.42} parent=5 // pred_check_branch
      %130 = sbr.rel (%p127) target = $region12
    $region11: #{wrn_forward.42} parent=5 // pred_region
      %s131 = ssub.s32 %s9, 1
      // Predicated region
      $region13: #{wrn_forward.42} parent=11 // pred_check
        %p132 = pneg %p68
      $region14: #{wrn_forward.42} parent=11 // pred_check_branch
        %134 = sbr.rel (%p132) target = $region16
      $region15: #{wrn_forward.42} parent=11 // pred_region
        _
      $region16: #{wrn_forward.42} parent=11 // pred_fallthru
        _
      // Predicated region
      $region17: #{wrn_forward.42} parent=11 // pred_check
        %p135 = pneg %p89
      $region18: #{wrn_forward.42} parent=11 // pred_check_branch
        %137 = sbr.rel (%p135) target = $region20
      $region19: #{wrn_forward.42} parent=11 // pred_region
        _
      $region20: #{wrn_forward.42} parent=11 // pred_fallthru
        _
    $region12: #{wrn_forward.42} parent=5 // pred_fallthru
      _
    %p138 = scmp.lt.s32.totalorder %s9, 32
    // Predicated region
    $region21: #{wrn_forward.42} parent=5 // pred_check
      %p139 = pneg %p138
    $region22: #{wrn_forward.42} parent=5 // pred_check_branch
      %141 = sbr.rel (%p139) target = $region24
    $region23: #{wrn_forward.42} parent=5 // pred_region
      // Predicated region
      $region25: #{wrn_forward.42} parent=23 // pred_check
        %p142 = pneg %p41
      $region26: #{wrn_forward.42} parent=23 // pred_check_branch
        %144 = sbr.rel (%p142) target = $region28
      $region27: #{wrn_forward.42} parent=23 // pred_region
        %p145 = scmp.lt.s32.totalorder %s16, 1
        %s146 = scalar_select %p145, %s16, 1
        %s147 = smul.addr %s146, 54
        %s148 = smul.addr %s147, 8
        %s149 = scalar_lea.vmem %s0, %s148
      $region28: #{wrn_forward.42} parent=23 // pred_fallthru
        _
    $region24: #{wrn_forward.42} parent=5 // pred_fallthru
      _
    %p150 = scmp.le.s32.totalorder 1, %s9
    %p151 = scmp.lt.s32.totalorder %s9, 33
    %p152 = pnand %p150, %p151
    %p153 = pneg %p152
    // Predicated region
    $region29: #{wrn_forward.42} parent=5 // pred_check
      _
    $region30: #{wrn_forward.42} parent=5 // pred_check_branch
      %155 = sbr.rel (%p152) target = $region32
    $region31: #{wrn_forward.42} parent=5 // pred_region
      %s156 = ssub.s32 %s9, 1
      %p157 = scmp.lt.s32.totalorder %s18, 1
      %s158 = scalar_select %p157, %s18, 1
      %s159 = smul.addr %s158, 54
      %s160 = smul.addr %s159, 8
      %s161 = scalar_lea.vmem %s0, %s160
      %p162 = pneg %p47
      %p163 = pneg %p44
      %p164 = pneg %p68
      %p165 = pneg %p65
      %p166 = pneg %p89
      %p167 = pneg %p86
      %p168 = pneg %p117
      %p169 = pneg %p114
      %p170 = scmp.lt.s32.totalorder %s18, 1
      %s171 = scalar_select %p170, %s18, 1
      %p172 = scmp.lt.s32.totalorder %s19, 15
      %s173 = scalar_select %p172, %s19, 15
      %s174 = smul.addr %s173, 2
      %s175 = smul.addr %s171, 32
      %s176 = sadd.s32 %s174, %s175
      %s177 = smul.addr %s176, 8
      %s178 = scalar_lea.vmem %s3, %s177
      %p179 = scmp.lt.s32.totalorder %s18, 1
      %s180 = scalar_select %p179, %s18, 1
      %s181 = smul.addr %s180, 54
      %s182 = smul.addr %s181, 8
      %s183 = scalar_lea.vmem %s0, %s182
      %p184 = scmp.lt.s32.totalorder %s18, 1
      %s185 = scalar_select %p184, %s18, 1
      %p186 = scmp.lt.s32.totalorder %s19, 15
      %s187 = scalar_select %p186, %s19, 15
      %s188 = smul.addr %s187, 2
      %s189 = smul.addr %s185, 32
      %s190 = sadd.s32 %s188, %s189
      %s191 = smul.addr %s190, 8
      %s192 = scalar_lea.vmem %s3, %s191
      %v193 = vld [vmem:[%s2] sm:$0x1]
      %v195 = vperm.slane %v193, 0
      %s197 = smul.u32 %s19, 24
      %s198 = scalar_lea.vmem %s183, %s197
      %v199 = vld [vmem:[%s198] sm:$0xff]
      %v200 = vld [vmem:[%s198 + $0x8] sm:$0xff]
      %v201 = vld [vmem:[%s1] sm:$0x7]
      %vm202 = vcmask 23552
      %v204 = vsel %vm202, %v199, 0
      %v207 = vsel %vm202, %v200, 0
      %vm209 = vcmask 1042432
      %v211 = vsel %vm209, %v201, 0
      %213 = vmatpush.msra.mxu0 0.0
      %214 = vmatpush.msra.mxu0 0.0
      %215 = vmatpush.msra.mxu0 0.0
      %216 = vmatpush.msra.mxu0 0.0
      %217 = vmatpush.msra.mxu0 0.0
      %218 = vmatpush.msra.mxu0 0.0
      %219 = vmatpush.msra.mxu0 0.0
      %220 = vmatpush.msra.mxu0 0.0
      %221 = vmatpush.msra.mxu0 0.0
      %222 = vmatpush.msra.mxu0 0.0
      %223 = vmatpush.msra.mxu0 0.0
      %224 = vmatpush.msra.mxu0 0.0
      %225 = vmatpush.msra.mxu0 0.0
      %226 = vmatpush.msra.mxu0 0.0
      %227 = vmatpush.msra.mxu0 0.0
      %228 = vmatpush.msra.mxu0 %v211
      %229 = vmatmul.f32.gmra.mxu0 %v204
      %v230 = vpop.f32.mrf.mxu0
      %v231 = vadd.f32 0.0, %v230
      %232 = vmatmul.f32.gmra.mxu0 %v207
      %v233 = vpop.f32.mrf.mxu0
      %v234 = vadd.f32 0.0, %v233
      %235 = vdwg.mxu0
      %v236 = vadd.f32 %v195, %v231
      %v237 = vadd.f32 %v195, %v234
      %v238 = vld [vmem:[%s198 + $0x1] sm:$0xff]
      %v239 = vld [vmem:[%s198 + $0x9] sm:$0xff]
      %s240 = scalar_lea.vmem %s1, 4
      %v241 = vld [vmem:[%s240] sm:$0x7]
      %v243 = vsel %vm202, %v238, 0
      %v246 = vsel %vm202, %v239, 0
      %v249 = vsel %vm209, %v241, 0
      %251 = vmatpush.msra.mxu0 0.0
      %252 = vmatpush.msra.mxu0 0.0
      %253 = vmatpush.msra.mxu0 0.0
      %254 = vmatpush.msra.mxu0 0.0
      %255 = vmatpush.msra.mxu0 0.0
      %256 = vmatpush.msra.mxu0 0.0
      %257 = vmatpush.msra.mxu0 0.0
      %258 = vmatpush.msra.mxu0 0.0
      %259 = vmatpush.msra.mxu0 0.0
      %260 = vmatpush.msra.mxu0 0.0
      %261 = vmatpush.msra.mxu0 0.0
      %262 = vmatpush.msra.mxu0 0.0
      %263 = vmatpush.msra.mxu0 0.0
      %264 = vmatpush.msra.mxu0 0.0
      %265 = vmatpush.msra.mxu0 0.0
      %266 = vmatpush.msra.mxu0 %v249
      %267 = vmatmul.f32.gmra.mxu0 %v243
      %v268 = vpop.f32.mrf.mxu0
      %v269 = vadd.f32 0.0, %v268
      %270 = vmatmul.f32.gmra.mxu0 %v246
      %v271 = vpop.f32.mrf.mxu0
      %v272 = vadd.f32 0.0, %v271
      %273 = vdwg.mxu0
      %v274 = vadd.f32 %v236, %v269
      %v275 = vadd.f32 %v237, %v272
      %v276 = vld [vmem:[%s198 + $0x2] sm:$0xff]
      %v277 = vld [vmem:[%s198 + $0xa] sm:$0xff]
      %s278 = scalar_lea.vmem %s1, 8
      %v279 = vld [vmem:[%s278] sm:$0x7]
      %v281 = vsel %vm202, %v276, 0
      %v284 = vsel %vm202, %v277, 0
      %v287 = vsel %vm209, %v279, 0
      %289 = vmatpush.msra.mxu0 0.0
      %290 = vmatpush.msra.mxu0 0.0
      %291 = vmatpush.msra.mxu0 0.0
      %292 = vmatpush.msra.mxu0 0.0
      %293 = vmatpush.msra.mxu0 0.0
      %294 = vmatpush.msra.mxu0 0.0
      %295 = vmatpush.msra.mxu0 0.0
      %296 = vmatpush.msra.mxu0 0.0
      %297 = vmatpush.msra.mxu0 0.0
      %298 = vmatpush.msra.mxu0 0.0
      %299 = vmatpush.msra.mxu0 0.0
      %300 = vmatpush.msra.mxu0 0.0
      %301 = vmatpush.msra.mxu0 0.0
      %302 = vmatpush.msra.mxu0 0.0
      %303 = vmatpush.msra.mxu0 0.0
      %304 = vmatpush.msra.mxu0 %v287
      %305 = vmatmul.f32.gmra.mxu0 %v281
      %v306 = vpop.f32.mrf.mxu0
      %v307 = vadd.f32 0.0, %v306
      %308 = vmatmul.f32.gmra.mxu0 %v284
      %v309 = vpop.f32.mrf.mxu0
      %v310 = vadd.f32 0.0, %v309
      %311 = vdwg.mxu0
      %v312 = vadd.f32 %v274, %v307
      %v313 = vadd.f32 %v275, %v310
      %s314 = sadd.s32 %s19, 1
      %s315 = smul.u32 %s314, 24
      %s316 = scalar_lea.vmem %s183, %s315
      %v317 = vld [vmem:[%s316] sm:$0xff]
      %v318 = vld [vmem:[%s316 + $0x8] sm:$0xff]
      %s319 = scalar_lea.vmem %s1, 12
      %v320 = vld [vmem:[%s319] sm:$0x7]
      %v322 = vsel %vm202, %v317, 0
      %v325 = vsel %vm202, %v318, 0
      %v328 = vsel %vm209, %v320, 0
      %330 = vmatpush.msra.mxu0 0.0
      %331 = vmatpush.msra.mxu0 0.0
      %332 = vmatpush.msra.mxu0 0.0
      %333 = vmatpush.msra.mxu0 0.0
      %334 = vmatpush.msra.mxu0 0.0
      %335 = vmatpush.msra.mxu0 0.0
      %336 = vmatpush.msra.mxu0 0.0
      %337 = vmatpush.msra.mxu0 0.0
      %338 = vmatpush.msra.mxu0 0.0
      %339 = vmatpush.msra.mxu0 0.0
      %340 = vmatpush.msra.mxu0 0.0
      %341 = vmatpush.msra.mxu0 0.0
      %342 = vmatpush.msra.mxu0 0.0
      %343 = vmatpush.msra.mxu0 0.0
      %344 = vmatpush.msra.mxu0 0.0
      %345 = vmatpush.msra.mxu0 %v328
      %346 = vmatmul.f32.gmra.mxu0 %v322
      %v347 = vpop.f32.mrf.mxu0
      %v348 = vadd.f32 0.0, %v347
      %349 = vmatmul.f32.gmra.mxu0 %v325
      %v350 = vpop.f32.mrf.mxu0
      %v351 = vadd.f32 0.0, %v350
      %352 = vdwg.mxu0
      %v353 = vadd.f32 %v312, %v348
      %v354 = vadd.f32 %v313, %v351
      %v355 = vld [vmem:[%s316 + $0x1] sm:$0xff]
      %v356 = vld [vmem:[%s316 + $0x9] sm:$0xff]
      %s357 = scalar_lea.vmem %s1, 16
      %v358 = vld [vmem:[%s357] sm:$0x7]
      %v360 = vsel %vm202, %v355, 0
      %v363 = vsel %vm202, %v356, 0
      %v366 = vsel %vm209, %v358, 0
      %368 = vmatpush.msra.mxu0 0.0
      %369 = vmatpush.msra.mxu0 0.0
      %370 = vmatpush.msra.mxu0 0.0
      %371 = vmatpush.msra.mxu0 0.0
      %372 = vmatpush.msra.mxu0 0.0
      %373 = vmatpush.msra.mxu0 0.0
      %374 = vmatpush.msra.mxu0 0.0
      %375 = vmatpush.msra.mxu0 0.0
      %376 = vmatpush.msra.mxu0 0.0
      %377 = vmatpush.msra.mxu0 0.0
      %378 = vmatpush.msra.mxu0 0.0
      %379 = vmatpush.msra.mxu0 0.0
      %380 = vmatpush.msra.mxu0 0.0
      %381 = vmatpush.msra.mxu0 0.0
      %382 = vmatpush.msra.mxu0 0.0
      %383 = vmatpush.msra.mxu0 %v366
      %384 = vmatmul.f32.gmra.mxu0 %v360
      %v385 = vpop.f32.mrf.mxu0
      %v386 = vadd.f32 0.0, %v385
      %387 = vmatmul.f32.gmra.mxu0 %v363
      %v388 = vpop.f32.mrf.mxu0
      %v389 = vadd.f32 0.0, %v388
      %390 = vdwg.mxu0
      %v391 = vadd.f32 %v353, %v386
      %v392 = vadd.f32 %v354, %v389
      %v393 = vld [vmem:[%s316 + $0x2] sm:$0xff]
      %v394 = vld [vmem:[%s316 + $0xa] sm:$0xff]
      %s395 = scalar_lea.vmem %s1, 20
      %v396 = vld [vmem:[%s395] sm:$0x7]
      %v398 = vsel %vm202, %v393, 0
      %v401 = vsel %vm202, %v394, 0
      %v404 = vsel %vm209, %v396, 0
      %406 = vmatpush.msra.mxu0 0.0
      %407 = vmatpush.msra.mxu0 0.0
      %408 = vmatpush.msra.mxu0 0.0
      %409 = vmatpush.msra.mxu0 0.0
      %410 = vmatpush.msra.mxu0 0.0
      %411 = vmatpush.msra.mxu0 0.0
      %412 = vmatpush.msra.mxu0 0.0
      %413 = vmatpush.msra.mxu0 0.0
      %414 = vmatpush.msra.mxu0 0.0
      %415 = vmatpush.msra.mxu0 0.0
      %416 = vmatpush.msra.mxu0 0.0
      %417 = vmatpush.msra.mxu0 0.0
      %418 = vmatpush.msra.mxu0 0.0
      %419 = vmatpush.msra.mxu0 0.0
      %420 = vmatpush.msra.mxu0 0.0
      %421 = vmatpush.msra.mxu0 %v404
      %422 = vmatmul.f32.gmra.mxu0 %v398
      %v423 = vpop.f32.mrf.mxu0
      %v424 = vadd.f32 0.0, %v423
      %425 = vmatmul.f32.gmra.mxu0 %v401
      %v426 = vpop.f32.mrf.mxu0
      %v427 = vadd.f32 0.0, %v426
      %428 = vdwg.mxu0
      %v429 = vadd.f32 %v391, %v424
      %v430 = vadd.f32 %v392, %v427
      %s431 = sadd.s32 %s19, 2
      %s432 = smul.u32 %s431, 24
      %s433 = scalar_lea.vmem %s183, %s432
      %v434 = vld [vmem:[%s433] sm:$0xff]
      %v435 = vld [vmem:[%s433 + $0x8] sm:$0xff]
      %s436 = scalar_lea.vmem %s1, 24
      %v437 = vld [vmem:[%s436] sm:$0x7]
      %v439 = vsel %vm202, %v434, 0
      %v442 = vsel %vm202, %v435, 0
      %v445 = vsel %vm209, %v437, 0
      %447 = vmatpush.msra.mxu0 0.0
      %448 = vmatpush.msra.mxu0 0.0
      %449 = vmatpush.msra.mxu0 0.0
      %450 = vmatpush.msra.mxu0 0.0
      %451 = vmatpush.msra.mxu0 0.0
      %452 = vmatpush.msra.mxu0 0.0
      %453 = vmatpush.msra.mxu0 0.0
      %454 = vmatpush.msra.mxu0 0.0
      %455 = vmatpush.msra.mxu0 0.0
      %456 = vmatpush.msra.mxu0 0.0
      %457 = vmatpush.msra.mxu0 0.0
      %458 = vmatpush.msra.mxu0 0.0
      %459 = vmatpush.msra.mxu0 0.0
      %460 = vmatpush.msra.mxu0 0.0
      %461 = vmatpush.msra.mxu0 0.0
      %462 = vmatpush.msra.mxu0 %v445
      %463 = vmatmul.f32.gmra.mxu0 %v439
      %v464 = vpop.f32.mrf.mxu0
      %v465 = vadd.f32 0.0, %v464
      %466 = vmatmul.f32.gmra.mxu0 %v442
      %v467 = vpop.f32.mrf.mxu0
      %v468 = vadd.f32 0.0, %v467
      %469 = vdwg.mxu0
      %v470 = vadd.f32 %v429, %v465
      %v471 = vadd.f32 %v430, %v468
      %v472 = vld [vmem:[%s433 + $0x1] sm:$0xff]
      %v473 = vld [vmem:[%s433 + $0x9] sm:$0xff]
      %s474 = scalar_lea.vmem %s1, 28
      %v475 = vld [vmem:[%s474] sm:$0x7]
      %v477 = vsel %vm202, %v472, 0
      %v480 = vsel %vm202, %v473, 0
      %v483 = vsel %vm209, %v475, 0
      %485 = vmatpush.msra.mxu0 0.0
      %486 = vmatpush.msra.mxu0 0.0
      %487 = vmatpush.msra.mxu0 0.0
      %488 = vmatpush.msra.mxu0 0.0
      %489 = vmatpush.msra.mxu0 0.0
      %490 = vmatpush.msra.mxu0 0.0
      %491 = vmatpush.msra.mxu0 0.0
      %492 = vmatpush.msra.mxu0 0.0
      %493 = vmatpush.msra.mxu0 0.0
      %494 = vmatpush.msra.mxu0 0.0
      %495 = vmatpush.msra.mxu0 0.0
      %496 = vmatpush.msra.mxu0 0.0
      %497 = vmatpush.msra.mxu0 0.0
      %498 = vmatpush.msra.mxu0 0.0
      %499 = vmatpush.msra.mxu0 0.0
      %500 = vmatpush.msra.mxu0 %v483
      %501 = vmatmul.f32.gmra.mxu0 %v477
      %v502 = vpop.f32.mrf.mxu0
      %v503 = vadd.f32 0.0, %v502
      %504 = vmatmul.f32.gmra.mxu0 %v480
      %v505 = vpop.f32.mrf.mxu0
      %v506 = vadd.f32 0.0, %v505
      %507 = vdwg.mxu0
      %v508 = vadd.f32 %v470, %v503
      %v509 = vadd.f32 %v471, %v506
      %v510 = vld [vmem:[%s433 + $0x2] sm:$0xff]
      %v511 = vld [vmem:[%s433 + $0xa] sm:$0xff]
      %s512 = scalar_lea.vmem %s1, 32
      %v513 = vld [vmem:[%s512] sm:$0x7]
      %v515 = vsel %vm202, %v510, 0
      %v518 = vsel %vm202, %v511, 0
      %v521 = vsel %vm209, %v513, 0
      %523 = vmatpush.msra.mxu0 0.0
      %524 = vmatpush.msra.mxu0 0.0
      %525 = vmatpush.msra.mxu0 0.0
      %526 = vmatpush.msra.mxu0 0.0
      %527 = vmatpush.msra.mxu0 0.0
      %528 = vmatpush.msra.mxu0 0.0
      %529 = vmatpush.msra.mxu0 0.0
      %530 = vmatpush.msra.mxu0 0.0
      %531 = vmatpush.msra.mxu0 0.0
      %532 = vmatpush.msra.mxu0 0.0
      %533 = vmatpush.msra.mxu0 0.0
      %534 = vmatpush.msra.mxu0 0.0
      %535 = vmatpush.msra.mxu0 0.0
      %536 = vmatpush.msra.mxu0 0.0
      %537 = vmatpush.msra.mxu0 0.0
      %538 = vmatpush.msra.mxu0 %v521
      %539 = vmatmul.f32.gmra.mxu0 %v515
      %v540 = vpop.f32.mrf.mxu0
      %v541 = vadd.f32 0.0, %v540
      %542 = vmatmul.f32.gmra.mxu0 %v518
      %v543 = vpop.f32.mrf.mxu0
      %v544 = vadd.f32 0.0, %v543
      %545 = vdwg.mxu0
      %v546 = vadd.f32 %v508, %v541
      %v547 = vadd.f32 %v509, %v544
      %vm548 = vcmask 130048
      %549 = vst.msk [vmem:[%s192] sm:$0xff] %vm548, %v546
      %550 = vst.msk [vmem:[%s192 + $0x8] sm:$0xff] %vm548, %v547
      %p551 = scmp.lt.s32.totalorder %s18, 1
      %s552 = scalar_select %p551, %s18, 1
      %p553 = scmp.lt.s32.totalorder %s19, 15
      %s554 = scalar_select %p553, %s19, 15
      %s555 = smul.addr %s554, 2
      %s556 = smul.addr %s552, 32
      %s557 = sadd.s32 %s555, %s556
      %s558 = smul.addr %s557, 8
      %s559 = scalar_lea.vmem %s3, %s558
      // Predicated region
      $region33: #{wrn_forward.42} parent=31 // pred_check
        %p560 = pneg %p114
      $region34: #{wrn_forward.42} parent=31 // pred_check_branch
        %562 = sbr.rel (%p560) target = $region36
      $region35: #{wrn_forward.42} parent=31 // pred_region
        _
      $region36: #{wrn_forward.42} parent=31 // pred_fallthru
        _
    $region32: #{wrn_forward.42} parent=5 // pred_fallthru
      _
    %p563 = scmp.le.s32.totalorder 2, %s9
    // Predicated region
    $region37: #{wrn_forward.42} parent=5 // pred_check
      %p564 = pneg %p563
    $region38: #{wrn_forward.42} parent=5 // pred_check_branch
      %566 = sbr.rel (%p564) target = $region40
    $region39: #{wrn_forward.42} parent=5 // pred_region
      %s567 = ssub.s32 %s9, 2
      // Predicated region
      $region41: #{wrn_forward.42} parent=39 // pred_check
        %p568 = pneg %p120
      $region42: #{wrn_forward.42} parent=39 // pred_check_branch
        %570 = sbr.rel (%p568) target = $region44
      $region43: #{wrn_forward.42} parent=39 // pred_region
        %p571 = scmp.lt.s32.totalorder %s20, 1
        %s572 = scalar_select %p571, %s20, 1
        %p573 = scmp.lt.s32.totalorder %s21, 15
        %s574 = scalar_select %p573, %s21, 15
        %s575 = smul.addr %s574, 2
        %s576 = smul.addr %s572, 32
        %s577 = sadd.s32 %s575, %s576
        %s578 = smul.addr %s577, 8
        %s579 = scalar_lea.vmem %s3, %s578
      $region44: #{wrn_forward.42} parent=39 // pred_fallthru
        _
    $region40: #{wrn_forward.42} parent=5 // pred_fallthru
      _
  $region6: #{wrn_forward.42} parent=0 // loop_footer
    %s13 = sadd.s32 1, %s9
  $region7: #{wrn_forward.42} parent=0 // loop_footer_branch
    %8 = sbr.rel target = $region3
  $region8: #{wrn_forward.42} parent=0 // loop_exit
    _

// kernel: wrn_forward.44
$region0: #{wrn_forward.44}
  #allocation0 [shape = 'u32[]', space=smem, size = 0x4, offset = 0x4, fixed_abs, tag = 'smem constant byte address 0x4 - core index']
  #allocation1 [shape = 'u32[72,128]{1,0:T(1,128)}', space=vmem, size = 0x9000, scoped, tag = 'internal scratch']
  %s0 = inlined_call_operand.vmem [shape: f32[32,256], index: 0, kind: input, shape index: {}]
  %s1 = inlined_call_operand.vmem [shape: f32[1,256], index: 1, kind: input, shape index: {}]
  %s2 = inlined_call_operand.vmem [shape: f32[1,256], index: 2, kind: input, shape index: {}]
  %s3 = inlined_call_operand.vmem [shape: f32[32,256], index: 3, kind: output, shape index: {}]
  %s4 = sld [smem:[#allocation0]]
  $region22: #{wrn_forward.44} parent=0
    _
  %s6 = ssub.s32 1, %s4
  %s7 = scalar_select 0, %s6, %s4
  // Predicated region
  $region2: #{wrn_forward.44} parent=0 // pred_check
    _
  $region3: #{wrn_forward.44} parent=0 // pred_check_branch
    %9 = sbr.rel (0) target = $region5
  $region4: #{wrn_forward.44} parent=0 // pred_region
    _
  $region5: #{wrn_forward.44} parent=0 // pred_fallthru
    _
  // Predicated region
  $region6: #{wrn_forward.44} parent=0 // pred_check
    _
  $region7: #{wrn_forward.44} parent=0 // pred_check_branch
    %11 = sbr.rel (0) target = $region9
  $region8: #{wrn_forward.44} parent=0 // pred_region
    _
  $region9: #{wrn_forward.44} parent=0 // pred_fallthru
    _
  // Predicated region
  $region10: #{wrn_forward.44} parent=0 // pred_check
    _
  $region11: #{wrn_forward.44} parent=0 // pred_check_branch
    %13 = sbr.rel (0) target = $region13
  $region12: #{wrn_forward.44} parent=0 // pred_region
    _
  $region13: #{wrn_forward.44} parent=0 // pred_fallthru
    _
  %v14 = vld [vmem:[%s0] sm:$0xff]
  %v15 = vld [vmem:[%s0 + $0x8] sm:$0xff]
  %v16 = vld [vmem:[%s0 + $0x10] sm:$0xff]
  %v17 = vld [vmem:[%s0 + $0x18] sm:$0xff]
  %v18 = vld [vmem:[%s0 + $0x20] sm:$0xff]
  %v19 = vld [vmem:[%s0 + $0x28] sm:$0xff]
  %v20 = vld [vmem:[%s0 + $0x30] sm:$0xff]
  %v21 = vld [vmem:[%s0 + $0x38] sm:$0xff]
  %v22 = vld [vmem:[%s1] sm:$0x3]
  %v24 = vperm.slane %v22, 0
  %v25 = vperm.slane %v22, 1
  %v28 = vmul.f32 %v14, %v24
  %v29 = vmul.f32 %v15, %v25
  %v30 = vmul.f32 %v16, %v24
  %v31 = vmul.f32 %v17, %v25
  %v32 = vmul.f32 %v18, %v24
  %v33 = vmul.f32 %v19, %v25
  %v34 = vmul.f32 %v20, %v24
  %v35 = vmul.f32 %v21, %v25
  %v36 = vld [vmem:[%s2] sm:$0x3]
  %v38 = vperm.slane %v36, 0
  %v39 = vperm.slane %v36, 1
  %v42 = vadd.f32 %v28, %v38
  %v43 = vadd.f32 %v29, %v39
  %v44 = vadd.f32 %v30, %v38
  %v45 = vadd.f32 %v31, %v39
  %v46 = vadd.f32 %v32, %v38
  %v47 = vadd.f32 %v33, %v39
  %v48 = vadd.f32 %v34, %v38
  %v49 = vadd.f32 %v35, %v39
  %vm50 = vcmp.ge.f32.partialorder %v42, 0.0
  %vm51 = vcmp.ge.f32.partialorder %v43, 0.0
  %vm52 = vcmp.ge.f32.partialorder %v44, 0.0
  %vm53 = vcmp.ge.f32.partialorder %v45, 0.0
  %vm54 = vcmp.ge.f32.partialorder %v46, 0.0
  %vm55 = vcmp.ge.f32.partialorder %v47, 0.0
  %vm56 = vcmp.ge.f32.partialorder %v48, 0.0
  %vm57 = vcmp.ge.f32.partialorder %v49, 0.0
  %v58 = vmul.f32 %v42, 0.1
  %v59 = vmul.f32 %v43, 0.1
  %v60 = vmul.f32 %v44, 0.1
  %v61 = vmul.f32 %v45, 0.1
  %v62 = vmul.f32 %v46, 0.1
  %v63 = vmul.f32 %v47, 0.1
  %v64 = vmul.f32 %v48, 0.1
  %v65 = vmul.f32 %v49, 0.1
  %v66 = vsel %vm50, %v42, %v58
  %v67 = vsel %vm51, %v43, %v59
  %v68 = vsel %vm52, %v44, %v60
  %v69 = vsel %vm53, %v45, %v61
  %v70 = vsel %vm54, %v46, %v62
  %v71 = vsel %vm55, %v47, %v63
  %v72 = vsel %vm56, %v48, %v64
  %v73 = vsel %vm57, %v49, %v65
  %74 = vst [vmem:[%s3] sm:$0xff] %v66
  %75 = vst [vmem:[%s3 + $0x8] sm:$0xff] %v67
  %76 = vst [vmem:[%s3 + $0x10] sm:$0xff] %v68
  %77 = vst [vmem:[%s3 + $0x18] sm:$0xff] %v69
  %78 = vst [vmem:[%s3 + $0x20] sm:$0xff] %v70
  %79 = vst [vmem:[%s3 + $0x28] sm:$0xff] %v71
  %80 = vst [vmem:[%s3 + $0x30] sm:$0xff] %v72
  %81 = vst [vmem:[%s3 + $0x38] sm:$0xff] %v73
  // Predicated region
  $region14: #{wrn_forward.44} parent=0 // pred_check
    _
  $region15: #{wrn_forward.44} parent=0 // pred_check_branch
    %83 = sbr.rel (0) target = $region17
  $region16: #{wrn_forward.44} parent=0 // pred_region
    _
  $region17: #{wrn_forward.44} parent=0 // pred_fallthru
    _
  // Predicated region
  $region18: #{wrn_forward.44} parent=0 // pred_check
    _
  $region19: #{wrn_forward.44} parent=0 // pred_check_branch
    %85 = sbr.rel (0) target = $region21
  $region20: #{wrn_forward.44} parent=0 // pred_region
    _
  $region21: #{wrn_forward.44} parent=0 // pred_fallthru
    _

// kernel: wrn_forward.45
$region0: #{wrn_forward.45}
  #allocation0 [shape = 'u32[]', space=smem, size = 0x4, offset = 0x4, fixed_abs, tag = 'smem constant byte address 0x4 - core index']
  #allocation1 [shape = 'u32[72,128]{1,0:T(1,128)}', space=vmem, size = 0x9000, scoped, tag = 'internal scratch']
  %s0 = inlined_call_operand.vmem [shape: f32[2,18,1,18,16], index: 0, kind: input, shape index: {}]
  %s1 = inlined_call_operand.vmem [shape: f32[9,16,16], index: 1, kind: input, shape index: {}]
  %s2 = inlined_call_operand.vmem [shape: f32[1,16], index: 2, kind: input, shape index: {}]
  %s3 = inlined_call_operand.vmem [shape: f32[2,16,16,16], index: 3, kind: output, shape index: {}]
  %s4 = sld [smem:[#allocation0]]
  $region45: #{wrn_forward.45} parent=0
    _
  %s6 = ssub.s32 1, %s4
  %s7 = scalar_select 0, %s6, %s4
  loop: start=0, step=1, limit=34
  $region2: #{wrn_forward.45} parent=0 // loop_pre_header
    _
  $region3: #{wrn_forward.45} parent=0 // loop_header
    %s9 = sphi 0, %s13
    %p10 = scmp.ge.s32.totalorder %s9, 34
    %s16 = sphi 0, %s28
    %s17 = sphi 0, %s24
    %s18 = sphi 0, %s16
    %s19 = sphi 0, %s17
    %s20 = sphi 0, %s18
    %s21 = sphi 0, %s19
    %s31 = sphi 0, %s33
    %s34 = sphi 0, %s31
    %s35 = sphi 0, %s34
    %s51 = sphi 0, %s35
    %s55 = sphi 0, %s55
    %s57 = sphi 0, %s55
    %s58 = sphi 0, %s57
    %s72 = sphi 0, %s58
    %s76 = sphi 0, %s76
    %s78 = sphi 0, %s76
    %s79 = sphi 0, %s78
    %s93 = sphi 0, %s79
    %s101 = sphi 0, %s103
    %s104 = sphi 0, %s101
    %s105 = sphi 0, %s104
    %s121 = sphi 0, %s105
  $region4: #{wrn_forward.45} parent=0 // loop_header_branch
    %12 = sbr.rel (%p10) target = $region8
  $region5: #{wrn_forward.45} parent=0 // loop_body
    %s14 = ssub.s32 %s9, 1
    %s15 = ssub.s32 %s9, 2
    %s22 = sadd.s32 1, %s17
    %p23 = scmp.ge.s32.totalorder %s22, 16
    %s24 = scalar_select %p23, 0, %s22
    %s25 = sadd.s32 1, %s16
    %s26 = scalar_select %p23, %s25, %s16
    %p27 = scmp.ge.s32.totalorder %s26, 2
    %s28 = scalar_select %p27, 0, %s26
    %s29 = ssub.s32 %s16, %s28
    %p30 = scmp.eq.s32.totalorder %s29, 0
    %s32 = sadd.s32 %s31, 1
    %s33 = scalar_select %p30, %s31, %s32
    %p36 = pneg %p30
    %p37 = scmp.eq.s32.totalorder %s9, 31
    %p38 = por %p36, %p37
    %p39 = scmp.ne.s32.totalorder %s31, %s34
    %p40 = scmp.eq.s32.totalorder %s9, 0
    %p41 = por %p39, %p40
    %p42 = scmp.ne.s32.totalorder %s31, %s34
    %p43 = scmp.eq.s32.totalorder %s14, 31
    %p44 = por %p42, %p43
    %p45 = scmp.ne.s32.totalorder %s34, %s35
    %p46 = scmp.eq.s32.totalorder %s14, 0
    %p47 = por %p45, %p46
    %p48 = scmp.ne.s32.totalorder %s34, %s35
    %p49 = scmp.eq.s32.totalorder %s15, 31
    %p50 = por %p48, %p49
    %p52 = scmp.ne.s32.totalorder %s35, %s51
    %p53 = scmp.eq.s32.totalorder %s15, 0
    %p54 = por %p52, %p53
    %s56 = sadd.s32 %s55, 1
    %p59 = scmp.eq.s32.totalorder %s9, 31
    %p60 = scmp.ne.s32.totalorder %s55, %s57
    %p61 = scmp.eq.s32.totalorder %s9, 0
    %p62 = por %p60, %p61
    %p63 = scmp.ne.s32.totalorder %s55, %s57
    %p64 = scmp.eq.s32.totalorder %s14, 31
    %p65 = por %p63, %p64
    %p66 = scmp.ne.s32.totalorder %s57, %s58
    %p67 = scmp.eq.s32.totalorder %s14, 0
    %p68 = por %p66, %p67
    %p69 = scmp.ne.s32.totalorder %s57, %s58
    %p70 = scmp.eq.s32.totalorder %s15, 31
    %p71 = por %p69, %p70
    %p73 = scmp.ne.s32.totalorder %s58, %s72
    %p74 = scmp.eq.s32.totalorder %s15, 0
    %p75 = por %p73, %p74
    %s77 = sadd.s32 %s76, 1
    %p80 = scmp.eq.s32.totalorder %s9, 31
    %p81 = scmp.ne.s32.totalorder %s76, %s78
    %p82 = scmp.eq.s32.totalorder %s9, 0
    %p83 = por %p81, %p82
    %p84 = scmp.ne.s32.totalorder %s76, %s78
    %p85 = scmp.eq.s32.totalorder %s14, 31
    %p86 = por %p84, %p85
    %p87 = scmp.ne.s32.totalorder %s78, %s79
    %p88 = scmp.eq.s32.totalorder %s14, 0
    %p89 = por %p87, %p88
    %p90 = scmp.ne.s32.totalorder %s78, %s79
    %p91 = scmp.eq.s32.totalorder %s15, 31
    %p92 = por %p90, %p91
    %p94 = scmp.ne.s32.totalorder %s79, %s93
    %p95 = scmp.eq.s32.totalorder %s15, 0
    %p96 = por %p94, %p95
    %s97 = ssub.s32 %s16, %s28
    %s98 = ssub.s32 %s17, %s24
    %s99 = sor.u32 %s97, %s98
    %p100 = scmp.eq.s32.totalorder %s99, 0
    %s102 = sadd.s32 %s101, 1
    %s103 = scalar_select %p100, %s101, %s102
    %p106 = pneg %p100
    %p107 = scmp.eq.s32.totalorder %s9, 31
    %p108 = por %p106, %p107
    %p109 = scmp.ne.s32.totalorder %s101, %s104
    %p110 = scmp.eq.s32.totalorder %s9, 0
    %p111 = por %p109, %p110
    %p112 = scmp.ne.s32.totalorder %s101, %s104
    %p113 = scmp.eq.s32.totalorder %s14, 31
    %p114 = por %p112, %p113
    %p115 = scmp.ne.s32.totalorder %s104, %s105
    %p116 = scmp.eq.s32.totalorder %s14, 0
    %p117 = por %p115, %p116
    %p118 = scmp.ne.s32.totalorder %s104, %s105
    %p119 = scmp.eq.s32.totalorder %s15, 31
    %p120 = por %p118, %p119
    %p122 = scmp.ne.s32.totalorder %s105, %s121
    %p123 = scmp.eq.s32.totalorder %s15, 0
    %p124 = por %p122, %p123
    %p125 = scmp.le.s32.totalorder 1, %s9
    %p126 = scmp.lt.s32.totalorder %s9, 33
    %p127 = pnand %p125, %p126
    %p128 = pneg %p127
    // Predicated region
    $region9: #{wrn_forward.45} parent=5 // pred_check
      _
    $region10: #{wrn_forward.45} parent=5 // pred_check_branch
      %130 = sbr.rel (%p127) target = $region12
    $region11: #{wrn_forward.45} parent=5 // pred_region
      %s131 = ssub.s32 %s9, 1
      // Predicated region
      $region13: #{wrn_forward.45} parent=11 // pred_check
        %p132 = pneg %p68
      $region14: #{wrn_forward.45} parent=11 // pred_check_branch
        %134 = sbr.rel (%p132) target = $region16
      $region15: #{wrn_forward.45} parent=11 // pred_region
        _
      $region16: #{wrn_forward.45} parent=11 // pred_fallthru
        _
      // Predicated region
      $region17: #{wrn_forward.45} parent=11 // pred_check
        %p135 = pneg %p89
      $region18: #{wrn_forward.45} parent=11 // pred_check_branch
        %137 = sbr.rel (%p135) target = $region20
      $region19: #{wrn_forward.45} parent=11 // pred_region
        _
      $region20: #{wrn_forward.45} parent=11 // pred_fallthru
        _
    $region12: #{wrn_forward.45} parent=5 // pred_fallthru
      _
    %p138 = scmp.lt.s32.totalorder %s9, 32
    // Predicated region
    $region21: #{wrn_forward.45} parent=5 // pred_check
      %p139 = pneg %p138
    $region22: #{wrn_forward.45} parent=5 // pred_check_branch
      %141 = sbr.rel (%p139) target = $region24
    $region23: #{wrn_forward.45} parent=5 // pred_region
      // Predicated region
      $region25: #{wrn_forward.45} parent=23 // pred_check
        %p142 = pneg %p41
      $region26: #{wrn_forward.45} parent=23 // pred_check_branch
        %144 = sbr.rel (%p142) target = $region28
      $region27: #{wrn_forward.45} parent=23 // pred_region
        %p145 = scmp.lt.s32.totalorder %s16, 1
        %s146 = scalar_select %p145, %s16, 1
        %s147 = smul.addr %s146, 54
        %s148 = smul.addr %s147, 8
        %s149 = scalar_lea.vmem %s0, %s148
      $region28: #{wrn_forward.45} parent=23 // pred_fallthru
        _
    $region24: #{wrn_forward.45} parent=5 // pred_fallthru
      _
    %p150 = scmp.le.s32.totalorder 1, %s9
    %p151 = scmp.lt.s32.totalorder %s9, 33
    %p152 = pnand %p150, %p151
    %p153 = pneg %p152
    // Predicated region
    $region29: #{wrn_forward.45} parent=5 // pred_check
      _
    $region30: #{wrn_forward.45} parent=5 // pred_check_branch
      %155 = sbr.rel (%p152) target = $region32
    $region31: #{wrn_forward.45} parent=5 // pred_region
      %s156 = ssub.s32 %s9, 1
      %p157 = scmp.lt.s32.totalorder %s18, 1
      %s158 = scalar_select %p157, %s18, 1
      %s159 = smul.addr %s158, 54
      %s160 = smul.addr %s159, 8
      %s161 = scalar_lea.vmem %s0, %s160
      %p162 = pneg %p47
      %p163 = pneg %p44
      %p164 = pneg %p68
      %p165 = pneg %p65
      %p166 = pneg %p89
      %p167 = pneg %p86
      %p168 = pneg %p117
      %p169 = pneg %p114
      %p170 = scmp.lt.s32.totalorder %s18, 1
      %s171 = scalar_select %p170, %s18, 1
      %p172 = scmp.lt.s32.totalorder %s19, 15
      %s173 = scalar_select %p172, %s19, 15
      %s174 = smul.addr %s173, 2
      %s175 = smul.addr %s171, 32
      %s176 = sadd.s32 %s174, %s175
      %s177 = smul.addr %s176, 8
      %s178 = scalar_lea.vmem %s3, %s177
      %p179 = scmp.lt.s32.totalorder %s18, 1
      %s180 = scalar_select %p179, %s18, 1
      %s181 = smul.addr %s180, 54
      %s182 = smul.addr %s181, 8
      %s183 = scalar_lea.vmem %s0, %s182
      %p184 = scmp.lt.s32.totalorder %s18, 1
      %s185 = scalar_select %p184, %s18, 1
      %p186 = scmp.lt.s32.totalorder %s19, 15
      %s187 = scalar_select %p186, %s19, 15
      %s188 = smul.addr %s187, 2
      %s189 = smul.addr %s185, 32
      %s190 = sadd.s32 %s188, %s189
      %s191 = smul.addr %s190, 8
      %s192 = scalar_lea.vmem %s3, %s191
      %v193 = vld [vmem:[%s2] sm:$0x1]
      %v195 = vperm.slane %v193, 0
      %s197 = smul.u32 %s19, 24
      %s198 = scalar_lea.vmem %s183, %s197
      %v199 = vld [vmem:[%s198] sm:$0xff]
      %v200 = vld [vmem:[%s198 + $0x8] sm:$0xff]
      %v201 = vld [vmem:[%s1] sm:$0xff]
      %v202 = vld [vmem:[%s1 + $0x8] sm:$0xff]
      %vm203 = vcmask 130048
      %v205 = vsel %vm203, %v199, 0
      %v208 = vsel %vm203, %v200, 0
      %210 = vmatpush.msra.mxu0 0.0
      %211 = vmatpush.msra.mxu0 0.0
      %212 = vmatpush.msra.mxu0 0.0
      %213 = vmatpush.msra.mxu0 0.0
      %214 = vmatpush.msra.mxu0 0.0
      %215 = vmatpush.msra.mxu0 0.0
      %216 = vmatpush.msra.mxu0 0.0
      %217 = vmatpush.msra.mxu0 0.0
      %218 = vmatpush.msra.mxu0 0.0
      %219 = vmatpush.msra.mxu0 0.0
      %220 = vmatpush.msra.mxu0 0.0
      %221 = vmatpush.msra.mxu0 0.0
      %222 = vmatpush.msra.mxu0 0.0
      %223 = vmatpush.msra.mxu0 0.0
      %224 = vmatpush.msra.mxu0 %v202
      %225 = vmatpush.msra.mxu0 %v201
      %226 = vmatmul.f32.gmra.mxu0 %v205
      %v227 = vpop.f32.mrf.mxu0
      %v228 = vadd.f32 0.0, %v227
      %229 = vmatmul.f32.gmra.mxu0 %v208
      %v230 = vpop.f32.mrf.mxu0
      %v231 = vadd.f32 0.0, %v230
      %232 = vdwg.mxu0
      %v233 = vadd.f32 %v195, %v228
      %v234 = vadd.f32 %v195, %v231
      %v235 = vld [vmem:[%s198 + $0x1] sm:$0xff]
      %v236 = vld [vmem:[%s198 + $0x9] sm:$0xff]
      %s237 = scalar_lea.vmem %s1, 16
      %v238 = vld [vmem:[%s237] sm:$0xff]
      %v239 = vld [vmem:[%s237 + $0x8] sm:$0xff]
      %v241 = vsel %vm203, %v235, 0
      %v244 = vsel %vm203, %v236, 0
      %246 = vmatpush.msra.mxu0 0.0
      %247 = vmatpush.msra.mxu0 0.0
      %248 = vmatpush.msra.mxu0 0.0
      %249 = vmatpush.msra.mxu0 0.0
      %250 = vmatpush.msra.mxu0 0.0
      %251 = vmatpush.msra.mxu0 0.0
      %252 = vmatpush.msra.mxu0 0.0
      %253 = vmatpush.msra.mxu0 0.0
      %254 = vmatpush.msra.mxu0 0.0
      %255 = vmatpush.msra.mxu0 0.0
      %256 = vmatpush.msra.mxu0 0.0
      %257 = vmatpush.msra.mxu0 0.0
      %258 = vmatpush.msra.mxu0 0.0
      %259 = vmatpush.msra.mxu0 0.0
      %260 = vmatpush.msra.mxu0 %v239
      %261 = vmatpush.msra.mxu0 %v238
      %262 = vmatmul.f32.gmra.mxu0 %v241
      %v263 = vpop.f32.mrf.mxu0
      %v264 = vadd.f32 0.0, %v263
      %265 = vmatmul.f32.gmra.mxu0 %v244
      %v266 = vpop.f32.mrf.mxu0
      %v267 = vadd.f32 0.0, %v266
      %268 = vdwg.mxu0
      %v269 = vadd.f32 %v233, %v264
      %v270 = vadd.f32 %v234, %v267
      %v271 = vld [vmem:[%s198 + $0x2] sm:$0xff]
      %v272 = vld [vmem:[%s198 + $0xa] sm:$0xff]
      %s273 = scalar_lea.vmem %s1, 32
      %v274 = vld [vmem:[%s273] sm:$0xff]
      %v275 = vld [vmem:[%s273 + $0x8] sm:$0xff]
      %v277 = vsel %vm203, %v271, 0
      %v280 = vsel %vm203, %v272, 0
      %282 = vmatpush.msra.mxu0 0.0
      %283 = vmatpush.msra.mxu0 0.0
      %284 = vmatpush.msra.mxu0 0.0
      %285 = vmatpush.msra.mxu0 0.0
      %286 = vmatpush.msra.mxu0 0.0
      %287 = vmatpush.msra.mxu0 0.0
      %288 = vmatpush.msra.mxu0 0.0
      %289 = vmatpush.msra.mxu0 0.0
      %290 = vmatpush.msra.mxu0 0.0
      %291 = vmatpush.msra.mxu0 0.0
      %292 = vmatpush.msra.mxu0 0.0
      %293 = vmatpush.msra.mxu0 0.0
      %294 = vmatpush.msra.mxu0 0.0
      %295 = vmatpush.msra.mxu0 0.0
      %296 = vmatpush.msra.mxu0 %v275
      %297 = vmatpush.msra.mxu0 %v274
      %298 = vmatmul.f32.gmra.mxu0 %v277
      %v299 = vpop.f32.mrf.mxu0
      %v300 = vadd.f32 0.0, %v299
      %301 = vmatmul.f32.gmra.mxu0 %v280
      %v302 = vpop.f32.mrf.mxu0
      %v303 = vadd.f32 0.0, %v302
      %304 = vdwg.mxu0
      %v305 = vadd.f32 %v269, %v300
      %v306 = vadd.f32 %v270, %v303
      %s307 = sadd.s32 %s19, 1
      %s308 = smul.u32 %s307, 24
      %s309 = scalar_lea.vmem %s183, %s308
      %v310 = vld [vmem:[%s309] sm:$0xff]
      %v311 = vld [vmem:[%s309 + $0x8] sm:$0xff]
      %s312 = scalar_lea.vmem %s1, 48
      %v313 = vld [vmem:[%s312] sm:$0xff]
      %v314 = vld [vmem:[%s312 + $0x8] sm:$0xff]
      %v316 = vsel %vm203, %v310, 0
      %v319 = vsel %vm203, %v311, 0
      %321 = vmatpush.msra.mxu0 0.0
      %322 = vmatpush.msra.mxu0 0.0
      %323 = vmatpush.msra.mxu0 0.0
      %324 = vmatpush.msra.mxu0 0.0
      %325 = vmatpush.msra.mxu0 0.0
      %326 = vmatpush.msra.mxu0 0.0
      %327 = vmatpush.msra.mxu0 0.0
      %328 = vmatpush.msra.mxu0 0.0
      %329 = vmatpush.msra.mxu0 0.0
      %330 = vmatpush.msra.mxu0 0.0
      %331 = vmatpush.msra.mxu0 0.0
      %332 = vmatpush.msra.mxu0 0.0
      %333 = vmatpush.msra.mxu0 0.0
      %334 = vmatpush.msra.mxu0 0.0
      %335 = vmatpush.msra.mxu0 %v314
      %336 = vmatpush.msra.mxu0 %v313
      %337 = vmatmul.f32.gmra.mxu0 %v316
      %v338 = vpop.f32.mrf.mxu0
      %v339 = vadd.f32 0.0, %v338
      %340 = vmatmul.f32.gmra.mxu0 %v319
      %v341 = vpop.f32.mrf.mxu0
      %v342 = vadd.f32 0.0, %v341
      %343 = vdwg.mxu0
      %v344 = vadd.f32 %v305, %v339
      %v345 = vadd.f32 %v306, %v342
      %v346 = vld [vmem:[%s309 + $0x1] sm:$0xff]
      %v347 = vld [vmem:[%s309 + $0x9] sm:$0xff]
      %s348 = scalar_lea.vmem %s1, 64
      %v349 = vld [vmem:[%s348] sm:$0xff]
      %v350 = vld [vmem:[%s348 + $0x8] sm:$0xff]
      %v352 = vsel %vm203, %v346, 0
      %v355 = vsel %vm203, %v347, 0
      %357 = vmatpush.msra.mxu0 0.0
      %358 = vmatpush.msra.mxu0 0.0
      %359 = vmatpush.msra.mxu0 0.0
      %360 = vmatpush.msra.mxu0 0.0
      %361 = vmatpush.msra.mxu0 0.0
      %362 = vmatpush.msra.mxu0 0.0
      %363 = vmatpush.msra.mxu0 0.0
      %364 = vmatpush.msra.mxu0 0.0
      %365 = vmatpush.msra.mxu0 0.0
      %366 = vmatpush.msra.mxu0 0.0
      %367 = vmatpush.msra.mxu0 0.0
      %368 = vmatpush.msra.mxu0 0.0
      %369 = vmatpush.msra.mxu0 0.0
      %370 = vmatpush.msra.mxu0 0.0
      %371 = vmatpush.msra.mxu0 %v350
      %372 = vmatpush.msra.mxu0 %v349
      %373 = vmatmul.f32.gmra.mxu0 %v352
      %v374 = vpop.f32.mrf.mxu0
      %v375 = vadd.f32 0.0, %v374
      %376 = vmatmul.f32.gmra.mxu0 %v355
      %v377 = vpop.f32.mrf.mxu0
      %v378 = vadd.f32 0.0, %v377
      %379 = vdwg.mxu0
      %v380 = vadd.f32 %v344, %v375
      %v381 = vadd.f32 %v345, %v378
      %v382 = vld [vmem:[%s309 + $0x2] sm:$0xff]
      %v383 = vld [vmem:[%s309 + $0xa] sm:$0xff]
      %s384 = scalar_lea.vmem %s1, 80
      %v385 = vld [vmem:[%s384] sm:$0xff]
      %v386 = vld [vmem:[%s384 + $0x8] sm:$0xff]
      %v388 = vsel %vm203, %v382, 0
      %v391 = vsel %vm203, %v383, 0
      %393 = vmatpush.msra.mxu0 0.0
      %394 = vmatpush.msra.mxu0 0.0
      %395 = vmatpush.msra.mxu0 0.0
      %396 = vmatpush.msra.mxu0 0.0
      %397 = vmatpush.msra.mxu0 0.0
      %398 = vmatpush.msra.mxu0 0.0
      %399 = vmatpush.msra.mxu0 0.0
      %400 = vmatpush.msra.mxu0 0.0
      %401 = vmatpush.msra.mxu0 0.0
      %402 = vmatpush.msra.mxu0 0.0
      %403 = vmatpush.msra.mxu0 0.0
      %404 = vmatpush.msra.mxu0 0.0
      %405 = vmatpush.msra.mxu0 0.0
      %406 = vmatpush.msra.mxu0 0.0
      %407 = vmatpush.msra.mxu0 %v386
      %408 = vmatpush.msra.mxu0 %v385
      %409 = vmatmul.f32.gmra.mxu0 %v388
      %v410 = vpop.f32.mrf.mxu0
      %v411 = vadd.f32 0.0, %v410
      %412 = vmatmul.f32.gmra.mxu0 %v391
      %v413 = vpop.f32.mrf.mxu0
      %v414 = vadd.f32 0.0, %v413
      %415 = vdwg.mxu0
      %v416 = vadd.f32 %v380, %v411
      %v417 = vadd.f32 %v381, %v414
      %s418 = sadd.s32 %s19, 2
      %s419 = smul.u32 %s418, 24
      %s420 = scalar_lea.vmem %s183, %s419
      %v421 = vld [vmem:[%s420] sm:$0xff]
      %v422 = vld [vmem:[%s420 + $0x8] sm:$0xff]
      %s423 = scalar_lea.vmem %s1, 96
      %v424 = vld [vmem:[%s423] sm:$0xff]
      %v425 = vld [vmem:[%s423 + $0x8] sm:$0xff]
      %v427 = vsel %vm203, %v421, 0
      %v430 = vsel %vm203, %v422, 0
      %432 = vmatpush.msra.mxu0 0.0
      %433 = vmatpush.msra.mxu0 0.0
      %434 = vmatpush.msra.mxu0 0.0
      %435 = vmatpush.msra.mxu0 0.0
      %436 = vmatpush.msra.mxu0 0.0
      %437 = vmatpush.msra.mxu0 0.0
      %438 = vmatpush.msra.mxu0 0.0
      %439 = vmatpush.msra.mxu0 0.0
      %440 = vmatpush.msra.mxu0 0.0
      %441 = vmatpush.msra.mxu0 0.0
      %442 = vmatpush.msra.mxu0 0.0
      %443 = vmatpush.msra.mxu0 0.0
      %444 = vmatpush.msra.mxu0 0.0
      %445 = vmatpush.msra.mxu0 0.0
      %446 = vmatpush.msra.mxu0 %v425
      %447 = vmatpush.msra.mxu0 %v424
      %448 = vmatmul.f32.gmra.mxu0 %v427
      %v449 = vpop.f32.mrf.mxu0
      %v450 = vadd.f32 0.0, %v449
      %451 = vmatmul.f32.gmra.mxu0 %v430
      %v452 = vpop.f32.mrf.mxu0
      %v453 = vadd.f32 0.0, %v452
      %454 = vdwg.mxu0
      %v455 = vadd.f32 %v416, %v450
      %v456 = vadd.f32 %v417, %v453
      %v457 = vld [vmem:[%s420 + $0x1] sm:$0xff]
      %v458 = vld [vmem:[%s420 + $0x9] sm:$0xff]
      %s459 = scalar_lea.vmem %s1, 112
      %v460 = vld [vmem:[%s459] sm:$0xff]
      %v461 = vld [vmem:[%s459 + $0x8] sm:$0xff]
      %v463 = vsel %vm203, %v457, 0
      %v466 = vsel %vm203, %v458, 0
      %468 = vmatpush.msra.mxu0 0.0
      %469 = vmatpush.msra.mxu0 0.0
      %470 = vmatpush.msra.mxu0 0.0
      %471 = vmatpush.msra.mxu0 0.0
      %472 = vmatpush.msra.mxu0 0.0
      %473 = vmatpush.msra.mxu0 0.0
      %474 = vmatpush.msra.mxu0 0.0
      %475 = vmatpush.msra.mxu0 0.0
      %476 = vmatpush.msra.mxu0 0.0
      %477 = vmatpush.msra.mxu0 0.0
      %478 = vmatpush.msra.mxu0 0.0
      %479 = vmatpush.msra.mxu0 0.0
      %480 = vmatpush.msra.mxu0 0.0
      %481 = vmatpush.msra.mxu0 0.0
      %482 = vmatpush.msra.mxu0 %v461
      %483 = vmatpush.msra.mxu0 %v460
      %484 = vmatmul.f32.gmra.mxu0 %v463
      %v485 = vpop.f32.mrf.mxu0
      %v486 = vadd.f32 0.0, %v485
      %487 = vmatmul.f32.gmra.mxu0 %v466
      %v488 = vpop.f32.mrf.mxu0
      %v489 = vadd.f32 0.0, %v488
      %490 = vdwg.mxu0
      %v491 = vadd.f32 %v455, %v486
      %v492 = vadd.f32 %v456, %v489
      %v493 = vld [vmem:[%s420 + $0x2] sm:$0xff]
      %v494 = vld [vmem:[%s420 + $0xa] sm:$0xff]
      %s495 = scalar_lea.vmem %s1, 128
      %v496 = vld [vmem:[%s495] sm:$0xff]
      %v497 = vld [vmem:[%s495 + $0x8] sm:$0xff]
      %v499 = vsel %vm203, %v493, 0
      %v502 = vsel %vm203, %v494, 0
      %504 = vmatpush.msra.mxu0 0.0
      %505 = vmatpush.msra.mxu0 0.0
      %506 = vmatpush.msra.mxu0 0.0
      %507 = vmatpush.msra.mxu0 0.0
      %508 = vmatpush.msra.mxu0 0.0
      %509 = vmatpush.msra.mxu0 0.0
      %510 = vmatpush.msra.mxu0 0.0
      %511 = vmatpush.msra.mxu0 0.0
      %512 = vmatpush.msra.mxu0 0.0
      %513 = vmatpush.msra.mxu0 0.0
      %514 = vmatpush.msra.mxu0 0.0
      %515 = vmatpush.msra.mxu0 0.0
      %516 = vmatpush.msra.mxu0 0.0
      %517 = vmatpush.msra.mxu0 0.0
      %518 = vmatpush.msra.mxu0 %v497
      %519 = vmatpush.msra.mxu0 %v496
      %520 = vmatmul.f32.gmra.mxu0 %v499
      %v521 = vpop.f32.mrf.mxu0
      %v522 = vadd.f32 0.0, %v521
      %523 = vmatmul.f32.gmra.mxu0 %v502
      %v524 = vpop.f32.mrf.mxu0
      %v525 = vadd.f32 0.0, %v524
      %526 = vdwg.mxu0
      %v527 = vadd.f32 %v491, %v522
      %v528 = vadd.f32 %v492, %v525
      %529 = vst.msk [vmem:[%s192] sm:$0xff] %vm203, %v527
      %530 = vst.msk [vmem:[%s192 + $0x8] sm:$0xff] %vm203, %v528
      %p531 = scmp.lt.s32.totalorder %s18, 1
      %s532 = scalar_select %p531, %s18, 1
      %p533 = scmp.lt.s32.totalorder %s19, 15
      %s534 = scalar_select %p533, %s19, 15
      %s535 = smul.addr %s534, 2
      %s536 = smul.addr %s532, 32
      %s537 = sadd.s32 %s535, %s536
      %s538 = smul.addr %s537, 8
      %s539 = scalar_lea.vmem %s3, %s538
      // Predicated region
      $region33: #{wrn_forward.45} parent=31 // pred_check
        %p540 = pneg %p114
      $region34: #{wrn_forward.45} parent=31 // pred_check_branch
        %542 = sbr.rel (%p540) target = $region36
      $region35: #{wrn_forward.45} parent=31 // pred_region
        _
      $region36: #{wrn_forward.45} parent=31 // pred_fallthru
        _
    $region32: #{wrn_forward.45} parent=5 // pred_fallthru
      _
    %p543 = scmp.le.s32.totalorder 2, %s9
    // Predicated region
    $region37: #{wrn_forward.45} parent=5 // pred_check
      %p544 = pneg %p543
    $region38: #{wrn_forward.45} parent=5 // pred_check_branch
      %546 = sbr.rel (%p544) target = $region40
    $region39: #{wrn_forward.45} parent=5 // pred_region
      %s547 = ssub.s32 %s9, 2
      // Predicated region
      $region41: #{wrn_forward.45} parent=39 // pred_check
        %p548 = pneg %p120
      $region42: #{wrn_forward.45} parent=39 // pred_check_branch
        %550 = sbr.rel (%p548) target = $region44
      $region43: #{wrn_forward.45} parent=39 // pred_region
        %p551 = scmp.lt.s32.totalorder %s20, 1
        %s552 = scalar_select %p551, %s20, 1
        %p553 = scmp.lt.s32.totalorder %s21, 15
        %s554 = scalar_select %p553, %s21, 15
        %s555 = smul.addr %s554, 2
        %s556 = smul.addr %s552, 32
        %s557 = sadd.s32 %s555, %s556
        %s558 = smul.addr %s557, 8
        %s559 = scalar_lea.vmem %s3, %s558
      $region44: #{wrn_forward.45} parent=39 // pred_fallthru
        _
    $region40: #{wrn_forward.45} parent=5 // pred_fallthru
      _
  $region6: #{wrn_forward.45} parent=0 // loop_footer
    %s13 = sadd.s32 1, %s9
  $region7: #{wrn_forward.45} parent=0 // loop_footer_branch
    %8 = sbr.rel target = $region3
  $region8: #{wrn_forward.45} parent=0 // loop_exit
    _

// kernel: wrn_forward.48
$region0: #{wrn_forward.48}
  #allocation0 [shape = 'u32[]', space=smem, size = 0x4, offset = 0x4, fixed_abs, tag = 'smem constant byte address 0x4 - core index']
  #allocation1 [shape = 'u32[72,128]{1,0:T(1,128)}', space=vmem, size = 0x9000, scoped, tag = 'internal scratch']
  %s0 = inlined_call_operand.vmem [shape: f32[2,18,1,18,16], index: 0, kind: input, shape index: {}]
  %s1 = inlined_call_operand.vmem [shape: f32[9,16,16], index: 1, kind: input, shape index: {}]
  %s2 = inlined_call_operand.vmem [shape: f32[1,16], index: 2, kind: input, shape index: {}]
  %s3 = inlined_call_operand.vmem [shape: f32[2,16,16,16], index: 3, kind: input, shape index: {}]
  %s4 = inlined_call_operand.vmem [shape: f32[2,16,16,16], index: 4, kind: output, shape index: {}]
  %s5 = sld [smem:[#allocation0]]
  $region49: #{wrn_forward.48} parent=0
    _
  %s7 = ssub.s32 1, %s5
  %s8 = scalar_select 0, %s7, %s5
  loop: start=0, step=1, limit=34
  $region2: #{wrn_forward.48} parent=0 // loop_pre_header
    _
  $region3: #{wrn_forward.48} parent=0 // loop_header
    %s10 = sphi 0, %s14
    %p11 = scmp.ge.s32.totalorder %s10, 34
    %s17 = sphi 0, %s29
    %s18 = sphi 0, %s25
    %s19 = sphi 0, %s17
    %s20 = sphi 0, %s18
    %s21 = sphi 0, %s19
    %s22 = sphi 0, %s20
    %s32 = sphi 0, %s34
    %s35 = sphi 0, %s32
    %s36 = sphi 0, %s35
    %s52 = sphi 0, %s36
    %s56 = sphi 0, %s56
    %s58 = sphi 0, %s56
    %s59 = sphi 0, %s58
    %s73 = sphi 0, %s59
    %s77 = sphi 0, %s77
    %s79 = sphi 0, %s77
    %s80 = sphi 0, %s79
    %s94 = sphi 0, %s80
    %s102 = sphi 0, %s104
    %s105 = sphi 0, %s102
    %s106 = sphi 0, %s105
    %s122 = sphi 0, %s106
    %s130 = sphi 0, %s132
    %s133 = sphi 0, %s130
    %s134 = sphi 0, %s133
    %s150 = sphi 0, %s134
  $region4: #{wrn_forward.48} parent=0 // loop_header_branch
    %13 = sbr.rel (%p11) target = $region8
  $region5: #{wrn_forward.48} parent=0 // loop_body
    %s15 = ssub.s32 %s10, 1
    %s16 = ssub.s32 %s10, 2
    %s23 = sadd.s32 1, %s18
    %p24 = scmp.ge.s32.totalorder %s23, 16
    %s25 = scalar_select %p24, 0, %s23
    %s26 = sadd.s32 1, %s17
    %s27 = scalar_select %p24, %s26, %s17
    %p28 = scmp.ge.s32.totalorder %s27, 2
    %s29 = scalar_select %p28, 0, %s27
    %s30 = ssub.s32 %s17, %s29
    %p31 = scmp.eq.s32.totalorder %s30, 0
    %s33 = sadd.s32 %s32, 1
    %s34 = scalar_select %p31, %s32, %s33
    %p37 = pneg %p31
    %p38 = scmp.eq.s32.totalorder %s10, 31
    %p39 = por %p37, %p38
    %p40 = scmp.ne.s32.totalorder %s32, %s35
    %p41 = scmp.eq.s32.totalorder %s10, 0
    %p42 = por %p40, %p41
    %p43 = scmp.ne.s32.totalorder %s32, %s35
    %p44 = scmp.eq.s32.totalorder %s15, 31
    %p45 = por %p43, %p44
    %p46 = scmp.ne.s32.totalorder %s35, %s36
    %p47 = scmp.eq.s32.totalorder %s15, 0
    %p48 = por %p46, %p47
    %p49 = scmp.ne.s32.totalorder %s35, %s36
    %p50 = scmp.eq.s32.totalorder %s16, 31
    %p51 = por %p49, %p50
    %p53 = scmp.ne.s32.totalorder %s36, %s52
    %p54 = scmp.eq.s32.totalorder %s16, 0
    %p55 = por %p53, %p54
    %s57 = sadd.s32 %s56, 1
    %p60 = scmp.eq.s32.totalorder %s10, 31
    %p61 = scmp.ne.s32.totalorder %s56, %s58
    %p62 = scmp.eq.s32.totalorder %s10, 0
    %p63 = por %p61, %p62
    %p64 = scmp.ne.s32.totalorder %s56, %s58
    %p65 = scmp.eq.s32.totalorder %s15, 31
    %p66 = por %p64, %p65
    %p67 = scmp.ne.s32.totalorder %s58, %s59
    %p68 = scmp.eq.s32.totalorder %s15, 0
    %p69 = por %p67, %p68
    %p70 = scmp.ne.s32.totalorder %s58, %s59
    %p71 = scmp.eq.s32.totalorder %s16, 31
    %p72 = por %p70, %p71
    %p74 = scmp.ne.s32.totalorder %s59, %s73
    %p75 = scmp.eq.s32.totalorder %s16, 0
    %p76 = por %p74, %p75
    %s78 = sadd.s32 %s77, 1
    %p81 = scmp.eq.s32.totalorder %s10, 31
    %p82 = scmp.ne.s32.totalorder %s77, %s79
    %p83 = scmp.eq.s32.totalorder %s10, 0
    %p84 = por %p82, %p83
    %p85 = scmp.ne.s32.totalorder %s77, %s79
    %p86 = scmp.eq.s32.totalorder %s15, 31
    %p87 = por %p85, %p86
    %p88 = scmp.ne.s32.totalorder %s79, %s80
    %p89 = scmp.eq.s32.totalorder %s15, 0
    %p90 = por %p88, %p89
    %p91 = scmp.ne.s32.totalorder %s79, %s80
    %p92 = scmp.eq.s32.totalorder %s16, 31
    %p93 = por %p91, %p92
    %p95 = scmp.ne.s32.totalorder %s80, %s94
    %p96 = scmp.eq.s32.totalorder %s16, 0
    %p97 = por %p95, %p96
    %s98 = ssub.s32 %s17, %s29
    %s99 = ssub.s32 %s18, %s25
    %s100 = sor.u32 %s98, %s99
    %p101 = scmp.eq.s32.totalorder %s100, 0
    %s103 = sadd.s32 %s102, 1
    %s104 = scalar_select %p101, %s102, %s103
    %p107 = pneg %p101
    %p108 = scmp.eq.s32.totalorder %s10, 31
    %p109 = por %p107, %p108
    %p110 = scmp.ne.s32.totalorder %s102, %s105
    %p111 = scmp.eq.s32.totalorder %s10, 0
    %p112 = por %p110, %p111
    %p113 = scmp.ne.s32.totalorder %s102, %s105
    %p114 = scmp.eq.s32.totalorder %s15, 31
    %p115 = por %p113, %p114
    %p116 = scmp.ne.s32.totalorder %s105, %s106
    %p117 = scmp.eq.s32.totalorder %s15, 0
    %p118 = por %p116, %p117
    %p119 = scmp.ne.s32.totalorder %s105, %s106
    %p120 = scmp.eq.s32.totalorder %s16, 31
    %p121 = por %p119, %p120
    %p123 = scmp.ne.s32.totalorder %s106, %s122
    %p124 = scmp.eq.s32.totalorder %s16, 0
    %p125 = por %p123, %p124
    %s126 = ssub.s32 %s17, %s29
    %s127 = ssub.s32 %s18, %s25
    %s128 = sor.u32 %s126, %s127
    %p129 = scmp.eq.s32.totalorder %s128, 0
    %s131 = sadd.s32 %s130, 1
    %s132 = scalar_select %p129, %s130, %s131
    %p135 = pneg %p129
    %p136 = scmp.eq.s32.totalorder %s10, 31
    %p137 = por %p135, %p136
    %p138 = scmp.ne.s32.totalorder %s130, %s133
    %p139 = scmp.eq.s32.totalorder %s10, 0
    %p140 = por %p138, %p139
    %p141 = scmp.ne.s32.totalorder %s130, %s133
    %p142 = scmp.eq.s32.totalorder %s15, 31
    %p143 = por %p141, %p142
    %p144 = scmp.ne.s32.totalorder %s133, %s134
    %p145 = scmp.eq.s32.totalorder %s15, 0
    %p146 = por %p144, %p145
    %p147 = scmp.ne.s32.totalorder %s133, %s134
    %p148 = scmp.eq.s32.totalorder %s16, 31
    %p149 = por %p147, %p148
    %p151 = scmp.ne.s32.totalorder %s134, %s150
    %p152 = scmp.eq.s32.totalorder %s16, 0
    %p153 = por %p151, %p152
    %p154 = scmp.le.s32.totalorder 1, %s10
    %p155 = scmp.lt.s32.totalorder %s10, 33
    %p156 = pnand %p154, %p155
    %p157 = pneg %p156
    // Predicated region
    $region9: #{wrn_forward.48} parent=5 // pred_check
      _
    $region10: #{wrn_forward.48} parent=5 // pred_check_branch
      %159 = sbr.rel (%p156) target = $region12
    $region11: #{wrn_forward.48} parent=5 // pred_region
      %s160 = ssub.s32 %s10, 1
      // Predicated region
      $region13: #{wrn_forward.48} parent=11 // pred_check
        %p161 = pneg %p69
      $region14: #{wrn_forward.48} parent=11 // pred_check_branch
        %163 = sbr.rel (%p161) target = $region16
      $region15: #{wrn_forward.48} parent=11 // pred_region
        _
      $region16: #{wrn_forward.48} parent=11 // pred_fallthru
        _
      // Predicated region
      $region17: #{wrn_forward.48} parent=11 // pred_check
        %p164 = pneg %p90
      $region18: #{wrn_forward.48} parent=11 // pred_check_branch
        %166 = sbr.rel (%p164) target = $region20
      $region19: #{wrn_forward.48} parent=11 // pred_region
        _
      $region20: #{wrn_forward.48} parent=11 // pred_fallthru
        _
    $region12: #{wrn_forward.48} parent=5 // pred_fallthru
      _
    %p167 = scmp.lt.s32.totalorder %s10, 32
    // Predicated region
    $region21: #{wrn_forward.48} parent=5 // pred_check
      %p168 = pneg %p167
    $region22: #{wrn_forward.48} parent=5 // pred_check_branch
      %170 = sbr.rel (%p168) target = $region24
    $region23: #{wrn_forward.48} parent=5 // pred_region
      // Predicated region
      $region25: #{wrn_forward.48} parent=23 // pred_check
        %p171 = pneg %p42
      $region26: #{wrn_forward.48} parent=23 // pred_check_branch
        %173 = sbr.rel (%p171) target = $region28
      $region27: #{wrn_forward.48} parent=23 // pred_region
        %p174 = scmp.lt.s32.totalorder %s17, 1
        %s175 = scalar_select %p174, %s17, 1
        %s176 = smul.addr %s175, 54
        %s177 = smul.addr %s176, 8
        %s178 = scalar_lea.vmem %s0, %s177
      $region28: #{wrn_forward.48} parent=23 // pred_fallthru
        _
      // Predicated region
      $region29: #{wrn_forward.48} parent=23 // pred_check
        %p179 = pneg %p112
      $region30: #{wrn_forward.48} parent=23 // pred_check_branch
        %181 = sbr.rel (%p179) target = $region32
      $region31: #{wrn_forward.48} parent=23 // pred_region
        %p182 = scmp.lt.s32.totalorder %s17, 1
        %s183 = scalar_select %p182, %s17, 1
        %p184 = scmp.lt.s32.totalorder %s18, 15
        %s185 = scalar_select %p184, %s18, 15
        %s186 = smul.addr %s185, 2
        %s187 = smul.addr %s183, 32
        %s188 = sadd.s32 %s186, %s187
        %s189 = smul.addr %s188, 8
        %s190 = scalar_lea.vmem %s3, %s189
      $region32: #{wrn_forward.48} parent=23 // pred_fallthru
        _
    $region24: #{wrn_forward.48} parent=5 // pred_fallthru
      _
    %p191 = scmp.le.s32.totalorder 1, %s10
    %p192 = scmp.lt.s32.totalorder %s10, 33
    %p193 = pnand %p191, %p192
    %p194 = pneg %p193
    // Predicated region
    $region33: #{wrn_forward.48} parent=5 // pred_check
      _
    $region34: #{wrn_forward.48} parent=5 // pred_check_branch
      %196 = sbr.rel (%p193) target = $region36
    $region35: #{wrn_forward.48} parent=5 // pred_region
      %s197 = ssub.s32 %s10, 1
      %p198 = scmp.lt.s32.totalorder %s19, 1
      %s199 = scalar_select %p198, %s19, 1
      %s200 = smul.addr %s199, 54
      %s201 = smul.addr %s200, 8
      %s202 = scalar_lea.vmem %s0, %s201
      %p203 = pneg %p48
      %p204 = pneg %p45
      %p205 = pneg %p69
      %p206 = pneg %p66
      %p207 = pneg %p90
      %p208 = pneg %p87
      %p209 = scmp.lt.s32.totalorder %s19, 1
      %s210 = scalar_select %p209, %s19, 1
      %p211 = scmp.lt.s32.totalorder %s20, 15
      %s212 = scalar_select %p211, %s20, 15
      %s213 = smul.addr %s212, 2
      %s214 = smul.addr %s210, 32
      %s215 = sadd.s32 %s213, %s214
      %s216 = smul.addr %s215, 8
      %s217 = scalar_lea.vmem %s3, %s216
      %p218 = pneg %p118
      %p219 = pneg %p115
      %p220 = pneg %p146
      %p221 = pneg %p143
      %p222 = scmp.lt.s32.totalorder %s19, 1
      %s223 = scalar_select %p222, %s19, 1
      %p224 = scmp.lt.s32.totalorder %s20, 15
      %s225 = scalar_select %p224, %s20, 15
      %s226 = smul.addr %s225, 2
      %s227 = smul.addr %s223, 32
      %s228 = sadd.s32 %s226, %s227
      %s229 = smul.addr %s228, 8
      %s230 = scalar_lea.vmem %s4, %s229
      %p231 = scmp.lt.s32.totalorder %s19, 1
      %s232 = scalar_select %p231, %s19, 1
      %s233 = smul.addr %s232, 54
      %s234 = smul.addr %s233, 8
      %s235 = scalar_lea.vmem %s0, %s234
      %p236 = scmp.lt.s32.totalorder %s19, 1
      %s237 = scalar_select %p236, %s19, 1
      %p238 = scmp.lt.s32.totalorder %s20, 15
      %s239 = scalar_select %p238, %s20, 15
      %s240 = smul.addr %s239, 2
      %s241 = smul.addr %s237, 32
      %s242 = sadd.s32 %s240, %s241
      %s243 = smul.addr %s242, 8
      %s244 = scalar_lea.vmem %s3, %s243
      %p245 = scmp.lt.s32.totalorder %s19, 1
      %s246 = scalar_select %p245, %s19, 1
      %p247 = scmp.lt.s32.totalorder %s20, 15
      %s248 = scalar_select %p247, %s20, 15
      %s249 = smul.addr %s248, 2
      %s250 = smul.addr %s246, 32
      %s251 = sadd.s32 %s249, %s250
      %s252 = smul.addr %s251, 8
      %s253 = scalar_lea.vmem %s4, %s252
      %v254 = vld [vmem:[%s2] sm:$0x1]
      %v256 = vperm.slane %v254, 0
      %v258 = vld [vmem:[%s244] sm:$0xff]
      %v259 = vld [vmem:[%s244 + $0x8] sm:$0xff]
      %v260 = vadd.f32 %v256, %v258
      %v261 = vadd.f32 %v256, %v259
      %s262 = smul.u32 %s20, 24
      %s263 = scalar_lea.vmem %s235, %s262
      %v264 = vld [vmem:[%s263] sm:$0xff]
      %v265 = vld [vmem:[%s263 + $0x8] sm:$0xff]
      %v266 = vld [vmem:[%s1] sm:$0xff]
      %v267 = vld [vmem:[%s1 + $0x8] sm:$0xff]
      %vm268 = vcmask 130048
      %v270 = vsel %vm268, %v264, 0
      %v273 = vsel %vm268, %v265, 0
      %275 = vmatpush.msra.mxu0 0.0
      %276 = vmatpush.msra.mxu0 0.0
      %277 = vmatpush.msra.mxu0 0.0
      %278 = vmatpush.msra.mxu0 0.0
      %279 = vmatpush.msra.mxu0 0.0
      %280 = vmatpush.msra.mxu0 0.0
      %281 = vmatpush.msra.mxu0 0.0
      %282 = vmatpush.msra.mxu0 0.0
      %283 = vmatpush.msra.mxu0 0.0
      %284 = vmatpush.msra.mxu0 0.0
      %285 = vmatpush.msra.mxu0 0.0
      %286 = vmatpush.msra.mxu0 0.0
      %287 = vmatpush.msra.mxu0 0.0
      %288 = vmatpush.msra.mxu0 0.0
      %289 = vmatpush.msra.mxu0 %v267
      %290 = vmatpush.msra.mxu0 %v266
      %291 = vmatmul.f32.gmra.mxu0 %v270
      %v292 = vpop.f32.mrf.mxu0
      %v293 = vadd.f32 0.0, %v292
      %294 = vmatmul.f32.gmra.mxu0 %v273
      %v295 = vpop.f32.mrf.mxu0
      %v296 = vadd.f32 0.0, %v295
      %297 = vdwg.mxu0
      %v298 = vadd.f32 %v260, %v293
      %v299 = vadd.f32 %v261, %v296
      %v300 = vld [vmem:[%s263 + $0x1] sm:$0xff]
      %v301 = vld [vmem:[%s263 + $0x9] sm:$0xff]
      %s302 = scalar_lea.vmem %s1, 16
      %v303 = vld [vmem:[%s302] sm:$0xff]
      %v304 = vld [vmem:[%s302 + $0x8] sm:$0xff]
      %v306 = vsel %vm268, %v300, 0
      %v309 = vsel %vm268, %v301, 0
      %311 = vmatpush.msra.mxu0 0.0
      %312 = vmatpush.msra.mxu0 0.0
      %313 = vmatpush.msra.mxu0 0.0
      %314 = vmatpush.msra.mxu0 0.0
      %315 = vmatpush.msra.mxu0 0.0
      %316 = vmatpush.msra.mxu0 0.0
      %317 = vmatpush.msra.mxu0 0.0
      %318 = vmatpush.msra.mxu0 0.0
      %319 = vmatpush.msra.mxu0 0.0
      %320 = vmatpush.msra.mxu0 0.0
      %321 = vmatpush.msra.mxu0 0.0
      %322 = vmatpush.msra.mxu0 0.0
      %323 = vmatpush.msra.mxu0 0.0
      %324 = vmatpush.msra.mxu0 0.0
      %325 = vmatpush.msra.mxu0 %v304
      %326 = vmatpush.msra.mxu0 %v303
      %327 = vmatmul.f32.gmra.mxu0 %v306
      %v328 = vpop.f32.mrf.mxu0
      %v329 = vadd.f32 0.0, %v328
      %330 = vmatmul.f32.gmra.mxu0 %v309
      %v331 = vpop.f32.mrf.mxu0
      %v332 = vadd.f32 0.0, %v331
      %333 = vdwg.mxu0
      %v334 = vadd.f32 %v298, %v329
      %v335 = vadd.f32 %v299, %v332
      %v336 = vld [vmem:[%s263 + $0x2] sm:$0xff]
      %v337 = vld [vmem:[%s263 + $0xa] sm:$0xff]
      %s338 = scalar_lea.vmem %s1, 32
      %v339 = vld [vmem:[%s338] sm:$0xff]
      %v340 = vld [vmem:[%s338 + $0x8] sm:$0xff]
      %v342 = vsel %vm268, %v336, 0
      %v345 = vsel %vm268, %v337, 0
      %347 = vmatpush.msra.mxu0 0.0
      %348 = vmatpush.msra.mxu0 0.0
      %349 = vmatpush.msra.mxu0 0.0
      %350 = vmatpush.msra.mxu0 0.0
      %351 = vmatpush.msra.mxu0 0.0
      %352 = vmatpush.msra.mxu0 0.0
      %353 = vmatpush.msra.mxu0 0.0
      %354 = vmatpush.msra.mxu0 0.0
      %355 = vmatpush.msra.mxu0 0.0
      %356 = vmatpush.msra.mxu0 0.0
      %357 = vmatpush.msra.mxu0 0.0
      %358 = vmatpush.msra.mxu0 0.0
      %359 = vmatpush.msra.mxu0 0.0
      %360 = vmatpush.msra.mxu0 0.0
      %361 = vmatpush.msra.mxu0 %v340
      %362 = vmatpush.msra.mxu0 %v339
      %363 = vmatmul.f32.gmra.mxu0 %v342
      %v364 = vpop.f32.mrf.mxu0
      %v365 = vadd.f32 0.0, %v364
      %366 = vmatmul.f32.gmra.mxu0 %v345
      %v367 = vpop.f32.mrf.mxu0
      %v368 = vadd.f32 0.0, %v367
      %369 = vdwg.mxu0
      %v370 = vadd.f32 %v334, %v365
      %v371 = vadd.f32 %v335, %v368
      %s372 = sadd.s32 %s20, 1
      %s373 = smul.u32 %s372, 24
      %s374 = scalar_lea.vmem %s235, %s373
      %v375 = vld [vmem:[%s374] sm:$0xff]
      %v376 = vld [vmem:[%s374 + $0x8] sm:$0xff]
      %s377 = scalar_lea.vmem %s1, 48
      %v378 = vld [vmem:[%s377] sm:$0xff]
      %v379 = vld [vmem:[%s377 + $0x8] sm:$0xff]
      %v381 = vsel %vm268, %v375, 0
      %v384 = vsel %vm268, %v376, 0
      %386 = vmatpush.msra.mxu0 0.0
      %387 = vmatpush.msra.mxu0 0.0
      %388 = vmatpush.msra.mxu0 0.0
      %389 = vmatpush.msra.mxu0 0.0
      %390 = vmatpush.msra.mxu0 0.0
      %391 = vmatpush.msra.mxu0 0.0
      %392 = vmatpush.msra.mxu0 0.0
      %393 = vmatpush.msra.mxu0 0.0
      %394 = vmatpush.msra.mxu0 0.0
      %395 = vmatpush.msra.mxu0 0.0
      %396 = vmatpush.msra.mxu0 0.0
      %397 = vmatpush.msra.mxu0 0.0
      %398 = vmatpush.msra.mxu0 0.0
      %399 = vmatpush.msra.mxu0 0.0
      %400 = vmatpush.msra.mxu0 %v379
      %401 = vmatpush.msra.mxu0 %v378
      %402 = vmatmul.f32.gmra.mxu0 %v381
      %v403 = vpop.f32.mrf.mxu0
      %v404 = vadd.f32 0.0, %v403
      %405 = vmatmul.f32.gmra.mxu0 %v384
      %v406 = vpop.f32.mrf.mxu0
      %v407 = vadd.f32 0.0, %v406
      %408 = vdwg.mxu0
      %v409 = vadd.f32 %v370, %v404
      %v410 = vadd.f32 %v371, %v407
      %v411 = vld [vmem:[%s374 + $0x1] sm:$0xff]
      %v412 = vld [vmem:[%s374 + $0x9] sm:$0xff]
      %s413 = scalar_lea.vmem %s1, 64
      %v414 = vld [vmem:[%s413] sm:$0xff]
      %v415 = vld [vmem:[%s413 + $0x8] sm:$0xff]
      %v417 = vsel %vm268, %v411, 0
      %v420 = vsel %vm268, %v412, 0
      %422 = vmatpush.msra.mxu0 0.0
      %423 = vmatpush.msra.mxu0 0.0
      %424 = vmatpush.msra.mxu0 0.0
      %425 = vmatpush.msra.mxu0 0.0
      %426 = vmatpush.msra.mxu0 0.0
      %427 = vmatpush.msra.mxu0 0.0
      %428 = vmatpush.msra.mxu0 0.0
      %429 = vmatpush.msra.mxu0 0.0
      %430 = vmatpush.msra.mxu0 0.0
      %431 = vmatpush.msra.mxu0 0.0
      %432 = vmatpush.msra.mxu0 0.0
      %433 = vmatpush.msra.mxu0 0.0
      %434 = vmatpush.msra.mxu0 0.0
      %435 = vmatpush.msra.mxu0 0.0
      %436 = vmatpush.msra.mxu0 %v415
      %437 = vmatpush.msra.mxu0 %v414
      %438 = vmatmul.f32.gmra.mxu0 %v417
      %v439 = vpop.f32.mrf.mxu0
      %v440 = vadd.f32 0.0, %v439
      %441 = vmatmul.f32.gmra.mxu0 %v420
      %v442 = vpop.f32.mrf.mxu0
      %v443 = vadd.f32 0.0, %v442
      %444 = vdwg.mxu0
      %v445 = vadd.f32 %v409, %v440
      %v446 = vadd.f32 %v410, %v443
      %v447 = vld [vmem:[%s374 + $0x2] sm:$0xff]
      %v448 = vld [vmem:[%s374 + $0xa] sm:$0xff]
      %s449 = scalar_lea.vmem %s1, 80
      %v450 = vld [vmem:[%s449] sm:$0xff]
      %v451 = vld [vmem:[%s449 + $0x8] sm:$0xff]
      %v453 = vsel %vm268, %v447, 0
      %v456 = vsel %vm268, %v448, 0
      %458 = vmatpush.msra.mxu0 0.0
      %459 = vmatpush.msra.mxu0 0.0
      %460 = vmatpush.msra.mxu0 0.0
      %461 = vmatpush.msra.mxu0 0.0
      %462 = vmatpush.msra.mxu0 0.0
      %463 = vmatpush.msra.mxu0 0.0
      %464 = vmatpush.msra.mxu0 0.0
      %465 = vmatpush.msra.mxu0 0.0
      %466 = vmatpush.msra.mxu0 0.0
      %467 = vmatpush.msra.mxu0 0.0
      %468 = vmatpush.msra.mxu0 0.0
      %469 = vmatpush.msra.mxu0 0.0
      %470 = vmatpush.msra.mxu0 0.0
      %471 = vmatpush.msra.mxu0 0.0
      %472 = vmatpush.msra.mxu0 %v451
      %473 = vmatpush.msra.mxu0 %v450
      %474 = vmatmul.f32.gmra.mxu0 %v453
      %v475 = vpop.f32.mrf.mxu0
      %v476 = vadd.f32 0.0, %v475
      %477 = vmatmul.f32.gmra.mxu0 %v456
      %v478 = vpop.f32.mrf.mxu0
      %v479 = vadd.f32 0.0, %v478
      %480 = vdwg.mxu0
      %v481 = vadd.f32 %v445, %v476
      %v482 = vadd.f32 %v446, %v479
      %s483 = sadd.s32 %s20, 2
      %s484 = smul.u32 %s483, 24
      %s485 = scalar_lea.vmem %s235, %s484
      %v486 = vld [vmem:[%s485] sm:$0xff]
      %v487 = vld [vmem:[%s485 + $0x8] sm:$0xff]
      %s488 = scalar_lea.vmem %s1, 96
      %v489 = vld [vmem:[%s488] sm:$0xff]
      %v490 = vld [vmem:[%s488 + $0x8] sm:$0xff]
      %v492 = vsel %vm268, %v486, 0
      %v495 = vsel %vm268, %v487, 0
      %497 = vmatpush.msra.mxu0 0.0
      %498 = vmatpush.msra.mxu0 0.0
      %499 = vmatpush.msra.mxu0 0.0
      %500 = vmatpush.msra.mxu0 0.0
      %501 = vmatpush.msra.mxu0 0.0
      %502 = vmatpush.msra.mxu0 0.0
      %503 = vmatpush.msra.mxu0 0.0
      %504 = vmatpush.msra.mxu0 0.0
      %505 = vmatpush.msra.mxu0 0.0
      %506 = vmatpush.msra.mxu0 0.0
      %507 = vmatpush.msra.mxu0 0.0
      %508 = vmatpush.msra.mxu0 0.0
      %509 = vmatpush.msra.mxu0 0.0
      %510 = vmatpush.msra.mxu0 0.0
      %511 = vmatpush.msra.mxu0 %v490
      %512 = vmatpush.msra.mxu0 %v489
      %513 = vmatmul.f32.gmra.mxu0 %v492
      %v514 = vpop.f32.mrf.mxu0
      %v515 = vadd.f32 0.0, %v514
      %516 = vmatmul.f32.gmra.mxu0 %v495
      %v517 = vpop.f32.mrf.mxu0
      %v518 = vadd.f32 0.0, %v517
      %519 = vdwg.mxu0
      %v520 = vadd.f32 %v481, %v515
      %v521 = vadd.f32 %v482, %v518
      %v522 = vld [vmem:[%s485 + $0x1] sm:$0xff]
      %v523 = vld [vmem:[%s485 + $0x9] sm:$0xff]
      %s524 = scalar_lea.vmem %s1, 112
      %v525 = vld [vmem:[%s524] sm:$0xff]
      %v526 = vld [vmem:[%s524 + $0x8] sm:$0xff]
      %v528 = vsel %vm268, %v522, 0
      %v531 = vsel %vm268, %v523, 0
      %533 = vmatpush.msra.mxu0 0.0
      %534 = vmatpush.msra.mxu0 0.0
      %535 = vmatpush.msra.mxu0 0.0
      %536 = vmatpush.msra.mxu0 0.0
      %537 = vmatpush.msra.mxu0 0.0
      %538 = vmatpush.msra.mxu0 0.0
      %539 = vmatpush.msra.mxu0 0.0
      %540 = vmatpush.msra.mxu0 0.0
      %541 = vmatpush.msra.mxu0 0.0
      %542 = vmatpush.msra.mxu0 0.0
      %543 = vmatpush.msra.mxu0 0.0
      %544 = vmatpush.msra.mxu0 0.0
      %545 = vmatpush.msra.mxu0 0.0
      %546 = vmatpush.msra.mxu0 0.0
      %547 = vmatpush.msra.mxu0 %v526
      %548 = vmatpush.msra.mxu0 %v525
      %549 = vmatmul.f32.gmra.mxu0 %v528
      %v550 = vpop.f32.mrf.mxu0
      %v551 = vadd.f32 0.0, %v550
      %552 = vmatmul.f32.gmra.mxu0 %v531
      %v553 = vpop.f32.mrf.mxu0
      %v554 = vadd.f32 0.0, %v553
      %555 = vdwg.mxu0
      %v556 = vadd.f32 %v520, %v551
      %v557 = vadd.f32 %v521, %v554
      %v558 = vld [vmem:[%s485 + $0x2] sm:$0xff]
      %v559 = vld [vmem:[%s485 + $0xa] sm:$0xff]
      %s560 = scalar_lea.vmem %s1, 128
      %v561 = vld [vmem:[%s560] sm:$0xff]
      %v562 = vld [vmem:[%s560 + $0x8] sm:$0xff]
      %v564 = vsel %vm268, %v558, 0
      %v567 = vsel %vm268, %v559, 0
      %569 = vmatpush.msra.mxu0 0.0
      %570 = vmatpush.msra.mxu0 0.0
      %571 = vmatpush.msra.mxu0 0.0
      %572 = vmatpush.msra.mxu0 0.0
      %573 = vmatpush.msra.mxu0 0.0
      %574 = vmatpush.msra.mxu0 0.0
      %575 = vmatpush.msra.mxu0 0.0
      %576 = vmatpush.msra.mxu0 0.0
      %577 = vmatpush.msra.mxu0 0.0
      %578 = vmatpush.msra.mxu0 0.0
      %579 = vmatpush.msra.mxu0 0.0
      %580 = vmatpush.msra.mxu0 0.0
      %581 = vmatpush.msra.mxu0 0.0
      %582 = vmatpush.msra.mxu0 0.0
      %583 = vmatpush.msra.mxu0 %v562
      %584 = vmatpush.msra.mxu0 %v561
      %585 = vmatmul.f32.gmra.mxu0 %v564
      %v586 = vpop.f32.mrf.mxu0
      %v587 = vadd.f32 0.0, %v586
      %588 = vmatmul.f32.gmra.mxu0 %v567
      %v589 = vpop.f32.mrf.mxu0
      %v590 = vadd.f32 0.0, %v589
      %591 = vdwg.mxu0
      %v592 = vadd.f32 %v556, %v587
      %v593 = vadd.f32 %v557, %v590
      %594 = vst.msk [vmem:[%s253] sm:$0xff] %vm268, %v592
      %595 = vst.msk [vmem:[%s253 + $0x8] sm:$0xff] %vm268, %v593
      %p596 = scmp.lt.s32.totalorder %s19, 1
      %s597 = scalar_select %p596, %s19, 1
      %p598 = scmp.lt.s32.totalorder %s20, 15
      %s599 = scalar_select %p598, %s20, 15
      %s600 = smul.addr %s599, 2
      %s601 = smul.addr %s597, 32
      %s602 = sadd.s32 %s600, %s601
      %s603 = smul.addr %s602, 8
      %s604 = scalar_lea.vmem %s4, %s603
      // Predicated region
      $region37: #{wrn_forward.48} parent=35 // pred_check
        %p605 = pneg %p143
      $region38: #{wrn_forward.48} parent=35 // pred_check_branch
        %607 = sbr.rel (%p605) target = $region40
      $region39: #{wrn_forward.48} parent=35 // pred_region
        _
      $region40: #{wrn_forward.48} parent=35 // pred_fallthru
        _
    $region36: #{wrn_forward.48} parent=5 // pred_fallthru
      _
    %p608 = scmp.le.s32.totalorder 2, %s10
    // Predicated region
    $region41: #{wrn_forward.48} parent=5 // pred_check
      %p609 = pneg %p608
    $region42: #{wrn_forward.48} parent=5 // pred_check_branch
      %611 = sbr.rel (%p609) target = $region44
    $region43: #{wrn_forward.48} parent=5 // pred_region
      %s612 = ssub.s32 %s10, 2
      // Predicated region
      $region45: #{wrn_forward.48} parent=43 // pred_check
        %p613 = pneg %p149
      $region46: #{wrn_forward.48} parent=43 // pred_check_branch
        %615 = sbr.rel (%p613) target = $region48
      $region47: #{wrn_forward.48} parent=43 // pred_region
        %p616 = scmp.lt.s32.totalorder %s21, 1
        %s617 = scalar_select %p616, %s21, 1
        %p618 = scmp.lt.s32.totalorder %s22, 15
        %s619 = scalar_select %p618, %s22, 15
        %s620 = smul.addr %s619, 2
        %s621 = smul.addr %s617, 32
        %s622 = sadd.s32 %s620, %s621
        %s623 = smul.addr %s622, 8
        %s624 = scalar_lea.vmem %s4, %s623
      $region48: #{wrn_forward.48} parent=43 // pred_fallthru
        _
    $region44: #{wrn_forward.48} parent=5 // pred_fallthru
      _
  $region6: #{wrn_forward.48} parent=0 // loop_footer
    %s14 = sadd.s32 1, %s10
  $region7: #{wrn_forward.48} parent=0 // loop_footer_branch
    %9 = sbr.rel target = $region3
  $region8: #{wrn_forward.48} parent=0 // loop_exit
    _

// kernel: wrn_forward.60
$region0: #{wrn_forward.60}
  #allocation0 [shape = 'u32[]', space=smem, size = 0x4, offset = 0x4, fixed_abs, tag = 'smem constant byte address 0x4 - core index']
  #allocation1 [shape = 'u32[72,128]{1,0:T(1,128)}', space=vmem, size = 0x9000, scoped, tag = 'internal scratch']
  %s0 = inlined_call_operand.vmem [shape: f32[2,16,2,8,16], index: 0, kind: input, shape index: {}]
  %s1 = inlined_call_operand.vmem [shape: f32[1,16,32], index: 1, kind: input, shape index: {}]
  %s2 = inlined_call_operand.vmem [shape: f32[1,32], index: 2, kind: input, shape index: {}]
  %s3 = inlined_call_operand.vmem [shape: f32[2,8,8,32], index: 3, kind: output, shape index: {}]
  %s4 = sld [smem:[#allocation0]]
  $region45: #{wrn_forward.60} parent=0
    _
  %s6 = ssub.s32 1, %s4
  %s7 = scalar_select 0, %s6, %s4
  loop: start=0, step=1, limit=18
  $region2: #{wrn_forward.60} parent=0 // loop_pre_header
    _
  $region3: #{wrn_forward.60} parent=0 // loop_header
    %s9 = sphi 0, %s13
    %p10 = scmp.ge.s32.totalorder %s9, 18
    %s16 = sphi 0, %s28
    %s17 = sphi 0, %s24
    %s18 = sphi 0, %s16
    %s19 = sphi 0, %s17
    %s20 = sphi 0, %s18
    %s21 = sphi 0, %s19
    %s31 = sphi 0, %s33
    %s34 = sphi 0, %s31
    %s35 = sphi 0, %s34
    %s51 = sphi 0, %s35
    %s55 = sphi 0, %s55
    %s57 = sphi 0, %s55
    %s58 = sphi 0, %s57
    %s72 = sphi 0, %s58
    %s76 = sphi 0, %s76
    %s78 = sphi 0, %s76
    %s79 = sphi 0, %s78
    %s93 = sphi 0, %s79
    %s101 = sphi 0, %s103
    %s104 = sphi 0, %s101
    %s105 = sphi 0, %s104
    %s121 = sphi 0, %s105
  $region4: #{wrn_forward.60} parent=0 // loop_header_branch
    %12 = sbr.rel (%p10) target = $region8
  $region5: #{wrn_forward.60} parent=0 // loop_body
    %s14 = ssub.s32 %s9, 1
    %s15 = ssub.s32 %s9, 2
    %s22 = sadd.s32 1, %s17
    %p23 = scmp.ge.s32.totalorder %s22, 8
    %s24 = scalar_select %p23, 0, %s22
    %s25 = sadd.s32 1, %s16
    %s26 = scalar_select %p23, %s25, %s16
    %p27 = scmp.ge.s32.totalorder %s26, 2
    %s28 = scalar_select %p27, 0, %s26
    %s29 = ssub.s32 %s16, %s28
    %p30 = scmp.eq.s32.totalorder %s29, 0
    %s32 = sadd.s32 %s31, 1
    %s33 = scalar_select %p30, %s31, %s32
    %p36 = pneg %p30
    %p37 = scmp.eq.s32.totalorder %s9, 15
    %p38 = por %p36, %p37
    %p39 = scmp.ne.s32.totalorder %s31, %s34
    %p40 = scmp.eq.s32.totalorder %s9, 0
    %p41 = por %p39, %p40
    %p42 = scmp.ne.s32.totalorder %s31, %s34
    %p43 = scmp.eq.s32.totalorder %s14, 15
    %p44 = por %p42, %p43
    %p45 = scmp.ne.s32.totalorder %s34, %s35
    %p46 = scmp.eq.s32.totalorder %s14, 0
    %p47 = por %p45, %p46
    %p48 = scmp.ne.s32.totalorder %s34, %s35
    %p49 = scmp.eq.s32.totalorder %s15, 15
    %p50 = por %p48, %p49
    %p52 = scmp.ne.s32.totalorder %s35, %s51
    %p53 = scmp.eq.s32.totalorder %s15, 0
    %p54 = por %p52, %p53
    %s56 = sadd.s32 %s55, 1
    %p59 = scmp.eq.s32.totalorder %s9, 15
    %p60 = scmp.ne.s32.totalorder %s55, %s57
    %p61 = scmp.eq.s32.totalorder %s9, 0
    %p62 = por %p60, %p61
    %p63 = scmp.ne.s32.totalorder %s55, %s57
    %p64 = scmp.eq.s32.totalorder %s14, 15
    %p65 = por %p63, %p64
    %p66 = scmp.ne.s32.totalorder %s57, %s58
    %p67 = scmp.eq.s32.totalorder %s14, 0
    %p68 = por %p66, %p67
    %p69 = scmp.ne.s32.totalorder %s57, %s58
    %p70 = scmp.eq.s32.totalorder %s15, 15
    %p71 = por %p69, %p70
    %p73 = scmp.ne.s32.totalorder %s58, %s72
    %p74 = scmp.eq.s32.totalorder %s15, 0
    %p75 = por %p73, %p74
    %s77 = sadd.s32 %s76, 1
    %p80 = scmp.eq.s32.totalorder %s9, 15
    %p81 = scmp.ne.s32.totalorder %s76, %s78
    %p82 = scmp.eq.s32.totalorder %s9, 0
    %p83 = por %p81, %p82
    %p84 = scmp.ne.s32.totalorder %s76, %s78
    %p85 = scmp.eq.s32.totalorder %s14, 15
    %p86 = por %p84, %p85
    %p87 = scmp.ne.s32.totalorder %s78, %s79
    %p88 = scmp.eq.s32.totalorder %s14, 0
    %p89 = por %p87, %p88
    %p90 = scmp.ne.s32.totalorder %s78, %s79
    %p91 = scmp.eq.s32.totalorder %s15, 15
    %p92 = por %p90, %p91
    %p94 = scmp.ne.s32.totalorder %s79, %s93
    %p95 = scmp.eq.s32.totalorder %s15, 0
    %p96 = por %p94, %p95
    %s97 = ssub.s32 %s16, %s28
    %s98 = ssub.s32 %s17, %s24
    %s99 = sor.u32 %s97, %s98
    %p100 = scmp.eq.s32.totalorder %s99, 0
    %s102 = sadd.s32 %s101, 1
    %s103 = scalar_select %p100, %s101, %s102
    %p106 = pneg %p100
    %p107 = scmp.eq.s32.totalorder %s9, 15
    %p108 = por %p106, %p107
    %p109 = scmp.ne.s32.totalorder %s101, %s104
    %p110 = scmp.eq.s32.totalorder %s9, 0
    %p111 = por %p109, %p110
    %p112 = scmp.ne.s32.totalorder %s101, %s104
    %p113 = scmp.eq.s32.totalorder %s14, 15
    %p114 = por %p112, %p113
    %p115 = scmp.ne.s32.totalorder %s104, %s105
    %p116 = scmp.eq.s32.totalorder %s14, 0
    %p117 = por %p115, %p116
    %p118 = scmp.ne.s32.totalorder %s104, %s105
    %p119 = scmp.eq.s32.totalorder %s15, 15
    %p120 = por %p118, %p119
    %p122 = scmp.ne.s32.totalorder %s105, %s121
    %p123 = scmp.eq.s32.totalorder %s15, 0
    %p124 = por %p122, %p123
    %p125 = scmp.le.s32.totalorder 1, %s9
    %p126 = scmp.lt.s32.totalorder %s9, 17
    %p127 = pnand %p125, %p126
    %p128 = pneg %p127
    // Predicated region
    $region9: #{wrn_forward.60} parent=5 // pred_check
      _
    $region10: #{wrn_forward.60} parent=5 // pred_check_branch
      %130 = sbr.rel (%p127) target = $region12
    $region11: #{wrn_forward.60} parent=5 // pred_region
      %s131 = ssub.s32 %s9, 1
      // Predicated region
      $region13: #{wrn_forward.60} parent=11 // pred_check
        %p132 = pneg %p68
      $region14: #{wrn_forward.60} parent=11 // pred_check_branch
        %134 = sbr.rel (%p132) target = $region16
      $region15: #{wrn_forward.60} parent=11 // pred_region
        _
      $region16: #{wrn_forward.60} parent=11 // pred_fallthru
        _
      // Predicated region
      $region17: #{wrn_forward.60} parent=11 // pred_check
        %p135 = pneg %p89
      $region18: #{wrn_forward.60} parent=11 // pred_check_branch
        %137 = sbr.rel (%p135) target = $region20
      $region19: #{wrn_forward.60} parent=11 // pred_region
        _
      $region20: #{wrn_forward.60} parent=11 // pred_fallthru
        _
    $region12: #{wrn_forward.60} parent=5 // pred_fallthru
      _
    %p138 = scmp.lt.s32.totalorder %s9, 16
    // Predicated region
    $region21: #{wrn_forward.60} parent=5 // pred_check
      %p139 = pneg %p138
    $region22: #{wrn_forward.60} parent=5 // pred_check_branch
      %141 = sbr.rel (%p139) target = $region24
    $region23: #{wrn_forward.60} parent=5 // pred_region
      // Predicated region
      $region25: #{wrn_forward.60} parent=23 // pred_check
        %p142 = pneg %p41
      $region26: #{wrn_forward.60} parent=23 // pred_check_branch
        %144 = sbr.rel (%p142) target = $region28
      $region27: #{wrn_forward.60} parent=23 // pred_region
        %p145 = scmp.lt.s32.totalorder %s16, 1
        %s146 = scalar_select %p145, %s16, 1
        %s147 = smul.addr %s146, 32
        %s148 = smul.addr %s147, 8
        %s149 = scalar_lea.vmem %s0, %s148
      $region28: #{wrn_forward.60} parent=23 // pred_fallthru
        _
    $region24: #{wrn_forward.60} parent=5 // pred_fallthru
      _
    %p150 = scmp.le.s32.totalorder 1, %s9
    %p151 = scmp.lt.s32.totalorder %s9, 17
    %p152 = pnand %p150, %p151
    %p153 = pneg %p152
    // Predicated region
    $region29: #{wrn_forward.60} parent=5 // pred_check
      _
    $region30: #{wrn_forward.60} parent=5 // pred_check_branch
      %155 = sbr.rel (%p152) target = $region32
    $region31: #{wrn_forward.60} parent=5 // pred_region
      %s156 = ssub.s32 %s9, 1
      %p157 = scmp.lt.s32.totalorder %s18, 1
      %s158 = scalar_select %p157, %s18, 1
      %s159 = smul.addr %s158, 32
      %s160 = smul.addr %s159, 8
      %s161 = scalar_lea.vmem %s0, %s160
      %p162 = pneg %p47
      %p163 = pneg %p44
      %p164 = pneg %p68
      %p165 = pneg %p65
      %p166 = pneg %p89
      %p167 = pneg %p86
      %p168 = pneg %p117
      %p169 = pneg %p114
      %p170 = scmp.lt.s32.totalorder %s18, 1
      %s171 = scalar_select %p170, %s18, 1
      %p172 = scmp.lt.s32.totalorder %s19, 7
      %s173 = scalar_select %p172, %s19, 7
      %s174 = smul.addr %s171, 8
      %s175 = sadd.s32 %s173, %s174
      %s176 = smul.addr %s175, 8
      %s177 = scalar_lea.vmem %s3, %s176
      %p178 = scmp.lt.s32.totalorder %s18, 1
      %s179 = scalar_select %p178, %s18, 1
      %s180 = smul.addr %s179, 32
      %s181 = smul.addr %s180, 8
      %s182 = scalar_lea.vmem %s0, %s181
      %p183 = scmp.lt.s32.totalorder %s18, 1
      %s184 = scalar_select %p183, %s18, 1
      %p185 = scmp.lt.s32.totalorder %s19, 7
      %s186 = scalar_select %p185, %s19, 7
      %s187 = smul.addr %s184, 8
      %s188 = sadd.s32 %s186, %s187
      %s189 = smul.addr %s188, 8
      %s190 = scalar_lea.vmem %s3, %s189
      %v191 = vld [vmem:[%s2] sm:$0x1]
      %v193 = vperm.slane %v191, 0
      %s195 = smul.u32 %s19, 2
      %s196 = smul.u32 %s195, 16
      %s197 = scalar_lea.vmem %s182, %s196
      %v198 = vld [vmem:[%s197] sm:$0xff]
      %v199 = vld [vmem:[%s1] sm:$0xff]
      %v200 = vld [vmem:[%s1 + $0x8] sm:$0xff]
      %vm201 = vcmask 130048
      %v203 = vsel %vm201, %v198, 0
      %205 = vmatpush.msra.mxu0 0.0
      %206 = vmatpush.msra.mxu0 0.0
      %207 = vmatpush.msra.mxu0 0.0
      %208 = vmatpush.msra.mxu0 0.0
      %209 = vmatpush.msra.mxu0 0.0
      %210 = vmatpush.msra.mxu0 0.0
      %211 = vmatpush.msra.mxu0 0.0
      %212 = vmatpush.msra.mxu0 0.0
      %213 = vmatpush.msra.mxu0 0.0
      %214 = vmatpush.msra.mxu0 0.0
      %215 = vmatpush.msra.mxu0 0.0
      %216 = vmatpush.msra.mxu0 0.0
      %217 = vmatpush.msra.mxu0 0.0
      %218 = vmatpush.msra.mxu0 0.0
      %219 = vmatpush.msra.mxu0 %v200
      %220 = vmatpush.msra.mxu0 %v199
      %221 = vmatmul.f32.gmra.mxu0 %v203
      %v222 = vpop.f32.mrf.mxu0
      %v223 = vadd.f32 0.0, %v222
      %224 = vdwg.mxu0
      %v225 = vadd.f32 %v193, %v223
      %vm226 = vcmask 261120
      %227 = vst.msk [vmem:[%s190] sm:$0xff] %vm226, %v225
      %p228 = scmp.lt.s32.totalorder %s18, 1
      %s229 = scalar_select %p228, %s18, 1
      %p230 = scmp.lt.s32.totalorder %s19, 7
      %s231 = scalar_select %p230, %s19, 7
      %s232 = smul.addr %s229, 8
      %s233 = sadd.s32 %s231, %s232
      %s234 = smul.addr %s233, 8
      %s235 = scalar_lea.vmem %s3, %s234
      // Predicated region
      $region33: #{wrn_forward.60} parent=31 // pred_check
        %p236 = pneg %p114
      $region34: #{wrn_forward.60} parent=31 // pred_check_branch
        %238 = sbr.rel (%p236) target = $region36
      $region35: #{wrn_forward.60} parent=31 // pred_region
        _
      $region36: #{wrn_forward.60} parent=31 // pred_fallthru
        _
    $region32: #{wrn_forward.60} parent=5 // pred_fallthru
      _
    %p239 = scmp.le.s32.totalorder 2, %s9
    // Predicated region
    $region37: #{wrn_forward.60} parent=5 // pred_check
      %p240 = pneg %p239
    $region38: #{wrn_forward.60} parent=5 // pred_check_branch
      %242 = sbr.rel (%p240) target = $region40
    $region39: #{wrn_forward.60} parent=5 // pred_region
      %s243 = ssub.s32 %s9, 2
      // Predicated region
      $region41: #{wrn_forward.60} parent=39 // pred_check
        %p244 = pneg %p120
      $region42: #{wrn_forward.60} parent=39 // pred_check_branch
        %246 = sbr.rel (%p244) target = $region44
      $region43: #{wrn_forward.60} parent=39 // pred_region
        %p247 = scmp.lt.s32.totalorder %s20, 1
        %s248 = scalar_select %p247, %s20, 1
        %p249 = scmp.lt.s32.totalorder %s21, 7
        %s250 = scalar_select %p249, %s21, 7
        %s251 = smul.addr %s248, 8
        %s252 = sadd.s32 %s250, %s251
        %s253 = smul.addr %s252, 8
        %s254 = scalar_lea.vmem %s3, %s253
      $region44: #{wrn_forward.60} parent=39 // pred_fallthru
        _
    $region40: #{wrn_forward.60} parent=5 // pred_fallthru
      _
  $region6: #{wrn_forward.60} parent=0 // loop_footer
    %s13 = sadd.s32 1, %s9
  $region7: #{wrn_forward.60} parent=0 // loop_footer_branch
    %8 = sbr.rel target = $region3
  $region8: #{wrn_forward.60} parent=0 // loop_exit
    _

// kernel: wrn_forward.58
$region0: #{wrn_forward.58}
  #allocation0 [shape = 'u32[]', space=smem, size = 0x4, offset = 0x4, fixed_abs, tag = 'smem constant byte address 0x4 - core index']
  #allocation1 [shape = 'u32[72,128]{1,0:T(1,128)}', space=vmem, size = 0x9000, scoped, tag = 'internal scratch']
  %s0 = inlined_call_operand.vmem [shape: f32[16,256], index: 0, kind: input, shape index: {}]
  %s1 = inlined_call_operand.vmem [shape: f32[1,256], index: 1, kind: output, shape index: {0}]
  %s2 = inlined_call_operand.vmem [shape: f32[1,256], index: 2, kind: output, shape index: {1}]
  %3 = xla_tuple %s1, %s2
  %s4 = sld [smem:[#allocation0]]
  $region26: #{wrn_forward.58} parent=0
    _
  %s6 = ssub.s32 1, %s4
  %s7 = scalar_select 0, %s6, %s4
  // Predicated region
  $region2: #{wrn_forward.58} parent=0 // pred_check
    _
  $region3: #{wrn_forward.58} parent=0 // pred_check_branch
    %9 = sbr.rel (0) target = $region5
  $region4: #{wrn_forward.58} parent=0 // pred_region
    _
  $region5: #{wrn_forward.58} parent=0 // pred_fallthru
    _
  %p10 = scmp.eq.s32.totalorder 0, 0
  // Predicated region
  $region6: #{wrn_forward.58} parent=0 // pred_check
    %p11 = pneg %p10
  $region7: #{wrn_forward.58} parent=0 // pred_check_branch
    %13 = sbr.rel (%p11) target = $region9
  $region8: #{wrn_forward.58} parent=0 // pred_region
    %v14 = vlaneseq
    %vm15 = vcmp.ge.s32.totalorder %v14, 0
    %vm16 = vcmp.lt.s32.totalorder %v14, 256
    %vm17 = vmand %vm15, %vm16
    %18 = vst.msk [vmem:[%s1] sm:$0x3] %vm17, 0.0
    %19 = vst.msk [vmem:[%s2] sm:$0x3] %vm17, 0.0
  $region9: #{wrn_forward.58} parent=0 // pred_fallthru
    _
  %v20 = vld [vmem:[%s0] sm:$0xff]
  %v21 = vld [vmem:[%s0 + $0x8] sm:$0xff]
  %v22 = vld [vmem:[%s0 + $0x10] sm:$0xff]
  %v23 = vld [vmem:[%s0 + $0x18] sm:$0xff]
  %v24 = vld [vmem:[%s1] sm:$0x3]
  %v25 = vadd.f32 %v20, %v22
  %v26 = vrot.slane %v25, 4
  %v27 = vadd.f32 %v25, %v26
  %v28 = vrot.slane %v27, 2
  %v29 = vadd.f32 %v27, %v28
  %v30 = vrot.slane %v29, 1
  %v31 = vadd.f32 %v29, %v30
  %v32 = vadd.f32 %v21, %v23
  %v33 = vrot.slane %v32, 4
  %v34 = vadd.f32 %v32, %v33
  %v35 = vrot.slane %v34, 2
  %v36 = vadd.f32 %v34, %v35
  %v37 = vrot.slane %v36, 1
  %v38 = vadd.f32 %v36, %v37
  %v41 = vrot.slane %v38, 7
  %vm42 = vcmask 1040384
  %v43 = vsel %vm42, %v31, %v41
  %v45 = vadd.f32 %v24, %v43
  %v46 = vlaneseq
  %vm47 = vcmp.ge.s32.totalorder %v46, 0
  %vm48 = vcmp.lt.s32.totalorder %v46, 256
  %vm49 = vmand %vm47, %vm48
  %50 = vst.msk [vmem:[%s1] sm:$0x3] %vm49, %v45
  %v51 = vld [vmem:[%s2] sm:$0x3]
  %v52 = vmul.f32 %v20, %v20
  %v53 = vmul.f32 %v21, %v21
  %v54 = vmul.f32 %v22, %v22
  %v55 = vmul.f32 %v23, %v23
  %v56 = vadd.f32 %v52, %v54
  %v57 = vrot.slane %v56, 4
  %v58 = vadd.f32 %v56, %v57
  %v59 = vrot.slane %v58, 2
  %v60 = vadd.f32 %v58, %v59
  %v61 = vrot.slane %v60, 1
  %v62 = vadd.f32 %v60, %v61
  %v63 = vadd.f32 %v53, %v55
  %v64 = vrot.slane %v63, 4
  %v65 = vadd.f32 %v63, %v64
  %v66 = vrot.slane %v65, 2
  %v67 = vadd.f32 %v65, %v66
  %v68 = vrot.slane %v67, 1
  %v69 = vadd.f32 %v67, %v68
  %v72 = vrot.slane %v69, 7
  %v73 = vsel %vm42, %v62, %v72
  %v75 = vadd.f32 %v51, %v73
  %76 = vst.msk [vmem:[%s2] sm:$0x3] %vm49, %v75
  // Predicated region
  $region10: #{wrn_forward.58} parent=0 // pred_check
    _
  $region11: #{wrn_forward.58} parent=0 // pred_check_branch
    %78 = sbr.rel (0) target = $region13
  $region12: #{wrn_forward.58} parent=0 // pred_region
    _
  $region13: #{wrn_forward.58} parent=0 // pred_fallthru
    _
  // Predicated region
  $region14: #{wrn_forward.58} parent=0 // pred_check
    _
  $region15: #{wrn_forward.58} parent=0 // pred_check_branch
    %80 = sbr.rel (0) target = $region17
  $region16: #{wrn_forward.58} parent=0 // pred_region
    _
  $region17: #{wrn_forward.58} parent=0 // pred_fallthru
    _
  // Predicated region
  $region18: #{wrn_forward.58} parent=0 // pred_check
    _
  $region19: #{wrn_forward.58} parent=0 // pred_check_branch
    %82 = sbr.rel (0) target = $region21
  $region20: #{wrn_forward.58} parent=0 // pred_region
    _
  $region21: #{wrn_forward.58} parent=0 // pred_fallthru
    _
  // Predicated region
  $region22: #{wrn_forward.58} parent=0 // pred_check
    _
  $region23: #{wrn_forward.58} parent=0 // pred_check_branch
    %84 = sbr.rel (0) target = $region25
  $region24: #{wrn_forward.58} parent=0 // pred_region
    _
  $region25: #{wrn_forward.58} parent=0 // pred_fallthru
    _

// kernel: wrn_forward.57
$region0: #{wrn_forward.57}
  #allocation0 [shape = 'u32[]', space=smem, size = 0x4, offset = 0x4, fixed_abs, tag = 'smem constant byte address 0x4 - core index']
  #allocation1 [shape = 'u32[72,128]{1,0:T(1,128)}', space=vmem, size = 0x9000, scoped, tag = 'internal scratch']
  %s0 = inlined_call_operand.vmem [shape: f32[2,18,2,9,16], index: 0, kind: input, shape index: {}]
  %s1 = inlined_call_operand.vmem [shape: f32[9,16,32], index: 1, kind: input, shape index: {}]
  %s2 = inlined_call_operand.vmem [shape: f32[1,32], index: 2, kind: input, shape index: {}]
  %s3 = inlined_call_operand.vmem [shape: f32[2,8,8,32], index: 3, kind: output, shape index: {}]
  %s4 = sld [smem:[#allocation0]]
  $region45: #{wrn_forward.57} parent=0
    _
  %s6 = ssub.s32 1, %s4
  %s7 = scalar_select 0, %s6, %s4
  loop: start=0, step=1, limit=18
  $region2: #{wrn_forward.57} parent=0 // loop_pre_header
    _
  $region3: #{wrn_forward.57} parent=0 // loop_header
    %s9 = sphi 0, %s13
    %p10 = scmp.ge.s32.totalorder %s9, 18
    %s16 = sphi 0, %s28
    %s17 = sphi 0, %s24
    %s18 = sphi 0, %s16
    %s19 = sphi 0, %s17
    %s20 = sphi 0, %s18
    %s21 = sphi 0, %s19
    %s31 = sphi 0, %s33
    %s34 = sphi 0, %s31
    %s35 = sphi 0, %s34
    %s51 = sphi 0, %s35
    %s55 = sphi 0, %s55
    %s57 = sphi 0, %s55
    %s58 = sphi 0, %s57
    %s72 = sphi 0, %s58
    %s76 = sphi 0, %s76
    %s78 = sphi 0, %s76
    %s79 = sphi 0, %s78
    %s93 = sphi 0, %s79
    %s101 = sphi 0, %s103
    %s104 = sphi 0, %s101
    %s105 = sphi 0, %s104
    %s121 = sphi 0, %s105
  $region4: #{wrn_forward.57} parent=0 // loop_header_branch
    %12 = sbr.rel (%p10) target = $region8
  $region5: #{wrn_forward.57} parent=0 // loop_body
    %s14 = ssub.s32 %s9, 1
    %s15 = ssub.s32 %s9, 2
    %s22 = sadd.s32 1, %s17
    %p23 = scmp.ge.s32.totalorder %s22, 8
    %s24 = scalar_select %p23, 0, %s22
    %s25 = sadd.s32 1, %s16
    %s26 = scalar_select %p23, %s25, %s16
    %p27 = scmp.ge.s32.totalorder %s26, 2
    %s28 = scalar_select %p27, 0, %s26
    %s29 = ssub.s32 %s16, %s28
    %p30 = scmp.eq.s32.totalorder %s29, 0
    %s32 = sadd.s32 %s31, 1
    %s33 = scalar_select %p30, %s31, %s32
    %p36 = pneg %p30
    %p37 = scmp.eq.s32.totalorder %s9, 15
    %p38 = por %p36, %p37
    %p39 = scmp.ne.s32.totalorder %s31, %s34
    %p40 = scmp.eq.s32.totalorder %s9, 0
    %p41 = por %p39, %p40
    %p42 = scmp.ne.s32.totalorder %s31, %s34
    %p43 = scmp.eq.s32.totalorder %s14, 15
    %p44 = por %p42, %p43
    %p45 = scmp.ne.s32.totalorder %s34, %s35
    %p46 = scmp.eq.s32.totalorder %s14, 0
    %p47 = por %p45, %p46
    %p48 = scmp.ne.s32.totalorder %s34, %s35
    %p49 = scmp.eq.s32.totalorder %s15, 15
    %p50 = por %p48, %p49
    %p52 = scmp.ne.s32.totalorder %s35, %s51
    %p53 = scmp.eq.s32.totalorder %s15, 0
    %p54 = por %p52, %p53
    %s56 = sadd.s32 %s55, 1
    %p59 = scmp.eq.s32.totalorder %s9, 15
    %p60 = scmp.ne.s32.totalorder %s55, %s57
    %p61 = scmp.eq.s32.totalorder %s9, 0
    %p62 = por %p60, %p61
    %p63 = scmp.ne.s32.totalorder %s55, %s57
    %p64 = scmp.eq.s32.totalorder %s14, 15
    %p65 = por %p63, %p64
    %p66 = scmp.ne.s32.totalorder %s57, %s58
    %p67 = scmp.eq.s32.totalorder %s14, 0
    %p68 = por %p66, %p67
    %p69 = scmp.ne.s32.totalorder %s57, %s58
    %p70 = scmp.eq.s32.totalorder %s15, 15
    %p71 = por %p69, %p70
    %p73 = scmp.ne.s32.totalorder %s58, %s72
    %p74 = scmp.eq.s32.totalorder %s15, 0
    %p75 = por %p73, %p74
    %s77 = sadd.s32 %s76, 1
    %p80 = scmp.eq.s32.totalorder %s9, 15
    %p81 = scmp.ne.s32.totalorder %s76, %s78
    %p82 = scmp.eq.s32.totalorder %s9, 0
    %p83 = por %p81, %p82
    %p84 = scmp.ne.s32.totalorder %s76, %s78
    %p85 = scmp.eq.s32.totalorder %s14, 15
    %p86 = por %p84, %p85
    %p87 = scmp.ne.s32.totalorder %s78, %s79
    %p88 = scmp.eq.s32.totalorder %s14, 0
    %p89 = por %p87, %p88
    %p90 = scmp.ne.s32.totalorder %s78, %s79
    %p91 = scmp.eq.s32.totalorder %s15, 15
    %p92 = por %p90, %p91
    %p94 = scmp.ne.s32.totalorder %s79, %s93
    %p95 = scmp.eq.s32.totalorder %s15, 0
    %p96 = por %p94, %p95
    %s97 = ssub.s32 %s16, %s28
    %s98 = ssub.s32 %s17, %s24
    %s99 = sor.u32 %s97, %s98
    %p100 = scmp.eq.s32.totalorder %s99, 0
    %s102 = sadd.s32 %s101, 1
    %s103 = scalar_select %p100, %s101, %s102
    %p106 = pneg %p100
    %p107 = scmp.eq.s32.totalorder %s9, 15
    %p108 = por %p106, %p107
    %p109 = scmp.ne.s32.totalorder %s101, %s104
    %p110 = scmp.eq.s32.totalorder %s9, 0
    %p111 = por %p109, %p110
    %p112 = scmp.ne.s32.totalorder %s101, %s104
    %p113 = scmp.eq.s32.totalorder %s14, 15
    %p114 = por %p112, %p113
    %p115 = scmp.ne.s32.totalorder %s104, %s105
    %p116 = scmp.eq.s32.totalorder %s14, 0
    %p117 = por %p115, %p116
    %p118 = scmp.ne.s32.totalorder %s104, %s105
    %p119 = scmp.eq.s32.totalorder %s15, 15
    %p120 = por %p118, %p119
    %p122 = scmp.ne.s32.totalorder %s105, %s121
    %p123 = scmp.eq.s32.totalorder %s15, 0
    %p124 = por %p122, %p123
    %p125 = scmp.le.s32.totalorder 1, %s9
    %p126 = scmp.lt.s32.totalorder %s9, 17
    %p127 = pnand %p125, %p126
    %p128 = pneg %p127
    // Predicated region
    $region9: #{wrn_forward.57} parent=5 // pred_check
      _
    $region10: #{wrn_forward.57} parent=5 // pred_check_branch
      %130 = sbr.rel (%p127) target = $region12
    $region11: #{wrn_forward.57} parent=5 // pred_region
      %s131 = ssub.s32 %s9, 1
      // Predicated region
      $region13: #{wrn_forward.57} parent=11 // pred_check
        %p132 = pneg %p68
      $region14: #{wrn_forward.57} parent=11 // pred_check_branch
        %134 = sbr.rel (%p132) target = $region16
      $region15: #{wrn_forward.57} parent=11 // pred_region
        _
      $region16: #{wrn_forward.57} parent=11 // pred_fallthru
        _
      // Predicated region
      $region17: #{wrn_forward.57} parent=11 // pred_check
        %p135 = pneg %p89
      $region18: #{wrn_forward.57} parent=11 // pred_check_branch
        %137 = sbr.rel (%p135) target = $region20
      $region19: #{wrn_forward.57} parent=11 // pred_region
        _
      $region20: #{wrn_forward.57} parent=11 // pred_fallthru
        _
    $region12: #{wrn_forward.57} parent=5 // pred_fallthru
      _
    %p138 = scmp.lt.s32.totalorder %s9, 16
    // Predicated region
    $region21: #{wrn_forward.57} parent=5 // pred_check
      %p139 = pneg %p138
    $region22: #{wrn_forward.57} parent=5 // pred_check_branch
      %141 = sbr.rel (%p139) target = $region24
    $region23: #{wrn_forward.57} parent=5 // pred_region
      // Predicated region
      $region25: #{wrn_forward.57} parent=23 // pred_check
        %p142 = pneg %p41
      $region26: #{wrn_forward.57} parent=23 // pred_check_branch
        %144 = sbr.rel (%p142) target = $region28
      $region27: #{wrn_forward.57} parent=23 // pred_region
        %p145 = scmp.lt.s32.totalorder %s16, 1
        %s146 = scalar_select %p145, %s16, 1
        %s147 = smul.addr %s146, 72
        %s148 = smul.addr %s147, 8
        %s149 = scalar_lea.vmem %s0, %s148
      $region28: #{wrn_forward.57} parent=23 // pred_fallthru
        _
    $region24: #{wrn_forward.57} parent=5 // pred_fallthru
      _
    %p150 = scmp.le.s32.totalorder 1, %s9
    %p151 = scmp.lt.s32.totalorder %s9, 17
    %p152 = pnand %p150, %p151
    %p153 = pneg %p152
    // Predicated region
    $region29: #{wrn_forward.57} parent=5 // pred_check
      _
    $region30: #{wrn_forward.57} parent=5 // pred_check_branch
      %155 = sbr.rel (%p152) target = $region32
    $region31: #{wrn_forward.57} parent=5 // pred_region
      %s156 = ssub.s32 %s9, 1
      %p157 = scmp.lt.s32.totalorder %s18, 1
      %s158 = scalar_select %p157, %s18, 1
      %s159 = smul.addr %s158, 72
      %s160 = smul.addr %s159, 8
      %s161 = scalar_lea.vmem %s0, %s160
      %p162 = pneg %p47
      %p163 = pneg %p44
      %p164 = pneg %p68
      %p165 = pneg %p65
      %p166 = pneg %p89
      %p167 = pneg %p86
      %p168 = pneg %p117
      %p169 = pneg %p114
      %p170 = scmp.lt.s32.totalorder %s18, 1
      %s171 = scalar_select %p170, %s18, 1
      %p172 = scmp.lt.s32.totalorder %s19, 7
      %s173 = scalar_select %p172, %s19, 7
      %s174 = smul.addr %s171, 8
      %s175 = sadd.s32 %s173, %s174
      %s176 = smul.addr %s175, 8
      %s177 = scalar_lea.vmem %s3, %s176
      %p178 = scmp.lt.s32.totalorder %s18, 1
      %s179 = scalar_select %p178, %s18, 1
      %s180 = smul.addr %s179, 72
      %s181 = smul.addr %s180, 8
      %s182 = scalar_lea.vmem %s0, %s181
      %p183 = scmp.lt.s32.totalorder %s18, 1
      %s184 = scalar_select %p183, %s18, 1
      %p185 = scmp.lt.s32.totalorder %s19, 7
      %s186 = scalar_select %p185, %s19, 7
      %s187 = smul.addr %s184, 8
      %s188 = sadd.s32 %s186, %s187
      %s189 = smul.addr %s188, 8
      %s190 = scalar_lea.vmem %s3, %s189
      %v191 = vld [vmem:[%s2] sm:$0x1]
      %v193 = vperm.slane %v191, 0
      %s195 = smul.u32 %s19, 2
      %s196 = smul.u32 %s195, 32
      %s197 = scalar_lea.vmem %s182, %s196
      %v198 = vld [vmem:[%s197] sm:$0xff]
      %v199 = vld [vmem:[%s1] sm:$0xff]
      %v200 = vld [vmem:[%s1 + $0x8] sm:$0xff]
      %vm201 = vcmask 130048
      %v203 = vsel %vm201, %v198, 0
      %205 = vmatpush.msra.mxu0 0.0
      %206 = vmatpush.msra.mxu0 0.0
      %207 = vmatpush.msra.mxu0 0.0
      %208 = vmatpush.msra.mxu0 0.0
      %209 = vmatpush.msra.mxu0 0.0
      %210 = vmatpush.msra.mxu0 0.0
      %211 = vmatpush.msra.mxu0 0.0
      %212 = vmatpush.msra.mxu0 0.0
      %213 = vmatpush.msra.mxu0 0.0
      %214 = vmatpush.msra.mxu0 0.0
      %215 = vmatpush.msra.mxu0 0.0
      %216 = vmatpush.msra.mxu0 0.0
      %217 = vmatpush.msra.mxu0 0.0
      %218 = vmatpush.msra.mxu0 0.0
      %219 = vmatpush.msra.mxu0 %v200
      %220 = vmatpush.msra.mxu0 %v199
      %221 = vmatmul.f32.gmra.mxu0 %v203
      %v222 = vpop.f32.mrf.mxu0
      %v223 = vadd.f32 0.0, %v222
      %224 = vdwg.mxu0
      %v225 = vadd.f32 %v193, %v223
      %s226 = sadd.s32 16, %s196
      %s227 = scalar_lea.vmem %s182, %s226
      %v228 = vld [vmem:[%s227] sm:$0xff]
      %s229 = scalar_lea.vmem %s1, 16
      %v230 = vld [vmem:[%s229] sm:$0xff]
      %v231 = vld [vmem:[%s229 + $0x8] sm:$0xff]
      %v233 = vsel %vm201, %v228, 0
      %235 = vmatpush.msra.mxu0 0.0
      %236 = vmatpush.msra.mxu0 0.0
      %237 = vmatpush.msra.mxu0 0.0
      %238 = vmatpush.msra.mxu0 0.0
      %239 = vmatpush.msra.mxu0 0.0
      %240 = vmatpush.msra.mxu0 0.0
      %241 = vmatpush.msra.mxu0 0.0
      %242 = vmatpush.msra.mxu0 0.0
      %243 = vmatpush.msra.mxu0 0.0
      %244 = vmatpush.msra.mxu0 0.0
      %245 = vmatpush.msra.mxu0 0.0
      %246 = vmatpush.msra.mxu0 0.0
      %247 = vmatpush.msra.mxu0 0.0
      %248 = vmatpush.msra.mxu0 0.0
      %249 = vmatpush.msra.mxu0 %v231
      %250 = vmatpush.msra.mxu0 %v230
      %251 = vmatmul.f32.gmra.mxu0 %v233
      %v252 = vpop.f32.mrf.mxu0
      %v253 = vadd.f32 0.0, %v252
      %254 = vdwg.mxu0
      %v255 = vadd.f32 %v225, %v253
      %v256 = vld [vmem:[%s197 + $0x1] sm:$0xff]
      %s257 = scalar_lea.vmem %s1, 32
      %v258 = vld [vmem:[%s257] sm:$0xff]
      %v259 = vld [vmem:[%s257 + $0x8] sm:$0xff]
      %v261 = vsel %vm201, %v256, 0
      %263 = vmatpush.msra.mxu0 0.0
      %264 = vmatpush.msra.mxu0 0.0
      %265 = vmatpush.msra.mxu0 0.0
      %266 = vmatpush.msra.mxu0 0.0
      %267 = vmatpush.msra.mxu0 0.0
      %268 = vmatpush.msra.mxu0 0.0
      %269 = vmatpush.msra.mxu0 0.0
      %270 = vmatpush.msra.mxu0 0.0
      %271 = vmatpush.msra.mxu0 0.0
      %272 = vmatpush.msra.mxu0 0.0
      %273 = vmatpush.msra.mxu0 0.0
      %274 = vmatpush.msra.mxu0 0.0
      %275 = vmatpush.msra.mxu0 0.0
      %276 = vmatpush.msra.mxu0 0.0
      %277 = vmatpush.msra.mxu0 %v259
      %278 = vmatpush.msra.mxu0 %v258
      %279 = vmatmul.f32.gmra.mxu0 %v261
      %v280 = vpop.f32.mrf.mxu0
      %v281 = vadd.f32 0.0, %v280
      %282 = vdwg.mxu0
      %v283 = vadd.f32 %v255, %v281
      %s284 = sadd.s32 %s195, 1
      %s285 = smul.u32 %s284, 32
      %s286 = scalar_lea.vmem %s182, %s285
      %v287 = vld [vmem:[%s286] sm:$0xff]
      %s288 = scalar_lea.vmem %s1, 48
      %v289 = vld [vmem:[%s288] sm:$0xff]
      %v290 = vld [vmem:[%s288 + $0x8] sm:$0xff]
      %v292 = vsel %vm201, %v287, 0
      %294 = vmatpush.msra.mxu0 0.0
      %295 = vmatpush.msra.mxu0 0.0
      %296 = vmatpush.msra.mxu0 0.0
      %297 = vmatpush.msra.mxu0 0.0
      %298 = vmatpush.msra.mxu0 0.0
      %299 = vmatpush.msra.mxu0 0.0
      %300 = vmatpush.msra.mxu0 0.0
      %301 = vmatpush.msra.mxu0 0.0
      %302 = vmatpush.msra.mxu0 0.0
      %303 = vmatpush.msra.mxu0 0.0
      %304 = vmatpush.msra.mxu0 0.0
      %305 = vmatpush.msra.mxu0 0.0
      %306 = vmatpush.msra.mxu0 0.0
      %307 = vmatpush.msra.mxu0 0.0
      %308 = vmatpush.msra.mxu0 %v290
      %309 = vmatpush.msra.mxu0 %v289
      %310 = vmatmul.f32.gmra.mxu0 %v292
      %v311 = vpop.f32.mrf.mxu0
      %v312 = vadd.f32 0.0, %v311
      %313 = vdwg.mxu0
      %v314 = vadd.f32 %v283, %v312
      %s315 = sadd.s32 16, %s285
      %s316 = scalar_lea.vmem %s182, %s315
      %v317 = vld [vmem:[%s316] sm:$0xff]
      %s318 = scalar_lea.vmem %s1, 64
      %v319 = vld [vmem:[%s318] sm:$0xff]
      %v320 = vld [vmem:[%s318 + $0x8] sm:$0xff]
      %v322 = vsel %vm201, %v317, 0
      %324 = vmatpush.msra.mxu0 0.0
      %325 = vmatpush.msra.mxu0 0.0
      %326 = vmatpush.msra.mxu0 0.0
      %327 = vmatpush.msra.mxu0 0.0
      %328 = vmatpush.msra.mxu0 0.0
      %329 = vmatpush.msra.mxu0 0.0
      %330 = vmatpush.msra.mxu0 0.0
      %331 = vmatpush.msra.mxu0 0.0
      %332 = vmatpush.msra.mxu0 0.0
      %333 = vmatpush.msra.mxu0 0.0
      %334 = vmatpush.msra.mxu0 0.0
      %335 = vmatpush.msra.mxu0 0.0
      %336 = vmatpush.msra.mxu0 0.0
      %337 = vmatpush.msra.mxu0 0.0
      %338 = vmatpush.msra.mxu0 %v320
      %339 = vmatpush.msra.mxu0 %v319
      %340 = vmatmul.f32.gmra.mxu0 %v322
      %v341 = vpop.f32.mrf.mxu0
      %v342 = vadd.f32 0.0, %v341
      %343 = vdwg.mxu0
      %v344 = vadd.f32 %v314, %v342
      %v345 = vld [vmem:[%s286 + $0x1] sm:$0xff]
      %s346 = scalar_lea.vmem %s1, 80
      %v347 = vld [vmem:[%s346] sm:$0xff]
      %v348 = vld [vmem:[%s346 + $0x8] sm:$0xff]
      %v350 = vsel %vm201, %v345, 0
      %352 = vmatpush.msra.mxu0 0.0
      %353 = vmatpush.msra.mxu0 0.0
      %354 = vmatpush.msra.mxu0 0.0
      %355 = vmatpush.msra.mxu0 0.0
      %356 = vmatpush.msra.mxu0 0.0
      %357 = vmatpush.msra.mxu0 0.0
      %358 = vmatpush.msra.mxu0 0.0
      %359 = vmatpush.msra.mxu0 0.0
      %360 = vmatpush.msra.mxu0 0.0
      %361 = vmatpush.msra.mxu0 0.0
      %362 = vmatpush.msra.mxu0 0.0
      %363 = vmatpush.msra.mxu0 0.0
      %364 = vmatpush.msra.mxu0 0.0
      %365 = vmatpush.msra.mxu0 0.0
      %366 = vmatpush.msra.mxu0 %v348
      %367 = vmatpush.msra.mxu0 %v347
      %368 = vmatmul.f32.gmra.mxu0 %v350
      %v369 = vpop.f32.mrf.mxu0
      %v370 = vadd.f32 0.0, %v369
      %371 = vdwg.mxu0
      %v372 = vadd.f32 %v344, %v370
      %s373 = sadd.s32 %s195, 2
      %s374 = smul.u32 %s373, 32
      %s375 = scalar_lea.vmem %s182, %s374
      %v376 = vld [vmem:[%s375] sm:$0xff]
      %s377 = scalar_lea.vmem %s1, 96
      %v378 = vld [vmem:[%s377] sm:$0xff]
      %v379 = vld [vmem:[%s377 + $0x8] sm:$0xff]
      %v381 = vsel %vm201, %v376, 0
      %383 = vmatpush.msra.mxu0 0.0
      %384 = vmatpush.msra.mxu0 0.0
      %385 = vmatpush.msra.mxu0 0.0
      %386 = vmatpush.msra.mxu0 0.0
      %387 = vmatpush.msra.mxu0 0.0
      %388 = vmatpush.msra.mxu0 0.0
      %389 = vmatpush.msra.mxu0 0.0
      %390 = vmatpush.msra.mxu0 0.0
      %391 = vmatpush.msra.mxu0 0.0
      %392 = vmatpush.msra.mxu0 0.0
      %393 = vmatpush.msra.mxu0 0.0
      %394 = vmatpush.msra.mxu0 0.0
      %395 = vmatpush.msra.mxu0 0.0
      %396 = vmatpush.msra.mxu0 0.0
      %397 = vmatpush.msra.mxu0 %v379
      %398 = vmatpush.msra.mxu0 %v378
      %399 = vmatmul.f32.gmra.mxu0 %v381
      %v400 = vpop.f32.mrf.mxu0
      %v401 = vadd.f32 0.0, %v400
      %402 = vdwg.mxu0
      %v403 = vadd.f32 %v372, %v401
      %s404 = sadd.s32 16, %s374
      %s405 = scalar_lea.vmem %s182, %s404
      %v406 = vld [vmem:[%s405] sm:$0xff]
      %s407 = scalar_lea.vmem %s1, 112
      %v408 = vld [vmem:[%s407] sm:$0xff]
      %v409 = vld [vmem:[%s407 + $0x8] sm:$0xff]
      %v411 = vsel %vm201, %v406, 0
      %413 = vmatpush.msra.mxu0 0.0
      %414 = vmatpush.msra.mxu0 0.0
      %415 = vmatpush.msra.mxu0 0.0
      %416 = vmatpush.msra.mxu0 0.0
      %417 = vmatpush.msra.mxu0 0.0
      %418 = vmatpush.msra.mxu0 0.0
      %419 = vmatpush.msra.mxu0 0.0
      %420 = vmatpush.msra.mxu0 0.0
      %421 = vmatpush.msra.mxu0 0.0
      %422 = vmatpush.msra.mxu0 0.0
      %423 = vmatpush.msra.mxu0 0.0
      %424 = vmatpush.msra.mxu0 0.0
      %425 = vmatpush.msra.mxu0 0.0
      %426 = vmatpush.msra.mxu0 0.0
      %427 = vmatpush.msra.mxu0 %v409
      %428 = vmatpush.msra.mxu0 %v408
      %429 = vmatmul.f32.gmra.mxu0 %v411
      %v430 = vpop.f32.mrf.mxu0
      %v431 = vadd.f32 0.0, %v430
      %432 = vdwg.mxu0
      %v433 = vadd.f32 %v403, %v431
      %v434 = vld [vmem:[%s375 + $0x1] sm:$0xff]
      %s435 = scalar_lea.vmem %s1, 128
      %v436 = vld [vmem:[%s435] sm:$0xff]
      %v437 = vld [vmem:[%s435 + $0x8] sm:$0xff]
      %v439 = vsel %vm201, %v434, 0
      %441 = vmatpush.msra.mxu0 0.0
      %442 = vmatpush.msra.mxu0 0.0
      %443 = vmatpush.msra.mxu0 0.0
      %444 = vmatpush.msra.mxu0 0.0
      %445 = vmatpush.msra.mxu0 0.0
      %446 = vmatpush.msra.mxu0 0.0
      %447 = vmatpush.msra.mxu0 0.0
      %448 = vmatpush.msra.mxu0 0.0
      %449 = vmatpush.msra.mxu0 0.0
      %450 = vmatpush.msra.mxu0 0.0
      %451 = vmatpush.msra.mxu0 0.0
      %452 = vmatpush.msra.mxu0 0.0
      %453 = vmatpush.msra.mxu0 0.0
      %454 = vmatpush.msra.mxu0 0.0
      %455 = vmatpush.msra.mxu0 %v437
      %456 = vmatpush.msra.mxu0 %v436
      %457 = vmatmul.f32.gmra.mxu0 %v439
      %v458 = vpop.f32.mrf.mxu0
      %v459 = vadd.f32 0.0, %v458
      %460 = vdwg.mxu0
      %v461 = vadd.f32 %v433, %v459
      %vm462 = vcmask 261120
      %463 = vst.msk [vmem:[%s190] sm:$0xff] %vm462, %v461
      %p464 = scmp.lt.s32.totalorder %s18, 1
      %s465 = scalar_select %p464, %s18, 1
      %p466 = scmp.lt.s32.totalorder %s19, 7
      %s467 = scalar_select %p466, %s19, 7
      %s468 = smul.addr %s465, 8
      %s469 = sadd.s32 %s467, %s468
      %s470 = smul.addr %s469, 8
      %s471 = scalar_lea.vmem %s3, %s470
      // Predicated region
      $region33: #{wrn_forward.57} parent=31 // pred_check
        %p472 = pneg %p114
      $region34: #{wrn_forward.57} parent=31 // pred_check_branch
        %474 = sbr.rel (%p472) target = $region36
      $region35: #{wrn_forward.57} parent=31 // pred_region
        _
      $region36: #{wrn_forward.57} parent=31 // pred_fallthru
        _
    $region32: #{wrn_forward.57} parent=5 // pred_fallthru
      _
    %p475 = scmp.le.s32.totalorder 2, %s9
    // Predicated region
    $region37: #{wrn_forward.57} parent=5 // pred_check
      %p476 = pneg %p475
    $region38: #{wrn_forward.57} parent=5 // pred_check_branch
      %478 = sbr.rel (%p476) target = $region40
    $region39: #{wrn_forward.57} parent=5 // pred_region
      %s479 = ssub.s32 %s9, 2
      // Predicated region
      $region41: #{wrn_forward.57} parent=39 // pred_check
        %p480 = pneg %p120
      $region42: #{wrn_forward.57} parent=39 // pred_check_branch
        %482 = sbr.rel (%p480) target = $region44
      $region43: #{wrn_forward.57} parent=39 // pred_region
        %p483 = scmp.lt.s32.totalorder %s20, 1
        %s484 = scalar_select %p483, %s20, 1
        %p485 = scmp.lt.s32.totalorder %s21, 7
        %s486 = scalar_select %p485, %s21, 7
        %s487 = smul.addr %s484, 8
        %s488 = sadd.s32 %s486, %s487
        %s489 = smul.addr %s488, 8
        %s490 = scalar_lea.vmem %s3, %s489
      $region44: #{wrn_forward.57} parent=39 // pred_fallthru
        _
    $region40: #{wrn_forward.57} parent=5 // pred_fallthru
      _
  $region6: #{wrn_forward.57} parent=0 // loop_footer
    %s13 = sadd.s32 1, %s9
  $region7: #{wrn_forward.57} parent=0 // loop_footer_branch
    %8 = sbr.rel target = $region3
  $region8: #{wrn_forward.57} parent=0 // loop_exit
    _

// kernel: tile.178
$region0: #{tile.178}
  #allocation0 [shape = 's32[1]{0}', space=sflag, size = 0x4, scoped, tag = 'scoped memory for tile.178']
  %s0 = inlined_call_operand.vmem [shape: f32[32], index: 0, kind: input, shape index: {}]
  %s1 = inlined_call_operand.vmem [shape: f32[8,32], index: 1, kind: output, shape index: {}]
  // Predicated region
  $region2: #{tile.178} parent=0 // pred_check
    _
  $region3: #{tile.178} parent=0 // pred_check_branch
    %3 = sbr.rel (0) target = $region5
  $region4: #{tile.178} parent=0 // pred_region
    _
  $region5: #{tile.178} parent=0 // pred_fallthru
    _
  %v4 = vld [vmem:[%s0] ss:$0 sm:$0xff]
  %5 = vst [vmem:[%s1] sm:$0xff] %v4

// kernel: tile.179
$region0: #{tile.179}
  %s0 = inlined_call_operand.vmem [shape: f32[8,32], index: 0, kind: input, shape index: {}]
  %s1 = inlined_call_operand.vmem [shape: f32[1,256], index: 1, kind: output, shape index: {}]
  $region1: #{tile.179} parent=0
    #allocation0 [shape = 'u8[8192]{0}', space=vmem, size = 0x2000, scoped, tag = 'scoped mem for output reshape']
    %s2 = smov 3
    %v3 = vld [vmem:[%s0] ss:$4 sm:%s2]
    %vm4 = vcmask 261120
    %5 = vst.msk [vmem:[#allocation0] ss:$8 sm:$0x3] %vm4, %v3
    %s6 = scalar_lea.vmem %s0, 3
    %s7 = smov 3
    %v8 = vld [vmem:[%s6] ss:$4 sm:%s7]
    %9 = vrot.lane.b32.xlu0 %v8, 96
    %v10 = vpop.permute.xlu0 %9
    %vm11 = vcmask 1048320
    %12 = vst.msk [vmem:[#allocation0] ss:$8 sm:$0x3] %vm11, %v10
    %s13 = scalar_lea.vmem %s0, 2
    %s14 = smov 3
    %v15 = vld [vmem:[%s13] ss:$4 sm:%s14]
    %16 = vrot.lane.b32.xlu0 %v15, 64
    %v17 = vpop.permute.xlu0 %16
    %vm18 = vcmask 785920
    %19 = vst.msk [vmem:[#allocation0] ss:$8 sm:$0x3] %vm18, %v17
    %s20 = scalar_lea.vmem %s0, 1
    %s21 = smov 3
    %v22 = vld [vmem:[%s20] ss:$4 sm:%s21]
    %23 = vrot.lane.b32.xlu0 %v22, 32
    %v24 = vpop.permute.xlu0 %23
    %vm25 = vcmask 523520
    %26 = vst.msk [vmem:[#allocation0] ss:$8 sm:$0x3] %vm25, %v24
    %s28 = ssub.s32 2, 1
    %v29 = vld [vmem:[#allocation0] sm:%s28]
    %s31 = ssub.s32 2, 1
    %32 = vst [vmem:[%s1] sm:%s31] %v29
    %s33 = scalar_lea.vmem [#allocation0], 8
    %v34 = vld [vmem:[%s33] sm:%s28]
    %s36 = ssub.s32 2, 1
    %s37 = scalar_lea.vmem %s1, 1
    %38 = vst [vmem:[%s37] sm:%s36] %v34

// kernel: wrn_forward.59
$region0: #{wrn_forward.59}
  #allocation0 [shape = 'u32[]', space=smem, size = 0x4, offset = 0x4, fixed_abs, tag = 'smem constant byte address 0x4 - core index']
  #allocation1 [shape = 'u32[72,128]{1,0:T(1,128)}', space=vmem, size = 0x9000, scoped, tag = 'internal scratch']
  %s0 = inlined_call_operand.vmem [shape: f32[16,256], index: 0, kind: input, shape index: {}]
  %s1 = inlined_call_operand.vmem [shape: f32[1,256], index: 1, kind: input, shape index: {}]
  %s2 = inlined_call_operand.vmem [shape: f32[1,256], index: 2, kind: input, shape index: {}]
  %s3 = inlined_call_operand.vmem [shape: f32[16,256], index: 3, kind: output, shape index: {}]
  %s4 = sld [smem:[#allocation0]]
  $region22: #{wrn_forward.59} parent=0
    _
  %s6 = ssub.s32 1, %s4
  %s7 = scalar_select 0, %s6, %s4
  // Predicated region
  $region2: #{wrn_forward.59} parent=0 // pred_check
    _
  $region3: #{wrn_forward.59} parent=0 // pred_check_branch
    %9 = sbr.rel (0) target = $region5
  $region4: #{wrn_forward.59} parent=0 // pred_region
    _
  $region5: #{wrn_forward.59} parent=0 // pred_fallthru
    _
  // Predicated region
  $region6: #{wrn_forward.59} parent=0 // pred_check
    _
  $region7: #{wrn_forward.59} parent=0 // pred_check_branch
    %11 = sbr.rel (0) target = $region9
  $region8: #{wrn_forward.59} parent=0 // pred_region
    _
  $region9: #{wrn_forward.59} parent=0 // pred_fallthru
    _
  // Predicated region
  $region10: #{wrn_forward.59} parent=0 // pred_check
    _
  $region11: #{wrn_forward.59} parent=0 // pred_check_branch
    %13 = sbr.rel (0) target = $region13
  $region12: #{wrn_forward.59} parent=0 // pred_region
    _
  $region13: #{wrn_forward.59} parent=0 // pred_fallthru
    _
  %v14 = vld [vmem:[%s0] sm:$0xff]
  %v15 = vld [vmem:[%s0 + $0x8] sm:$0xff]
  %v16 = vld [vmem:[%s0 + $0x10] sm:$0xff]
  %v17 = vld [vmem:[%s0 + $0x18] sm:$0xff]
  %v18 = vld [vmem:[%s1] sm:$0x3]
  %v20 = vperm.slane %v18, 0
  %v21 = vperm.slane %v18, 1
  %v24 = vmul.f32 %v14, %v20
  %v25 = vmul.f32 %v15, %v21
  %v26 = vmul.f32 %v16, %v20
  %v27 = vmul.f32 %v17, %v21
  %v28 = vld [vmem:[%s2] sm:$0x3]
  %v30 = vperm.slane %v28, 0
  %v31 = vperm.slane %v28, 1
  %v34 = vadd.f32 %v24, %v30
  %v35 = vadd.f32 %v25, %v31
  %v36 = vadd.f32 %v26, %v30
  %v37 = vadd.f32 %v27, %v31
  %vm38 = vcmp.ge.f32.partialorder %v34, 0.0
  %vm39 = vcmp.ge.f32.partialorder %v35, 0.0
  %vm40 = vcmp.ge.f32.partialorder %v36, 0.0
  %vm41 = vcmp.ge.f32.partialorder %v37, 0.0
  %v42 = vmul.f32 %v34, 0.1
  %v43 = vmul.f32 %v35, 0.1
  %v44 = vmul.f32 %v36, 0.1
  %v45 = vmul.f32 %v37, 0.1
  %v46 = vsel %vm38, %v34, %v42
  %v47 = vsel %vm39, %v35, %v43
  %v48 = vsel %vm40, %v36, %v44
  %v49 = vsel %vm41, %v37, %v45
  %50 = vst [vmem:[%s3] sm:$0xff] %v46
  %51 = vst [vmem:[%s3 + $0x8] sm:$0xff] %v47
  %52 = vst [vmem:[%s3 + $0x10] sm:$0xff] %v48
  %53 = vst [vmem:[%s3 + $0x18] sm:$0xff] %v49
  // Predicated region
  $region14: #{wrn_forward.59} parent=0 // pred_check
    _
  $region15: #{wrn_forward.59} parent=0 // pred_check_branch
    %55 = sbr.rel (0) target = $region17
  $region16: #{wrn_forward.59} parent=0 // pred_region
    _
  $region17: #{wrn_forward.59} parent=0 // pred_fallthru
    _
  // Predicated region
  $region18: #{wrn_forward.59} parent=0 // pred_check
    _
  $region19: #{wrn_forward.59} parent=0 // pred_check_branch
    %57 = sbr.rel (0) target = $region21
  $region20: #{wrn_forward.59} parent=0 // pred_region
    _
  $region21: #{wrn_forward.59} parent=0 // pred_fallthru
    _

// kernel: wrn_forward.64
$region0: #{wrn_forward.64}
  #allocation0 [shape = 'u32[]', space=smem, size = 0x4, offset = 0x4, fixed_abs, tag = 'smem constant byte address 0x4 - core index']
  #allocation1 [shape = 'u32[72,128]{1,0:T(1,128)}', space=vmem, size = 0x9000, scoped, tag = 'internal scratch']
  %s0 = inlined_call_operand.vmem [shape: f32[2,10,1,10,32], index: 0, kind: input, shape index: {}]
  %s1 = inlined_call_operand.vmem [shape: f32[9,32,32], index: 1, kind: input, shape index: {}]
  %s2 = inlined_call_operand.vmem [shape: f32[1,32], index: 2, kind: input, shape index: {}]
  %s3 = inlined_call_operand.vmem [shape: f32[2,8,8,32], index: 3, kind: output, shape index: {}]
  %s4 = sld [smem:[#allocation0]]
  $region45: #{wrn_forward.64} parent=0
    _
  %s6 = ssub.s32 1, %s4
  %s7 = scalar_select 0, %s6, %s4
  loop: start=0, step=1, limit=18
  $region2: #{wrn_forward.64} parent=0 // loop_pre_header
    _
  $region3: #{wrn_forward.64} parent=0 // loop_header
    %s9 = sphi 0, %s13
    %p10 = scmp.ge.s32.totalorder %s9, 18
    %s16 = sphi 0, %s28
    %s17 = sphi 0, %s24
    %s18 = sphi 0, %s16
    %s19 = sphi 0, %s17
    %s20 = sphi 0, %s18
    %s21 = sphi 0, %s19
    %s31 = sphi 0, %s33
    %s34 = sphi 0, %s31
    %s35 = sphi 0, %s34
    %s51 = sphi 0, %s35
    %s55 = sphi 0, %s55
    %s57 = sphi 0, %s55
    %s58 = sphi 0, %s57
    %s72 = sphi 0, %s58
    %s76 = sphi 0, %s76
    %s78 = sphi 0, %s76
    %s79 = sphi 0, %s78
    %s93 = sphi 0, %s79
    %s101 = sphi 0, %s103
    %s104 = sphi 0, %s101
    %s105 = sphi 0, %s104
    %s121 = sphi 0, %s105
  $region4: #{wrn_forward.64} parent=0 // loop_header_branch
    %12 = sbr.rel (%p10) target = $region8
  $region5: #{wrn_forward.64} parent=0 // loop_body
    %s14 = ssub.s32 %s9, 1
    %s15 = ssub.s32 %s9, 2
    %s22 = sadd.s32 1, %s17
    %p23 = scmp.ge.s32.totalorder %s22, 8
    %s24 = scalar_select %p23, 0, %s22
    %s25 = sadd.s32 1, %s16
    %s26 = scalar_select %p23, %s25, %s16
    %p27 = scmp.ge.s32.totalorder %s26, 2
    %s28 = scalar_select %p27, 0, %s26
    %s29 = ssub.s32 %s16, %s28
    %p30 = scmp.eq.s32.totalorder %s29, 0
    %s32 = sadd.s32 %s31, 1
    %s33 = scalar_select %p30, %s31, %s32
    %p36 = pneg %p30
    %p37 = scmp.eq.s32.totalorder %s9, 15
    %p38 = por %p36, %p37
    %p39 = scmp.ne.s32.totalorder %s31, %s34
    %p40 = scmp.eq.s32.totalorder %s9, 0
    %p41 = por %p39, %p40
    %p42 = scmp.ne.s32.totalorder %s31, %s34
    %p43 = scmp.eq.s32.totalorder %s14, 15
    %p44 = por %p42, %p43
    %p45 = scmp.ne.s32.totalorder %s34, %s35
    %p46 = scmp.eq.s32.totalorder %s14, 0
    %p47 = por %p45, %p46
    %p48 = scmp.ne.s32.totalorder %s34, %s35
    %p49 = scmp.eq.s32.totalorder %s15, 15
    %p50 = por %p48, %p49
    %p52 = scmp.ne.s32.totalorder %s35, %s51
    %p53 = scmp.eq.s32.totalorder %s15, 0
    %p54 = por %p52, %p53
    %s56 = sadd.s32 %s55, 1
    %p59 = scmp.eq.s32.totalorder %s9, 15
    %p60 = scmp.ne.s32.totalorder %s55, %s57
    %p61 = scmp.eq.s32.totalorder %s9, 0
    %p62 = por %p60, %p61
    %p63 = scmp.ne.s32.totalorder %s55, %s57
    %p64 = scmp.eq.s32.totalorder %s14, 15
    %p65 = por %p63, %p64
    %p66 = scmp.ne.s32.totalorder %s57, %s58
    %p67 = scmp.eq.s32.totalorder %s14, 0
    %p68 = por %p66, %p67
    %p69 = scmp.ne.s32.totalorder %s57, %s58
    %p70 = scmp.eq.s32.totalorder %s15, 15
    %p71 = por %p69, %p70
    %p73 = scmp.ne.s32.totalorder %s58, %s72
    %p74 = scmp.eq.s32.totalorder %s15, 0
    %p75 = por %p73, %p74
    %s77 = sadd.s32 %s76, 1
    %p80 = scmp.eq.s32.totalorder %s9, 15
    %p81 = scmp.ne.s32.totalorder %s76, %s78
    %p82 = scmp.eq.s32.totalorder %s9, 0
    %p83 = por %p81, %p82
    %p84 = scmp.ne.s32.totalorder %s76, %s78
    %p85 = scmp.eq.s32.totalorder %s14, 15
    %p86 = por %p84, %p85
    %p87 = scmp.ne.s32.totalorder %s78, %s79
    %p88 = scmp.eq.s32.totalorder %s14, 0
    %p89 = por %p87, %p88
    %p90 = scmp.ne.s32.totalorder %s78, %s79
    %p91 = scmp.eq.s32.totalorder %s15, 15
    %p92 = por %p90, %p91
    %p94 = scmp.ne.s32.totalorder %s79, %s93
    %p95 = scmp.eq.s32.totalorder %s15, 0
    %p96 = por %p94, %p95
    %s97 = ssub.s32 %s16, %s28
    %s98 = ssub.s32 %s17, %s24
    %s99 = sor.u32 %s97, %s98
    %p100 = scmp.eq.s32.totalorder %s99, 0
    %s102 = sadd.s32 %s101, 1
    %s103 = scalar_select %p100, %s101, %s102
    %p106 = pneg %p100
    %p107 = scmp.eq.s32.totalorder %s9, 15
    %p108 = por %p106, %p107
    %p109 = scmp.ne.s32.totalorder %s101, %s104
    %p110 = scmp.eq.s32.totalorder %s9, 0
    %p111 = por %p109, %p110
    %p112 = scmp.ne.s32.totalorder %s101, %s104
    %p113 = scmp.eq.s32.totalorder %s14, 15
    %p114 = por %p112, %p113
    %p115 = scmp.ne.s32.totalorder %s104, %s105
    %p116 = scmp.eq.s32.totalorder %s14, 0
    %p117 = por %p115, %p116
    %p118 = scmp.ne.s32.totalorder %s104, %s105
    %p119 = scmp.eq.s32.totalorder %s15, 15
    %p120 = por %p118, %p119
    %p122 = scmp.ne.s32.totalorder %s105, %s121
    %p123 = scmp.eq.s32.totalorder %s15, 0
    %p124 = por %p122, %p123
    %p125 = scmp.le.s32.totalorder 1, %s9
    %p126 = scmp.lt.s32.totalorder %s9, 17
    %p127 = pnand %p125, %p126
    %p128 = pneg %p127
    // Predicated region
    $region9: #{wrn_forward.64} parent=5 // pred_check
      _
    $region10: #{wrn_forward.64} parent=5 // pred_check_branch
      %130 = sbr.rel (%p127) target = $region12
    $region11: #{wrn_forward.64} parent=5 // pred_region
      %s131 = ssub.s32 %s9, 1
      // Predicated region
      $region13: #{wrn_forward.64} parent=11 // pred_check
        %p132 = pneg %p68
      $region14: #{wrn_forward.64} parent=11 // pred_check_branch
        %134 = sbr.rel (%p132) target = $region16
      $region15: #{wrn_forward.64} parent=11 // pred_region
        _
      $region16: #{wrn_forward.64} parent=11 // pred_fallthru
        _
      // Predicated region
      $region17: #{wrn_forward.64} parent=11 // pred_check
        %p135 = pneg %p89
      $region18: #{wrn_forward.64} parent=11 // pred_check_branch
        %137 = sbr.rel (%p135) target = $region20
      $region19: #{wrn_forward.64} parent=11 // pred_region
        _
      $region20: #{wrn_forward.64} parent=11 // pred_fallthru
        _
    $region12: #{wrn_forward.64} parent=5 // pred_fallthru
      _
    %p138 = scmp.lt.s32.totalorder %s9, 16
    // Predicated region
    $region21: #{wrn_forward.64} parent=5 // pred_check
      %p139 = pneg %p138
    $region22: #{wrn_forward.64} parent=5 // pred_check_branch
      %141 = sbr.rel (%p139) target = $region24
    $region23: #{wrn_forward.64} parent=5 // pred_region
      // Predicated region
      $region25: #{wrn_forward.64} parent=23 // pred_check
        %p142 = pneg %p41
      $region26: #{wrn_forward.64} parent=23 // pred_check_branch
        %144 = sbr.rel (%p142) target = $region28
      $region27: #{wrn_forward.64} parent=23 // pred_region
        %p145 = scmp.lt.s32.totalorder %s16, 1
        %s146 = scalar_select %p145, %s16, 1
        %s147 = smul.addr %s146, 20
        %s148 = smul.addr %s147, 8
        %s149 = scalar_lea.vmem %s0, %s148
      $region28: #{wrn_forward.64} parent=23 // pred_fallthru
        _
    $region24: #{wrn_forward.64} parent=5 // pred_fallthru
      _
    %p150 = scmp.le.s32.totalorder 1, %s9
    %p151 = scmp.lt.s32.totalorder %s9, 17
    %p152 = pnand %p150, %p151
    %p153 = pneg %p152
    // Predicated region
    $region29: #{wrn_forward.64} parent=5 // pred_check
      _
    $region30: #{wrn_forward.64} parent=5 // pred_check_branch
      %155 = sbr.rel (%p152) target = $region32
    $region31: #{wrn_forward.64} parent=5 // pred_region
      %s156 = ssub.s32 %s9, 1
      %p157 = scmp.lt.s32.totalorder %s18, 1
      %s158 = scalar_select %p157, %s18, 1
      %s159 = smul.addr %s158, 20
      %s160 = smul.addr %s159, 8
      %s161 = scalar_lea.vmem %s0, %s160
      %p162 = pneg %p47
      %p163 = pneg %p44
      %p164 = pneg %p68
      %p165 = pneg %p65
      %p166 = pneg %p89
      %p167 = pneg %p86
      %p168 = pneg %p117
      %p169 = pneg %p114
      %p170 = scmp.lt.s32.totalorder %s18, 1
      %s171 = scalar_select %p170, %s18, 1
      %p172 = scmp.lt.s32.totalorder %s19, 7
      %s173 = scalar_select %p172, %s19, 7
      %s174 = smul.addr %s171, 8
      %s175 = sadd.s32 %s173, %s174
      %s176 = smul.addr %s175, 8
      %s177 = scalar_lea.vmem %s3, %s176
      %p178 = scmp.lt.s32.totalorder %s18, 1
      %s179 = scalar_select %p178, %s18, 1
      %s180 = smul.addr %s179, 20
      %s181 = smul.addr %s180, 8
      %s182 = scalar_lea.vmem %s0, %s181
      %p183 = scmp.lt.s32.totalorder %s18, 1
      %s184 = scalar_select %p183, %s18, 1
      %p185 = scmp.lt.s32.totalorder %s19, 7
      %s186 = scalar_select %p185, %s19, 7
      %s187 = smul.addr %s184, 8
      %s188 = sadd.s32 %s186, %s187
      %s189 = smul.addr %s188, 8
      %s190 = scalar_lea.vmem %s3, %s189
      %v191 = vld [vmem:[%s2] sm:$0x1]
      %v193 = vperm.slane %v191, 0
      %s195 = smul.u32 %s19, 16
      %s196 = scalar_lea.vmem %s182, %s195
      %v197 = vld [vmem:[%s196] sm:$0xff]
      %v198 = vld [vmem:[%s1] sm:$0xff]
      %v199 = vld [vmem:[%s1 + $0x8] sm:$0xff]
      %v200 = vld [vmem:[%s1 + $0x10] sm:$0xff]
      %v201 = vld [vmem:[%s1 + $0x18] sm:$0xff]
      %vm202 = vcmask 261120
      %v204 = vsel %vm202, %v197, 0
      %206 = vmatpush.msra.mxu0 0.0
      %207 = vmatpush.msra.mxu0 0.0
      %208 = vmatpush.msra.mxu0 0.0
      %209 = vmatpush.msra.mxu0 0.0
      %210 = vmatpush.msra.mxu0 0.0
      %211 = vmatpush.msra.mxu0 0.0
      %212 = vmatpush.msra.mxu0 0.0
      %213 = vmatpush.msra.mxu0 0.0
      %214 = vmatpush.msra.mxu0 0.0
      %215 = vmatpush.msra.mxu0 0.0
      %216 = vmatpush.msra.mxu0 0.0
      %217 = vmatpush.msra.mxu0 0.0
      %218 = vmatpush.msra.mxu0 %v201
      %219 = vmatpush.msra.mxu0 %v200
      %220 = vmatpush.msra.mxu0 %v199
      %221 = vmatpush.msra.mxu0 %v198
      %222 = vmatmul.f32.gmra.mxu0 %v204
      %v223 = vpop.f32.mrf.mxu0
      %v224 = vadd.f32 0.0, %v223
      %225 = vdwg.mxu0
      %v226 = vadd.f32 %v193, %v224
      %v227 = vld [vmem:[%s196 + $0x1] sm:$0xff]
      %s228 = scalar_lea.vmem %s1, 32
      %v229 = vld [vmem:[%s228] sm:$0xff]
      %v230 = vld [vmem:[%s228 + $0x8] sm:$0xff]
      %v231 = vld [vmem:[%s228 + $0x10] sm:$0xff]
      %v232 = vld [vmem:[%s228 + $0x18] sm:$0xff]
      %v234 = vsel %vm202, %v227, 0
      %236 = vmatpush.msra.mxu0 0.0
      %237 = vmatpush.msra.mxu0 0.0
      %238 = vmatpush.msra.mxu0 0.0
      %239 = vmatpush.msra.mxu0 0.0
      %240 = vmatpush.msra.mxu0 0.0
      %241 = vmatpush.msra.mxu0 0.0
      %242 = vmatpush.msra.mxu0 0.0
      %243 = vmatpush.msra.mxu0 0.0
      %244 = vmatpush.msra.mxu0 0.0
      %245 = vmatpush.msra.mxu0 0.0
      %246 = vmatpush.msra.mxu0 0.0
      %247 = vmatpush.msra.mxu0 0.0
      %248 = vmatpush.msra.mxu0 %v232
      %249 = vmatpush.msra.mxu0 %v231
      %250 = vmatpush.msra.mxu0 %v230
      %251 = vmatpush.msra.mxu0 %v229
      %252 = vmatmul.f32.gmra.mxu0 %v234
      %v253 = vpop.f32.mrf.mxu0
      %v254 = vadd.f32 0.0, %v253
      %255 = vdwg.mxu0
      %v256 = vadd.f32 %v226, %v254
      %v257 = vld [vmem:[%s196 + $0x2] sm:$0xff]
      %s258 = scalar_lea.vmem %s1, 64
      %v259 = vld [vmem:[%s258] sm:$0xff]
      %v260 = vld [vmem:[%s258 + $0x8] sm:$0xff]
      %v261 = vld [vmem:[%s258 + $0x10] sm:$0xff]
      %v262 = vld [vmem:[%s258 + $0x18] sm:$0xff]
      %v264 = vsel %vm202, %v257, 0
      %266 = vmatpush.msra.mxu0 0.0
      %267 = vmatpush.msra.mxu0 0.0
      %268 = vmatpush.msra.mxu0 0.0
      %269 = vmatpush.msra.mxu0 0.0
      %270 = vmatpush.msra.mxu0 0.0
      %271 = vmatpush.msra.mxu0 0.0
      %272 = vmatpush.msra.mxu0 0.0
      %273 = vmatpush.msra.mxu0 0.0
      %274 = vmatpush.msra.mxu0 0.0
      %275 = vmatpush.msra.mxu0 0.0
      %276 = vmatpush.msra.mxu0 0.0
      %277 = vmatpush.msra.mxu0 0.0
      %278 = vmatpush.msra.mxu0 %v262
      %279 = vmatpush.msra.mxu0 %v261
      %280 = vmatpush.msra.mxu0 %v260
      %281 = vmatpush.msra.mxu0 %v259
      %282 = vmatmul.f32.gmra.mxu0 %v264
      %v283 = vpop.f32.mrf.mxu0
      %v284 = vadd.f32 0.0, %v283
      %285 = vdwg.mxu0
      %v286 = vadd.f32 %v256, %v284
      %s287 = sadd.s32 %s19, 1
      %s288 = smul.u32 %s287, 16
      %s289 = scalar_lea.vmem %s182, %s288
      %v290 = vld [vmem:[%s289] sm:$0xff]
      %s291 = scalar_lea.vmem %s1, 96
      %v292 = vld [vmem:[%s291] sm:$0xff]
      %v293 = vld [vmem:[%s291 + $0x8] sm:$0xff]
      %v294 = vld [vmem:[%s291 + $0x10] sm:$0xff]
      %v295 = vld [vmem:[%s291 + $0x18] sm:$0xff]
      %v297 = vsel %vm202, %v290, 0
      %299 = vmatpush.msra.mxu0 0.0
      %300 = vmatpush.msra.mxu0 0.0
      %301 = vmatpush.msra.mxu0 0.0
      %302 = vmatpush.msra.mxu0 0.0
      %303 = vmatpush.msra.mxu0 0.0
      %304 = vmatpush.msra.mxu0 0.0
      %305 = vmatpush.msra.mxu0 0.0
      %306 = vmatpush.msra.mxu0 0.0
      %307 = vmatpush.msra.mxu0 0.0
      %308 = vmatpush.msra.mxu0 0.0
      %309 = vmatpush.msra.mxu0 0.0
      %310 = vmatpush.msra.mxu0 0.0
      %311 = vmatpush.msra.mxu0 %v295
      %312 = vmatpush.msra.mxu0 %v294
      %313 = vmatpush.msra.mxu0 %v293
      %314 = vmatpush.msra.mxu0 %v292
      %315 = vmatmul.f32.gmra.mxu0 %v297
      %v316 = vpop.f32.mrf.mxu0
      %v317 = vadd.f32 0.0, %v316
      %318 = vdwg.mxu0
      %v319 = vadd.f32 %v286, %v317
      %v320 = vld [vmem:[%s289 + $0x1] sm:$0xff]
      %s321 = scalar_lea.vmem %s1, 128
      %v322 = vld [vmem:[%s321] sm:$0xff]
      %v323 = vld [vmem:[%s321 + $0x8] sm:$0xff]
      %v324 = vld [vmem:[%s321 + $0x10] sm:$0xff]
      %v325 = vld [vmem:[%s321 + $0x18] sm:$0xff]
      %v327 = vsel %vm202, %v320, 0
      %329 = vmatpush.msra.mxu0 0.0
      %330 = vmatpush.msra.mxu0 0.0
      %331 = vmatpush.msra.mxu0 0.0
      %332 = vmatpush.msra.mxu0 0.0
      %333 = vmatpush.msra.mxu0 0.0
      %334 = vmatpush.msra.mxu0 0.0
      %335 = vmatpush.msra.mxu0 0.0
      %336 = vmatpush.msra.mxu0 0.0
      %337 = vmatpush.msra.mxu0 0.0
      %338 = vmatpush.msra.mxu0 0.0
      %339 = vmatpush.msra.mxu0 0.0
      %340 = vmatpush.msra.mxu0 0.0
      %341 = vmatpush.msra.mxu0 %v325
      %342 = vmatpush.msra.mxu0 %v324
      %343 = vmatpush.msra.mxu0 %v323
      %344 = vmatpush.msra.mxu0 %v322
      %345 = vmatmul.f32.gmra.mxu0 %v327
      %v346 = vpop.f32.mrf.mxu0
      %v347 = vadd.f32 0.0, %v346
      %348 = vdwg.mxu0
      %v349 = vadd.f32 %v319, %v347
      %v350 = vld [vmem:[%s289 + $0x2] sm:$0xff]
      %s351 = scalar_lea.vmem %s1, 160
      %v352 = vld [vmem:[%s351] sm:$0xff]
      %v353 = vld [vmem:[%s351 + $0x8] sm:$0xff]
      %v354 = vld [vmem:[%s351 + $0x10] sm:$0xff]
      %v355 = vld [vmem:[%s351 + $0x18] sm:$0xff]
      %v357 = vsel %vm202, %v350, 0
      %359 = vmatpush.msra.mxu0 0.0
      %360 = vmatpush.msra.mxu0 0.0
      %361 = vmatpush.msra.mxu0 0.0
      %362 = vmatpush.msra.mxu0 0.0
      %363 = vmatpush.msra.mxu0 0.0
      %364 = vmatpush.msra.mxu0 0.0
      %365 = vmatpush.msra.mxu0 0.0
      %366 = vmatpush.msra.mxu0 0.0
      %367 = vmatpush.msra.mxu0 0.0
      %368 = vmatpush.msra.mxu0 0.0
      %369 = vmatpush.msra.mxu0 0.0
      %370 = vmatpush.msra.mxu0 0.0
      %371 = vmatpush.msra.mxu0 %v355
      %372 = vmatpush.msra.mxu0 %v354
      %373 = vmatpush.msra.mxu0 %v353
      %374 = vmatpush.msra.mxu0 %v352
      %375 = vmatmul.f32.gmra.mxu0 %v357
      %v376 = vpop.f32.mrf.mxu0
      %v377 = vadd.f32 0.0, %v376
      %378 = vdwg.mxu0
      %v379 = vadd.f32 %v349, %v377
      %s380 = sadd.s32 %s19, 2
      %s381 = smul.u32 %s380, 16
      %s382 = scalar_lea.vmem %s182, %s381
      %v383 = vld [vmem:[%s382] sm:$0xff]
      %s384 = scalar_lea.vmem %s1, 192
      %v385 = vld [vmem:[%s384] sm:$0xff]
      %v386 = vld [vmem:[%s384 + $0x8] sm:$0xff]
      %v387 = vld [vmem:[%s384 + $0x10] sm:$0xff]
      %v388 = vld [vmem:[%s384 + $0x18] sm:$0xff]
      %v390 = vsel %vm202, %v383, 0
      %392 = vmatpush.msra.mxu0 0.0
      %393 = vmatpush.msra.mxu0 0.0
      %394 = vmatpush.msra.mxu0 0.0
      %395 = vmatpush.msra.mxu0 0.0
      %396 = vmatpush.msra.mxu0 0.0
      %397 = vmatpush.msra.mxu0 0.0
      %398 = vmatpush.msra.mxu0 0.0
      %399 = vmatpush.msra.mxu0 0.0
      %400 = vmatpush.msra.mxu0 0.0
      %401 = vmatpush.msra.mxu0 0.0
      %402 = vmatpush.msra.mxu0 0.0
      %403 = vmatpush.msra.mxu0 0.0
      %404 = vmatpush.msra.mxu0 %v388
      %405 = vmatpush.msra.mxu0 %v387
      %406 = vmatpush.msra.mxu0 %v386
      %407 = vmatpush.msra.mxu0 %v385
      %408 = vmatmul.f32.gmra.mxu0 %v390
      %v409 = vpop.f32.mrf.mxu0
      %v410 = vadd.f32 0.0, %v409
      %411 = vdwg.mxu0
      %v412 = vadd.f32 %v379, %v410
      %v413 = vld [vmem:[%s382 + $0x1] sm:$0xff]
      %s414 = scalar_lea.vmem %s1, 224
      %v415 = vld [vmem:[%s414] sm:$0xff]
      %v416 = vld [vmem:[%s414 + $0x8] sm:$0xff]
      %v417 = vld [vmem:[%s414 + $0x10] sm:$0xff]
      %v418 = vld [vmem:[%s414 + $0x18] sm:$0xff]
      %v420 = vsel %vm202, %v413, 0
      %422 = vmatpush.msra.mxu0 0.0
      %423 = vmatpush.msra.mxu0 0.0
      %424 = vmatpush.msra.mxu0 0.0
      %425 = vmatpush.msra.mxu0 0.0
      %426 = vmatpush.msra.mxu0 0.0
      %427 = vmatpush.msra.mxu0 0.0
      %428 = vmatpush.msra.mxu0 0.0
      %429 = vmatpush.msra.mxu0 0.0
      %430 = vmatpush.msra.mxu0 0.0
      %431 = vmatpush.msra.mxu0 0.0
      %432 = vmatpush.msra.mxu0 0.0
      %433 = vmatpush.msra.mxu0 0.0
      %434 = vmatpush.msra.mxu0 %v418
      %435 = vmatpush.msra.mxu0 %v417
      %436 = vmatpush.msra.mxu0 %v416
      %437 = vmatpush.msra.mxu0 %v415
      %438 = vmatmul.f32.gmra.mxu0 %v420
      %v439 = vpop.f32.mrf.mxu0
      %v440 = vadd.f32 0.0, %v439
      %441 = vdwg.mxu0
      %v442 = vadd.f32 %v412, %v440
      %v443 = vld [vmem:[%s382 + $0x2] sm:$0xff]
      %s444 = scalar_lea.vmem %s1, 256
      %v445 = vld [vmem:[%s444] sm:$0xff]
      %v446 = vld [vmem:[%s444 + $0x8] sm:$0xff]
      %v447 = vld [vmem:[%s444 + $0x10] sm:$0xff]
      %v448 = vld [vmem:[%s444 + $0x18] sm:$0xff]
      %v450 = vsel %vm202, %v443, 0
      %452 = vmatpush.msra.mxu0 0.0
      %453 = vmatpush.msra.mxu0 0.0
      %454 = vmatpush.msra.mxu0 0.0
      %455 = vmatpush.msra.mxu0 0.0
      %456 = vmatpush.msra.mxu0 0.0
      %457 = vmatpush.msra.mxu0 0.0
      %458 = vmatpush.msra.mxu0 0.0
      %459 = vmatpush.msra.mxu0 0.0
      %460 = vmatpush.msra.mxu0 0.0
      %461 = vmatpush.msra.mxu0 0.0
      %462 = vmatpush.msra.mxu0 0.0
      %463 = vmatpush.msra.mxu0 0.0
      %464 = vmatpush.msra.mxu0 %v448
      %465 = vmatpush.msra.mxu0 %v447
      %466 = vmatpush.msra.mxu0 %v446
      %467 = vmatpush.msra.mxu0 %v445
      %468 = vmatmul.f32.gmra.mxu0 %v450
      %v469 = vpop.f32.mrf.mxu0
      %v470 = vadd.f32 0.0, %v469
      %471 = vdwg.mxu0
      %v472 = vadd.f32 %v442, %v470
      %473 = vst.msk [vmem:[%s190] sm:$0xff] %vm202, %v472
      %p474 = scmp.lt.s32.totalorder %s18, 1
      %s475 = scalar_select %p474, %s18, 1
      %p476 = scmp.lt.s32.totalorder %s19, 7
      %s477 = scalar_select %p476, %s19, 7
      %s478 = smul.addr %s475, 8
      %s479 = sadd.s32 %s477, %s478
      %s480 = smul.addr %s479, 8
      %s481 = scalar_lea.vmem %s3, %s480
      // Predicated region
      $region33: #{wrn_forward.64} parent=31 // pred_check
        %p482 = pneg %p114
      $region34: #{wrn_forward.64} parent=31 // pred_check_branch
        %484 = sbr.rel (%p482) target = $region36
      $region35: #{wrn_forward.64} parent=31 // pred_region
        _
      $region36: #{wrn_forward.64} parent=31 // pred_fallthru
        _
    $region32: #{wrn_forward.64} parent=5 // pred_fallthru
      _
    %p485 = scmp.le.s32.totalorder 2, %s9
    // Predicated region
    $region37: #{wrn_forward.64} parent=5 // pred_check
      %p486 = pneg %p485
    $region38: #{wrn_forward.64} parent=5 // pred_check_branch
      %488 = sbr.rel (%p486) target = $region40
    $region39: #{wrn_forward.64} parent=5 // pred_region
      %s489 = ssub.s32 %s9, 2
      // Predicated region
      $region41: #{wrn_forward.64} parent=39 // pred_check
        %p490 = pneg %p120
      $region42: #{wrn_forward.64} parent=39 // pred_check_branch
        %492 = sbr.rel (%p490) target = $region44
      $region43: #{wrn_forward.64} parent=39 // pred_region
        %p493 = scmp.lt.s32.totalorder %s20, 1
        %s494 = scalar_select %p493, %s20, 1
        %p495 = scmp.lt.s32.totalorder %s21, 7
        %s496 = scalar_select %p495, %s21, 7
        %s497 = smul.addr %s494, 8
        %s498 = sadd.s32 %s496, %s497
        %s499 = smul.addr %s498, 8
        %s500 = scalar_lea.vmem %s3, %s499
      $region44: #{wrn_forward.64} parent=39 // pred_fallthru
        _
    $region40: #{wrn_forward.64} parent=5 // pred_fallthru
      _
  $region6: #{wrn_forward.64} parent=0 // loop_footer
    %s13 = sadd.s32 1, %s9
  $region7: #{wrn_forward.64} parent=0 // loop_footer_branch
    %8 = sbr.rel target = $region3
  $region8: #{wrn_forward.64} parent=0 // loop_exit
    _

// kernel: wrn_forward.61
$region0: #{wrn_forward.61}
  #allocation0 [shape = 'u32[]', space=smem, size = 0x4, offset = 0x4, fixed_abs, tag = 'smem constant byte address 0x4 - core index']
  #allocation1 [shape = 'u32[72,128]{1,0:T(1,128)}', space=vmem, size = 0x9000, scoped, tag = 'internal scratch']
  %s0 = inlined_call_operand.vmem [shape: f32[2,10,1,10,32], index: 0, kind: input, shape index: {}]
  %s1 = inlined_call_operand.vmem [shape: f32[9,32,32], index: 1, kind: input, shape index: {}]
  %s2 = inlined_call_operand.vmem [shape: f32[1,32], index: 2, kind: input, shape index: {}]
  %s3 = inlined_call_operand.vmem [shape: f32[2,8,8,32], index: 3, kind: input, shape index: {}]
  %s4 = inlined_call_operand.vmem [shape: f32[2,8,8,32], index: 4, kind: output, shape index: {}]
  %s5 = sld [smem:[#allocation0]]
  $region49: #{wrn_forward.61} parent=0
    _
  %s7 = ssub.s32 1, %s5
  %s8 = scalar_select 0, %s7, %s5
  loop: start=0, step=1, limit=18
  $region2: #{wrn_forward.61} parent=0 // loop_pre_header
    _
  $region3: #{wrn_forward.61} parent=0 // loop_header
    %s10 = sphi 0, %s14
    %p11 = scmp.ge.s32.totalorder %s10, 18
    %s17 = sphi 0, %s29
    %s18 = sphi 0, %s25
    %s19 = sphi 0, %s17
    %s20 = sphi 0, %s18
    %s21 = sphi 0, %s19
    %s22 = sphi 0, %s20
    %s32 = sphi 0, %s34
    %s35 = sphi 0, %s32
    %s36 = sphi 0, %s35
    %s52 = sphi 0, %s36
    %s56 = sphi 0, %s56
    %s58 = sphi 0, %s56
    %s59 = sphi 0, %s58
    %s73 = sphi 0, %s59
    %s77 = sphi 0, %s77
    %s79 = sphi 0, %s77
    %s80 = sphi 0, %s79
    %s94 = sphi 0, %s80
    %s102 = sphi 0, %s104
    %s105 = sphi 0, %s102
    %s106 = sphi 0, %s105
    %s122 = sphi 0, %s106
    %s130 = sphi 0, %s132
    %s133 = sphi 0, %s130
    %s134 = sphi 0, %s133
    %s150 = sphi 0, %s134
  $region4: #{wrn_forward.61} parent=0 // loop_header_branch
    %13 = sbr.rel (%p11) target = $region8
  $region5: #{wrn_forward.61} parent=0 // loop_body
    %s15 = ssub.s32 %s10, 1
    %s16 = ssub.s32 %s10, 2
    %s23 = sadd.s32 1, %s18
    %p24 = scmp.ge.s32.totalorder %s23, 8
    %s25 = scalar_select %p24, 0, %s23
    %s26 = sadd.s32 1, %s17
    %s27 = scalar_select %p24, %s26, %s17
    %p28 = scmp.ge.s32.totalorder %s27, 2
    %s29 = scalar_select %p28, 0, %s27
    %s30 = ssub.s32 %s17, %s29
    %p31 = scmp.eq.s32.totalorder %s30, 0
    %s33 = sadd.s32 %s32, 1
    %s34 = scalar_select %p31, %s32, %s33
    %p37 = pneg %p31
    %p38 = scmp.eq.s32.totalorder %s10, 15
    %p39 = por %p37, %p38
    %p40 = scmp.ne.s32.totalorder %s32, %s35
    %p41 = scmp.eq.s32.totalorder %s10, 0
    %p42 = por %p40, %p41
    %p43 = scmp.ne.s32.totalorder %s32, %s35
    %p44 = scmp.eq.s32.totalorder %s15, 15
    %p45 = por %p43, %p44
    %p46 = scmp.ne.s32.totalorder %s35, %s36
    %p47 = scmp.eq.s32.totalorder %s15, 0
    %p48 = por %p46, %p47
    %p49 = scmp.ne.s32.totalorder %s35, %s36
    %p50 = scmp.eq.s32.totalorder %s16, 15
    %p51 = por %p49, %p50
    %p53 = scmp.ne.s32.totalorder %s36, %s52
    %p54 = scmp.eq.s32.totalorder %s16, 0
    %p55 = por %p53, %p54
    %s57 = sadd.s32 %s56, 1
    %p60 = scmp.eq.s32.totalorder %s10, 15
    %p61 = scmp.ne.s32.totalorder %s56, %s58
    %p62 = scmp.eq.s32.totalorder %s10, 0
    %p63 = por %p61, %p62
    %p64 = scmp.ne.s32.totalorder %s56, %s58
    %p65 = scmp.eq.s32.totalorder %s15, 15
    %p66 = por %p64, %p65
    %p67 = scmp.ne.s32.totalorder %s58, %s59
    %p68 = scmp.eq.s32.totalorder %s15, 0
    %p69 = por %p67, %p68
    %p70 = scmp.ne.s32.totalorder %s58, %s59
    %p71 = scmp.eq.s32.totalorder %s16, 15
    %p72 = por %p70, %p71
    %p74 = scmp.ne.s32.totalorder %s59, %s73
    %p75 = scmp.eq.s32.totalorder %s16, 0
    %p76 = por %p74, %p75
    %s78 = sadd.s32 %s77, 1
    %p81 = scmp.eq.s32.totalorder %s10, 15
    %p82 = scmp.ne.s32.totalorder %s77, %s79
    %p83 = scmp.eq.s32.totalorder %s10, 0
    %p84 = por %p82, %p83
    %p85 = scmp.ne.s32.totalorder %s77, %s79
    %p86 = scmp.eq.s32.totalorder %s15, 15
    %p87 = por %p85, %p86
    %p88 = scmp.ne.s32.totalorder %s79, %s80
    %p89 = scmp.eq.s32.totalorder %s15, 0
    %p90 = por %p88, %p89
    %p91 = scmp.ne.s32.totalorder %s79, %s80
    %p92 = scmp.eq.s32.totalorder %s16, 15
    %p93 = por %p91, %p92
    %p95 = scmp.ne.s32.totalorder %s80, %s94
    %p96 = scmp.eq.s32.totalorder %s16, 0
    %p97 = por %p95, %p96
    %s98 = ssub.s32 %s17, %s29
    %s99 = ssub.s32 %s18, %s25
    %s100 = sor.u32 %s98, %s99
    %p101 = scmp.eq.s32.totalorder %s100, 0
    %s103 = sadd.s32 %s102, 1
    %s104 = scalar_select %p101, %s102, %s103
    %p107 = pneg %p101
    %p108 = scmp.eq.s32.totalorder %s10, 15
    %p109 = por %p107, %p108
    %p110 = scmp.ne.s32.totalorder %s102, %s105
    %p111 = scmp.eq.s32.totalorder %s10, 0
    %p112 = por %p110, %p111
    %p113 = scmp.ne.s32.totalorder %s102, %s105
    %p114 = scmp.eq.s32.totalorder %s15, 15
    %p115 = por %p113, %p114
    %p116 = scmp.ne.s32.totalorder %s105, %s106
    %p117 = scmp.eq.s32.totalorder %s15, 0
    %p118 = por %p116, %p117
    %p119 = scmp.ne.s32.totalorder %s105, %s106
    %p120 = scmp.eq.s32.totalorder %s16, 15
    %p121 = por %p119, %p120
    %p123 = scmp.ne.s32.totalorder %s106, %s122
    %p124 = scmp.eq.s32.totalorder %s16, 0
    %p125 = por %p123, %p124
    %s126 = ssub.s32 %s17, %s29
    %s127 = ssub.s32 %s18, %s25
    %s128 = sor.u32 %s126, %s127
    %p129 = scmp.eq.s32.totalorder %s128, 0
    %s131 = sadd.s32 %s130, 1
    %s132 = scalar_select %p129, %s130, %s131
    %p135 = pneg %p129
    %p136 = scmp.eq.s32.totalorder %s10, 15
    %p137 = por %p135, %p136
    %p138 = scmp.ne.s32.totalorder %s130, %s133
    %p139 = scmp.eq.s32.totalorder %s10, 0
    %p140 = por %p138, %p139
    %p141 = scmp.ne.s32.totalorder %s130, %s133
    %p142 = scmp.eq.s32.totalorder %s15, 15
    %p143 = por %p141, %p142
    %p144 = scmp.ne.s32.totalorder %s133, %s134
    %p145 = scmp.eq.s32.totalorder %s15, 0
    %p146 = por %p144, %p145
    %p147 = scmp.ne.s32.totalorder %s133, %s134
    %p148 = scmp.eq.s32.totalorder %s16, 15
    %p149 = por %p147, %p148
    %p151 = scmp.ne.s32.totalorder %s134, %s150
    %p152 = scmp.eq.s32.totalorder %s16, 0
    %p153 = por %p151, %p152
    %p154 = scmp.le.s32.totalorder 1, %s10
    %p155 = scmp.lt.s32.totalorder %s10, 17
    %p156 = pnand %p154, %p155
    %p157 = pneg %p156
    // Predicated region
    $region9: #{wrn_forward.61} parent=5 // pred_check
      _
    $region10: #{wrn_forward.61} parent=5 // pred_check_branch
      %159 = sbr.rel (%p156) target = $region12
    $region11: #{wrn_forward.61} parent=5 // pred_region
      %s160 = ssub.s32 %s10, 1
      // Predicated region
      $region13: #{wrn_forward.61} parent=11 // pred_check
        %p161 = pneg %p69
      $region14: #{wrn_forward.61} parent=11 // pred_check_branch
        %163 = sbr.rel (%p161) target = $region16
      $region15: #{wrn_forward.61} parent=11 // pred_region
        _
      $region16: #{wrn_forward.61} parent=11 // pred_fallthru
        _
      // Predicated region
      $region17: #{wrn_forward.61} parent=11 // pred_check
        %p164 = pneg %p90
      $region18: #{wrn_forward.61} parent=11 // pred_check_branch
        %166 = sbr.rel (%p164) target = $region20
      $region19: #{wrn_forward.61} parent=11 // pred_region
        _
      $region20: #{wrn_forward.61} parent=11 // pred_fallthru
        _
    $region12: #{wrn_forward.61} parent=5 // pred_fallthru
      _
    %p167 = scmp.lt.s32.totalorder %s10, 16
    // Predicated region
    $region21: #{wrn_forward.61} parent=5 // pred_check
      %p168 = pneg %p167
    $region22: #{wrn_forward.61} parent=5 // pred_check_branch
      %170 = sbr.rel (%p168) target = $region24
    $region23: #{wrn_forward.61} parent=5 // pred_region
      // Predicated region
      $region25: #{wrn_forward.61} parent=23 // pred_check
        %p171 = pneg %p42
      $region26: #{wrn_forward.61} parent=23 // pred_check_branch
        %173 = sbr.rel (%p171) target = $region28
      $region27: #{wrn_forward.61} parent=23 // pred_region
        %p174 = scmp.lt.s32.totalorder %s17, 1
        %s175 = scalar_select %p174, %s17, 1
        %s176 = smul.addr %s175, 20
        %s177 = smul.addr %s176, 8
        %s178 = scalar_lea.vmem %s0, %s177
      $region28: #{wrn_forward.61} parent=23 // pred_fallthru
        _
      // Predicated region
      $region29: #{wrn_forward.61} parent=23 // pred_check
        %p179 = pneg %p112
      $region30: #{wrn_forward.61} parent=23 // pred_check_branch
        %181 = sbr.rel (%p179) target = $region32
      $region31: #{wrn_forward.61} parent=23 // pred_region
        %p182 = scmp.lt.s32.totalorder %s17, 1
        %s183 = scalar_select %p182, %s17, 1
        %p184 = scmp.lt.s32.totalorder %s18, 7
        %s185 = scalar_select %p184, %s18, 7
        %s186 = smul.addr %s183, 8
        %s187 = sadd.s32 %s185, %s186
        %s188 = smul.addr %s187, 8
        %s189 = scalar_lea.vmem %s3, %s188
      $region32: #{wrn_forward.61} parent=23 // pred_fallthru
        _
    $region24: #{wrn_forward.61} parent=5 // pred_fallthru
      _
    %p190 = scmp.le.s32.totalorder 1, %s10
    %p191 = scmp.lt.s32.totalorder %s10, 17
    %p192 = pnand %p190, %p191
    %p193 = pneg %p192
    // Predicated region
    $region33: #{wrn_forward.61} parent=5 // pred_check
      _
    $region34: #{wrn_forward.61} parent=5 // pred_check_branch
      %195 = sbr.rel (%p192) target = $region36
    $region35: #{wrn_forward.61} parent=5 // pred_region
      %s196 = ssub.s32 %s10, 1
      %p197 = scmp.lt.s32.totalorder %s19, 1
      %s198 = scalar_select %p197, %s19, 1
      %s199 = smul.addr %s198, 20
      %s200 = smul.addr %s199, 8
      %s201 = scalar_lea.vmem %s0, %s200
      %p202 = pneg %p48
      %p203 = pneg %p45
      %p204 = pneg %p69
      %p205 = pneg %p66
      %p206 = pneg %p90
      %p207 = pneg %p87
      %p208 = scmp.lt.s32.totalorder %s19, 1
      %s209 = scalar_select %p208, %s19, 1
      %p210 = scmp.lt.s32.totalorder %s20, 7
      %s211 = scalar_select %p210, %s20, 7
      %s212 = smul.addr %s209, 8
      %s213 = sadd.s32 %s211, %s212
      %s214 = smul.addr %s213, 8
      %s215 = scalar_lea.vmem %s3, %s214
      %p216 = pneg %p118
      %p217 = pneg %p115
      %p218 = pneg %p146
      %p219 = pneg %p143
      %p220 = scmp.lt.s32.totalorder %s19, 1
      %s221 = scalar_select %p220, %s19, 1
      %p222 = scmp.lt.s32.totalorder %s20, 7
      %s223 = scalar_select %p222, %s20, 7
      %s224 = smul.addr %s221, 8
      %s225 = sadd.s32 %s223, %s224
      %s226 = smul.addr %s225, 8
      %s227 = scalar_lea.vmem %s4, %s226
      %p228 = scmp.lt.s32.totalorder %s19, 1
      %s229 = scalar_select %p228, %s19, 1
      %s230 = smul.addr %s229, 20
      %s231 = smul.addr %s230, 8
      %s232 = scalar_lea.vmem %s0, %s231
      %p233 = scmp.lt.s32.totalorder %s19, 1
      %s234 = scalar_select %p233, %s19, 1
      %p235 = scmp.lt.s32.totalorder %s20, 7
      %s236 = scalar_select %p235, %s20, 7
      %s237 = smul.addr %s234, 8
      %s238 = sadd.s32 %s236, %s237
      %s239 = smul.addr %s238, 8
      %s240 = scalar_lea.vmem %s3, %s239
      %p241 = scmp.lt.s32.totalorder %s19, 1
      %s242 = scalar_select %p241, %s19, 1
      %p243 = scmp.lt.s32.totalorder %s20, 7
      %s244 = scalar_select %p243, %s20, 7
      %s245 = smul.addr %s242, 8
      %s246 = sadd.s32 %s244, %s245
      %s247 = smul.addr %s246, 8
      %s248 = scalar_lea.vmem %s4, %s247
      %v249 = vld [vmem:[%s2] sm:$0x1]
      %v251 = vperm.slane %v249, 0
      %v253 = vld [vmem:[%s240] sm:$0xff]
      %v254 = vadd.f32 %v251, %v253
      %s255 = smul.u32 %s20, 16
      %s256 = scalar_lea.vmem %s232, %s255
      %v257 = vld [vmem:[%s256] sm:$0xff]
      %v258 = vld [vmem:[%s1] sm:$0xff]
      %v259 = vld [vmem:[%s1 + $0x8] sm:$0xff]
      %v260 = vld [vmem:[%s1 + $0x10] sm:$0xff]
      %v261 = vld [vmem:[%s1 + $0x18] sm:$0xff]
      %vm262 = vcmask 261120
      %v264 = vsel %vm262, %v257, 0
      %266 = vmatpush.msra.mxu0 0.0
      %267 = vmatpush.msra.mxu0 0.0
      %268 = vmatpush.msra.mxu0 0.0
      %269 = vmatpush.msra.mxu0 0.0
      %270 = vmatpush.msra.mxu0 0.0
      %271 = vmatpush.msra.mxu0 0.0
      %272 = vmatpush.msra.mxu0 0.0
      %273 = vmatpush.msra.mxu0 0.0
      %274 = vmatpush.msra.mxu0 0.0
      %275 = vmatpush.msra.mxu0 0.0
      %276 = vmatpush.msra.mxu0 0.0
      %277 = vmatpush.msra.mxu0 0.0
      %278 = vmatpush.msra.mxu0 %v261
      %279 = vmatpush.msra.mxu0 %v260
      %280 = vmatpush.msra.mxu0 %v259
      %281 = vmatpush.msra.mxu0 %v258
      %282 = vmatmul.f32.gmra.mxu0 %v264
      %v283 = vpop.f32.mrf.mxu0
      %v284 = vadd.f32 0.0, %v283
      %285 = vdwg.mxu0
      %v286 = vadd.f32 %v254, %v284
      %v287 = vld [vmem:[%s256 + $0x1] sm:$0xff]
      %s288 = scalar_lea.vmem %s1, 32
      %v289 = vld [vmem:[%s288] sm:$0xff]
      %v290 = vld [vmem:[%s288 + $0x8] sm:$0xff]
      %v291 = vld [vmem:[%s288 + $0x10] sm:$0xff]
      %v292 = vld [vmem:[%s288 + $0x18] sm:$0xff]
      %v294 = vsel %vm262, %v287, 0
      %296 = vmatpush.msra.mxu0 0.0
      %297 = vmatpush.msra.mxu0 0.0
      %298 = vmatpush.msra.mxu0 0.0
      %299 = vmatpush.msra.mxu0 0.0
      %300 = vmatpush.msra.mxu0 0.0
      %301 = vmatpush.msra.mxu0 0.0
      %302 = vmatpush.msra.mxu0 0.0
      %303 = vmatpush.msra.mxu0 0.0
      %304 = vmatpush.msra.mxu0 0.0
      %305 = vmatpush.msra.mxu0 0.0
      %306 = vmatpush.msra.mxu0 0.0
      %307 = vmatpush.msra.mxu0 0.0
      %308 = vmatpush.msra.mxu0 %v292
      %309 = vmatpush.msra.mxu0 %v291
      %310 = vmatpush.msra.mxu0 %v290
      %311 = vmatpush.msra.mxu0 %v289
      %312 = vmatmul.f32.gmra.mxu0 %v294
      %v313 = vpop.f32.mrf.mxu0
      %v314 = vadd.f32 0.0, %v313
      %315 = vdwg.mxu0
      %v316 = vadd.f32 %v286, %v314
      %v317 = vld [vmem:[%s256 + $0x2] sm:$0xff]
      %s318 = scalar_lea.vmem %s1, 64
      %v319 = vld [vmem:[%s318] sm:$0xff]
      %v320 = vld [vmem:[%s318 + $0x8] sm:$0xff]
      %v321 = vld [vmem:[%s318 + $0x10] sm:$0xff]
      %v322 = vld [vmem:[%s318 + $0x18] sm:$0xff]
      %v324 = vsel %vm262, %v317, 0
      %326 = vmatpush.msra.mxu0 0.0
      %327 = vmatpush.msra.mxu0 0.0
      %328 = vmatpush.msra.mxu0 0.0
      %329 = vmatpush.msra.mxu0 0.0
      %330 = vmatpush.msra.mxu0 0.0
      %331 = vmatpush.msra.mxu0 0.0
      %332 = vmatpush.msra.mxu0 0.0
      %333 = vmatpush.msra.mxu0 0.0
      %334 = vmatpush.msra.mxu0 0.0
      %335 = vmatpush.msra.mxu0 0.0
      %336 = vmatpush.msra.mxu0 0.0
      %337 = vmatpush.msra.mxu0 0.0
      %338 = vmatpush.msra.mxu0 %v322
      %339 = vmatpush.msra.mxu0 %v321
      %340 = vmatpush.msra.mxu0 %v320
      %341 = vmatpush.msra.mxu0 %v319
      %342 = vmatmul.f32.gmra.mxu0 %v324
      %v343 = vpop.f32.mrf.mxu0
      %v344 = vadd.f32 0.0, %v343
      %345 = vdwg.mxu0
      %v346 = vadd.f32 %v316, %v344
      %s347 = sadd.s32 %s20, 1
      %s348 = smul.u32 %s347, 16
      %s349 = scalar_lea.vmem %s232, %s348
      %v350 = vld [vmem:[%s349] sm:$0xff]
      %s351 = scalar_lea.vmem %s1, 96
      %v352 = vld [vmem:[%s351] sm:$0xff]
      %v353 = vld [vmem:[%s351 + $0x8] sm:$0xff]
      %v354 = vld [vmem:[%s351 + $0x10] sm:$0xff]
      %v355 = vld [vmem:[%s351 + $0x18] sm:$0xff]
      %v357 = vsel %vm262, %v350, 0
      %359 = vmatpush.msra.mxu0 0.0
      %360 = vmatpush.msra.mxu0 0.0
      %361 = vmatpush.msra.mxu0 0.0
      %362 = vmatpush.msra.mxu0 0.0
      %363 = vmatpush.msra.mxu0 0.0
      %364 = vmatpush.msra.mxu0 0.0
      %365 = vmatpush.msra.mxu0 0.0
      %366 = vmatpush.msra.mxu0 0.0
      %367 = vmatpush.msra.mxu0 0.0
      %368 = vmatpush.msra.mxu0 0.0
      %369 = vmatpush.msra.mxu0 0.0
      %370 = vmatpush.msra.mxu0 0.0
      %371 = vmatpush.msra.mxu0 %v355
      %372 = vmatpush.msra.mxu0 %v354
      %373 = vmatpush.msra.mxu0 %v353
      %374 = vmatpush.msra.mxu0 %v352
      %375 = vmatmul.f32.gmra.mxu0 %v357
      %v376 = vpop.f32.mrf.mxu0
      %v377 = vadd.f32 0.0, %v376
      %378 = vdwg.mxu0
      %v379 = vadd.f32 %v346, %v377
      %v380 = vld [vmem:[%s349 + $0x1] sm:$0xff]
      %s381 = scalar_lea.vmem %s1, 128
      %v382 = vld [vmem:[%s381] sm:$0xff]
      %v383 = vld [vmem:[%s381 + $0x8] sm:$0xff]
      %v384 = vld [vmem:[%s381 + $0x10] sm:$0xff]
      %v385 = vld [vmem:[%s381 + $0x18] sm:$0xff]
      %v387 = vsel %vm262, %v380, 0
      %389 = vmatpush.msra.mxu0 0.0
      %390 = vmatpush.msra.mxu0 0.0
      %391 = vmatpush.msra.mxu0 0.0
      %392 = vmatpush.msra.mxu0 0.0
      %393 = vmatpush.msra.mxu0 0.0
      %394 = vmatpush.msra.mxu0 0.0
      %395 = vmatpush.msra.mxu0 0.0
      %396 = vmatpush.msra.mxu0 0.0
      %397 = vmatpush.msra.mxu0 0.0
      %398 = vmatpush.msra.mxu0 0.0
      %399 = vmatpush.msra.mxu0 0.0
      %400 = vmatpush.msra.mxu0 0.0
      %401 = vmatpush.msra.mxu0 %v385
      %402 = vmatpush.msra.mxu0 %v384
      %403 = vmatpush.msra.mxu0 %v383
      %404 = vmatpush.msra.mxu0 %v382
      %405 = vmatmul.f32.gmra.mxu0 %v387
      %v406 = vpop.f32.mrf.mxu0
      %v407 = vadd.f32 0.0, %v406
      %408 = vdwg.mxu0
      %v409 = vadd.f32 %v379, %v407
      %v410 = vld [vmem:[%s349 + $0x2] sm:$0xff]
      %s411 = scalar_lea.vmem %s1, 160
      %v412 = vld [vmem:[%s411] sm:$0xff]
      %v413 = vld [vmem:[%s411 + $0x8] sm:$0xff]
      %v414 = vld [vmem:[%s411 + $0x10] sm:$0xff]
      %v415 = vld [vmem:[%s411 + $0x18] sm:$0xff]
      %v417 = vsel %vm262, %v410, 0
      %419 = vmatpush.msra.mxu0 0.0
      %420 = vmatpush.msra.mxu0 0.0
      %421 = vmatpush.msra.mxu0 0.0
      %422 = vmatpush.msra.mxu0 0.0
      %423 = vmatpush.msra.mxu0 0.0
      %424 = vmatpush.msra.mxu0 0.0
      %425 = vmatpush.msra.mxu0 0.0
      %426 = vmatpush.msra.mxu0 0.0
      %427 = vmatpush.msra.mxu0 0.0
      %428 = vmatpush.msra.mxu0 0.0
      %429 = vmatpush.msra.mxu0 0.0
      %430 = vmatpush.msra.mxu0 0.0
      %431 = vmatpush.msra.mxu0 %v415
      %432 = vmatpush.msra.mxu0 %v414
      %433 = vmatpush.msra.mxu0 %v413
      %434 = vmatpush.msra.mxu0 %v412
      %435 = vmatmul.f32.gmra.mxu0 %v417
      %v436 = vpop.f32.mrf.mxu0
      %v437 = vadd.f32 0.0, %v436
      %438 = vdwg.mxu0
      %v439 = vadd.f32 %v409, %v437
      %s440 = sadd.s32 %s20, 2
      %s441 = smul.u32 %s440, 16
      %s442 = scalar_lea.vmem %s232, %s441
      %v443 = vld [vmem:[%s442] sm:$0xff]
      %s444 = scalar_lea.vmem %s1, 192
      %v445 = vld [vmem:[%s444] sm:$0xff]
      %v446 = vld [vmem:[%s444 + $0x8] sm:$0xff]
      %v447 = vld [vmem:[%s444 + $0x10] sm:$0xff]
      %v448 = vld [vmem:[%s444 + $0x18] sm:$0xff]
      %v450 = vsel %vm262, %v443, 0
      %452 = vmatpush.msra.mxu0 0.0
      %453 = vmatpush.msra.mxu0 0.0
      %454 = vmatpush.msra.mxu0 0.0
      %455 = vmatpush.msra.mxu0 0.0
      %456 = vmatpush.msra.mxu0 0.0
      %457 = vmatpush.msra.mxu0 0.0
      %458 = vmatpush.msra.mxu0 0.0
      %459 = vmatpush.msra.mxu0 0.0
      %460 = vmatpush.msra.mxu0 0.0
      %461 = vmatpush.msra.mxu0 0.0
      %462 = vmatpush.msra.mxu0 0.0
      %463 = vmatpush.msra.mxu0 0.0
      %464 = vmatpush.msra.mxu0 %v448
      %465 = vmatpush.msra.mxu0 %v447
      %466 = vmatpush.msra.mxu0 %v446
      %467 = vmatpush.msra.mxu0 %v445
      %468 = vmatmul.f32.gmra.mxu0 %v450
      %v469 = vpop.f32.mrf.mxu0
      %v470 = vadd.f32 0.0, %v469
      %471 = vdwg.mxu0
      %v472 = vadd.f32 %v439, %v470
      %v473 = vld [vmem:[%s442 + $0x1] sm:$0xff]
      %s474 = scalar_lea.vmem %s1, 224
      %v475 = vld [vmem:[%s474] sm:$0xff]
      %v476 = vld [vmem:[%s474 + $0x8] sm:$0xff]
      %v477 = vld [vmem:[%s474 + $0x10] sm:$0xff]
      %v478 = vld [vmem:[%s474 + $0x18] sm:$0xff]
      %v480 = vsel %vm262, %v473, 0
      %482 = vmatpush.msra.mxu0 0.0
      %483 = vmatpush.msra.mxu0 0.0
      %484 = vmatpush.msra.mxu0 0.0
      %485 = vmatpush.msra.mxu0 0.0
      %486 = vmatpush.msra.mxu0 0.0
      %487 = vmatpush.msra.mxu0 0.0
      %488 = vmatpush.msra.mxu0 0.0
      %489 = vmatpush.msra.mxu0 0.0
      %490 = vmatpush.msra.mxu0 0.0
      %491 = vmatpush.msra.mxu0 0.0
      %492 = vmatpush.msra.mxu0 0.0
      %493 = vmatpush.msra.mxu0 0.0
      %494 = vmatpush.msra.mxu0 %v478
      %495 = vmatpush.msra.mxu0 %v477
      %496 = vmatpush.msra.mxu0 %v476
      %497 = vmatpush.msra.mxu0 %v475
      %498 = vmatmul.f32.gmra.mxu0 %v480
      %v499 = vpop.f32.mrf.mxu0
      %v500 = vadd.f32 0.0, %v499
      %501 = vdwg.mxu0
      %v502 = vadd.f32 %v472, %v500
      %v503 = vld [vmem:[%s442 + $0x2] sm:$0xff]
      %s504 = scalar_lea.vmem %s1, 256
      %v505 = vld [vmem:[%s504] sm:$0xff]
      %v506 = vld [vmem:[%s504 + $0x8] sm:$0xff]
      %v507 = vld [vmem:[%s504 + $0x10] sm:$0xff]
      %v508 = vld [vmem:[%s504 + $0x18] sm:$0xff]
      %v510 = vsel %vm262, %v503, 0
      %512 = vmatpush.msra.mxu0 0.0
      %513 = vmatpush.msra.mxu0 0.0
      %514 = vmatpush.msra.mxu0 0.0
      %515 = vmatpush.msra.mxu0 0.0
      %516 = vmatpush.msra.mxu0 0.0
      %517 = vmatpush.msra.mxu0 0.0
      %518 = vmatpush.msra.mxu0 0.0
      %519 = vmatpush.msra.mxu0 0.0
      %520 = vmatpush.msra.mxu0 0.0
      %521 = vmatpush.msra.mxu0 0.0
      %522 = vmatpush.msra.mxu0 0.0
      %523 = vmatpush.msra.mxu0 0.0
      %524 = vmatpush.msra.mxu0 %v508
      %525 = vmatpush.msra.mxu0 %v507
      %526 = vmatpush.msra.mxu0 %v506
      %527 = vmatpush.msra.mxu0 %v505
      %528 = vmatmul.f32.gmra.mxu0 %v510
      %v529 = vpop.f32.mrf.mxu0
      %v530 = vadd.f32 0.0, %v529
      %531 = vdwg.mxu0
      %v532 = vadd.f32 %v502, %v530
      %533 = vst.msk [vmem:[%s248] sm:$0xff] %vm262, %v532
      %p534 = scmp.lt.s32.totalorder %s19, 1
      %s535 = scalar_select %p534, %s19, 1
      %p536 = scmp.lt.s32.totalorder %s20, 7
      %s537 = scalar_select %p536, %s20, 7
      %s538 = smul.addr %s535, 8
      %s539 = sadd.s32 %s537, %s538
      %s540 = smul.addr %s539, 8
      %s541 = scalar_lea.vmem %s4, %s540
      // Predicated region
      $region37: #{wrn_forward.61} parent=35 // pred_check
        %p542 = pneg %p143
      $region38: #{wrn_forward.61} parent=35 // pred_check_branch
        %544 = sbr.rel (%p542) target = $region40
      $region39: #{wrn_forward.61} parent=35 // pred_region
        _
      $region40: #{wrn_forward.61} parent=35 // pred_fallthru
        _
    $region36: #{wrn_forward.61} parent=5 // pred_fallthru
      _
    %p545 = scmp.le.s32.totalorder 2, %s10
    // Predicated region
    $region41: #{wrn_forward.61} parent=5 // pred_check
      %p546 = pneg %p545
    $region42: #{wrn_forward.61} parent=5 // pred_check_branch
      %548 = sbr.rel (%p546) target = $region44
    $region43: #{wrn_forward.61} parent=5 // pred_region
      %s549 = ssub.s32 %s10, 2
      // Predicated region
      $region45: #{wrn_forward.61} parent=43 // pred_check
        %p550 = pneg %p149
      $region46: #{wrn_forward.61} parent=43 // pred_check_branch
        %552 = sbr.rel (%p550) target = $region48
      $region47: #{wrn_forward.61} parent=43 // pred_region
        %p553 = scmp.lt.s32.totalorder %s21, 1
        %s554 = scalar_select %p553, %s21, 1
        %p555 = scmp.lt.s32.totalorder %s22, 7
        %s556 = scalar_select %p555, %s22, 7
        %s557 = smul.addr %s554, 8
        %s558 = sadd.s32 %s556, %s557
        %s559 = smul.addr %s558, 8
        %s560 = scalar_lea.vmem %s4, %s559
      $region48: #{wrn_forward.61} parent=43 // pred_fallthru
        _
    $region44: #{wrn_forward.61} parent=5 // pred_fallthru
      _
  $region6: #{wrn_forward.61} parent=0 // loop_footer
    %s14 = sadd.s32 1, %s10
  $region7: #{wrn_forward.61} parent=0 // loop_footer_branch
    %9 = sbr.rel target = $region3
  $region8: #{wrn_forward.61} parent=0 // loop_exit
    _

// kernel: tile.218
$region0: #{tile.218}
  #allocation0 [shape = 's32[1]{0}', space=sflag, size = 0x4, scoped, tag = 'scoped memory for tile.218']
  %s0 = inlined_call_operand.vmem [shape: f32[64], index: 0, kind: input, shape index: {}]
  %s1 = inlined_call_operand.vmem [shape: f32[4,64], index: 1, kind: output, shape index: {}]
  // Predicated region
  $region2: #{tile.218} parent=0 // pred_check
    _
  $region3: #{tile.218} parent=0 // pred_check_branch
    %3 = sbr.rel (0) target = $region5
  $region4: #{tile.218} parent=0 // pred_region
    _
  $region5: #{tile.218} parent=0 // pred_fallthru
    _
  %v4 = vld [vmem:[%s0] ss:$0 sm:$0xff]
  %5 = vst [vmem:[%s1] sm:$0xf] %v4

// kernel: tile.219
$region0: #{tile.219}
  %s0 = inlined_call_operand.vmem [shape: f32[4,64], index: 0, kind: input, shape index: {}]
  %s1 = inlined_call_operand.vmem [shape: f32[1,256], index: 1, kind: output, shape index: {}]
  $region1: #{tile.219} parent=0
    #allocation0 [shape = 'u8[8192]{0}', space=vmem, size = 0x2000, scoped, tag = 'scoped mem for output reshape']
    #allocation1 [shape = 'u8[4096]{0}', space=vmem, size = 0x1000, scoped, tag = 'scoped mem for input reshape']
    %s3 = ssub.s32 16, 1
    %v4 = vld [vmem:[%s0] sm:%s3]
    %5 = vst [vmem:[#allocation1] sm:%s3] %v4
    %s6 = smov 3
    %v7 = vld [vmem:[#allocation1] ss:$2 sm:%s6]
    %vm8 = vcmask 523264
    %9 = vst.msk [vmem:[#allocation0] ss:$8 sm:$0x3] %vm8, %v7
    %s10 = scalar_lea.vmem [#allocation1], 1
    %s11 = smov 3
    %v12 = vld [vmem:[%s10] ss:$2 sm:%s11]
    %13 = vrot.lane.b32.xlu0 %v12, 64
    %v14 = vpop.permute.xlu0 %13
    %vm15 = vcmask 1048064
    %16 = vst.msk [vmem:[#allocation0] ss:$8 sm:$0x3] %vm15, %v14
    %s18 = ssub.s32 2, 1
    %v19 = vld [vmem:[#allocation0] sm:%s18]
    %s21 = ssub.s32 2, 1
    %22 = vst [vmem:[%s1] sm:%s21] %v19
    %s23 = scalar_lea.vmem [#allocation0], 8
    %v24 = vld [vmem:[%s23] sm:%s18]
    %s26 = ssub.s32 2, 1
    %s27 = scalar_lea.vmem %s1, 1
    %28 = vst [vmem:[%s27] sm:%s26] %v24

// kernel: wrn_forward.71
$region0: #{wrn_forward.71}
  #allocation0 [shape = 'u32[]', space=smem, size = 0x4, offset = 0x4, fixed_abs, tag = 'smem constant byte address 0x4 - core index']
  #allocation1 [shape = 'u32[72,128]{1,0:T(1,128)}', space=vmem, size = 0x9000, scoped, tag = 'internal scratch']
  %s0 = inlined_call_operand.vmem [shape: f32[8,256], index: 0, kind: input, shape index: {}]
  %s1 = inlined_call_operand.vmem [shape: f32[1,256], index: 1, kind: output, shape index: {0}]
  %s2 = inlined_call_operand.vmem [shape: f32[1,256], index: 2, kind: output, shape index: {1}]
  %3 = xla_tuple %s1, %s2
  %s4 = sld [smem:[#allocation0]]
  $region26: #{wrn_forward.71} parent=0
    _
  %s6 = ssub.s32 1, %s4
  %s7 = scalar_select 0, %s6, %s4
  // Predicated region
  $region2: #{wrn_forward.71} parent=0 // pred_check
    _
  $region3: #{wrn_forward.71} parent=0 // pred_check_branch
    %9 = sbr.rel (0) target = $region5
  $region4: #{wrn_forward.71} parent=0 // pred_region
    _
  $region5: #{wrn_forward.71} parent=0 // pred_fallthru
    _
  %p10 = scmp.eq.s32.totalorder 0, 0
  // Predicated region
  $region6: #{wrn_forward.71} parent=0 // pred_check
    %p11 = pneg %p10
  $region7: #{wrn_forward.71} parent=0 // pred_check_branch
    %13 = sbr.rel (%p11) target = $region9
  $region8: #{wrn_forward.71} parent=0 // pred_region
    %v14 = vlaneseq
    %vm15 = vcmp.ge.s32.totalorder %v14, 0
    %vm16 = vcmp.lt.s32.totalorder %v14, 256
    %vm17 = vmand %vm15, %vm16
    %18 = vst.msk [vmem:[%s1] sm:$0x3] %vm17, 0.0
    %19 = vst.msk [vmem:[%s2] sm:$0x3] %vm17, 0.0
  $region9: #{wrn_forward.71} parent=0 // pred_fallthru
    _
  %v20 = vld [vmem:[%s0] sm:$0xff]
  %v21 = vld [vmem:[%s0 + $0x8] sm:$0xff]
  %v22 = vld [vmem:[%s1] sm:$0x3]
  %v23 = vrot.slane %v20, 4
  %v24 = vadd.f32 %v20, %v23
  %v25 = vrot.slane %v24, 2
  %v26 = vadd.f32 %v24, %v25
  %v27 = vrot.slane %v26, 1
  %v28 = vadd.f32 %v26, %v27
  %v29 = vrot.slane %v21, 4
  %v30 = vadd.f32 %v21, %v29
  %v31 = vrot.slane %v30, 2
  %v32 = vadd.f32 %v30, %v31
  %v33 = vrot.slane %v32, 1
  %v34 = vadd.f32 %v32, %v33
  %v37 = vrot.slane %v34, 7
  %vm38 = vcmask 1040384
  %v39 = vsel %vm38, %v28, %v37
  %v41 = vadd.f32 %v22, %v39
  %v42 = vlaneseq
  %vm43 = vcmp.ge.s32.totalorder %v42, 0
  %vm44 = vcmp.lt.s32.totalorder %v42, 256
  %vm45 = vmand %vm43, %vm44
  %46 = vst.msk [vmem:[%s1] sm:$0x3] %vm45, %v41
  %v47 = vld [vmem:[%s2] sm:$0x3]
  %v48 = vmul.f32 %v20, %v20
  %v49 = vmul.f32 %v21, %v21
  %v50 = vrot.slane %v48, 4
  %v51 = vadd.f32 %v48, %v50
  %v52 = vrot.slane %v51, 2
  %v53 = vadd.f32 %v51, %v52
  %v54 = vrot.slane %v53, 1
  %v55 = vadd.f32 %v53, %v54
  %v56 = vrot.slane %v49, 4
  %v57 = vadd.f32 %v49, %v56
  %v58 = vrot.slane %v57, 2
  %v59 = vadd.f32 %v57, %v58
  %v60 = vrot.slane %v59, 1
  %v61 = vadd.f32 %v59, %v60
  %v64 = vrot.slane %v61, 7
  %v65 = vsel %vm38, %v55, %v64
  %v67 = vadd.f32 %v47, %v65
  %68 = vst.msk [vmem:[%s2] sm:$0x3] %vm45, %v67
  // Predicated region
  $region10: #{wrn_forward.71} parent=0 // pred_check
    _
  $region11: #{wrn_forward.71} parent=0 // pred_check_branch
    %70 = sbr.rel (0) target = $region13
  $region12: #{wrn_forward.71} parent=0 // pred_region
    _
  $region13: #{wrn_forward.71} parent=0 // pred_fallthru
    _
  // Predicated region
  $region14: #{wrn_forward.71} parent=0 // pred_check
    _
  $region15: #{wrn_forward.71} parent=0 // pred_check_branch
    %72 = sbr.rel (0) target = $region17
  $region16: #{wrn_forward.71} parent=0 // pred_region
    _
  $region17: #{wrn_forward.71} parent=0 // pred_fallthru
    _
  // Predicated region
  $region18: #{wrn_forward.71} parent=0 // pred_check
    _
  $region19: #{wrn_forward.71} parent=0 // pred_check_branch
    %74 = sbr.rel (0) target = $region21
  $region20: #{wrn_forward.71} parent=0 // pred_region
    _
  $region21: #{wrn_forward.71} parent=0 // pred_fallthru
    _
  // Predicated region
  $region22: #{wrn_forward.71} parent=0 // pred_check
    _
  $region23: #{wrn_forward.71} parent=0 // pred_check_branch
    %76 = sbr.rel (0) target = $region25
  $region24: #{wrn_forward.71} parent=0 // pred_region
    _
  $region25: #{wrn_forward.71} parent=0 // pred_fallthru
    _

// kernel: wrn_forward.72
$region0: #{wrn_forward.72}
  #allocation0 [shape = 'u32[]', space=smem, size = 0x4, offset = 0x4, fixed_abs, tag = 'smem constant byte address 0x4 - core index']
  #allocation1 [shape = 'u32[72,128]{1,0:T(1,128)}', space=vmem, size = 0x9000, scoped, tag = 'internal scratch']
  %s0 = inlined_call_operand.vmem [shape: f32[8,256], index: 0, kind: input, shape index: {}]
  %s1 = inlined_call_operand.vmem [shape: f32[1,256], index: 1, kind: input, shape index: {}]
  %s2 = inlined_call_operand.vmem [shape: f32[1,256], index: 2, kind: input, shape index: {}]
  %s3 = inlined_call_operand.vmem [shape: f32[8,256], index: 3, kind: output, shape index: {}]
  %s4 = sld [smem:[#allocation0]]
  $region22: #{wrn_forward.72} parent=0
    _
  %s6 = ssub.s32 1, %s4
  %s7 = scalar_select 0, %s6, %s4
  // Predicated region
  $region2: #{wrn_forward.72} parent=0 // pred_check
    _
  $region3: #{wrn_forward.72} parent=0 // pred_check_branch
    %9 = sbr.rel (0) target = $region5
  $region4: #{wrn_forward.72} parent=0 // pred_region
    _
  $region5: #{wrn_forward.72} parent=0 // pred_fallthru
    _
  // Predicated region
  $region6: #{wrn_forward.72} parent=0 // pred_check
    _
  $region7: #{wrn_forward.72} parent=0 // pred_check_branch
    %11 = sbr.rel (0) target = $region9
  $region8: #{wrn_forward.72} parent=0 // pred_region
    _
  $region9: #{wrn_forward.72} parent=0 // pred_fallthru
    _
  // Predicated region
  $region10: #{wrn_forward.72} parent=0 // pred_check
    _
  $region11: #{wrn_forward.72} parent=0 // pred_check_branch
    %13 = sbr.rel (0) target = $region13
  $region12: #{wrn_forward.72} parent=0 // pred_region
    _
  $region13: #{wrn_forward.72} parent=0 // pred_fallthru
    _
  %v14 = vld [vmem:[%s0] sm:$0xff]
  %v15 = vld [vmem:[%s0 + $0x8] sm:$0xff]
  %v16 = vld [vmem:[%s1] sm:$0x3]
  %v18 = vperm.slane %v16, 0
  %v19 = vperm.slane %v16, 1
  %v22 = vmul.f32 %v14, %v18
  %v23 = vmul.f32 %v15, %v19
  %v24 = vld [vmem:[%s2] sm:$0x3]
  %v26 = vperm.slane %v24, 0
  %v27 = vperm.slane %v24, 1
  %v30 = vadd.f32 %v22, %v26
  %v31 = vadd.f32 %v23, %v27
  %vm32 = vcmp.ge.f32.partialorder %v30, 0.0
  %vm33 = vcmp.ge.f32.partialorder %v31, 0.0
  %v34 = vmul.f32 %v30, 0.1
  %v35 = vmul.f32 %v31, 0.1
  %v36 = vsel %vm32, %v30, %v34
  %v37 = vsel %vm33, %v31, %v35
  %38 = vst [vmem:[%s3] sm:$0xff] %v36
  %39 = vst [vmem:[%s3 + $0x8] sm:$0xff] %v37
  // Predicated region
  $region14: #{wrn_forward.72} parent=0 // pred_check
    _
  $region15: #{wrn_forward.72} parent=0 // pred_check_branch
    %41 = sbr.rel (0) target = $region17
  $region16: #{wrn_forward.72} parent=0 // pred_region
    _
  $region17: #{wrn_forward.72} parent=0 // pred_fallthru
    _
  // Predicated region
  $region18: #{wrn_forward.72} parent=0 // pred_check
    _
  $region19: #{wrn_forward.72} parent=0 // pred_check_branch
    %43 = sbr.rel (0) target = $region21
  $region20: #{wrn_forward.72} parent=0 // pred_region
    _
  $region21: #{wrn_forward.72} parent=0 // pred_fallthru
    _

// kernel: wrn_forward.70
$region0: #{wrn_forward.70}
  #allocation0 [shape = 'u32[]', space=smem, size = 0x4, offset = 0x4, fixed_abs, tag = 'smem constant byte address 0x4 - core index']
  #allocation1 [shape = 'u32[72,128]{1,0:T(1,128)}', space=vmem, size = 0x9000, scoped, tag = 'internal scratch']
  %s0 = inlined_call_operand.vmem [shape: f32[2,10,2,5,32], index: 0, kind: input, shape index: {}]
  %s1 = inlined_call_operand.vmem [shape: f32[9,32,64], index: 1, kind: input, shape index: {}]
  %s2 = inlined_call_operand.vmem [shape: f32[1,64], index: 2, kind: input, shape index: {}]
  %s3 = inlined_call_operand.vmem [shape: f32[2,4,4,64], index: 3, kind: output, shape index: {}]
  %s4 = sld [smem:[#allocation0]]
  $region45: #{wrn_forward.70} parent=0
    _
  %s6 = ssub.s32 1, %s4
  %s7 = scalar_select 0, %s6, %s4
  loop: start=0, step=1, limit=10
  $region2: #{wrn_forward.70} parent=0 // loop_pre_header
    _
  $region3: #{wrn_forward.70} parent=0 // loop_header
    %s9 = sphi 0, %s13
    %p10 = scmp.ge.s32.totalorder %s9, 10
    %s16 = sphi 0, %s28
    %s17 = sphi 0, %s24
    %s18 = sphi 0, %s16
    %s19 = sphi 0, %s17
    %s20 = sphi 0, %s18
    %s21 = sphi 0, %s19
    %s31 = sphi 0, %s33
    %s34 = sphi 0, %s31
    %s35 = sphi 0, %s34
    %s51 = sphi 0, %s35
    %s55 = sphi 0, %s55
    %s57 = sphi 0, %s55
    %s58 = sphi 0, %s57
    %s72 = sphi 0, %s58
    %s76 = sphi 0, %s76
    %s78 = sphi 0, %s76
    %s79 = sphi 0, %s78
    %s93 = sphi 0, %s79
    %s101 = sphi 0, %s103
    %s104 = sphi 0, %s101
    %s105 = sphi 0, %s104
    %s121 = sphi 0, %s105
  $region4: #{wrn_forward.70} parent=0 // loop_header_branch
    %12 = sbr.rel (%p10) target = $region8
  $region5: #{wrn_forward.70} parent=0 // loop_body
    %s14 = ssub.s32 %s9, 1
    %s15 = ssub.s32 %s9, 2
    %s22 = sadd.s32 1, %s17
    %p23 = scmp.ge.s32.totalorder %s22, 4
    %s24 = scalar_select %p23, 0, %s22
    %s25 = sadd.s32 1, %s16
    %s26 = scalar_select %p23, %s25, %s16
    %p27 = scmp.ge.s32.totalorder %s26, 2
    %s28 = scalar_select %p27, 0, %s26
    %s29 = ssub.s32 %s16, %s28
    %p30 = scmp.eq.s32.totalorder %s29, 0
    %s32 = sadd.s32 %s31, 1
    %s33 = scalar_select %p30, %s31, %s32
    %p36 = pneg %p30
    %p37 = scmp.eq.s32.totalorder %s9, 7
    %p38 = por %p36, %p37
    %p39 = scmp.ne.s32.totalorder %s31, %s34
    %p40 = scmp.eq.s32.totalorder %s9, 0
    %p41 = por %p39, %p40
    %p42 = scmp.ne.s32.totalorder %s31, %s34
    %p43 = scmp.eq.s32.totalorder %s14, 7
    %p44 = por %p42, %p43
    %p45 = scmp.ne.s32.totalorder %s34, %s35
    %p46 = scmp.eq.s32.totalorder %s14, 0
    %p47 = por %p45, %p46
    %p48 = scmp.ne.s32.totalorder %s34, %s35
    %p49 = scmp.eq.s32.totalorder %s15, 7
    %p50 = por %p48, %p49
    %p52 = scmp.ne.s32.totalorder %s35, %s51
    %p53 = scmp.eq.s32.totalorder %s15, 0
    %p54 = por %p52, %p53
    %s56 = sadd.s32 %s55, 1
    %p59 = scmp.eq.s32.totalorder %s9, 7
    %p60 = scmp.ne.s32.totalorder %s55, %s57
    %p61 = scmp.eq.s32.totalorder %s9, 0
    %p62 = por %p60, %p61
    %p63 = scmp.ne.s32.totalorder %s55, %s57
    %p64 = scmp.eq.s32.totalorder %s14, 7
    %p65 = por %p63, %p64
    %p66 = scmp.ne.s32.totalorder %s57, %s58
    %p67 = scmp.eq.s32.totalorder %s14, 0
    %p68 = por %p66, %p67
    %p69 = scmp.ne.s32.totalorder %s57, %s58
    %p70 = scmp.eq.s32.totalorder %s15, 7
    %p71 = por %p69, %p70
    %p73 = scmp.ne.s32.totalorder %s58, %s72
    %p74 = scmp.eq.s32.totalorder %s15, 0
    %p75 = por %p73, %p74
    %s77 = sadd.s32 %s76, 1
    %p80 = scmp.eq.s32.totalorder %s9, 7
    %p81 = scmp.ne.s32.totalorder %s76, %s78
    %p82 = scmp.eq.s32.totalorder %s9, 0
    %p83 = por %p81, %p82
    %p84 = scmp.ne.s32.totalorder %s76, %s78
    %p85 = scmp.eq.s32.totalorder %s14, 7
    %p86 = por %p84, %p85
    %p87 = scmp.ne.s32.totalorder %s78, %s79
    %p88 = scmp.eq.s32.totalorder %s14, 0
    %p89 = por %p87, %p88
    %p90 = scmp.ne.s32.totalorder %s78, %s79
    %p91 = scmp.eq.s32.totalorder %s15, 7
    %p92 = por %p90, %p91
    %p94 = scmp.ne.s32.totalorder %s79, %s93
    %p95 = scmp.eq.s32.totalorder %s15, 0
    %p96 = por %p94, %p95
    %s97 = ssub.s32 %s16, %s28
    %s98 = ssub.s32 %s17, %s24
    %s99 = sor.u32 %s97, %s98
    %p100 = scmp.eq.s32.totalorder %s99, 0
    %s102 = sadd.s32 %s101, 1
    %s103 = scalar_select %p100, %s101, %s102
    %p106 = pneg %p100
    %p107 = scmp.eq.s32.totalorder %s9, 7
    %p108 = por %p106, %p107
    %p109 = scmp.ne.s32.totalorder %s101, %s104
    %p110 = scmp.eq.s32.totalorder %s9, 0
    %p111 = por %p109, %p110
    %p112 = scmp.ne.s32.totalorder %s101, %s104
    %p113 = scmp.eq.s32.totalorder %s14, 7
    %p114 = por %p112, %p113
    %p115 = scmp.ne.s32.totalorder %s104, %s105
    %p116 = scmp.eq.s32.totalorder %s14, 0
    %p117 = por %p115, %p116
    %p118 = scmp.ne.s32.totalorder %s104, %s105
    %p119 = scmp.eq.s32.totalorder %s15, 7
    %p120 = por %p118, %p119
    %p122 = scmp.ne.s32.totalorder %s105, %s121
    %p123 = scmp.eq.s32.totalorder %s15, 0
    %p124 = por %p122, %p123
    %p125 = scmp.le.s32.totalorder 1, %s9
    %p126 = scmp.lt.s32.totalorder %s9, 9
    %p127 = pnand %p125, %p126
    %p128 = pneg %p127
    // Predicated region
    $region9: #{wrn_forward.70} parent=5 // pred_check
      _
    $region10: #{wrn_forward.70} parent=5 // pred_check_branch
      %130 = sbr.rel (%p127) target = $region12
    $region11: #{wrn_forward.70} parent=5 // pred_region
      %s131 = ssub.s32 %s9, 1
      // Predicated region
      $region13: #{wrn_forward.70} parent=11 // pred_check
        %p132 = pneg %p68
      $region14: #{wrn_forward.70} parent=11 // pred_check_branch
        %134 = sbr.rel (%p132) target = $region16
      $region15: #{wrn_forward.70} parent=11 // pred_region
        _
      $region16: #{wrn_forward.70} parent=11 // pred_fallthru
        _
      // Predicated region
      $region17: #{wrn_forward.70} parent=11 // pred_check
        %p135 = pneg %p89
      $region18: #{wrn_forward.70} parent=11 // pred_check_branch
        %137 = sbr.rel (%p135) target = $region20
      $region19: #{wrn_forward.70} parent=11 // pred_region
        _
      $region20: #{wrn_forward.70} parent=11 // pred_fallthru
        _
    $region12: #{wrn_forward.70} parent=5 // pred_fallthru
      _
    %p138 = scmp.lt.s32.totalorder %s9, 8
    // Predicated region
    $region21: #{wrn_forward.70} parent=5 // pred_check
      %p139 = pneg %p138
    $region22: #{wrn_forward.70} parent=5 // pred_check_branch
      %141 = sbr.rel (%p139) target = $region24
    $region23: #{wrn_forward.70} parent=5 // pred_region
      // Predicated region
      $region25: #{wrn_forward.70} parent=23 // pred_check
        %p142 = pneg %p41
      $region26: #{wrn_forward.70} parent=23 // pred_check_branch
        %144 = sbr.rel (%p142) target = $region28
      $region27: #{wrn_forward.70} parent=23 // pred_region
        %p145 = scmp.lt.s32.totalorder %s16, 1
        %s146 = scalar_select %p145, %s16, 1
        %s147 = smul.addr %s146, 20
        %s148 = smul.addr %s147, 8
        %s149 = scalar_lea.vmem %s0, %s148
      $region28: #{wrn_forward.70} parent=23 // pred_fallthru
        _
    $region24: #{wrn_forward.70} parent=5 // pred_fallthru
      _
    %p150 = scmp.le.s32.totalorder 1, %s9
    %p151 = scmp.lt.s32.totalorder %s9, 9
    %p152 = pnand %p150, %p151
    %p153 = pneg %p152
    // Predicated region
    $region29: #{wrn_forward.70} parent=5 // pred_check
      _
    $region30: #{wrn_forward.70} parent=5 // pred_check_branch
      %155 = sbr.rel (%p152) target = $region32
    $region31: #{wrn_forward.70} parent=5 // pred_region
      %s156 = ssub.s32 %s9, 1
      %p157 = scmp.lt.s32.totalorder %s18, 1
      %s158 = scalar_select %p157, %s18, 1
      %s159 = smul.addr %s158, 20
      %s160 = smul.addr %s159, 8
      %s161 = scalar_lea.vmem %s0, %s160
      %p162 = pneg %p47
      %p163 = pneg %p44
      %p164 = pneg %p68
      %p165 = pneg %p65
      %p166 = pneg %p89
      %p167 = pneg %p86
      %p168 = pneg %p117
      %p169 = pneg %p114
      %p170 = scmp.lt.s32.totalorder %s18, 1
      %s171 = scalar_select %p170, %s18, 1
      %p172 = scmp.lt.s32.totalorder %s19, 3
      %s173 = scalar_select %p172, %s19, 3
      %s174 = smul.addr %s171, 4
      %s175 = sadd.s32 %s173, %s174
      %s176 = smul.addr %s175, 4
      %s177 = scalar_lea.vmem %s3, %s176
      %p178 = scmp.lt.s32.totalorder %s18, 1
      %s179 = scalar_select %p178, %s18, 1
      %s180 = smul.addr %s179, 20
      %s181 = smul.addr %s180, 8
      %s182 = scalar_lea.vmem %s0, %s181
      %p183 = scmp.lt.s32.totalorder %s18, 1
      %s184 = scalar_select %p183, %s18, 1
      %p185 = scmp.lt.s32.totalorder %s19, 3
      %s186 = scalar_select %p185, %s19, 3
      %s187 = smul.addr %s184, 4
      %s188 = sadd.s32 %s186, %s187
      %s189 = smul.addr %s188, 4
      %s190 = scalar_lea.vmem %s3, %s189
      %v191 = vld [vmem:[%s2] sm:$0x1]
      %v193 = vperm.slane %v191, 0
      %s195 = smul.u32 %s19, 2
      %s196 = smul.u32 %s195, 16
      %s197 = scalar_lea.vmem %s182, %s196
      %v198 = vld [vmem:[%s197] sm:$0xf]
      %v199 = vld [vmem:[%s1] sm:$0xff]
      %v200 = vld [vmem:[%s1 + $0x8] sm:$0xff]
      %v201 = vld [vmem:[%s1 + $0x10] sm:$0xff]
      %v202 = vld [vmem:[%s1 + $0x18] sm:$0xff]
      %vm203 = vcmask 261120
      %v205 = vsel %vm203, %v198, 0
      %207 = vmatpush.msra.mxu0 0.0
      %208 = vmatpush.msra.mxu0 0.0
      %209 = vmatpush.msra.mxu0 0.0
      %210 = vmatpush.msra.mxu0 0.0
      %211 = vmatpush.msra.mxu0 0.0
      %212 = vmatpush.msra.mxu0 0.0
      %213 = vmatpush.msra.mxu0 0.0
      %214 = vmatpush.msra.mxu0 0.0
      %215 = vmatpush.msra.mxu0 0.0
      %216 = vmatpush.msra.mxu0 0.0
      %217 = vmatpush.msra.mxu0 0.0
      %218 = vmatpush.msra.mxu0 0.0
      %219 = vmatpush.msra.mxu0 %v202
      %220 = vmatpush.msra.mxu0 %v201
      %221 = vmatpush.msra.mxu0 %v200
      %222 = vmatpush.msra.mxu0 %v199
      %223 = vmatmul.f32.gmra.mxu0 %v205
      %v224 = vpop.f32.mrf.mxu0
      %v225 = vadd.f32 0.0, %v224
      %226 = vdwg.mxu0
      %v227 = vadd.f32 %v193, %v225
      %s228 = sadd.s32 8, %s196
      %s229 = scalar_lea.vmem %s182, %s228
      %v230 = vld [vmem:[%s229] sm:$0xf]
      %s231 = scalar_lea.vmem %s1, 32
      %v232 = vld [vmem:[%s231] sm:$0xff]
      %v233 = vld [vmem:[%s231 + $0x8] sm:$0xff]
      %v234 = vld [vmem:[%s231 + $0x10] sm:$0xff]
      %v235 = vld [vmem:[%s231 + $0x18] sm:$0xff]
      %v237 = vsel %vm203, %v230, 0
      %239 = vmatpush.msra.mxu0 0.0
      %240 = vmatpush.msra.mxu0 0.0
      %241 = vmatpush.msra.mxu0 0.0
      %242 = vmatpush.msra.mxu0 0.0
      %243 = vmatpush.msra.mxu0 0.0
      %244 = vmatpush.msra.mxu0 0.0
      %245 = vmatpush.msra.mxu0 0.0
      %246 = vmatpush.msra.mxu0 0.0
      %247 = vmatpush.msra.mxu0 0.0
      %248 = vmatpush.msra.mxu0 0.0
      %249 = vmatpush.msra.mxu0 0.0
      %250 = vmatpush.msra.mxu0 0.0
      %251 = vmatpush.msra.mxu0 %v235
      %252 = vmatpush.msra.mxu0 %v234
      %253 = vmatpush.msra.mxu0 %v233
      %254 = vmatpush.msra.mxu0 %v232
      %255 = vmatmul.f32.gmra.mxu0 %v237
      %v256 = vpop.f32.mrf.mxu0
      %v257 = vadd.f32 0.0, %v256
      %258 = vdwg.mxu0
      %v259 = vadd.f32 %v227, %v257
      %v260 = vld [vmem:[%s197 + $0x1] sm:$0xf]
      %s261 = scalar_lea.vmem %s1, 64
      %v262 = vld [vmem:[%s261] sm:$0xff]
      %v263 = vld [vmem:[%s261 + $0x8] sm:$0xff]
      %v264 = vld [vmem:[%s261 + $0x10] sm:$0xff]
      %v265 = vld [vmem:[%s261 + $0x18] sm:$0xff]
      %v267 = vsel %vm203, %v260, 0
      %269 = vmatpush.msra.mxu0 0.0
      %270 = vmatpush.msra.mxu0 0.0
      %271 = vmatpush.msra.mxu0 0.0
      %272 = vmatpush.msra.mxu0 0.0
      %273 = vmatpush.msra.mxu0 0.0
      %274 = vmatpush.msra.mxu0 0.0
      %275 = vmatpush.msra.mxu0 0.0
      %276 = vmatpush.msra.mxu0 0.0
      %277 = vmatpush.msra.mxu0 0.0
      %278 = vmatpush.msra.mxu0 0.0
      %279 = vmatpush.msra.mxu0 0.0
      %280 = vmatpush.msra.mxu0 0.0
      %281 = vmatpush.msra.mxu0 %v265
      %282 = vmatpush.msra.mxu0 %v264
      %283 = vmatpush.msra.mxu0 %v263
      %284 = vmatpush.msra.mxu0 %v262
      %285 = vmatmul.f32.gmra.mxu0 %v267
      %v286 = vpop.f32.mrf.mxu0
      %v287 = vadd.f32 0.0, %v286
      %288 = vdwg.mxu0
      %v289 = vadd.f32 %v259, %v287
      %s290 = sadd.s32 %s195, 1
      %s291 = smul.u32 %s290, 16
      %s292 = scalar_lea.vmem %s182, %s291
      %v293 = vld [vmem:[%s292] sm:$0xf]
      %s294 = scalar_lea.vmem %s1, 96
      %v295 = vld [vmem:[%s294] sm:$0xff]
      %v296 = vld [vmem:[%s294 + $0x8] sm:$0xff]
      %v297 = vld [vmem:[%s294 + $0x10] sm:$0xff]
      %v298 = vld [vmem:[%s294 + $0x18] sm:$0xff]
      %v300 = vsel %vm203, %v293, 0
      %302 = vmatpush.msra.mxu0 0.0
      %303 = vmatpush.msra.mxu0 0.0
      %304 = vmatpush.msra.mxu0 0.0
      %305 = vmatpush.msra.mxu0 0.0
      %306 = vmatpush.msra.mxu0 0.0
      %307 = vmatpush.msra.mxu0 0.0
      %308 = vmatpush.msra.mxu0 0.0
      %309 = vmatpush.msra.mxu0 0.0
      %310 = vmatpush.msra.mxu0 0.0
      %311 = vmatpush.msra.mxu0 0.0
      %312 = vmatpush.msra.mxu0 0.0
      %313 = vmatpush.msra.mxu0 0.0
      %314 = vmatpush.msra.mxu0 %v298
      %315 = vmatpush.msra.mxu0 %v297
      %316 = vmatpush.msra.mxu0 %v296
      %317 = vmatpush.msra.mxu0 %v295
      %318 = vmatmul.f32.gmra.mxu0 %v300
      %v319 = vpop.f32.mrf.mxu0
      %v320 = vadd.f32 0.0, %v319
      %321 = vdwg.mxu0
      %v322 = vadd.f32 %v289, %v320
      %s323 = sadd.s32 8, %s291
      %s324 = scalar_lea.vmem %s182, %s323
      %v325 = vld [vmem:[%s324] sm:$0xf]
      %s326 = scalar_lea.vmem %s1, 128
      %v327 = vld [vmem:[%s326] sm:$0xff]
      %v328 = vld [vmem:[%s326 + $0x8] sm:$0xff]
      %v329 = vld [vmem:[%s326 + $0x10] sm:$0xff]
      %v330 = vld [vmem:[%s326 + $0x18] sm:$0xff]
      %v332 = vsel %vm203, %v325, 0
      %334 = vmatpush.msra.mxu0 0.0
      %335 = vmatpush.msra.mxu0 0.0
      %336 = vmatpush.msra.mxu0 0.0
      %337 = vmatpush.msra.mxu0 0.0
      %338 = vmatpush.msra.mxu0 0.0
      %339 = vmatpush.msra.mxu0 0.0
      %340 = vmatpush.msra.mxu0 0.0
      %341 = vmatpush.msra.mxu0 0.0
      %342 = vmatpush.msra.mxu0 0.0
      %343 = vmatpush.msra.mxu0 0.0
      %344 = vmatpush.msra.mxu0 0.0
      %345 = vmatpush.msra.mxu0 0.0
      %346 = vmatpush.msra.mxu0 %v330
      %347 = vmatpush.msra.mxu0 %v329
      %348 = vmatpush.msra.mxu0 %v328
      %349 = vmatpush.msra.mxu0 %v327
      %350 = vmatmul.f32.gmra.mxu0 %v332
      %v351 = vpop.f32.mrf.mxu0
      %v352 = vadd.f32 0.0, %v351
      %353 = vdwg.mxu0
      %v354 = vadd.f32 %v322, %v352
      %v355 = vld [vmem:[%s292 + $0x1] sm:$0xf]
      %s356 = scalar_lea.vmem %s1, 160
      %v357 = vld [vmem:[%s356] sm:$0xff]
      %v358 = vld [vmem:[%s356 + $0x8] sm:$0xff]
      %v359 = vld [vmem:[%s356 + $0x10] sm:$0xff]
      %v360 = vld [vmem:[%s356 + $0x18] sm:$0xff]
      %v362 = vsel %vm203, %v355, 0
      %364 = vmatpush.msra.mxu0 0.0
      %365 = vmatpush.msra.mxu0 0.0
      %366 = vmatpush.msra.mxu0 0.0
      %367 = vmatpush.msra.mxu0 0.0
      %368 = vmatpush.msra.mxu0 0.0
      %369 = vmatpush.msra.mxu0 0.0
      %370 = vmatpush.msra.mxu0 0.0
      %371 = vmatpush.msra.mxu0 0.0
      %372 = vmatpush.msra.mxu0 0.0
      %373 = vmatpush.msra.mxu0 0.0
      %374 = vmatpush.msra.mxu0 0.0
      %375 = vmatpush.msra.mxu0 0.0
      %376 = vmatpush.msra.mxu0 %v360
      %377 = vmatpush.msra.mxu0 %v359
      %378 = vmatpush.msra.mxu0 %v358
      %379 = vmatpush.msra.mxu0 %v357
      %380 = vmatmul.f32.gmra.mxu0 %v362
      %v381 = vpop.f32.mrf.mxu0
      %v382 = vadd.f32 0.0, %v381
      %383 = vdwg.mxu0
      %v384 = vadd.f32 %v354, %v382
      %s385 = sadd.s32 %s195, 2
      %s386 = smul.u32 %s385, 16
      %s387 = scalar_lea.vmem %s182, %s386
      %v388 = vld [vmem:[%s387] sm:$0xf]
      %s389 = scalar_lea.vmem %s1, 192
      %v390 = vld [vmem:[%s389] sm:$0xff]
      %v391 = vld [vmem:[%s389 + $0x8] sm:$0xff]
      %v392 = vld [vmem:[%s389 + $0x10] sm:$0xff]
      %v393 = vld [vmem:[%s389 + $0x18] sm:$0xff]
      %v395 = vsel %vm203, %v388, 0
      %397 = vmatpush.msra.mxu0 0.0
      %398 = vmatpush.msra.mxu0 0.0
      %399 = vmatpush.msra.mxu0 0.0
      %400 = vmatpush.msra.mxu0 0.0
      %401 = vmatpush.msra.mxu0 0.0
      %402 = vmatpush.msra.mxu0 0.0
      %403 = vmatpush.msra.mxu0 0.0
      %404 = vmatpush.msra.mxu0 0.0
      %405 = vmatpush.msra.mxu0 0.0
      %406 = vmatpush.msra.mxu0 0.0
      %407 = vmatpush.msra.mxu0 0.0
      %408 = vmatpush.msra.mxu0 0.0
      %409 = vmatpush.msra.mxu0 %v393
      %410 = vmatpush.msra.mxu0 %v392
      %411 = vmatpush.msra.mxu0 %v391
      %412 = vmatpush.msra.mxu0 %v390
      %413 = vmatmul.f32.gmra.mxu0 %v395
      %v414 = vpop.f32.mrf.mxu0
      %v415 = vadd.f32 0.0, %v414
      %416 = vdwg.mxu0
      %v417 = vadd.f32 %v384, %v415
      %s418 = sadd.s32 8, %s386
      %s419 = scalar_lea.vmem %s182, %s418
      %v420 = vld [vmem:[%s419] sm:$0xf]
      %s421 = scalar_lea.vmem %s1, 224
      %v422 = vld [vmem:[%s421] sm:$0xff]
      %v423 = vld [vmem:[%s421 + $0x8] sm:$0xff]
      %v424 = vld [vmem:[%s421 + $0x10] sm:$0xff]
      %v425 = vld [vmem:[%s421 + $0x18] sm:$0xff]
      %v427 = vsel %vm203, %v420, 0
      %429 = vmatpush.msra.mxu0 0.0
      %430 = vmatpush.msra.mxu0 0.0
      %431 = vmatpush.msra.mxu0 0.0
      %432 = vmatpush.msra.mxu0 0.0
      %433 = vmatpush.msra.mxu0 0.0
      %434 = vmatpush.msra.mxu0 0.0
      %435 = vmatpush.msra.mxu0 0.0
      %436 = vmatpush.msra.mxu0 0.0
      %437 = vmatpush.msra.mxu0 0.0
      %438 = vmatpush.msra.mxu0 0.0
      %439 = vmatpush.msra.mxu0 0.0
      %440 = vmatpush.msra.mxu0 0.0
      %441 = vmatpush.msra.mxu0 %v425
      %442 = vmatpush.msra.mxu0 %v424
      %443 = vmatpush.msra.mxu0 %v423
      %444 = vmatpush.msra.mxu0 %v422
      %445 = vmatmul.f32.gmra.mxu0 %v427
      %v446 = vpop.f32.mrf.mxu0
      %v447 = vadd.f32 0.0, %v446
      %448 = vdwg.mxu0
      %v449 = vadd.f32 %v417, %v447
      %v450 = vld [vmem:[%s387 + $0x1] sm:$0xf]
      %s451 = scalar_lea.vmem %s1, 256
      %v452 = vld [vmem:[%s451] sm:$0xff]
      %v453 = vld [vmem:[%s451 + $0x8] sm:$0xff]
      %v454 = vld [vmem:[%s451 + $0x10] sm:$0xff]
      %v455 = vld [vmem:[%s451 + $0x18] sm:$0xff]
      %v457 = vsel %vm203, %v450, 0
      %459 = vmatpush.msra.mxu0 0.0
      %460 = vmatpush.msra.mxu0 0.0
      %461 = vmatpush.msra.mxu0 0.0
      %462 = vmatpush.msra.mxu0 0.0
      %463 = vmatpush.msra.mxu0 0.0
      %464 = vmatpush.msra.mxu0 0.0
      %465 = vmatpush.msra.mxu0 0.0
      %466 = vmatpush.msra.mxu0 0.0
      %467 = vmatpush.msra.mxu0 0.0
      %468 = vmatpush.msra.mxu0 0.0
      %469 = vmatpush.msra.mxu0 0.0
      %470 = vmatpush.msra.mxu0 0.0
      %471 = vmatpush.msra.mxu0 %v455
      %472 = vmatpush.msra.mxu0 %v454
      %473 = vmatpush.msra.mxu0 %v453
      %474 = vmatpush.msra.mxu0 %v452
      %475 = vmatmul.f32.gmra.mxu0 %v457
      %v476 = vpop.f32.mrf.mxu0
      %v477 = vadd.f32 0.0, %v476
      %478 = vdwg.mxu0
      %v479 = vadd.f32 %v449, %v477
      %vm480 = vcmask 519168
      %481 = vst.msk [vmem:[%s190] sm:$0xf] %vm480, %v479
      %p482 = scmp.lt.s32.totalorder %s18, 1
      %s483 = scalar_select %p482, %s18, 1
      %p484 = scmp.lt.s32.totalorder %s19, 3
      %s485 = scalar_select %p484, %s19, 3
      %s486 = smul.addr %s483, 4
      %s487 = sadd.s32 %s485, %s486
      %s488 = smul.addr %s487, 4
      %s489 = scalar_lea.vmem %s3, %s488
      // Predicated region
      $region33: #{wrn_forward.70} parent=31 // pred_check
        %p490 = pneg %p114
      $region34: #{wrn_forward.70} parent=31 // pred_check_branch
        %492 = sbr.rel (%p490) target = $region36
      $region35: #{wrn_forward.70} parent=31 // pred_region
        _
      $region36: #{wrn_forward.70} parent=31 // pred_fallthru
        _
    $region32: #{wrn_forward.70} parent=5 // pred_fallthru
      _
    %p493 = scmp.le.s32.totalorder 2, %s9
    // Predicated region
    $region37: #{wrn_forward.70} parent=5 // pred_check
      %p494 = pneg %p493
    $region38: #{wrn_forward.70} parent=5 // pred_check_branch
      %496 = sbr.rel (%p494) target = $region40
    $region39: #{wrn_forward.70} parent=5 // pred_region
      %s497 = ssub.s32 %s9, 2
      // Predicated region
      $region41: #{wrn_forward.70} parent=39 // pred_check
        %p498 = pneg %p120
      $region42: #{wrn_forward.70} parent=39 // pred_check_branch
        %500 = sbr.rel (%p498) target = $region44
      $region43: #{wrn_forward.70} parent=39 // pred_region
        %p501 = scmp.lt.s32.totalorder %s20, 1
        %s502 = scalar_select %p501, %s20, 1
        %p503 = scmp.lt.s32.totalorder %s21, 3
        %s504 = scalar_select %p503, %s21, 3
        %s505 = smul.addr %s502, 4
        %s506 = sadd.s32 %s504, %s505
        %s507 = smul.addr %s506, 4
        %s508 = scalar_lea.vmem %s3, %s507
      $region44: #{wrn_forward.70} parent=39 // pred_fallthru
        _
    $region40: #{wrn_forward.70} parent=5 // pred_fallthru
      _
  $region6: #{wrn_forward.70} parent=0 // loop_footer
    %s13 = sadd.s32 1, %s9
  $region7: #{wrn_forward.70} parent=0 // loop_footer_branch
    %8 = sbr.rel target = $region3
  $region8: #{wrn_forward.70} parent=0 // loop_exit
    _

// kernel: wrn_forward.73
$region0: #{wrn_forward.73}
  #allocation0 [shape = 'u32[]', space=smem, size = 0x4, offset = 0x4, fixed_abs, tag = 'smem constant byte address 0x4 - core index']
  #allocation1 [shape = 'u32[72,128]{1,0:T(1,128)}', space=vmem, size = 0x9000, scoped, tag = 'internal scratch']
  %s0 = inlined_call_operand.vmem [shape: f32[2,8,2,4,32], index: 0, kind: input, shape index: {}]
  %s1 = inlined_call_operand.vmem [shape: f32[1,32,64], index: 1, kind: input, shape index: {}]
  %s2 = inlined_call_operand.vmem [shape: f32[1,64], index: 2, kind: input, shape index: {}]
  %s3 = inlined_call_operand.vmem [shape: f32[2,4,4,64], index: 3, kind: output, shape index: {}]
  %s4 = sld [smem:[#allocation0]]
  $region45: #{wrn_forward.73} parent=0
    _
  %s6 = ssub.s32 1, %s4
  %s7 = scalar_select 0, %s6, %s4
  loop: start=0, step=1, limit=10
  $region2: #{wrn_forward.73} parent=0 // loop_pre_header
    _
  $region3: #{wrn_forward.73} parent=0 // loop_header
    %s9 = sphi 0, %s13
    %p10 = scmp.ge.s32.totalorder %s9, 10
    %s16 = sphi 0, %s28
    %s17 = sphi 0, %s24
    %s18 = sphi 0, %s16
    %s19 = sphi 0, %s17
    %s20 = sphi 0, %s18
    %s21 = sphi 0, %s19
    %s31 = sphi 0, %s33
    %s34 = sphi 0, %s31
    %s35 = sphi 0, %s34
    %s51 = sphi 0, %s35
    %s55 = sphi 0, %s55
    %s57 = sphi 0, %s55
    %s58 = sphi 0, %s57
    %s72 = sphi 0, %s58
    %s76 = sphi 0, %s76
    %s78 = sphi 0, %s76
    %s79 = sphi 0, %s78
    %s93 = sphi 0, %s79
    %s101 = sphi 0, %s103
    %s104 = sphi 0, %s101
    %s105 = sphi 0, %s104
    %s121 = sphi 0, %s105
  $region4: #{wrn_forward.73} parent=0 // loop_header_branch
    %12 = sbr.rel (%p10) target = $region8
  $region5: #{wrn_forward.73} parent=0 // loop_body
    %s14 = ssub.s32 %s9, 1
    %s15 = ssub.s32 %s9, 2
    %s22 = sadd.s32 1, %s17
    %p23 = scmp.ge.s32.totalorder %s22, 4
    %s24 = scalar_select %p23, 0, %s22
    %s25 = sadd.s32 1, %s16
    %s26 = scalar_select %p23, %s25, %s16
    %p27 = scmp.ge.s32.totalorder %s26, 2
    %s28 = scalar_select %p27, 0, %s26
    %s29 = ssub.s32 %s16, %s28
    %p30 = scmp.eq.s32.totalorder %s29, 0
    %s32 = sadd.s32 %s31, 1
    %s33 = scalar_select %p30, %s31, %s32
    %p36 = pneg %p30
    %p37 = scmp.eq.s32.totalorder %s9, 7
    %p38 = por %p36, %p37
    %p39 = scmp.ne.s32.totalorder %s31, %s34
    %p40 = scmp.eq.s32.totalorder %s9, 0
    %p41 = por %p39, %p40
    %p42 = scmp.ne.s32.totalorder %s31, %s34
    %p43 = scmp.eq.s32.totalorder %s14, 7
    %p44 = por %p42, %p43
    %p45 = scmp.ne.s32.totalorder %s34, %s35
    %p46 = scmp.eq.s32.totalorder %s14, 0
    %p47 = por %p45, %p46
    %p48 = scmp.ne.s32.totalorder %s34, %s35
    %p49 = scmp.eq.s32.totalorder %s15, 7
    %p50 = por %p48, %p49
    %p52 = scmp.ne.s32.totalorder %s35, %s51
    %p53 = scmp.eq.s32.totalorder %s15, 0
    %p54 = por %p52, %p53
    %s56 = sadd.s32 %s55, 1
    %p59 = scmp.eq.s32.totalorder %s9, 7
    %p60 = scmp.ne.s32.totalorder %s55, %s57
    %p61 = scmp.eq.s32.totalorder %s9, 0
    %p62 = por %p60, %p61
    %p63 = scmp.ne.s32.totalorder %s55, %s57
    %p64 = scmp.eq.s32.totalorder %s14, 7
    %p65 = por %p63, %p64
    %p66 = scmp.ne.s32.totalorder %s57, %s58
    %p67 = scmp.eq.s32.totalorder %s14, 0
    %p68 = por %p66, %p67
    %p69 = scmp.ne.s32.totalorder %s57, %s58
    %p70 = scmp.eq.s32.totalorder %s15, 7
    %p71 = por %p69, %p70
    %p73 = scmp.ne.s32.totalorder %s58, %s72
    %p74 = scmp.eq.s32.totalorder %s15, 0
    %p75 = por %p73, %p74
    %s77 = sadd.s32 %s76, 1
    %p80 = scmp.eq.s32.totalorder %s9, 7
    %p81 = scmp.ne.s32.totalorder %s76, %s78
    %p82 = scmp.eq.s32.totalorder %s9, 0
    %p83 = por %p81, %p82
    %p84 = scmp.ne.s32.totalorder %s76, %s78
    %p85 = scmp.eq.s32.totalorder %s14, 7
    %p86 = por %p84, %p85
    %p87 = scmp.ne.s32.totalorder %s78, %s79
    %p88 = scmp.eq.s32.totalorder %s14, 0
    %p89 = por %p87, %p88
    %p90 = scmp.ne.s32.totalorder %s78, %s79
    %p91 = scmp.eq.s32.totalorder %s15, 7
    %p92 = por %p90, %p91
    %p94 = scmp.ne.s32.totalorder %s79, %s93
    %p95 = scmp.eq.s32.totalorder %s15, 0
    %p96 = por %p94, %p95
    %s97 = ssub.s32 %s16, %s28
    %s98 = ssub.s32 %s17, %s24
    %s99 = sor.u32 %s97, %s98
    %p100 = scmp.eq.s32.totalorder %s99, 0
    %s102 = sadd.s32 %s101, 1
    %s103 = scalar_select %p100, %s101, %s102
    %p106 = pneg %p100
    %p107 = scmp.eq.s32.totalorder %s9, 7
    %p108 = por %p106, %p107
    %p109 = scmp.ne.s32.totalorder %s101, %s104
    %p110 = scmp.eq.s32.totalorder %s9, 0
    %p111 = por %p109, %p110
    %p112 = scmp.ne.s32.totalorder %s101, %s104
    %p113 = scmp.eq.s32.totalorder %s14, 7
    %p114 = por %p112, %p113
    %p115 = scmp.ne.s32.totalorder %s104, %s105
    %p116 = scmp.eq.s32.totalorder %s14, 0
    %p117 = por %p115, %p116
    %p118 = scmp.ne.s32.totalorder %s104, %s105
    %p119 = scmp.eq.s32.totalorder %s15, 7
    %p120 = por %p118, %p119
    %p122 = scmp.ne.s32.totalorder %s105, %s121
    %p123 = scmp.eq.s32.totalorder %s15, 0
    %p124 = por %p122, %p123
    %p125 = scmp.le.s32.totalorder 1, %s9
    %p126 = scmp.lt.s32.totalorder %s9, 9
    %p127 = pnand %p125, %p126
    %p128 = pneg %p127
    // Predicated region
    $region9: #{wrn_forward.73} parent=5 // pred_check
      _
    $region10: #{wrn_forward.73} parent=5 // pred_check_branch
      %130 = sbr.rel (%p127) target = $region12
    $region11: #{wrn_forward.73} parent=5 // pred_region
      %s131 = ssub.s32 %s9, 1
      // Predicated region
      $region13: #{wrn_forward.73} parent=11 // pred_check
        %p132 = pneg %p68
      $region14: #{wrn_forward.73} parent=11 // pred_check_branch
        %134 = sbr.rel (%p132) target = $region16
      $region15: #{wrn_forward.73} parent=11 // pred_region
        _
      $region16: #{wrn_forward.73} parent=11 // pred_fallthru
        _
      // Predicated region
      $region17: #{wrn_forward.73} parent=11 // pred_check
        %p135 = pneg %p89
      $region18: #{wrn_forward.73} parent=11 // pred_check_branch
        %137 = sbr.rel (%p135) target = $region20
      $region19: #{wrn_forward.73} parent=11 // pred_region
        _
      $region20: #{wrn_forward.73} parent=11 // pred_fallthru
        _
    $region12: #{wrn_forward.73} parent=5 // pred_fallthru
      _
    %p138 = scmp.lt.s32.totalorder %s9, 8
    // Predicated region
    $region21: #{wrn_forward.73} parent=5 // pred_check
      %p139 = pneg %p138
    $region22: #{wrn_forward.73} parent=5 // pred_check_branch
      %141 = sbr.rel (%p139) target = $region24
    $region23: #{wrn_forward.73} parent=5 // pred_region
      // Predicated region
      $region25: #{wrn_forward.73} parent=23 // pred_check
        %p142 = pneg %p41
      $region26: #{wrn_forward.73} parent=23 // pred_check_branch
        %144 = sbr.rel (%p142) target = $region28
      $region27: #{wrn_forward.73} parent=23 // pred_region
        %p145 = scmp.lt.s32.totalorder %s16, 1
        %s146 = scalar_select %p145, %s16, 1
        %s147 = smul.addr %s146, 16
        %s148 = smul.addr %s147, 4
        %s149 = scalar_lea.vmem %s0, %s148
      $region28: #{wrn_forward.73} parent=23 // pred_fallthru
        _
    $region24: #{wrn_forward.73} parent=5 // pred_fallthru
      _
    %p150 = scmp.le.s32.totalorder 1, %s9
    %p151 = scmp.lt.s32.totalorder %s9, 9
    %p152 = pnand %p150, %p151
    %p153 = pneg %p152
    // Predicated region
    $region29: #{wrn_forward.73} parent=5 // pred_check
      _
    $region30: #{wrn_forward.73} parent=5 // pred_check_branch
      %155 = sbr.rel (%p152) target = $region32
    $region31: #{wrn_forward.73} parent=5 // pred_region
      %s156 = ssub.s32 %s9, 1
      %p157 = scmp.lt.s32.totalorder %s18, 1
      %s158 = scalar_select %p157, %s18, 1
      %s159 = smul.addr %s158, 16
      %s160 = smul.addr %s159, 4
      %s161 = scalar_lea.vmem %s0, %s160
      %p162 = pneg %p47
      %p163 = pneg %p44
      %p164 = pneg %p68
      %p165 = pneg %p65
      %p166 = pneg %p89
      %p167 = pneg %p86
      %p168 = pneg %p117
      %p169 = pneg %p114
      %p170 = scmp.lt.s32.totalorder %s18, 1
      %s171 = scalar_select %p170, %s18, 1
      %p172 = scmp.lt.s32.totalorder %s19, 3
      %s173 = scalar_select %p172, %s19, 3
      %s174 = smul.addr %s171, 4
      %s175 = sadd.s32 %s173, %s174
      %s176 = smul.addr %s175, 4
      %s177 = scalar_lea.vmem %s3, %s176
      %p178 = scmp.lt.s32.totalorder %s18, 1
      %s179 = scalar_select %p178, %s18, 1
      %s180 = smul.addr %s179, 16
      %s181 = smul.addr %s180, 4
      %s182 = scalar_lea.vmem %s0, %s181
      %p183 = scmp.lt.s32.totalorder %s18, 1
      %s184 = scalar_select %p183, %s18, 1
      %p185 = scmp.lt.s32.totalorder %s19, 3
      %s186 = scalar_select %p185, %s19, 3
      %s187 = smul.addr %s184, 4
      %s188 = sadd.s32 %s186, %s187
      %s189 = smul.addr %s188, 4
      %s190 = scalar_lea.vmem %s3, %s189
      %v191 = vld [vmem:[%s2] sm:$0x1]
      %v193 = vperm.slane %v191, 0
      %s195 = smul.u32 %s19, 2
      %s196 = smul.u32 %s195, 8
      %s197 = scalar_lea.vmem %s182, %s196
      %v198 = vld [vmem:[%s197] sm:$0xf]
      %v199 = vld [vmem:[%s1] sm:$0xff]
      %v200 = vld [vmem:[%s1 + $0x8] sm:$0xff]
      %v201 = vld [vmem:[%s1 + $0x10] sm:$0xff]
      %v202 = vld [vmem:[%s1 + $0x18] sm:$0xff]
      %vm203 = vcmask 261120
      %v205 = vsel %vm203, %v198, 0
      %207 = vmatpush.msra.mxu0 0.0
      %208 = vmatpush.msra.mxu0 0.0
      %209 = vmatpush.msra.mxu0 0.0
      %210 = vmatpush.msra.mxu0 0.0
      %211 = vmatpush.msra.mxu0 0.0
      %212 = vmatpush.msra.mxu0 0.0
      %213 = vmatpush.msra.mxu0 0.0
      %214 = vmatpush.msra.mxu0 0.0
      %215 = vmatpush.msra.mxu0 0.0
      %216 = vmatpush.msra.mxu0 0.0
      %217 = vmatpush.msra.mxu0 0.0
      %218 = vmatpush.msra.mxu0 0.0
      %219 = vmatpush.msra.mxu0 %v202
      %220 = vmatpush.msra.mxu0 %v201
      %221 = vmatpush.msra.mxu0 %v200
      %222 = vmatpush.msra.mxu0 %v199
      %223 = vmatmul.f32.gmra.mxu0 %v205
      %v224 = vpop.f32.mrf.mxu0
      %v225 = vadd.f32 0.0, %v224
      %226 = vdwg.mxu0
      %v227 = vadd.f32 %v193, %v225
      %vm228 = vcmask 519168
      %229 = vst.msk [vmem:[%s190] sm:$0xf] %vm228, %v227
      %p230 = scmp.lt.s32.totalorder %s18, 1
      %s231 = scalar_select %p230, %s18, 1
      %p232 = scmp.lt.s32.totalorder %s19, 3
      %s233 = scalar_select %p232, %s19, 3
      %s234 = smul.addr %s231, 4
      %s235 = sadd.s32 %s233, %s234
      %s236 = smul.addr %s235, 4
      %s237 = scalar_lea.vmem %s3, %s236
      // Predicated region
      $region33: #{wrn_forward.73} parent=31 // pred_check
        %p238 = pneg %p114
      $region34: #{wrn_forward.73} parent=31 // pred_check_branch
        %240 = sbr.rel (%p238) target = $region36
      $region35: #{wrn_forward.73} parent=31 // pred_region
        _
      $region36: #{wrn_forward.73} parent=31 // pred_fallthru
        _
    $region32: #{wrn_forward.73} parent=5 // pred_fallthru
      _
    %p241 = scmp.le.s32.totalorder 2, %s9
    // Predicated region
    $region37: #{wrn_forward.73} parent=5 // pred_check
      %p242 = pneg %p241
    $region38: #{wrn_forward.73} parent=5 // pred_check_branch
      %244 = sbr.rel (%p242) target = $region40
    $region39: #{wrn_forward.73} parent=5 // pred_region
      %s245 = ssub.s32 %s9, 2
      // Predicated region
      $region41: #{wrn_forward.73} parent=39 // pred_check
        %p246 = pneg %p120
      $region42: #{wrn_forward.73} parent=39 // pred_check_branch
        %248 = sbr.rel (%p246) target = $region44
      $region43: #{wrn_forward.73} parent=39 // pred_region
        %p249 = scmp.lt.s32.totalorder %s20, 1
        %s250 = scalar_select %p249, %s20, 1
        %p251 = scmp.lt.s32.totalorder %s21, 3
        %s252 = scalar_select %p251, %s21, 3
        %s253 = smul.addr %s250, 4
        %s254 = sadd.s32 %s252, %s253
        %s255 = smul.addr %s254, 4
        %s256 = scalar_lea.vmem %s3, %s255
      $region44: #{wrn_forward.73} parent=39 // pred_fallthru
        _
    $region40: #{wrn_forward.73} parent=5 // pred_fallthru
      _
  $region6: #{wrn_forward.73} parent=0 // loop_footer
    %s13 = sadd.s32 1, %s9
  $region7: #{wrn_forward.73} parent=0 // loop_footer_branch
    %8 = sbr.rel target = $region3
  $region8: #{wrn_forward.73} parent=0 // loop_exit
    _

// kernel: wrn_forward.74
$region0: #{wrn_forward.74}
  #allocation0 [shape = 'u32[]', space=smem, size = 0x4, offset = 0x4, fixed_abs, tag = 'smem constant byte address 0x4 - core index']
  #allocation1 [shape = 'u32[72,128]{1,0:T(1,128)}', space=vmem, size = 0x9000, scoped, tag = 'internal scratch']
  %s0 = inlined_call_operand.vmem [shape: f32[2,6,1,6,64], index: 0, kind: input, shape index: {}]
  %s1 = inlined_call_operand.vmem [shape: f32[9,64,64], index: 1, kind: input, shape index: {}]
  %s2 = inlined_call_operand.vmem [shape: f32[1,64], index: 2, kind: input, shape index: {}]
  %s3 = inlined_call_operand.vmem [shape: f32[2,4,4,64], index: 3, kind: input, shape index: {}]
  %s4 = inlined_call_operand.vmem [shape: f32[2,4,4,64], index: 4, kind: output, shape index: {}]
  %s5 = sld [smem:[#allocation0]]
  $region49: #{wrn_forward.74} parent=0
    _
  %s7 = ssub.s32 1, %s5
  %s8 = scalar_select 0, %s7, %s5
  loop: start=0, step=1, limit=10
  $region2: #{wrn_forward.74} parent=0 // loop_pre_header
    _
  $region3: #{wrn_forward.74} parent=0 // loop_header
    %s10 = sphi 0, %s14
    %p11 = scmp.ge.s32.totalorder %s10, 10
    %s17 = sphi 0, %s29
    %s18 = sphi 0, %s25
    %s19 = sphi 0, %s17
    %s20 = sphi 0, %s18
    %s21 = sphi 0, %s19
    %s22 = sphi 0, %s20
    %s32 = sphi 0, %s34
    %s35 = sphi 0, %s32
    %s36 = sphi 0, %s35
    %s52 = sphi 0, %s36
    %s56 = sphi 0, %s56
    %s58 = sphi 0, %s56
    %s59 = sphi 0, %s58
    %s73 = sphi 0, %s59
    %s77 = sphi 0, %s77
    %s79 = sphi 0, %s77
    %s80 = sphi 0, %s79
    %s94 = sphi 0, %s80
    %s102 = sphi 0, %s104
    %s105 = sphi 0, %s102
    %s106 = sphi 0, %s105
    %s122 = sphi 0, %s106
    %s130 = sphi 0, %s132
    %s133 = sphi 0, %s130
    %s134 = sphi 0, %s133
    %s150 = sphi 0, %s134
  $region4: #{wrn_forward.74} parent=0 // loop_header_branch
    %13 = sbr.rel (%p11) target = $region8
  $region5: #{wrn_forward.74} parent=0 // loop_body
    %s15 = ssub.s32 %s10, 1
    %s16 = ssub.s32 %s10, 2
    %s23 = sadd.s32 1, %s18
    %p24 = scmp.ge.s32.totalorder %s23, 4
    %s25 = scalar_select %p24, 0, %s23
    %s26 = sadd.s32 1, %s17
    %s27 = scalar_select %p24, %s26, %s17
    %p28 = scmp.ge.s32.totalorder %s27, 2
    %s29 = scalar_select %p28, 0, %s27
    %s30 = ssub.s32 %s17, %s29
    %p31 = scmp.eq.s32.totalorder %s30, 0
    %s33 = sadd.s32 %s32, 1
    %s34 = scalar_select %p31, %s32, %s33
    %p37 = pneg %p31
    %p38 = scmp.eq.s32.totalorder %s10, 7
    %p39 = por %p37, %p38
    %p40 = scmp.ne.s32.totalorder %s32, %s35
    %p41 = scmp.eq.s32.totalorder %s10, 0
    %p42 = por %p40, %p41
    %p43 = scmp.ne.s32.totalorder %s32, %s35
    %p44 = scmp.eq.s32.totalorder %s15, 7
    %p45 = por %p43, %p44
    %p46 = scmp.ne.s32.totalorder %s35, %s36
    %p47 = scmp.eq.s32.totalorder %s15, 0
    %p48 = por %p46, %p47
    %p49 = scmp.ne.s32.totalorder %s35, %s36
    %p50 = scmp.eq.s32.totalorder %s16, 7
    %p51 = por %p49, %p50
    %p53 = scmp.ne.s32.totalorder %s36, %s52
    %p54 = scmp.eq.s32.totalorder %s16, 0
    %p55 = por %p53, %p54
    %s57 = sadd.s32 %s56, 1
    %p60 = scmp.eq.s32.totalorder %s10, 7
    %p61 = scmp.ne.s32.totalorder %s56, %s58
    %p62 = scmp.eq.s32.totalorder %s10, 0
    %p63 = por %p61, %p62
    %p64 = scmp.ne.s32.totalorder %s56, %s58
    %p65 = scmp.eq.s32.totalorder %s15, 7
    %p66 = por %p64, %p65
    %p67 = scmp.ne.s32.totalorder %s58, %s59
    %p68 = scmp.eq.s32.totalorder %s15, 0
    %p69 = por %p67, %p68
    %p70 = scmp.ne.s32.totalorder %s58, %s59
    %p71 = scmp.eq.s32.totalorder %s16, 7
    %p72 = por %p70, %p71
    %p74 = scmp.ne.s32.totalorder %s59, %s73
    %p75 = scmp.eq.s32.totalorder %s16, 0
    %p76 = por %p74, %p75
    %s78 = sadd.s32 %s77, 1
    %p81 = scmp.eq.s32.totalorder %s10, 7
    %p82 = scmp.ne.s32.totalorder %s77, %s79
    %p83 = scmp.eq.s32.totalorder %s10, 0
    %p84 = por %p82, %p83
    %p85 = scmp.ne.s32.totalorder %s77, %s79
    %p86 = scmp.eq.s32.totalorder %s15, 7
    %p87 = por %p85, %p86
    %p88 = scmp.ne.s32.totalorder %s79, %s80
    %p89 = scmp.eq.s32.totalorder %s15, 0
    %p90 = por %p88, %p89
    %p91 = scmp.ne.s32.totalorder %s79, %s80
    %p92 = scmp.eq.s32.totalorder %s16, 7
    %p93 = por %p91, %p92
    %p95 = scmp.ne.s32.totalorder %s80, %s94
    %p96 = scmp.eq.s32.totalorder %s16, 0
    %p97 = por %p95, %p96
    %s98 = ssub.s32 %s17, %s29
    %s99 = ssub.s32 %s18, %s25
    %s100 = sor.u32 %s98, %s99
    %p101 = scmp.eq.s32.totalorder %s100, 0
    %s103 = sadd.s32 %s102, 1
    %s104 = scalar_select %p101, %s102, %s103
    %p107 = pneg %p101
    %p108 = scmp.eq.s32.totalorder %s10, 7
    %p109 = por %p107, %p108
    %p110 = scmp.ne.s32.totalorder %s102, %s105
    %p111 = scmp.eq.s32.totalorder %s10, 0
    %p112 = por %p110, %p111
    %p113 = scmp.ne.s32.totalorder %s102, %s105
    %p114 = scmp.eq.s32.totalorder %s15, 7
    %p115 = por %p113, %p114
    %p116 = scmp.ne.s32.totalorder %s105, %s106
    %p117 = scmp.eq.s32.totalorder %s15, 0
    %p118 = por %p116, %p117
    %p119 = scmp.ne.s32.totalorder %s105, %s106
    %p120 = scmp.eq.s32.totalorder %s16, 7
    %p121 = por %p119, %p120
    %p123 = scmp.ne.s32.totalorder %s106, %s122
    %p124 = scmp.eq.s32.totalorder %s16, 0
    %p125 = por %p123, %p124
    %s126 = ssub.s32 %s17, %s29
    %s127 = ssub.s32 %s18, %s25
    %s128 = sor.u32 %s126, %s127
    %p129 = scmp.eq.s32.totalorder %s128, 0
    %s131 = sadd.s32 %s130, 1
    %s132 = scalar_select %p129, %s130, %s131
    %p135 = pneg %p129
    %p136 = scmp.eq.s32.totalorder %s10, 7
    %p137 = por %p135, %p136
    %p138 = scmp.ne.s32.totalorder %s130, %s133
    %p139 = scmp.eq.s32.totalorder %s10, 0
    %p140 = por %p138, %p139
    %p141 = scmp.ne.s32.totalorder %s130, %s133
    %p142 = scmp.eq.s32.totalorder %s15, 7
    %p143 = por %p141, %p142
    %p144 = scmp.ne.s32.totalorder %s133, %s134
    %p145 = scmp.eq.s32.totalorder %s15, 0
    %p146 = por %p144, %p145
    %p147 = scmp.ne.s32.totalorder %s133, %s134
    %p148 = scmp.eq.s32.totalorder %s16, 7
    %p149 = por %p147, %p148
    %p151 = scmp.ne.s32.totalorder %s134, %s150
    %p152 = scmp.eq.s32.totalorder %s16, 0
    %p153 = por %p151, %p152
    %p154 = scmp.le.s32.totalorder 1, %s10
    %p155 = scmp.lt.s32.totalorder %s10, 9
    %p156 = pnand %p154, %p155
    %p157 = pneg %p156
    // Predicated region
    $region9: #{wrn_forward.74} parent=5 // pred_check
      _
    $region10: #{wrn_forward.74} parent=5 // pred_check_branch
      %159 = sbr.rel (%p156) target = $region12
    $region11: #{wrn_forward.74} parent=5 // pred_region
      %s160 = ssub.s32 %s10, 1
      // Predicated region
      $region13: #{wrn_forward.74} parent=11 // pred_check
        %p161 = pneg %p69
      $region14: #{wrn_forward.74} parent=11 // pred_check_branch
        %163 = sbr.rel (%p161) target = $region16
      $region15: #{wrn_forward.74} parent=11 // pred_region
        _
      $region16: #{wrn_forward.74} parent=11 // pred_fallthru
        _
      // Predicated region
      $region17: #{wrn_forward.74} parent=11 // pred_check
        %p164 = pneg %p90
      $region18: #{wrn_forward.74} parent=11 // pred_check_branch
        %166 = sbr.rel (%p164) target = $region20
      $region19: #{wrn_forward.74} parent=11 // pred_region
        _
      $region20: #{wrn_forward.74} parent=11 // pred_fallthru
        _
    $region12: #{wrn_forward.74} parent=5 // pred_fallthru
      _
    %p167 = scmp.lt.s32.totalorder %s10, 8
    // Predicated region
    $region21: #{wrn_forward.74} parent=5 // pred_check
      %p168 = pneg %p167
    $region22: #{wrn_forward.74} parent=5 // pred_check_branch
      %170 = sbr.rel (%p168) target = $region24
    $region23: #{wrn_forward.74} parent=5 // pred_region
      // Predicated region
      $region25: #{wrn_forward.74} parent=23 // pred_check
        %p171 = pneg %p42
      $region26: #{wrn_forward.74} parent=23 // pred_check_branch
        %173 = sbr.rel (%p171) target = $region28
      $region27: #{wrn_forward.74} parent=23 // pred_region
        %p174 = scmp.lt.s32.totalorder %s17, 1
        %s175 = scalar_select %p174, %s17, 1
        %s176 = smul.addr %s175, 6
        %s177 = smul.addr %s176, 8
        %s178 = scalar_lea.vmem %s0, %s177
      $region28: #{wrn_forward.74} parent=23 // pred_fallthru
        _
      // Predicated region
      $region29: #{wrn_forward.74} parent=23 // pred_check
        %p179 = pneg %p112
      $region30: #{wrn_forward.74} parent=23 // pred_check_branch
        %181 = sbr.rel (%p179) target = $region32
      $region31: #{wrn_forward.74} parent=23 // pred_region
        %p182 = scmp.lt.s32.totalorder %s17, 1
        %s183 = scalar_select %p182, %s17, 1
        %p184 = scmp.lt.s32.totalorder %s18, 3
        %s185 = scalar_select %p184, %s18, 3
        %s186 = smul.addr %s183, 4
        %s187 = sadd.s32 %s185, %s186
        %s188 = smul.addr %s187, 4
        %s189 = scalar_lea.vmem %s3, %s188
      $region32: #{wrn_forward.74} parent=23 // pred_fallthru
        _
    $region24: #{wrn_forward.74} parent=5 // pred_fallthru
      _
    %p190 = scmp.le.s32.totalorder 1, %s10
    %p191 = scmp.lt.s32.totalorder %s10, 9
    %p192 = pnand %p190, %p191
    %p193 = pneg %p192
    // Predicated region
    $region33: #{wrn_forward.74} parent=5 // pred_check
      _
    $region34: #{wrn_forward.74} parent=5 // pred_check_branch
      %195 = sbr.rel (%p192) target = $region36
    $region35: #{wrn_forward.74} parent=5 // pred_region
      %s196 = ssub.s32 %s10, 1
      %p197 = scmp.lt.s32.totalorder %s19, 1
      %s198 = scalar_select %p197, %s19, 1
      %s199 = smul.addr %s198, 6
      %s200 = smul.addr %s199, 8
      %s201 = scalar_lea.vmem %s0, %s200
      %p202 = pneg %p48
      %p203 = pneg %p45
      %p204 = pneg %p69
      %p205 = pneg %p66
      %p206 = pneg %p90
      %p207 = pneg %p87
      %p208 = scmp.lt.s32.totalorder %s19, 1
      %s209 = scalar_select %p208, %s19, 1
      %p210 = scmp.lt.s32.totalorder %s20, 3
      %s211 = scalar_select %p210, %s20, 3
      %s212 = smul.addr %s209, 4
      %s213 = sadd.s32 %s211, %s212
      %s214 = smul.addr %s213, 4
      %s215 = scalar_lea.vmem %s3, %s214
      %p216 = pneg %p118
      %p217 = pneg %p115
      %p218 = pneg %p146
      %p219 = pneg %p143
      %p220 = scmp.lt.s32.totalorder %s19, 1
      %s221 = scalar_select %p220, %s19, 1
      %p222 = scmp.lt.s32.totalorder %s20, 3
      %s223 = scalar_select %p222, %s20, 3
      %s224 = smul.addr %s221, 4
      %s225 = sadd.s32 %s223, %s224
      %s226 = smul.addr %s225, 4
      %s227 = scalar_lea.vmem %s4, %s226
      %p228 = scmp.lt.s32.totalorder %s19, 1
      %s229 = scalar_select %p228, %s19, 1
      %s230 = smul.addr %s229, 6
      %s231 = smul.addr %s230, 8
      %s232 = scalar_lea.vmem %s0, %s231
      %p233 = scmp.lt.s32.totalorder %s19, 1
      %s234 = scalar_select %p233, %s19, 1
      %p235 = scmp.lt.s32.totalorder %s20, 3
      %s236 = scalar_select %p235, %s20, 3
      %s237 = smul.addr %s234, 4
      %s238 = sadd.s32 %s236, %s237
      %s239 = smul.addr %s238, 4
      %s240 = scalar_lea.vmem %s3, %s239
      %p241 = scmp.lt.s32.totalorder %s19, 1
      %s242 = scalar_select %p241, %s19, 1
      %p243 = scmp.lt.s32.totalorder %s20, 3
      %s244 = scalar_select %p243, %s20, 3
      %s245 = smul.addr %s242, 4
      %s246 = sadd.s32 %s244, %s245
      %s247 = smul.addr %s246, 4
      %s248 = scalar_lea.vmem %s4, %s247
      %v249 = vld [vmem:[%s2] sm:$0x1]
      %v251 = vperm.slane %v249, 0
      %v253 = vld [vmem:[%s240] sm:$0xf]
      %v254 = vadd.f32 %v251, %v253
      %s255 = smul.u32 %s20, 8
      %s256 = scalar_lea.vmem %s232, %s255
      %v257 = vld [vmem:[%s256] sm:$0xf]
      %v258 = vld [vmem:[%s1] sm:$0xff]
      %v259 = vld [vmem:[%s1 + $0x8] sm:$0xff]
      %v260 = vld [vmem:[%s1 + $0x10] sm:$0xff]
      %v261 = vld [vmem:[%s1 + $0x18] sm:$0xff]
      %v262 = vld [vmem:[%s1 + $0x20] sm:$0xff]
      %v263 = vld [vmem:[%s1 + $0x28] sm:$0xff]
      %v264 = vld [vmem:[%s1 + $0x30] sm:$0xff]
      %v265 = vld [vmem:[%s1 + $0x38] sm:$0xff]
      %vm266 = vcmask 523264
      %v268 = vsel %vm266, %v257, 0
      %270 = vmatpush.msra.mxu0 0.0
      %271 = vmatpush.msra.mxu0 0.0
      %272 = vmatpush.msra.mxu0 0.0
      %273 = vmatpush.msra.mxu0 0.0
      %274 = vmatpush.msra.mxu0 0.0
      %275 = vmatpush.msra.mxu0 0.0
      %276 = vmatpush.msra.mxu0 0.0
      %277 = vmatpush.msra.mxu0 0.0
      %278 = vmatpush.msra.mxu0 %v265
      %279 = vmatpush.msra.mxu0 %v264
      %280 = vmatpush.msra.mxu0 %v263
      %281 = vmatpush.msra.mxu0 %v262
      %282 = vmatpush.msra.mxu0 %v261
      %283 = vmatpush.msra.mxu0 %v260
      %284 = vmatpush.msra.mxu0 %v259
      %285 = vmatpush.msra.mxu0 %v258
      %286 = vmatmul.f32.gmra.mxu0 %v268
      %v287 = vpop.f32.mrf.mxu0
      %v288 = vadd.f32 0.0, %v287
      %289 = vdwg.mxu0
      %v290 = vadd.f32 %v254, %v288
      %v291 = vld [vmem:[%s256 + $0x1] sm:$0xf]
      %s292 = scalar_lea.vmem %s1, 64
      %v293 = vld [vmem:[%s292] sm:$0xff]
      %v294 = vld [vmem:[%s292 + $0x8] sm:$0xff]
      %v295 = vld [vmem:[%s292 + $0x10] sm:$0xff]
      %v296 = vld [vmem:[%s292 + $0x18] sm:$0xff]
      %v297 = vld [vmem:[%s292 + $0x20] sm:$0xff]
      %v298 = vld [vmem:[%s292 + $0x28] sm:$0xff]
      %v299 = vld [vmem:[%s292 + $0x30] sm:$0xff]
      %v300 = vld [vmem:[%s292 + $0x38] sm:$0xff]
      %v302 = vsel %vm266, %v291, 0
      %304 = vmatpush.msra.mxu0 0.0
      %305 = vmatpush.msra.mxu0 0.0
      %306 = vmatpush.msra.mxu0 0.0
      %307 = vmatpush.msra.mxu0 0.0
      %308 = vmatpush.msra.mxu0 0.0
      %309 = vmatpush.msra.mxu0 0.0
      %310 = vmatpush.msra.mxu0 0.0
      %311 = vmatpush.msra.mxu0 0.0
      %312 = vmatpush.msra.mxu0 %v300
      %313 = vmatpush.msra.mxu0 %v299
      %314 = vmatpush.msra.mxu0 %v298
      %315 = vmatpush.msra.mxu0 %v297
      %316 = vmatpush.msra.mxu0 %v296
      %317 = vmatpush.msra.mxu0 %v295
      %318 = vmatpush.msra.mxu0 %v294
      %319 = vmatpush.msra.mxu0 %v293
      %320 = vmatmul.f32.gmra.mxu0 %v302
      %v321 = vpop.f32.mrf.mxu0
      %v322 = vadd.f32 0.0, %v321
      %323 = vdwg.mxu0
      %v324 = vadd.f32 %v290, %v322
      %v325 = vld [vmem:[%s256 + $0x2] sm:$0xf]
      %s326 = scalar_lea.vmem %s1, 128
      %v327 = vld [vmem:[%s326] sm:$0xff]
      %v328 = vld [vmem:[%s326 + $0x8] sm:$0xff]
      %v329 = vld [vmem:[%s326 + $0x10] sm:$0xff]
      %v330 = vld [vmem:[%s326 + $0x18] sm:$0xff]
      %v331 = vld [vmem:[%s326 + $0x20] sm:$0xff]
      %v332 = vld [vmem:[%s326 + $0x28] sm:$0xff]
      %v333 = vld [vmem:[%s326 + $0x30] sm:$0xff]
      %v334 = vld [vmem:[%s326 + $0x38] sm:$0xff]
      %v336 = vsel %vm266, %v325, 0
      %338 = vmatpush.msra.mxu0 0.0
      %339 = vmatpush.msra.mxu0 0.0
      %340 = vmatpush.msra.mxu0 0.0
      %341 = vmatpush.msra.mxu0 0.0
      %342 = vmatpush.msra.mxu0 0.0
      %343 = vmatpush.msra.mxu0 0.0
      %344 = vmatpush.msra.mxu0 0.0
      %345 = vmatpush.msra.mxu0 0.0
      %346 = vmatpush.msra.mxu0 %v334
      %347 = vmatpush.msra.mxu0 %v333
      %348 = vmatpush.msra.mxu0 %v332
      %349 = vmatpush.msra.mxu0 %v331
      %350 = vmatpush.msra.mxu0 %v330
      %351 = vmatpush.msra.mxu0 %v329
      %352 = vmatpush.msra.mxu0 %v328
      %353 = vmatpush.msra.mxu0 %v327
      %354 = vmatmul.f32.gmra.mxu0 %v336
      %v355 = vpop.f32.mrf.mxu0
      %v356 = vadd.f32 0.0, %v355
      %357 = vdwg.mxu0
      %v358 = vadd.f32 %v324, %v356
      %s359 = sadd.s32 %s20, 1
      %s360 = smul.u32 %s359, 8
      %s361 = scalar_lea.vmem %s232, %s360
      %v362 = vld [vmem:[%s361] sm:$0xf]
      %s363 = scalar_lea.vmem %s1, 192
      %v364 = vld [vmem:[%s363] sm:$0xff]
      %v365 = vld [vmem:[%s363 + $0x8] sm:$0xff]
      %v366 = vld [vmem:[%s363 + $0x10] sm:$0xff]
      %v367 = vld [vmem:[%s363 + $0x18] sm:$0xff]
      %v368 = vld [vmem:[%s363 + $0x20] sm:$0xff]
      %v369 = vld [vmem:[%s363 + $0x28] sm:$0xff]
      %v370 = vld [vmem:[%s363 + $0x30] sm:$0xff]
      %v371 = vld [vmem:[%s363 + $0x38] sm:$0xff]
      %v373 = vsel %vm266, %v362, 0
      %375 = vmatpush.msra.mxu0 0.0
      %376 = vmatpush.msra.mxu0 0.0
      %377 = vmatpush.msra.mxu0 0.0
      %378 = vmatpush.msra.mxu0 0.0
      %379 = vmatpush.msra.mxu0 0.0
      %380 = vmatpush.msra.mxu0 0.0
      %381 = vmatpush.msra.mxu0 0.0
      %382 = vmatpush.msra.mxu0 0.0
      %383 = vmatpush.msra.mxu0 %v371
      %384 = vmatpush.msra.mxu0 %v370
      %385 = vmatpush.msra.mxu0 %v369
      %386 = vmatpush.msra.mxu0 %v368
      %387 = vmatpush.msra.mxu0 %v367
      %388 = vmatpush.msra.mxu0 %v366
      %389 = vmatpush.msra.mxu0 %v365
      %390 = vmatpush.msra.mxu0 %v364
      %391 = vmatmul.f32.gmra.mxu0 %v373
      %v392 = vpop.f32.mrf.mxu0
      %v393 = vadd.f32 0.0, %v392
      %394 = vdwg.mxu0
      %v395 = vadd.f32 %v358, %v393
      %v396 = vld [vmem:[%s361 + $0x1] sm:$0xf]
      %s397 = scalar_lea.vmem %s1, 256
      %v398 = vld [vmem:[%s397] sm:$0xff]
      %v399 = vld [vmem:[%s397 + $0x8] sm:$0xff]
      %v400 = vld [vmem:[%s397 + $0x10] sm:$0xff]
      %v401 = vld [vmem:[%s397 + $0x18] sm:$0xff]
      %v402 = vld [vmem:[%s397 + $0x20] sm:$0xff]
      %v403 = vld [vmem:[%s397 + $0x28] sm:$0xff]
      %v404 = vld [vmem:[%s397 + $0x30] sm:$0xff]
      %v405 = vld [vmem:[%s397 + $0x38] sm:$0xff]
      %v407 = vsel %vm266, %v396, 0
      %409 = vmatpush.msra.mxu0 0.0
      %410 = vmatpush.msra.mxu0 0.0
      %411 = vmatpush.msra.mxu0 0.0
      %412 = vmatpush.msra.mxu0 0.0
      %413 = vmatpush.msra.mxu0 0.0
      %414 = vmatpush.msra.mxu0 0.0
      %415 = vmatpush.msra.mxu0 0.0
      %416 = vmatpush.msra.mxu0 0.0
      %417 = vmatpush.msra.mxu0 %v405
      %418 = vmatpush.msra.mxu0 %v404
      %419 = vmatpush.msra.mxu0 %v403
      %420 = vmatpush.msra.mxu0 %v402
      %421 = vmatpush.msra.mxu0 %v401
      %422 = vmatpush.msra.mxu0 %v400
      %423 = vmatpush.msra.mxu0 %v399
      %424 = vmatpush.msra.mxu0 %v398
      %425 = vmatmul.f32.gmra.mxu0 %v407
      %v426 = vpop.f32.mrf.mxu0
      %v427 = vadd.f32 0.0, %v426
      %428 = vdwg.mxu0
      %v429 = vadd.f32 %v395, %v427
      %v430 = vld [vmem:[%s361 + $0x2] sm:$0xf]
      %s431 = scalar_lea.vmem %s1, 320
      %v432 = vld [vmem:[%s431] sm:$0xff]
      %v433 = vld [vmem:[%s431 + $0x8] sm:$0xff]
      %v434 = vld [vmem:[%s431 + $0x10] sm:$0xff]
      %v435 = vld [vmem:[%s431 + $0x18] sm:$0xff]
      %v436 = vld [vmem:[%s431 + $0x20] sm:$0xff]
      %v437 = vld [vmem:[%s431 + $0x28] sm:$0xff]
      %v438 = vld [vmem:[%s431 + $0x30] sm:$0xff]
      %v439 = vld [vmem:[%s431 + $0x38] sm:$0xff]
      %v441 = vsel %vm266, %v430, 0
      %443 = vmatpush.msra.mxu0 0.0
      %444 = vmatpush.msra.mxu0 0.0
      %445 = vmatpush.msra.mxu0 0.0
      %446 = vmatpush.msra.mxu0 0.0
      %447 = vmatpush.msra.mxu0 0.0
      %448 = vmatpush.msra.mxu0 0.0
      %449 = vmatpush.msra.mxu0 0.0
      %450 = vmatpush.msra.mxu0 0.0
      %451 = vmatpush.msra.mxu0 %v439
      %452 = vmatpush.msra.mxu0 %v438
      %453 = vmatpush.msra.mxu0 %v437
      %454 = vmatpush.msra.mxu0 %v436
      %455 = vmatpush.msra.mxu0 %v435
      %456 = vmatpush.msra.mxu0 %v434
      %457 = vmatpush.msra.mxu0 %v433
      %458 = vmatpush.msra.mxu0 %v432
      %459 = vmatmul.f32.gmra.mxu0 %v441
      %v460 = vpop.f32.mrf.mxu0
      %v461 = vadd.f32 0.0, %v460
      %462 = vdwg.mxu0
      %v463 = vadd.f32 %v429, %v461
      %s464 = sadd.s32 %s20, 2
      %s465 = smul.u32 %s464, 8
      %s466 = scalar_lea.vmem %s232, %s465
      %v467 = vld [vmem:[%s466] sm:$0xf]
      %s468 = scalar_lea.vmem %s1, 384
      %v469 = vld [vmem:[%s468] sm:$0xff]
      %v470 = vld [vmem:[%s468 + $0x8] sm:$0xff]
      %v471 = vld [vmem:[%s468 + $0x10] sm:$0xff]
      %v472 = vld [vmem:[%s468 + $0x18] sm:$0xff]
      %v473 = vld [vmem:[%s468 + $0x20] sm:$0xff]
      %v474 = vld [vmem:[%s468 + $0x28] sm:$0xff]
      %v475 = vld [vmem:[%s468 + $0x30] sm:$0xff]
      %v476 = vld [vmem:[%s468 + $0x38] sm:$0xff]
      %v478 = vsel %vm266, %v467, 0
      %480 = vmatpush.msra.mxu0 0.0
      %481 = vmatpush.msra.mxu0 0.0
      %482 = vmatpush.msra.mxu0 0.0
      %483 = vmatpush.msra.mxu0 0.0
      %484 = vmatpush.msra.mxu0 0.0
      %485 = vmatpush.msra.mxu0 0.0
      %486 = vmatpush.msra.mxu0 0.0
      %487 = vmatpush.msra.mxu0 0.0
      %488 = vmatpush.msra.mxu0 %v476
      %489 = vmatpush.msra.mxu0 %v475
      %490 = vmatpush.msra.mxu0 %v474
      %491 = vmatpush.msra.mxu0 %v473
      %492 = vmatpush.msra.mxu0 %v472
      %493 = vmatpush.msra.mxu0 %v471
      %494 = vmatpush.msra.mxu0 %v470
      %495 = vmatpush.msra.mxu0 %v469
      %496 = vmatmul.f32.gmra.mxu0 %v478
      %v497 = vpop.f32.mrf.mxu0
      %v498 = vadd.f32 0.0, %v497
      %499 = vdwg.mxu0
      %v500 = vadd.f32 %v463, %v498
      %v501 = vld [vmem:[%s466 + $0x1] sm:$0xf]
      %s502 = scalar_lea.vmem %s1, 448
      %v503 = vld [vmem:[%s502] sm:$0xff]
      %v504 = vld [vmem:[%s502 + $0x8] sm:$0xff]
      %v505 = vld [vmem:[%s502 + $0x10] sm:$0xff]
      %v506 = vld [vmem:[%s502 + $0x18] sm:$0xff]
      %v507 = vld [vmem:[%s502 + $0x20] sm:$0xff]
      %v508 = vld [vmem:[%s502 + $0x28] sm:$0xff]
      %v509 = vld [vmem:[%s502 + $0x30] sm:$0xff]
      %v510 = vld [vmem:[%s502 + $0x38] sm:$0xff]
      %v512 = vsel %vm266, %v501, 0
      %514 = vmatpush.msra.mxu0 0.0
      %515 = vmatpush.msra.mxu0 0.0
      %516 = vmatpush.msra.mxu0 0.0
      %517 = vmatpush.msra.mxu0 0.0
      %518 = vmatpush.msra.mxu0 0.0
      %519 = vmatpush.msra.mxu0 0.0
      %520 = vmatpush.msra.mxu0 0.0
      %521 = vmatpush.msra.mxu0 0.0
      %522 = vmatpush.msra.mxu0 %v510
      %523 = vmatpush.msra.mxu0 %v509
      %524 = vmatpush.msra.mxu0 %v508
      %525 = vmatpush.msra.mxu0 %v507
      %526 = vmatpush.msra.mxu0 %v506
      %527 = vmatpush.msra.mxu0 %v505
      %528 = vmatpush.msra.mxu0 %v504
      %529 = vmatpush.msra.mxu0 %v503
      %530 = vmatmul.f32.gmra.mxu0 %v512
      %v531 = vpop.f32.mrf.mxu0
      %v532 = vadd.f32 0.0, %v531
      %533 = vdwg.mxu0
      %v534 = vadd.f32 %v500, %v532
      %v535 = vld [vmem:[%s466 + $0x2] sm:$0xf]
      %s536 = scalar_lea.vmem %s1, 512
      %v537 = vld [vmem:[%s536] sm:$0xff]
      %v538 = vld [vmem:[%s536 + $0x8] sm:$0xff]
      %v539 = vld [vmem:[%s536 + $0x10] sm:$0xff]
      %v540 = vld [vmem:[%s536 + $0x18] sm:$0xff]
      %v541 = vld [vmem:[%s536 + $0x20] sm:$0xff]
      %v542 = vld [vmem:[%s536 + $0x28] sm:$0xff]
      %v543 = vld [vmem:[%s536 + $0x30] sm:$0xff]
      %v544 = vld [vmem:[%s536 + $0x38] sm:$0xff]
      %v546 = vsel %vm266, %v535, 0
      %548 = vmatpush.msra.mxu0 0.0
      %549 = vmatpush.msra.mxu0 0.0
      %550 = vmatpush.msra.mxu0 0.0
      %551 = vmatpush.msra.mxu0 0.0
      %552 = vmatpush.msra.mxu0 0.0
      %553 = vmatpush.msra.mxu0 0.0
      %554 = vmatpush.msra.mxu0 0.0
      %555 = vmatpush.msra.mxu0 0.0
      %556 = vmatpush.msra.mxu0 %v544
      %557 = vmatpush.msra.mxu0 %v543
      %558 = vmatpush.msra.mxu0 %v542
      %559 = vmatpush.msra.mxu0 %v541
      %560 = vmatpush.msra.mxu0 %v540
      %561 = vmatpush.msra.mxu0 %v539
      %562 = vmatpush.msra.mxu0 %v538
      %563 = vmatpush.msra.mxu0 %v537
      %564 = vmatmul.f32.gmra.mxu0 %v546
      %v565 = vpop.f32.mrf.mxu0
      %v566 = vadd.f32 0.0, %v565
      %567 = vdwg.mxu0
      %v568 = vadd.f32 %v534, %v566
      %vm569 = vcmask 519168
      %570 = vst.msk [vmem:[%s248] sm:$0xf] %vm569, %v568
      %p571 = scmp.lt.s32.totalorder %s19, 1
      %s572 = scalar_select %p571, %s19, 1
      %p573 = scmp.lt.s32.totalorder %s20, 3
      %s574 = scalar_select %p573, %s20, 3
      %s575 = smul.addr %s572, 4
      %s576 = sadd.s32 %s574, %s575
      %s577 = smul.addr %s576, 4
      %s578 = scalar_lea.vmem %s4, %s577
      // Predicated region
      $region37: #{wrn_forward.74} parent=35 // pred_check
        %p579 = pneg %p143
      $region38: #{wrn_forward.74} parent=35 // pred_check_branch
        %581 = sbr.rel (%p579) target = $region40
      $region39: #{wrn_forward.74} parent=35 // pred_region
        _
      $region40: #{wrn_forward.74} parent=35 // pred_fallthru
        _
    $region36: #{wrn_forward.74} parent=5 // pred_fallthru
      _
    %p582 = scmp.le.s32.totalorder 2, %s10
    // Predicated region
    $region41: #{wrn_forward.74} parent=5 // pred_check
      %p583 = pneg %p582
    $region42: #{wrn_forward.74} parent=5 // pred_check_branch
      %585 = sbr.rel (%p583) target = $region44
    $region43: #{wrn_forward.74} parent=5 // pred_region
      %s586 = ssub.s32 %s10, 2
      // Predicated region
      $region45: #{wrn_forward.74} parent=43 // pred_check
        %p587 = pneg %p149
      $region46: #{wrn_forward.74} parent=43 // pred_check_branch
        %589 = sbr.rel (%p587) target = $region48
      $region47: #{wrn_forward.74} parent=43 // pred_region
        %p590 = scmp.lt.s32.totalorder %s21, 1
        %s591 = scalar_select %p590, %s21, 1
        %p592 = scmp.lt.s32.totalorder %s22, 3
        %s593 = scalar_select %p592, %s22, 3
        %s594 = smul.addr %s591, 4
        %s595 = sadd.s32 %s593, %s594
        %s596 = smul.addr %s595, 4
        %s597 = scalar_lea.vmem %s4, %s596
      $region48: #{wrn_forward.74} parent=43 // pred_fallthru
        _
    $region44: #{wrn_forward.74} parent=5 // pred_fallthru
      _
  $region6: #{wrn_forward.74} parent=0 // loop_footer
    %s14 = sadd.s32 1, %s10
  $region7: #{wrn_forward.74} parent=0 // loop_footer_branch
    %9 = sbr.rel target = $region3
  $region8: #{wrn_forward.74} parent=0 // loop_exit
    _

// kernel: wrn_forward.82
$region0: #{wrn_forward.82}
  #allocation0 [shape = 'u32[]', space=smem, size = 0x4, offset = 0x4, fixed_abs, tag = 'smem constant byte address 0x4 - core index']
  #allocation1 [shape = 'u32[72,128]{1,0:T(1,128)}', space=vmem, size = 0x9000, scoped, tag = 'internal scratch']
  %s0 = inlined_call_operand.vmem [shape: f32[2,16,64], index: 0, kind: input, shape index: {}]
  %s1 = inlined_call_operand.vmem [shape: f32[1,64], index: 1, kind: input, shape index: {}]
  %s2 = inlined_call_operand.vmem [shape: f32[1,64], index: 2, kind: input, shape index: {}]
  %s3 = inlined_call_operand.vmem [shape: f32[2,1,64], index: 3, kind: output, shape index: {}]
  %s4 = sld [smem:[#allocation0]]
  $region45: #{wrn_forward.82} parent=0
    _
  %s6 = ssub.s32 1, %s4
  %s7 = scalar_select 0, %s6, %s4
  loop: start=0, step=1, limit=4
  $region2: #{wrn_forward.82} parent=0 // loop_pre_header
    _
  $region3: #{wrn_forward.82} parent=0 // loop_header
    %s9 = sphi 0, %s13
    %p10 = scmp.ge.s32.totalorder %s9, 4
    %s19 = sphi 0, %s21
    %s22 = sphi 0, %s19
    %s23 = sphi 0, %s22
    %s39 = sphi 0, %s23
    %s43 = sphi 0, %s43
    %s45 = sphi 0, %s43
    %s46 = sphi 0, %s45
    %s60 = sphi 0, %s46
    %s64 = sphi 0, %s64
    %s66 = sphi 0, %s64
    %s67 = sphi 0, %s66
    %s81 = sphi 0, %s67
    %s87 = sphi 0, %s89
    %s90 = sphi 0, %s87
    %s91 = sphi 0, %s90
    %s107 = sphi 0, %s91
  $region4: #{wrn_forward.82} parent=0 // loop_header_branch
    %12 = sbr.rel (%p10) target = $region8
  $region5: #{wrn_forward.82} parent=0 // loop_body
    %s14 = ssub.s32 %s9, 1
    %s15 = ssub.s32 %s9, 2
    %s16 = sadd.s32 %s9, 1
    %s17 = ssub.s32 %s9, %s16
    %p18 = scmp.eq.s32.totalorder %s17, 0
    %s20 = sadd.s32 %s19, 1
    %s21 = scalar_select %p18, %s19, %s20
    %p24 = pneg %p18
    %p25 = scmp.eq.s32.totalorder %s9, 1
    %p26 = por %p24, %p25
    %p27 = scmp.ne.s32.totalorder %s19, %s22
    %p28 = scmp.eq.s32.totalorder %s9, 0
    %p29 = por %p27, %p28
    %p30 = scmp.ne.s32.totalorder %s19, %s22
    %p31 = scmp.eq.s32.totalorder %s14, 1
    %p32 = por %p30, %p31
    %p33 = scmp.ne.s32.totalorder %s22, %s23
    %p34 = scmp.eq.s32.totalorder %s14, 0
    %p35 = por %p33, %p34
    %p36 = scmp.ne.s32.totalorder %s22, %s23
    %p37 = scmp.eq.s32.totalorder %s15, 1
    %p38 = por %p36, %p37
    %p40 = scmp.ne.s32.totalorder %s23, %s39
    %p41 = scmp.eq.s32.totalorder %s15, 0
    %p42 = por %p40, %p41
    %s44 = sadd.s32 %s43, 1
    %p47 = scmp.eq.s32.totalorder %s9, 1
    %p48 = scmp.ne.s32.totalorder %s43, %s45
    %p49 = scmp.eq.s32.totalorder %s9, 0
    %p50 = por %p48, %p49
    %p51 = scmp.ne.s32.totalorder %s43, %s45
    %p52 = scmp.eq.s32.totalorder %s14, 1
    %p53 = por %p51, %p52
    %p54 = scmp.ne.s32.totalorder %s45, %s46
    %p55 = scmp.eq.s32.totalorder %s14, 0
    %p56 = por %p54, %p55
    %p57 = scmp.ne.s32.totalorder %s45, %s46
    %p58 = scmp.eq.s32.totalorder %s15, 1
    %p59 = por %p57, %p58
    %p61 = scmp.ne.s32.totalorder %s46, %s60
    %p62 = scmp.eq.s32.totalorder %s15, 0
    %p63 = por %p61, %p62
    %s65 = sadd.s32 %s64, 1
    %p68 = scmp.eq.s32.totalorder %s9, 1
    %p69 = scmp.ne.s32.totalorder %s64, %s66
    %p70 = scmp.eq.s32.totalorder %s9, 0
    %p71 = por %p69, %p70
    %p72 = scmp.ne.s32.totalorder %s64, %s66
    %p73 = scmp.eq.s32.totalorder %s14, 1
    %p74 = por %p72, %p73
    %p75 = scmp.ne.s32.totalorder %s66, %s67
    %p76 = scmp.eq.s32.totalorder %s14, 0
    %p77 = por %p75, %p76
    %p78 = scmp.ne.s32.totalorder %s66, %s67
    %p79 = scmp.eq.s32.totalorder %s15, 1
    %p80 = por %p78, %p79
    %p82 = scmp.ne.s32.totalorder %s67, %s81
    %p83 = scmp.eq.s32.totalorder %s15, 0
    %p84 = por %p82, %p83
    %s85 = ssub.s32 %s9, %s16
    %p86 = scmp.eq.s32.totalorder %s85, 0
    %s88 = sadd.s32 %s87, 1
    %s89 = scalar_select %p86, %s87, %s88
    %p92 = pneg %p86
    %p93 = scmp.eq.s32.totalorder %s9, 1
    %p94 = por %p92, %p93
    %p95 = scmp.ne.s32.totalorder %s87, %s90
    %p96 = scmp.eq.s32.totalorder %s9, 0
    %p97 = por %p95, %p96
    %p98 = scmp.ne.s32.totalorder %s87, %s90
    %p99 = scmp.eq.s32.totalorder %s14, 1
    %p100 = por %p98, %p99
    %p101 = scmp.ne.s32.totalorder %s90, %s91
    %p102 = scmp.eq.s32.totalorder %s14, 0
    %p103 = por %p101, %p102
    %p104 = scmp.ne.s32.totalorder %s90, %s91
    %p105 = scmp.eq.s32.totalorder %s15, 1
    %p106 = por %p104, %p105
    %p108 = scmp.ne.s32.totalorder %s91, %s107
    %p109 = scmp.eq.s32.totalorder %s15, 0
    %p110 = por %p108, %p109
    %p111 = scmp.le.s32.totalorder 1, %s9
    %p112 = scmp.lt.s32.totalorder %s9, 3
    %p113 = pnand %p111, %p112
    %p114 = pneg %p113
    // Predicated region
    $region9: #{wrn_forward.82} parent=5 // pred_check
      _
    $region10: #{wrn_forward.82} parent=5 // pred_check_branch
      %116 = sbr.rel (%p113) target = $region12
    $region11: #{wrn_forward.82} parent=5 // pred_region
      %s117 = ssub.s32 %s9, 1
      // Predicated region
      $region13: #{wrn_forward.82} parent=11 // pred_check
        %p118 = pneg %p56
      $region14: #{wrn_forward.82} parent=11 // pred_check_branch
        %120 = sbr.rel (%p118) target = $region16
      $region15: #{wrn_forward.82} parent=11 // pred_region
        _
      $region16: #{wrn_forward.82} parent=11 // pred_fallthru
        _
      // Predicated region
      $region17: #{wrn_forward.82} parent=11 // pred_check
        %p121 = pneg %p77
      $region18: #{wrn_forward.82} parent=11 // pred_check_branch
        %123 = sbr.rel (%p121) target = $region20
      $region19: #{wrn_forward.82} parent=11 // pred_region
        _
      $region20: #{wrn_forward.82} parent=11 // pred_fallthru
        _
    $region12: #{wrn_forward.82} parent=5 // pred_fallthru
      _
    %p124 = scmp.lt.s32.totalorder %s9, 2
    // Predicated region
    $region21: #{wrn_forward.82} parent=5 // pred_check
      %p125 = pneg %p124
    $region22: #{wrn_forward.82} parent=5 // pred_check_branch
      %127 = sbr.rel (%p125) target = $region24
    $region23: #{wrn_forward.82} parent=5 // pred_region
      // Predicated region
      $region25: #{wrn_forward.82} parent=23 // pred_check
        %p128 = pneg %p29
      $region26: #{wrn_forward.82} parent=23 // pred_check_branch
        %130 = sbr.rel (%p128) target = $region28
      $region27: #{wrn_forward.82} parent=23 // pred_region
        %p131 = scmp.lt.s32.totalorder %s9, 1
        %s132 = scalar_select %p131, %s9, 1
        %s133 = smul.addr %s132, 2
        %s134 = smul.addr %s133, 8
        %s135 = scalar_lea.vmem %s0, %s134
      $region28: #{wrn_forward.82} parent=23 // pred_fallthru
        _
    $region24: #{wrn_forward.82} parent=5 // pred_fallthru
      _
    %p136 = scmp.le.s32.totalorder 1, %s9
    %p137 = scmp.lt.s32.totalorder %s9, 3
    %p138 = pnand %p136, %p137
    %p139 = pneg %p138
    // Predicated region
    $region29: #{wrn_forward.82} parent=5 // pred_check
      _
    $region30: #{wrn_forward.82} parent=5 // pred_check_branch
      %141 = sbr.rel (%p138) target = $region32
    $region31: #{wrn_forward.82} parent=5 // pred_region
      %s142 = ssub.s32 %s9, 1
      %p143 = scmp.lt.s32.totalorder %s14, 1
      %s144 = scalar_select %p143, %s14, 1
      %s145 = smul.addr %s144, 2
      %s146 = smul.addr %s145, 8
      %s147 = scalar_lea.vmem %s0, %s146
      %p148 = pneg %p35
      %p149 = pneg %p32
      %p150 = pneg %p56
      %p151 = pneg %p53
      %p152 = pneg %p77
      %p153 = pneg %p74
      %p154 = pneg %p103
      %p155 = pneg %p100
      %p156 = scmp.lt.s32.totalorder %s14, 1
      %s157 = scalar_select %p156, %s14, 1
      %s158 = scalar_lea.vmem %s3, %s157
      %p159 = scmp.lt.s32.totalorder %s14, 1
      %s160 = scalar_select %p159, %s14, 1
      %s161 = smul.addr %s160, 2
      %s162 = smul.addr %s161, 8
      %s163 = scalar_lea.vmem %s0, %s162
      %p164 = scmp.lt.s32.totalorder %s14, 1
      %s165 = scalar_select %p164, %s14, 1
      %s166 = scalar_lea.vmem %s3, %s165
      %v167 = vld [vmem:[%s163] sm:$0xff]
      %v168 = vld [vmem:[%s163 + $0x8] sm:$0xff]
      %v169 = vld [vmem:[%s1] sm:$0x1]
      %v171 = vperm.slane %v169, 0
      %v173 = vmul.f32 %v167, %v171
      %v174 = vmul.f32 %v168, %v171
      %v175 = vld [vmem:[%s2] sm:$0x1]
      %v177 = vperm.slane %v175, 0
      %v179 = vadd.f32 %v173, %v177
      %v180 = vadd.f32 %v174, %v177
      %vm181 = vcmp.ge.f32.partialorder %v179, 0.0
      %vm182 = vcmp.ge.f32.partialorder %v180, 0.0
      %v183 = vmul.f32 %v179, 0.1
      %v184 = vmul.f32 %v180, 0.1
      %v185 = vsel %vm181, %v179, %v183
      %v186 = vsel %vm182, %v180, %v184
      %vm187 = vcmask 523264
      %v188 = vsel %vm187, %v185, 0.0
      %v189 = vsel %vm187, %v186, 0.0
      %v190 = vadd.f32 %v188, %v189
      %v191 = vrot.slane %v190, 4
      %v192 = vadd.f32 %v190, %v191
      %v193 = vrot.slane %v192, 2
      %v194 = vadd.f32 %v192, %v193
      %v195 = vrot.slane %v194, 1
      %v196 = vadd.f32 %v194, %v195
      %v197 = vrcp.pop 16.0
      %v198 = vmul.f32 16.0, %v197
      %v199 = vsub.f32 1.0, %v198
      %v200 = vmul.f32 %v197, %v199
      %v201 = vadd.f32 %v197, %v200
      %vm202 = vweird.f32 %v197
      %v203 = vsel %vm202, %v197, %v201
      %v204 = vmul.f32 %v196, %v203
      %vm205 = vcmask 516096
      %206 = vst.msk [vmem:[%s166] sm:$0x1] %vm205, %v204
      %p207 = scmp.lt.s32.totalorder %s14, 1
      %s208 = scalar_select %p207, %s14, 1
      %s209 = scalar_lea.vmem %s3, %s208
      // Predicated region
      $region33: #{wrn_forward.82} parent=31 // pred_check
        %p210 = pneg %p100
      $region34: #{wrn_forward.82} parent=31 // pred_check_branch
        %212 = sbr.rel (%p210) target = $region36
      $region35: #{wrn_forward.82} parent=31 // pred_region
        _
      $region36: #{wrn_forward.82} parent=31 // pred_fallthru
        _
    $region32: #{wrn_forward.82} parent=5 // pred_fallthru
      _
    %p213 = scmp.le.s32.totalorder 2, %s9
    // Predicated region
    $region37: #{wrn_forward.82} parent=5 // pred_check
      %p214 = pneg %p213
    $region38: #{wrn_forward.82} parent=5 // pred_check_branch
      %216 = sbr.rel (%p214) target = $region40
    $region39: #{wrn_forward.82} parent=5 // pred_region
      %s217 = ssub.s32 %s9, 2
      // Predicated region
      $region41: #{wrn_forward.82} parent=39 // pred_check
        %p218 = pneg %p106
      $region42: #{wrn_forward.82} parent=39 // pred_check_branch
        %220 = sbr.rel (%p218) target = $region44
      $region43: #{wrn_forward.82} parent=39 // pred_region
        %p221 = scmp.lt.s32.totalorder %s15, 1
        %s222 = scalar_select %p221, %s15, 1
        %s223 = scalar_lea.vmem %s3, %s222
      $region44: #{wrn_forward.82} parent=39 // pred_fallthru
        _
    $region40: #{wrn_forward.82} parent=5 // pred_fallthru
      _
  $region6: #{wrn_forward.82} parent=0 // loop_footer
    %s13 = sadd.s32 1, %s9
  $region7: #{wrn_forward.82} parent=0 // loop_footer_branch
    %8 = sbr.rel target = $region3
  $region8: #{wrn_forward.82} parent=0 // loop_exit
    _

// kernel: wrn_forward.77
$region0: #{wrn_forward.77}
  #allocation0 [shape = 'u32[]', space=smem, size = 0x4, offset = 0x4, fixed_abs, tag = 'smem constant byte address 0x4 - core index']
  #allocation1 [shape = 'u32[72,128]{1,0:T(1,128)}', space=vmem, size = 0x9000, scoped, tag = 'internal scratch']
  %s0 = inlined_call_operand.vmem [shape: f32[2,6,1,6,64], index: 0, kind: input, shape index: {}]
  %s1 = inlined_call_operand.vmem [shape: f32[9,64,64], index: 1, kind: input, shape index: {}]
  %s2 = inlined_call_operand.vmem [shape: f32[1,64], index: 2, kind: input, shape index: {}]
  %s3 = inlined_call_operand.vmem [shape: f32[2,4,4,64], index: 3, kind: output, shape index: {}]
  %s4 = sld [smem:[#allocation0]]
  $region45: #{wrn_forward.77} parent=0
    _
  %s6 = ssub.s32 1, %s4
  %s7 = scalar_select 0, %s6, %s4
  loop: start=0, step=1, limit=10
  $region2: #{wrn_forward.77} parent=0 // loop_pre_header
    _
  $region3: #{wrn_forward.77} parent=0 // loop_header
    %s9 = sphi 0, %s13
    %p10 = scmp.ge.s32.totalorder %s9, 10
    %s16 = sphi 0, %s28
    %s17 = sphi 0, %s24
    %s18 = sphi 0, %s16
    %s19 = sphi 0, %s17
    %s20 = sphi 0, %s18
    %s21 = sphi 0, %s19
    %s31 = sphi 0, %s33
    %s34 = sphi 0, %s31
    %s35 = sphi 0, %s34
    %s51 = sphi 0, %s35
    %s55 = sphi 0, %s55
    %s57 = sphi 0, %s55
    %s58 = sphi 0, %s57
    %s72 = sphi 0, %s58
    %s76 = sphi 0, %s76
    %s78 = sphi 0, %s76
    %s79 = sphi 0, %s78
    %s93 = sphi 0, %s79
    %s101 = sphi 0, %s103
    %s104 = sphi 0, %s101
    %s105 = sphi 0, %s104
    %s121 = sphi 0, %s105
  $region4: #{wrn_forward.77} parent=0 // loop_header_branch
    %12 = sbr.rel (%p10) target = $region8
  $region5: #{wrn_forward.77} parent=0 // loop_body
    %s14 = ssub.s32 %s9, 1
    %s15 = ssub.s32 %s9, 2
    %s22 = sadd.s32 1, %s17
    %p23 = scmp.ge.s32.totalorder %s22, 4
    %s24 = scalar_select %p23, 0, %s22
    %s25 = sadd.s32 1, %s16
    %s26 = scalar_select %p23, %s25, %s16
    %p27 = scmp.ge.s32.totalorder %s26, 2
    %s28 = scalar_select %p27, 0, %s26
    %s29 = ssub.s32 %s16, %s28
    %p30 = scmp.eq.s32.totalorder %s29, 0
    %s32 = sadd.s32 %s31, 1
    %s33 = scalar_select %p30, %s31, %s32
    %p36 = pneg %p30
    %p37 = scmp.eq.s32.totalorder %s9, 7
    %p38 = por %p36, %p37
    %p39 = scmp.ne.s32.totalorder %s31, %s34
    %p40 = scmp.eq.s32.totalorder %s9, 0
    %p41 = por %p39, %p40
    %p42 = scmp.ne.s32.totalorder %s31, %s34
    %p43 = scmp.eq.s32.totalorder %s14, 7
    %p44 = por %p42, %p43
    %p45 = scmp.ne.s32.totalorder %s34, %s35
    %p46 = scmp.eq.s32.totalorder %s14, 0
    %p47 = por %p45, %p46
    %p48 = scmp.ne.s32.totalorder %s34, %s35
    %p49 = scmp.eq.s32.totalorder %s15, 7
    %p50 = por %p48, %p49
    %p52 = scmp.ne.s32.totalorder %s35, %s51
    %p53 = scmp.eq.s32.totalorder %s15, 0
    %p54 = por %p52, %p53
    %s56 = sadd.s32 %s55, 1
    %p59 = scmp.eq.s32.totalorder %s9, 7
    %p60 = scmp.ne.s32.totalorder %s55, %s57
    %p61 = scmp.eq.s32.totalorder %s9, 0
    %p62 = por %p60, %p61
    %p63 = scmp.ne.s32.totalorder %s55, %s57
    %p64 = scmp.eq.s32.totalorder %s14, 7
    %p65 = por %p63, %p64
    %p66 = scmp.ne.s32.totalorder %s57, %s58
    %p67 = scmp.eq.s32.totalorder %s14, 0
    %p68 = por %p66, %p67
    %p69 = scmp.ne.s32.totalorder %s57, %s58
    %p70 = scmp.eq.s32.totalorder %s15, 7
    %p71 = por %p69, %p70
    %p73 = scmp.ne.s32.totalorder %s58, %s72
    %p74 = scmp.eq.s32.totalorder %s15, 0
    %p75 = por %p73, %p74
    %s77 = sadd.s32 %s76, 1
    %p80 = scmp.eq.s32.totalorder %s9, 7
    %p81 = scmp.ne.s32.totalorder %s76, %s78
    %p82 = scmp.eq.s32.totalorder %s9, 0
    %p83 = por %p81, %p82
    %p84 = scmp.ne.s32.totalorder %s76, %s78
    %p85 = scmp.eq.s32.totalorder %s14, 7
    %p86 = por %p84, %p85
    %p87 = scmp.ne.s32.totalorder %s78, %s79
    %p88 = scmp.eq.s32.totalorder %s14, 0
    %p89 = por %p87, %p88
    %p90 = scmp.ne.s32.totalorder %s78, %s79
    %p91 = scmp.eq.s32.totalorder %s15, 7
    %p92 = por %p90, %p91
    %p94 = scmp.ne.s32.totalorder %s79, %s93
    %p95 = scmp.eq.s32.totalorder %s15, 0
    %p96 = por %p94, %p95
    %s97 = ssub.s32 %s16, %s28
    %s98 = ssub.s32 %s17, %s24
    %s99 = sor.u32 %s97, %s98
    %p100 = scmp.eq.s32.totalorder %s99, 0
    %s102 = sadd.s32 %s101, 1
    %s103 = scalar_select %p100, %s101, %s102
    %p106 = pneg %p100
    %p107 = scmp.eq.s32.totalorder %s9, 7
    %p108 = por %p106, %p107
    %p109 = scmp.ne.s32.totalorder %s101, %s104
    %p110 = scmp.eq.s32.totalorder %s9, 0
    %p111 = por %p109, %p110
    %p112 = scmp.ne.s32.totalorder %s101, %s104
    %p113 = scmp.eq.s32.totalorder %s14, 7
    %p114 = por %p112, %p113
    %p115 = scmp.ne.s32.totalorder %s104, %s105
    %p116 = scmp.eq.s32.totalorder %s14, 0
    %p117 = por %p115, %p116
    %p118 = scmp.ne.s32.totalorder %s104, %s105
    %p119 = scmp.eq.s32.totalorder %s15, 7
    %p120 = por %p118, %p119
    %p122 = scmp.ne.s32.totalorder %s105, %s121
    %p123 = scmp.eq.s32.totalorder %s15, 0
    %p124 = por %p122, %p123
    %p125 = scmp.le.s32.totalorder 1, %s9
    %p126 = scmp.lt.s32.totalorder %s9, 9
    %p127 = pnand %p125, %p126
    %p128 = pneg %p127
    // Predicated region
    $region9: #{wrn_forward.77} parent=5 // pred_check
      _
    $region10: #{wrn_forward.77} parent=5 // pred_check_branch
      %130 = sbr.rel (%p127) target = $region12
    $region11: #{wrn_forward.77} parent=5 // pred_region
      %s131 = ssub.s32 %s9, 1
      // Predicated region
      $region13: #{wrn_forward.77} parent=11 // pred_check
        %p132 = pneg %p68
      $region14: #{wrn_forward.77} parent=11 // pred_check_branch
        %134 = sbr.rel (%p132) target = $region16
      $region15: #{wrn_forward.77} parent=11 // pred_region
        _
      $region16: #{wrn_forward.77} parent=11 // pred_fallthru
        _
      // Predicated region
      $region17: #{wrn_forward.77} parent=11 // pred_check
        %p135 = pneg %p89
      $region18: #{wrn_forward.77} parent=11 // pred_check_branch
        %137 = sbr.rel (%p135) target = $region20
      $region19: #{wrn_forward.77} parent=11 // pred_region
        _
      $region20: #{wrn_forward.77} parent=11 // pred_fallthru
        _
    $region12: #{wrn_forward.77} parent=5 // pred_fallthru
      _
    %p138 = scmp.lt.s32.totalorder %s9, 8
    // Predicated region
    $region21: #{wrn_forward.77} parent=5 // pred_check
      %p139 = pneg %p138
    $region22: #{wrn_forward.77} parent=5 // pred_check_branch
      %141 = sbr.rel (%p139) target = $region24
    $region23: #{wrn_forward.77} parent=5 // pred_region
      // Predicated region
      $region25: #{wrn_forward.77} parent=23 // pred_check
        %p142 = pneg %p41
      $region26: #{wrn_forward.77} parent=23 // pred_check_branch
        %144 = sbr.rel (%p142) target = $region28
      $region27: #{wrn_forward.77} parent=23 // pred_region
        %p145 = scmp.lt.s32.totalorder %s16, 1
        %s146 = scalar_select %p145, %s16, 1
        %s147 = smul.addr %s146, 6
        %s148 = smul.addr %s147, 8
        %s149 = scalar_lea.vmem %s0, %s148
      $region28: #{wrn_forward.77} parent=23 // pred_fallthru
        _
    $region24: #{wrn_forward.77} parent=5 // pred_fallthru
      _
    %p150 = scmp.le.s32.totalorder 1, %s9
    %p151 = scmp.lt.s32.totalorder %s9, 9
    %p152 = pnand %p150, %p151
    %p153 = pneg %p152
    // Predicated region
    $region29: #{wrn_forward.77} parent=5 // pred_check
      _
    $region30: #{wrn_forward.77} parent=5 // pred_check_branch
      %155 = sbr.rel (%p152) target = $region32
    $region31: #{wrn_forward.77} parent=5 // pred_region
      %s156 = ssub.s32 %s9, 1
      %p157 = scmp.lt.s32.totalorder %s18, 1
      %s158 = scalar_select %p157, %s18, 1
      %s159 = smul.addr %s158, 6
      %s160 = smul.addr %s159, 8
      %s161 = scalar_lea.vmem %s0, %s160
      %p162 = pneg %p47
      %p163 = pneg %p44
      %p164 = pneg %p68
      %p165 = pneg %p65
      %p166 = pneg %p89
      %p167 = pneg %p86
      %p168 = pneg %p117
      %p169 = pneg %p114
      %p170 = scmp.lt.s32.totalorder %s18, 1
      %s171 = scalar_select %p170, %s18, 1
      %p172 = scmp.lt.s32.totalorder %s19, 3
      %s173 = scalar_select %p172, %s19, 3
      %s174 = smul.addr %s171, 4
      %s175 = sadd.s32 %s173, %s174
      %s176 = smul.addr %s175, 4
      %s177 = scalar_lea.vmem %s3, %s176
      %p178 = scmp.lt.s32.totalorder %s18, 1
      %s179 = scalar_select %p178, %s18, 1
      %s180 = smul.addr %s179, 6
      %s181 = smul.addr %s180, 8
      %s182 = scalar_lea.vmem %s0, %s181
      %p183 = scmp.lt.s32.totalorder %s18, 1
      %s184 = scalar_select %p183, %s18, 1
      %p185 = scmp.lt.s32.totalorder %s19, 3
      %s186 = scalar_select %p185, %s19, 3
      %s187 = smul.addr %s184, 4
      %s188 = sadd.s32 %s186, %s187
      %s189 = smul.addr %s188, 4
      %s190 = scalar_lea.vmem %s3, %s189
      %v191 = vld [vmem:[%s2] sm:$0x1]
      %v193 = vperm.slane %v191, 0
      %s195 = smul.u32 %s19, 8
      %s196 = scalar_lea.vmem %s182, %s195
      %v197 = vld [vmem:[%s196] sm:$0xf]
      %v198 = vld [vmem:[%s1] sm:$0xff]
      %v199 = vld [vmem:[%s1 + $0x8] sm:$0xff]
      %v200 = vld [vmem:[%s1 + $0x10] sm:$0xff]
      %v201 = vld [vmem:[%s1 + $0x18] sm:$0xff]
      %v202 = vld [vmem:[%s1 + $0x20] sm:$0xff]
      %v203 = vld [vmem:[%s1 + $0x28] sm:$0xff]
      %v204 = vld [vmem:[%s1 + $0x30] sm:$0xff]
      %v205 = vld [vmem:[%s1 + $0x38] sm:$0xff]
      %vm206 = vcmask 523264
      %v208 = vsel %vm206, %v197, 0
      %210 = vmatpush.msra.mxu0 0.0
      %211 = vmatpush.msra.mxu0 0.0
      %212 = vmatpush.msra.mxu0 0.0
      %213 = vmatpush.msra.mxu0 0.0
      %214 = vmatpush.msra.mxu0 0.0
      %215 = vmatpush.msra.mxu0 0.0
      %216 = vmatpush.msra.mxu0 0.0
      %217 = vmatpush.msra.mxu0 0.0
      %218 = vmatpush.msra.mxu0 %v205
      %219 = vmatpush.msra.mxu0 %v204
      %220 = vmatpush.msra.mxu0 %v203
      %221 = vmatpush.msra.mxu0 %v202
      %222 = vmatpush.msra.mxu0 %v201
      %223 = vmatpush.msra.mxu0 %v200
      %224 = vmatpush.msra.mxu0 %v199
      %225 = vmatpush.msra.mxu0 %v198
      %226 = vmatmul.f32.gmra.mxu0 %v208
      %v227 = vpop.f32.mrf.mxu0
      %v228 = vadd.f32 0.0, %v227
      %229 = vdwg.mxu0
      %v230 = vadd.f32 %v193, %v228
      %v231 = vld [vmem:[%s196 + $0x1] sm:$0xf]
      %s232 = scalar_lea.vmem %s1, 64
      %v233 = vld [vmem:[%s232] sm:$0xff]
      %v234 = vld [vmem:[%s232 + $0x8] sm:$0xff]
      %v235 = vld [vmem:[%s232 + $0x10] sm:$0xff]
      %v236 = vld [vmem:[%s232 + $0x18] sm:$0xff]
      %v237 = vld [vmem:[%s232 + $0x20] sm:$0xff]
      %v238 = vld [vmem:[%s232 + $0x28] sm:$0xff]
      %v239 = vld [vmem:[%s232 + $0x30] sm:$0xff]
      %v240 = vld [vmem:[%s232 + $0x38] sm:$0xff]
      %v242 = vsel %vm206, %v231, 0
      %244 = vmatpush.msra.mxu0 0.0
      %245 = vmatpush.msra.mxu0 0.0
      %246 = vmatpush.msra.mxu0 0.0
      %247 = vmatpush.msra.mxu0 0.0
      %248 = vmatpush.msra.mxu0 0.0
      %249 = vmatpush.msra.mxu0 0.0
      %250 = vmatpush.msra.mxu0 0.0
      %251 = vmatpush.msra.mxu0 0.0
      %252 = vmatpush.msra.mxu0 %v240
      %253 = vmatpush.msra.mxu0 %v239
      %254 = vmatpush.msra.mxu0 %v238
      %255 = vmatpush.msra.mxu0 %v237
      %256 = vmatpush.msra.mxu0 %v236
      %257 = vmatpush.msra.mxu0 %v235
      %258 = vmatpush.msra.mxu0 %v234
      %259 = vmatpush.msra.mxu0 %v233
      %260 = vmatmul.f32.gmra.mxu0 %v242
      %v261 = vpop.f32.mrf.mxu0
      %v262 = vadd.f32 0.0, %v261
      %263 = vdwg.mxu0
      %v264 = vadd.f32 %v230, %v262
      %v265 = vld [vmem:[%s196 + $0x2] sm:$0xf]
      %s266 = scalar_lea.vmem %s1, 128
      %v267 = vld [vmem:[%s266] sm:$0xff]
      %v268 = vld [vmem:[%s266 + $0x8] sm:$0xff]
      %v269 = vld [vmem:[%s266 + $0x10] sm:$0xff]
      %v270 = vld [vmem:[%s266 + $0x18] sm:$0xff]
      %v271 = vld [vmem:[%s266 + $0x20] sm:$0xff]
      %v272 = vld [vmem:[%s266 + $0x28] sm:$0xff]
      %v273 = vld [vmem:[%s266 + $0x30] sm:$0xff]
      %v274 = vld [vmem:[%s266 + $0x38] sm:$0xff]
      %v276 = vsel %vm206, %v265, 0
      %278 = vmatpush.msra.mxu0 0.0
      %279 = vmatpush.msra.mxu0 0.0
      %280 = vmatpush.msra.mxu0 0.0
      %281 = vmatpush.msra.mxu0 0.0
      %282 = vmatpush.msra.mxu0 0.0
      %283 = vmatpush.msra.mxu0 0.0
      %284 = vmatpush.msra.mxu0 0.0
      %285 = vmatpush.msra.mxu0 0.0
      %286 = vmatpush.msra.mxu0 %v274
      %287 = vmatpush.msra.mxu0 %v273
      %288 = vmatpush.msra.mxu0 %v272
      %289 = vmatpush.msra.mxu0 %v271
      %290 = vmatpush.msra.mxu0 %v270
      %291 = vmatpush.msra.mxu0 %v269
      %292 = vmatpush.msra.mxu0 %v268
      %293 = vmatpush.msra.mxu0 %v267
      %294 = vmatmul.f32.gmra.mxu0 %v276
      %v295 = vpop.f32.mrf.mxu0
      %v296 = vadd.f32 0.0, %v295
      %297 = vdwg.mxu0
      %v298 = vadd.f32 %v264, %v296
      %s299 = sadd.s32 %s19, 1
      %s300 = smul.u32 %s299, 8
      %s301 = scalar_lea.vmem %s182, %s300
      %v302 = vld [vmem:[%s301] sm:$0xf]
      %s303 = scalar_lea.vmem %s1, 192
      %v304 = vld [vmem:[%s303] sm:$0xff]
      %v305 = vld [vmem:[%s303 + $0x8] sm:$0xff]
      %v306 = vld [vmem:[%s303 + $0x10] sm:$0xff]
      %v307 = vld [vmem:[%s303 + $0x18] sm:$0xff]
      %v308 = vld [vmem:[%s303 + $0x20] sm:$0xff]
      %v309 = vld [vmem:[%s303 + $0x28] sm:$0xff]
      %v310 = vld [vmem:[%s303 + $0x30] sm:$0xff]
      %v311 = vld [vmem:[%s303 + $0x38] sm:$0xff]
      %v313 = vsel %vm206, %v302, 0
      %315 = vmatpush.msra.mxu0 0.0
      %316 = vmatpush.msra.mxu0 0.0
      %317 = vmatpush.msra.mxu0 0.0
      %318 = vmatpush.msra.mxu0 0.0
      %319 = vmatpush.msra.mxu0 0.0
      %320 = vmatpush.msra.mxu0 0.0
      %321 = vmatpush.msra.mxu0 0.0
      %322 = vmatpush.msra.mxu0 0.0
      %323 = vmatpush.msra.mxu0 %v311
      %324 = vmatpush.msra.mxu0 %v310
      %325 = vmatpush.msra.mxu0 %v309
      %326 = vmatpush.msra.mxu0 %v308
      %327 = vmatpush.msra.mxu0 %v307
      %328 = vmatpush.msra.mxu0 %v306
      %329 = vmatpush.msra.mxu0 %v305
      %330 = vmatpush.msra.mxu0 %v304
      %331 = vmatmul.f32.gmra.mxu0 %v313
      %v332 = vpop.f32.mrf.mxu0
      %v333 = vadd.f32 0.0, %v332
      %334 = vdwg.mxu0
      %v335 = vadd.f32 %v298, %v333
      %v336 = vld [vmem:[%s301 + $0x1] sm:$0xf]
      %s337 = scalar_lea.vmem %s1, 256
      %v338 = vld [vmem:[%s337] sm:$0xff]
      %v339 = vld [vmem:[%s337 + $0x8] sm:$0xff]
      %v340 = vld [vmem:[%s337 + $0x10] sm:$0xff]
      %v341 = vld [vmem:[%s337 + $0x18] sm:$0xff]
      %v342 = vld [vmem:[%s337 + $0x20] sm:$0xff]
      %v343 = vld [vmem:[%s337 + $0x28] sm:$0xff]
      %v344 = vld [vmem:[%s337 + $0x30] sm:$0xff]
      %v345 = vld [vmem:[%s337 + $0x38] sm:$0xff]
      %v347 = vsel %vm206, %v336, 0
      %349 = vmatpush.msra.mxu0 0.0
      %350 = vmatpush.msra.mxu0 0.0
      %351 = vmatpush.msra.mxu0 0.0
      %352 = vmatpush.msra.mxu0 0.0
      %353 = vmatpush.msra.mxu0 0.0
      %354 = vmatpush.msra.mxu0 0.0
      %355 = vmatpush.msra.mxu0 0.0
      %356 = vmatpush.msra.mxu0 0.0
      %357 = vmatpush.msra.mxu0 %v345
      %358 = vmatpush.msra.mxu0 %v344
      %359 = vmatpush.msra.mxu0 %v343
      %360 = vmatpush.msra.mxu0 %v342
      %361 = vmatpush.msra.mxu0 %v341
      %362 = vmatpush.msra.mxu0 %v340
      %363 = vmatpush.msra.mxu0 %v339
      %364 = vmatpush.msra.mxu0 %v338
      %365 = vmatmul.f32.gmra.mxu0 %v347
      %v366 = vpop.f32.mrf.mxu0
      %v367 = vadd.f32 0.0, %v366
      %368 = vdwg.mxu0
      %v369 = vadd.f32 %v335, %v367
      %v370 = vld [vmem:[%s301 + $0x2] sm:$0xf]
      %s371 = scalar_lea.vmem %s1, 320
      %v372 = vld [vmem:[%s371] sm:$0xff]
      %v373 = vld [vmem:[%s371 + $0x8] sm:$0xff]
      %v374 = vld [vmem:[%s371 + $0x10] sm:$0xff]
      %v375 = vld [vmem:[%s371 + $0x18] sm:$0xff]
      %v376 = vld [vmem:[%s371 + $0x20] sm:$0xff]
      %v377 = vld [vmem:[%s371 + $0x28] sm:$0xff]
      %v378 = vld [vmem:[%s371 + $0x30] sm:$0xff]
      %v379 = vld [vmem:[%s371 + $0x38] sm:$0xff]
      %v381 = vsel %vm206, %v370, 0
      %383 = vmatpush.msra.mxu0 0.0
      %384 = vmatpush.msra.mxu0 0.0
      %385 = vmatpush.msra.mxu0 0.0
      %386 = vmatpush.msra.mxu0 0.0
      %387 = vmatpush.msra.mxu0 0.0
      %388 = vmatpush.msra.mxu0 0.0
      %389 = vmatpush.msra.mxu0 0.0
      %390 = vmatpush.msra.mxu0 0.0
      %391 = vmatpush.msra.mxu0 %v379
      %392 = vmatpush.msra.mxu0 %v378
      %393 = vmatpush.msra.mxu0 %v377
      %394 = vmatpush.msra.mxu0 %v376
      %395 = vmatpush.msra.mxu0 %v375
      %396 = vmatpush.msra.mxu0 %v374
      %397 = vmatpush.msra.mxu0 %v373
      %398 = vmatpush.msra.mxu0 %v372
      %399 = vmatmul.f32.gmra.mxu0 %v381
      %v400 = vpop.f32.mrf.mxu0
      %v401 = vadd.f32 0.0, %v400
      %402 = vdwg.mxu0
      %v403 = vadd.f32 %v369, %v401
      %s404 = sadd.s32 %s19, 2
      %s405 = smul.u32 %s404, 8
      %s406 = scalar_lea.vmem %s182, %s405
      %v407 = vld [vmem:[%s406] sm:$0xf]
      %s408 = scalar_lea.vmem %s1, 384
      %v409 = vld [vmem:[%s408] sm:$0xff]
      %v410 = vld [vmem:[%s408 + $0x8] sm:$0xff]
      %v411 = vld [vmem:[%s408 + $0x10] sm:$0xff]
      %v412 = vld [vmem:[%s408 + $0x18] sm:$0xff]
      %v413 = vld [vmem:[%s408 + $0x20] sm:$0xff]
      %v414 = vld [vmem:[%s408 + $0x28] sm:$0xff]
      %v415 = vld [vmem:[%s408 + $0x30] sm:$0xff]
      %v416 = vld [vmem:[%s408 + $0x38] sm:$0xff]
      %v418 = vsel %vm206, %v407, 0
      %420 = vmatpush.msra.mxu0 0.0
      %421 = vmatpush.msra.mxu0 0.0
      %422 = vmatpush.msra.mxu0 0.0
      %423 = vmatpush.msra.mxu0 0.0
      %424 = vmatpush.msra.mxu0 0.0
      %425 = vmatpush.msra.mxu0 0.0
      %426 = vmatpush.msra.mxu0 0.0
      %427 = vmatpush.msra.mxu0 0.0
      %428 = vmatpush.msra.mxu0 %v416
      %429 = vmatpush.msra.mxu0 %v415
      %430 = vmatpush.msra.mxu0 %v414
      %431 = vmatpush.msra.mxu0 %v413
      %432 = vmatpush.msra.mxu0 %v412
      %433 = vmatpush.msra.mxu0 %v411
      %434 = vmatpush.msra.mxu0 %v410
      %435 = vmatpush.msra.mxu0 %v409
      %436 = vmatmul.f32.gmra.mxu0 %v418
      %v437 = vpop.f32.mrf.mxu0
      %v438 = vadd.f32 0.0, %v437
      %439 = vdwg.mxu0
      %v440 = vadd.f32 %v403, %v438
      %v441 = vld [vmem:[%s406 + $0x1] sm:$0xf]
      %s442 = scalar_lea.vmem %s1, 448
      %v443 = vld [vmem:[%s442] sm:$0xff]
      %v444 = vld [vmem:[%s442 + $0x8] sm:$0xff]
      %v445 = vld [vmem:[%s442 + $0x10] sm:$0xff]
      %v446 = vld [vmem:[%s442 + $0x18] sm:$0xff]
      %v447 = vld [vmem:[%s442 + $0x20] sm:$0xff]
      %v448 = vld [vmem:[%s442 + $0x28] sm:$0xff]
      %v449 = vld [vmem:[%s442 + $0x30] sm:$0xff]
      %v450 = vld [vmem:[%s442 + $0x38] sm:$0xff]
      %v452 = vsel %vm206, %v441, 0
      %454 = vmatpush.msra.mxu0 0.0
      %455 = vmatpush.msra.mxu0 0.0
      %456 = vmatpush.msra.mxu0 0.0
      %457 = vmatpush.msra.mxu0 0.0
      %458 = vmatpush.msra.mxu0 0.0
      %459 = vmatpush.msra.mxu0 0.0
      %460 = vmatpush.msra.mxu0 0.0
      %461 = vmatpush.msra.mxu0 0.0
      %462 = vmatpush.msra.mxu0 %v450
      %463 = vmatpush.msra.mxu0 %v449
      %464 = vmatpush.msra.mxu0 %v448
      %465 = vmatpush.msra.mxu0 %v447
      %466 = vmatpush.msra.mxu0 %v446
      %467 = vmatpush.msra.mxu0 %v445
      %468 = vmatpush.msra.mxu0 %v444
      %469 = vmatpush.msra.mxu0 %v443
      %470 = vmatmul.f32.gmra.mxu0 %v452
      %v471 = vpop.f32.mrf.mxu0
      %v472 = vadd.f32 0.0, %v471
      %473 = vdwg.mxu0
      %v474 = vadd.f32 %v440, %v472
      %v475 = vld [vmem:[%s406 + $0x2] sm:$0xf]
      %s476 = scalar_lea.vmem %s1, 512
      %v477 = vld [vmem:[%s476] sm:$0xff]
      %v478 = vld [vmem:[%s476 + $0x8] sm:$0xff]
      %v479 = vld [vmem:[%s476 + $0x10] sm:$0xff]
      %v480 = vld [vmem:[%s476 + $0x18] sm:$0xff]
      %v481 = vld [vmem:[%s476 + $0x20] sm:$0xff]
      %v482 = vld [vmem:[%s476 + $0x28] sm:$0xff]
      %v483 = vld [vmem:[%s476 + $0x30] sm:$0xff]
      %v484 = vld [vmem:[%s476 + $0x38] sm:$0xff]
      %v486 = vsel %vm206, %v475, 0
      %488 = vmatpush.msra.mxu0 0.0
      %489 = vmatpush.msra.mxu0 0.0
      %490 = vmatpush.msra.mxu0 0.0
      %491 = vmatpush.msra.mxu0 0.0
      %492 = vmatpush.msra.mxu0 0.0
      %493 = vmatpush.msra.mxu0 0.0
      %494 = vmatpush.msra.mxu0 0.0
      %495 = vmatpush.msra.mxu0 0.0
      %496 = vmatpush.msra.mxu0 %v484
      %497 = vmatpush.msra.mxu0 %v483
      %498 = vmatpush.msra.mxu0 %v482
      %499 = vmatpush.msra.mxu0 %v481
      %500 = vmatpush.msra.mxu0 %v480
      %501 = vmatpush.msra.mxu0 %v479
      %502 = vmatpush.msra.mxu0 %v478
      %503 = vmatpush.msra.mxu0 %v477
      %504 = vmatmul.f32.gmra.mxu0 %v486
      %v505 = vpop.f32.mrf.mxu0
      %v506 = vadd.f32 0.0, %v505
      %507 = vdwg.mxu0
      %v508 = vadd.f32 %v474, %v506
      %vm509 = vcmask 519168
      %510 = vst.msk [vmem:[%s190] sm:$0xf] %vm509, %v508
      %p511 = scmp.lt.s32.totalorder %s18, 1
      %s512 = scalar_select %p511, %s18, 1
      %p513 = scmp.lt.s32.totalorder %s19, 3
      %s514 = scalar_select %p513, %s19, 3
      %s515 = smul.addr %s512, 4
      %s516 = sadd.s32 %s514, %s515
      %s517 = smul.addr %s516, 4
      %s518 = scalar_lea.vmem %s3, %s517
      // Predicated region
      $region33: #{wrn_forward.77} parent=31 // pred_check
        %p519 = pneg %p114
      $region34: #{wrn_forward.77} parent=31 // pred_check_branch
        %521 = sbr.rel (%p519) target = $region36
      $region35: #{wrn_forward.77} parent=31 // pred_region
        _
      $region36: #{wrn_forward.77} parent=31 // pred_fallthru
        _
    $region32: #{wrn_forward.77} parent=5 // pred_fallthru
      _
    %p522 = scmp.le.s32.totalorder 2, %s9
    // Predicated region
    $region37: #{wrn_forward.77} parent=5 // pred_check
      %p523 = pneg %p522
    $region38: #{wrn_forward.77} parent=5 // pred_check_branch
      %525 = sbr.rel (%p523) target = $region40
    $region39: #{wrn_forward.77} parent=5 // pred_region
      %s526 = ssub.s32 %s9, 2
      // Predicated region
      $region41: #{wrn_forward.77} parent=39 // pred_check
        %p527 = pneg %p120
      $region42: #{wrn_forward.77} parent=39 // pred_check_branch
        %529 = sbr.rel (%p527) target = $region44
      $region43: #{wrn_forward.77} parent=39 // pred_region
        %p530 = scmp.lt.s32.totalorder %s20, 1
        %s531 = scalar_select %p530, %s20, 1
        %p532 = scmp.lt.s32.totalorder %s21, 3
        %s533 = scalar_select %p532, %s21, 3
        %s534 = smul.addr %s531, 4
        %s535 = sadd.s32 %s533, %s534
        %s536 = smul.addr %s535, 4
        %s537 = scalar_lea.vmem %s3, %s536
      $region44: #{wrn_forward.77} parent=39 // pred_fallthru
        _
    $region40: #{wrn_forward.77} parent=5 // pred_fallthru
      _
  $region6: #{wrn_forward.77} parent=0 // loop_footer
    %s13 = sadd.s32 1, %s9
  $region7: #{wrn_forward.77} parent=0 // loop_footer_branch
    %8 = sbr.rel target = $region3
  $region8: #{wrn_forward.77} parent=0 // loop_exit
    _

// kernel: wrn_forward.83
$region0: #{wrn_forward.83}
  #allocation0 [shape = 'u32[]', space=smem, size = 0x4, offset = 0x4, fixed_abs, tag = 'smem constant byte address 0x4 - core index']
  #allocation1 [shape = 'u32[72,128]{1,0:T(1,128)}', space=vmem, size = 0x9000, scoped, tag = 'internal scratch']
  %s0 = inlined_call_operand.vmem [shape: f32[8,64], index: 0, kind: input, shape index: {}]
  %s1 = inlined_call_operand.vmem [shape: f32[64,128], index: 1, kind: input, shape index: {}]
  %s2 = inlined_call_operand.vmem [shape: f32[1,128], index: 2, kind: input, shape index: {}]
  %s3 = inlined_call_operand.vmem [shape: f32[8,128], index: 3, kind: output, shape index: {}]
  %s4 = sld [smem:[#allocation0]]
  $region22: #{wrn_forward.83} parent=0
    _
  %s6 = ssub.s32 1, %s4
  %s7 = scalar_select 0, %s6, %s4
  // Predicated region
  $region2: #{wrn_forward.83} parent=0 // pred_check
    _
  $region3: #{wrn_forward.83} parent=0 // pred_check_branch
    %9 = sbr.rel (0) target = $region5
  $region4: #{wrn_forward.83} parent=0 // pred_region
    _
  $region5: #{wrn_forward.83} parent=0 // pred_fallthru
    _
  // Predicated region
  $region6: #{wrn_forward.83} parent=0 // pred_check
    _
  $region7: #{wrn_forward.83} parent=0 // pred_check_branch
    %11 = sbr.rel (0) target = $region9
  $region8: #{wrn_forward.83} parent=0 // pred_region
    _
  $region9: #{wrn_forward.83} parent=0 // pred_fallthru
    _
  // Predicated region
  $region10: #{wrn_forward.83} parent=0 // pred_check
    _
  $region11: #{wrn_forward.83} parent=0 // pred_check_branch
    %13 = sbr.rel (0) target = $region13
  $region12: #{wrn_forward.83} parent=0 // pred_region
    _
  $region13: #{wrn_forward.83} parent=0 // pred_fallthru
    _
  %v14 = vld [vmem:[%s0] sm:$0xff]
  %v15 = vld [vmem:[%s1] sm:$0xff]
  %v16 = vld [vmem:[%s1 + $0x8] sm:$0xff]
  %v17 = vld [vmem:[%s1 + $0x10] sm:$0xff]
  %v18 = vld [vmem:[%s1 + $0x18] sm:$0xff]
  %v19 = vld [vmem:[%s1 + $0x20] sm:$0xff]
  %v20 = vld [vmem:[%s1 + $0x28] sm:$0xff]
  %v21 = vld [vmem:[%s1 + $0x30] sm:$0xff]
  %v22 = vld [vmem:[%s1 + $0x38] sm:$0xff]
  %v23 = vld [vmem:[%s2] sm:$0x1]
  %v25 = vperm.slane %v23, 0
  %vm27 = vcmask 523264
  %v29 = vsel %vm27, %v14, 0
  %31 = vmatpush.msra.mxu0 0.0
  %32 = vmatpush.msra.mxu0 0.0
  %33 = vmatpush.msra.mxu0 0.0
  %34 = vmatpush.msra.mxu0 0.0
  %35 = vmatpush.msra.mxu0 0.0
  %36 = vmatpush.msra.mxu0 0.0
  %37 = vmatpush.msra.mxu0 0.0
  %38 = vmatpush.msra.mxu0 0.0
  %39 = vmatpush.msra.mxu0 %v22
  %40 = vmatpush.msra.mxu0 %v21
  %41 = vmatpush.msra.mxu0 %v20
  %42 = vmatpush.msra.mxu0 %v19
  %43 = vmatpush.msra.mxu0 %v18
  %44 = vmatpush.msra.mxu0 %v17
  %45 = vmatpush.msra.mxu0 %v16
  %46 = vmatpush.msra.mxu0 %v15
  %47 = vmatmul.f32.gmra.mxu0 %v29
  %v48 = vpop.f32.mrf.mxu0
  %v49 = vadd.f32 %v25, %v48
  %50 = vdwg.mxu0
  %51 = vst [vmem:[%s3] sm:$0xff] %v49
  // Predicated region
  $region14: #{wrn_forward.83} parent=0 // pred_check
    _
  $region15: #{wrn_forward.83} parent=0 // pred_check_branch
    %53 = sbr.rel (0) target = $region17
  $region16: #{wrn_forward.83} parent=0 // pred_region
    _
  $region17: #{wrn_forward.83} parent=0 // pred_fallthru
    _
  // Predicated region
  $region18: #{wrn_forward.83} parent=0 // pred_check
    _
  $region19: #{wrn_forward.83} parent=0 // pred_check_branch
    %55 = sbr.rel (0) target = $region21
  $region20: #{wrn_forward.83} parent=0 // pred_region
    _
  $region21: #{wrn_forward.83} parent=0 // pred_fallthru
    _

</llo_original>
